<compile_context>
chip_gen: v7x
topology: tpu7x:2x2x1
jax: 0.10.0
libtpu: 0.0.40
codegen_flags: <defaults>
</compile_context>

<pallas_src>
import functools

import jax
import jax.numpy as jnp
from jax.experimental import pallas as pl
from jax.experimental.pallas import tpu as pltpu

LEAKY_SLOPE = 0.2

# (out_channels, kernel_size, stride, apply_leaky_relu)
LAYERS = (
    (128, 4, 2, True),
    (128, 3, 2, True),
    (64, 4, 2, True),
    (32, 3, 2, True),
    (1, 5, 1, False),
)


def _round_up(v, m):
    return ((v + m - 1) // m) * m


# ----------------------------- Pallas kernels ------------------------------- #
def _matmul_act_kernel(p_ref, w_ref, o_ref, *, apply_act):
    # p_ref: (TM, Kp) bf16 im2col patches   w_ref: (Kp, OCp) bf16 conv weight
    acc = jnp.dot(p_ref[...], w_ref[...], preferred_element_type=jnp.float32)
    if apply_act:
        acc = jnp.where(acc >= 0.0, acc, LEAKY_SLOPE * acc)  # LeakyReLU(0.2) in f32
    o_ref[...] = acc.astype(o_ref.dtype)


def _tail_kernel(p4_ref, w4_ref, w5_ref, seg_ref, o_ref):
    # Fused layers 4+5 (tiny): conv4 as a matmul + LeakyReLU; conv5 (5x5 valid
    # conv on a 5x5 map, OC=1) as a row-aligned weighted per-image reduction,
    # avoiding a degenerate OC=1 MXU matmul with fully-masked stores.
    h4 = jnp.dot(p4_ref[...], w4_ref[...], preferred_element_type=jnp.float32)
    h4 = jnp.where(h4 >= 0.0, h4, LEAKY_SLOPE * h4)           # (M4, 32) f32
    prod = h4 * w5_ref[...]                                    # (M4, 32)
    per_img = jnp.dot(seg_ref[...], prod,
                      preferred_element_type=jnp.float32)      # (N, 32)
    o_ref[...] = jnp.sum(per_img, axis=1, keepdims=True).astype(o_ref.dtype)  # (N, 1)


# ------------------------------- JAX glue ----------------------------------- #
def _im2col(x, kh, kw, stride):
    # x: (N, H, W, C)  ->  patches: (N*OH*OW, kh*kw*C)
    n, h, w, c = x.shape
    oh = (h - kh) // stride + 1
    ow = (w - kw) // stride + 1
    cols = []
    for i in range(kh):
        for j in range(kw):
            cols.append(x[:, i:i + oh * stride:stride, j:j + ow * stride:stride, :])
    patches = jnp.stack(cols, axis=3)                 # (N, OH, OW, kh*kw, C)
    patches = patches.reshape(n * oh * ow, kh * kw * c)
    return patches, (n, oh, ow)


def conv2d_lrelu_pallas(x_nhwc, w_oihw, stride, apply_act, max_tm=1024):
    """Valid-padding strided conv (bias=False) + optional LeakyReLU(0.2).

    bf16 im2col patches -> Pallas bf16 MXU matmul with f32 accumulation;
    K and OC padded to 128 lanes, M tiled into at most ceil(M/1024) big blocks.
    """
    oc, ic, kh, kw = w_oihw.shape
    patches, (n, oh, ow) = _im2col(x_nhwc.astype(jnp.bfloat16), kh, kw, stride)
    k = kh * kw * ic
    m = patches.shape[0]

    # Lane-dense K / OC and a big-M tile plan (minimal tail padding).
    k_pad = _round_up(k, 128)
    oc_pad = _round_up(oc, 128)
    nt = -(-m // max_tm)                    # number of M tiles (1, 2 or 5 here)
    tm = _round_up(-(-m // nt), 8)          # rows per tile, 8-aligned
    m_pad = nt * tm

    # One minimal pad (tail rows + K lanes) on the already-bf16 patches.
    patches = jnp.pad(patches, ((0, m_pad - m), (0, k_pad - k)))

    # weight[(i*kw + j)*C + c, oc] == w_oihw[oc, c, i, j]  (matches patch order)
    w_mat = jnp.transpose(w_oihw, (2, 3, 1, 0)).reshape(k, oc)
    w_mat = jnp.pad(w_mat, ((0, k_pad - k), (0, oc_pad - oc))).astype(jnp.bfloat16)

    kern = functools.partial(_matmul_act_kernel, apply_act=apply_act)
    out = pl.pallas_call(
        kern,
        out_shape=jax.ShapeDtypeStruct((m_pad, oc_pad), jnp.float32),
        grid_spec=pltpu.PrefetchScalarGridSpec(
            num_scalar_prefetch=0,
            grid=(nt,),
            in_specs=[
                pl.BlockSpec((tm, k_pad), lambda i: (i, 0)),
                pl.BlockSpec((k_pad, oc_pad), lambda i: (0, 0)),  # weight stays resident
            ],
            out_specs=pl.BlockSpec((tm, oc_pad), lambda i: (i, 0)),
        ),
        compiler_params=pltpu.CompilerParams(dimension_semantics=("parallel",)),
    )(patches, w_mat)

    return out[:m, :oc].reshape(n, oh, ow, oc)


def tail_layers_pallas(x_nhwc, w4_oihw, w5_oihw):
    """Layers 4 (conv 3x3 s2 + LeakyReLU) and 5 (conv 5x5 s1, OC=1) in ONE kernel."""
    n = x_nhwc.shape[0]
    oc4, ic4, kh4, kw4 = w4_oihw.shape
    p4, (_, oh4, ow4) = _im2col(x_nhwc.astype(jnp.bfloat16), kh4, kw4, 2)
    k4 = kh4 * kw4 * ic4
    m4 = p4.shape[0]
    w4_mat = jnp.transpose(w4_oihw, (2, 3, 1, 0)).reshape(k4, oc4).astype(jnp.bfloat16)

    oc5, ic5, kh5, kw5 = w5_oihw.shape
    # The final 5x5 valid conv consumes the whole 5x5 layer-4 map: one patch/image.
    assert oc5 == 1 and (oh4, ow4) == (kh5, kw5) and ic5 == oc4
    # Row-aligned conv5 weights: w5_rows[n*OH4*OW4 + i*OW4 + j, c] = w5[0, c, i, j]
    w5_rows = jnp.tile(
        jnp.transpose(w5_oihw, (2, 3, 1, 0)).reshape(kh5 * kw5, ic5), (n, 1)
    ).astype(jnp.float32)
    # Per-image row selector for the final reduction: seg[b, r] = (r // 25 == b)
    seg = (jnp.arange(m4) // (oh4 * ow4) == jnp.arange(n)[:, None]).astype(jnp.float32)

    return pl.pallas_call(
        _tail_kernel,
        out_shape=jax.ShapeDtypeStruct((n, 1), jnp.float32),
    )(p4, w4_mat, w5_rows, seg)


# ----------------------------- parameters ----------------------------------- #
def spectral_normalize(w_oihw, key, n_iter=10, eps=1e-12):
    """W / sigma(W) with sigma from power iteration on W reshaped to (OC, -1)."""
    # TODO(synk): PyTorch's spectral_norm does ONE power iteration per forward on a
    # persistent random `u` buffer; here we run a deterministic power iteration at
    # parameter-setup time (converged sigma), which matches the math but not the
    # exact per-step buffer state of a live torch module.
    oc = w_oihw.shape[0]
    w_mat = w_oihw.reshape(oc, -1)
    u = jax.random.normal(key, (oc,), dtype=w_mat.dtype)
    u = u / (jnp.linalg.norm(u) + eps)
    v = None
    for _ in range(n_iter):
        v = w_mat.T @ u
        v = v / (jnp.linalg.norm(v) + eps)
        u = w_mat @ v
        u = u / (jnp.linalg.norm(u) + eps)
    sigma = u @ (w_mat @ v)
    return w_oihw / sigma


def init_params(key, in_channels):
    params = []
    c = in_channels
    for (oc, k, _s, _act) in LAYERS:
        key, wk, uk = jax.random.split(key, 3)
        w = jax.random.normal(wk, (oc, c, k, k), dtype=jnp.float32) * 0.05
        params.append(spectral_normalize(w, uk))
        c = oc
    return params


# ------------------------------ forward -------------------------------------- #
def discriminator_forward(x_nchw, params):
    # layout: convert PyTorch NCHW input to NHWC for the TPU kernels (once).
    x = jnp.transpose(x_nchw, (0, 2, 3, 1))
    # Layers 1-3: tiled Pallas conv kernels (all the real FLOPs live here).
    for (oc, kk, stride, act), w in zip(LAYERS[:3], params[:3]):
        x = conv2d_lrelu_pallas(x, w, stride, act)
    # TODO(synk): remaining structural win is fusing im2col into the conv kernel
    # (overlapping-window input blocks + in-kernel strided slices) to skip the
    # bf16 patch materialization in HBM entirely.
    # Layers 4+5: one fused grid-less Pallas kernel; result == out.view(-1, 1).
    return tail_layers_pallas(x, params[3], params[4])


if __name__ == "__main__":
    key = jax.random.PRNGKey(0)
    k_in, k_par = jax.random.split(key)

    # opt.d_image -> 3 channels; spatial 100 is the smallest even size that
    # survives the 5-layer valid-padding conv stack (final map is 1x1).
    batch, d_image, spatial = 2, 3, 100
    x = jax.random.normal(k_in, (batch, d_image, spatial, spatial), dtype=jnp.float32)

    params = init_params(k_par, d_image)

    out = jax.jit(discriminator_forward)(x, params)
    out = jax.block_until_ready(out)
    assert out.shape == (batch, 1), out.shape
    print("KERNEL_OK")
</pallas_src>

<mosaic_0001>
module attributes {stable_mosaic.version = 11 : i64} {
  func.func @_matmul_act_kernel(%arg0: i32, %arg1: memref<968x128xbf16, #tpu.memory_space<vmem>>, %arg2: memref<128x128xbf16, #tpu.memory_space<vmem>>, %arg3: memref<968x128xf32, #tpu.memory_space<vmem>>) attributes {dimension_semantics = [#tpu.dimension_semantics<parallel>], iteration_bounds = array<i64: 5>, scalar_prefetch = 0 : i64, scratch_operands = 0 : i64, tpu.core_type = #tpu.core_type<tc>, window_params = [{transform_indices = @transform_0, window_bounds = array<i64: 968, 128>}, {pipeline_mode = #tpu.pipeline_mode<synchronous>, transform_indices = @transform_1, window_bounds = array<i64: 128, 128>}, {transform_indices = @transform_2, window_bounds = array<i64: 968, 128>}]} {
    %c0 = arith.constant 0 : index
    %c0_0 = arith.constant 0 : index
    %0 = vector.load %arg1[%c0, %c0_0] : memref<968x128xbf16, #tpu.memory_space<vmem>>, vector<968x128xbf16>
    %c0_1 = arith.constant 0 : index
    %c0_2 = arith.constant 0 : index
    %1 = vector.load %arg2[%c0_1, %c0_2] : memref<128x128xbf16, #tpu.memory_space<vmem>>, vector<128x128xbf16>
    %cst = arith.constant dense<0.000000e+00> : vector<968x128xf32>
    %2 = tpu.matmul %0, %1, %cst {dimension_numbers = #tpu.dot_dimension_numbers<[1], [0], [0], [1], [0, 0, 1, 1], [], []>} : vector<968x128xbf16>, vector<128x128xbf16>, vector<968x128xf32> -> vector<968x128xf32>
    %cst_3 = arith.constant 0.000000e+00 : f32
    %3 = vector.broadcast %cst_3 : f32 to vector<968x128xf32>
    %4 = arith.cmpf oge, %2, %3 : vector<968x128xf32>
    %cst_4 = arith.constant 2.000000e-01 : f32
    %5 = vector.broadcast %cst_4 : f32 to vector<968x128xf32>
    %6 = arith.mulf %5, %2 : vector<968x128xf32>
    %7 = arith.select %4, %2, %6 : vector<968x128xi1>, vector<968x128xf32>
    %c0_5 = arith.constant 0 : index
    %c0_6 = arith.constant 0 : index
    %8 = vector.load %arg3[%c0_5, %c0_6] : memref<968x128xf32, #tpu.memory_space<vmem>>, vector<968x128xf32>
    tpu.vector_store %arg3[%c0_5, %c0_6], %7 {strides = array<i32>} : memref<968x128xf32, #tpu.memory_space<vmem>>, vector<968x128xf32>,
    return
  }
  func.func @transform_0(%arg0: i32) -> (i32, i32) {
    %c0_i32 = arith.constant 0 : i32
    %c0_i32_0 = arith.constant 0 : i32
    return %arg0, %c0_i32 : i32, i32
  }
  func.func @transform_1(%arg0: i32) -> (i32, i32) {
    %c0_i32 = arith.constant 0 : i32
    %c0_i32_0 = arith.constant 0 : i32
    %c0_i32_1 = arith.constant 0 : i32
    return %c0_i32, %c0_i32_0 : i32, i32
  }
  func.func @transform_2(%arg0: i32) -> (i32, i32) {
    %c0_i32 = arith.constant 0 : i32
    %c0_i32_0 = arith.constant 0 : i32
    return %arg0, %c0_i32 : i32, i32
  }
}

module attributes {stable_mosaic.version = 11 : i64} {
  func.func @_matmul_act_kernel(%arg0: i32, %arg1: memref<576x1152xbf16, #tpu.memory_space<vmem>>, %arg2: memref<1152x128xbf16, #tpu.memory_space<vmem>>, %arg3: memref<576x128xf32, #tpu.memory_space<vmem>>) attributes {dimension_semantics = [#tpu.dimension_semantics<parallel>], iteration_bounds = array<i64: 2>, scalar_prefetch = 0 : i64, scratch_operands = 0 : i64, tpu.core_type = #tpu.core_type<tc>, window_params = [{transform_indices = @transform_0, window_bounds = array<i64: 576, 1152>}, {pipeline_mode = #tpu.pipeline_mode<synchronous>, transform_indices = @transform_1, window_bounds = array<i64: 1152, 128>}, {transform_indices = @transform_2, window_bounds = array<i64: 576, 128>}]} {
    %c0 = arith.constant 0 : index
    %c0_0 = arith.constant 0 : index
    %0 = vector.load %arg1[%c0, %c0_0] : memref<576x1152xbf16, #tpu.memory_space<vmem>>, vector<576x1152xbf16>
    %c0_1 = arith.constant 0 : index
    %c0_2 = arith.constant 0 : index
    %1 = vector.load %arg2[%c0_1, %c0_2] : memref<1152x128xbf16, #tpu.memory_space<vmem>>, vector<1152x128xbf16>
    %cst = arith.constant dense<0.000000e+00> : vector<576x128xf32>
    %2 = tpu.matmul %0, %1, %cst {dimension_numbers = #tpu.dot_dimension_numbers<[1], [0], [0], [1], [0, 0, 1, 1], [], []>} : vector<576x1152xbf16>, vector<1152x128xbf16>, vector<576x128xf32> -> vector<576x128xf32>
    %cst_3 = arith.constant 0.000000e+00 : f32
    %3 = vector.broadcast %cst_3 : f32 to vector<576x128xf32>
    %4 = arith.cmpf oge, %2, %3 : vector<576x128xf32>
    %cst_4 = arith.constant 2.000000e-01 : f32
    %5 = vector.broadcast %cst_4 : f32 to vector<576x128xf32>
    %6 = arith.mulf %5, %2 : vector<576x128xf32>
    %7 = arith.select %4, %2, %6 : vector<576x128xi1>, vector<576x128xf32>
    %c0_5 = arith.constant 0 : index
    %c0_6 = arith.constant 0 : index
    %8 = vector.load %arg3[%c0_5, %c0_6] : memref<576x128xf32, #tpu.memory_space<vmem>>, vector<576x128xf32>
    tpu.vector_store %arg3[%c0_5, %c0_6], %7 {strides = array<i32>} : memref<576x128xf32, #tpu.memory_space<vmem>>, vector<576x128xf32>,
    return
  }
  func.func @transform_0(%arg0: i32) -> (i32, i32) {
    %c0_i32 = arith.constant 0 : i32
    %c0_i32_0 = arith.constant 0 : i32
    return %arg0, %c0_i32 : i32, i32
  }
  func.func @transform_1(%arg0: i32) -> (i32, i32) {
    %c0_i32 = arith.constant 0 : i32
    %c0_i32_0 = arith.constant 0 : i32
    %c0_i32_1 = arith.constant 0 : i32
    return %c0_i32, %c0_i32_0 : i32, i32
  }
  func.func @transform_2(%arg0: i32) -> (i32, i32) {
    %c0_i32 = arith.constant 0 : i32
    %c0_i32_0 = arith.constant 0 : i32
    return %arg0, %c0_i32 : i32, i32
  }
}

module attributes {stable_mosaic.version = 11 : i64} {
  func.func @_matmul_act_kernel(%arg0: i32, %arg1: memref<248x2048xbf16, #tpu.memory_space<vmem>>, %arg2: memref<2048x128xbf16, #tpu.memory_space<vmem>>, %arg3: memref<248x128xf32, #tpu.memory_space<vmem>>) attributes {dimension_semantics = [#tpu.dimension_semantics<parallel>], iteration_bounds = array<i64: 1>, scalar_prefetch = 0 : i64, scratch_operands = 0 : i64, tpu.core_type = #tpu.core_type<tc>, window_params = [{transform_indices = @transform_0, window_bounds = array<i64: 248, 2048>}, {pipeline_mode = #tpu.pipeline_mode<synchronous>, transform_indices = @transform_1, window_bounds = array<i64: 2048, 128>}, {transform_indices = @transform_2, window_bounds = array<i64: 248, 128>}]} {
    %c0 = arith.constant 0 : index
    %c0_0 = arith.constant 0 : index
    %0 = vector.load %arg1[%c0, %c0_0] : memref<248x2048xbf16, #tpu.memory_space<vmem>>, vector<248x2048xbf16>
    %c0_1 = arith.constant 0 : index
    %c0_2 = arith.constant 0 : index
    %1 = vector.load %arg2[%c0_1, %c0_2] : memref<2048x128xbf16, #tpu.memory_space<vmem>>, vector<2048x128xbf16>
    %cst = arith.constant dense<0.000000e+00> : vector<248x128xf32>
    %2 = tpu.matmul %0, %1, %cst {dimension_numbers = #tpu.dot_dimension_numbers<[1], [0], [0], [1], [0, 0, 1, 1], [], []>} : vector<248x2048xbf16>, vector<2048x128xbf16>, vector<248x128xf32> -> vector<248x128xf32>
    %cst_3 = arith.constant 0.000000e+00 : f32
    %3 = vector.broadcast %cst_3 : f32 to vector<248x128xf32>
    %4 = arith.cmpf oge, %2, %3 : vector<248x128xf32>
    %cst_4 = arith.constant 2.000000e-01 : f32
    %5 = vector.broadcast %cst_4 : f32 to vector<248x128xf32>
    %6 = arith.mulf %5, %2 : vector<248x128xf32>
    %7 = arith.select %4, %2, %6 : vector<248x128xi1>, vector<248x128xf32>
    %c0_5 = arith.constant 0 : index
    %c0_6 = arith.constant 0 : index
    %8 = vector.load %arg3[%c0_5, %c0_6] : memref<248x128xf32, #tpu.memory_space<vmem>>, vector<248x128xf32>
    tpu.vector_store %arg3[%c0_5, %c0_6], %7 {strides = array<i32>} : memref<248x128xf32, #tpu.memory_space<vmem>>, vector<248x128xf32>,
    return
  }
  func.func @transform_0(%arg0: i32) -> (i32, i32) {
    %c0_i32 = arith.constant 0 : i32
    %c0_i32_0 = arith.constant 0 : i32
    return %arg0, %c0_i32 : i32, i32
  }
  func.func @transform_1(%arg0: i32) -> (i32, i32) {
    %c0_i32 = arith.constant 0 : i32
    %c0_i32_0 = arith.constant 0 : i32
    %c0_i32_1 = arith.constant 0 : i32
    return %c0_i32, %c0_i32_0 : i32, i32
  }
  func.func @transform_2(%arg0: i32) -> (i32, i32) {
    %c0_i32 = arith.constant 0 : i32
    %c0_i32_0 = arith.constant 0 : i32
    return %arg0, %c0_i32 : i32, i32
  }
}

module attributes {stable_mosaic.version = 11 : i64} {
  func.func @_tail_kernel(%arg0: memref<50x576xbf16, #tpu.memory_space<vmem>>, %arg1: memref<576x32xbf16, #tpu.memory_space<vmem>>, %arg2: memref<50x32xf32, #tpu.memory_space<vmem>>, %arg3: memref<2x50xf32, #tpu.memory_space<vmem>>, %arg4: memref<2x1xf32, #tpu.memory_space<vmem>>) attributes {dimension_semantics = [], scalar_prefetch = 0 : i64, scratch_operands = 0 : i64, tpu.core_type = #tpu.core_type<tc>} {
    %c0 = arith.constant 0 : index
    %c0_0 = arith.constant 0 : index
    %0 = vector.load %arg0[%c0, %c0_0] : memref<50x576xbf16, #tpu.memory_space<vmem>>, vector<50x576xbf16>
    %c0_1 = arith.constant 0 : index
    %c0_2 = arith.constant 0 : index
    %1 = vector.load %arg1[%c0_1, %c0_2] : memref<576x32xbf16, #tpu.memory_space<vmem>>, vector<576x32xbf16>
    %cst = arith.constant dense<0.000000e+00> : vector<50x32xf32>
    %2 = tpu.matmul %0, %1, %cst {dimension_numbers = #tpu.dot_dimension_numbers<[1], [0], [0], [1], [0, 0, 1, 1], [], []>} : vector<50x576xbf16>, vector<576x32xbf16>, vector<50x32xf32> -> vector<50x32xf32>
    %cst_3 = arith.constant 0.000000e+00 : f32
    %3 = vector.broadcast %cst_3 : f32 to vector<50x32xf32>
    %4 = arith.cmpf oge, %2, %3 : vector<50x32xf32>
    %cst_4 = arith.constant 2.000000e-01 : f32
    %5 = vector.broadcast %cst_4 : f32 to vector<50x32xf32>
    %6 = arith.mulf %5, %2 : vector<50x32xf32>
    %7 = arith.select %4, %2, %6 : vector<50x32xi1>, vector<50x32xf32>
    %c0_5 = arith.constant 0 : index
    %c0_6 = arith.constant 0 : index
    %8 = vector.load %arg2[%c0_5, %c0_6] : memref<50x32xf32, #tpu.memory_space<vmem>>, vector<50x32xf32>
    %9 = arith.mulf %7, %8 : vector<50x32xf32>
    %c0_7 = arith.constant 0 : index
    %c0_8 = arith.constant 0 : index
    %10 = vector.load %arg3[%c0_7, %c0_8] : memref<2x50xf32, #tpu.memory_space<vmem>>, vector<2x50xf32>
    %cst_9 = arith.constant dense<0.000000e+00> : vector<2x32xf32>
    %11 = tpu.matmul %10, %9, %cst_9 {dimension_numbers = #tpu.dot_dimension_numbers<[1], [0], [0], [1], [0, 0, 1, 1], [], []>} : vector<2x50xf32>, vector<50x32xf32>, vector<2x32xf32> -> vector<2x32xf32>
    %cst_10 = arith.constant dense<0.000000e+00> : vector<2xf32>
    %12 = vector.multi_reduction <add>, %11, %cst_10 [1] : vector<2x32xf32> to vector<2xf32>
    %13 = vector.shape_cast %12 : vector<2xf32> to vector<2x1xf32>
    %c0_11 = arith.constant 0 : index
    %c0_12 = arith.constant 0 : index
    %14 = vector.load %arg4[%c0_11, %c0_12] : memref<2x1xf32, #tpu.memory_space<vmem>>, vector<2x1xf32>
    tpu.vector_store %arg4[%c0_11, %c0_12], %13 {strides = array<i32>} : memref<2x1xf32, #tpu.memory_space<vmem>>, vector<2x1xf32>,
    return
  }
}

</mosaic_0001>

<llo_original>
// kernel: discriminator_forward.4
$region0: #{discriminator_forward.4}
  #allocation0 [shape = 'u32[]', space=smem, size = 0x4, offset = 0x4, fixed_abs, tag = 'smem constant byte address 0x4 - core index']
  #allocation1 [shape = 'u32[144,128]{1,0:T(1,128)}', space=vmem, size = 0x12000, scoped, tag = 'internal scratch']
  %s0 = inlined_call_operand.vmem [shape: bf16[4840,128], index: 0, kind: input, shape index: {}]
  %s1 = inlined_call_operand.vmem [shape: bf16[128,128], index: 1, kind: input, shape index: {}]
  %s2 = inlined_call_operand.vmem [shape: f32[4840,128], index: 2, kind: output, shape index: {}]
  %s3 = sld [smem:[#allocation0]]
  $region41: #{discriminator_forward.4} parent=0
    _
  %s5 = ssub.s32 1, %s3
  %s6 = scalar_select 0, %s5, %s3
  loop: start=0, step=1, limit=7
  $region2: #{discriminator_forward.4} parent=0 // loop_pre_header
    _
  $region3: #{discriminator_forward.4} parent=0 // loop_header
    %s8 = sphi 0, %s12
    %p9 = scmp.ge.s32.totalorder %s8, 7
    %s18 = sphi 0, %s20
    %s21 = sphi 0, %s18
    %s22 = sphi 0, %s21
    %s38 = sphi 0, %s22
    %s42 = sphi 0, %s42
    %s44 = sphi 0, %s42
    %s45 = sphi 0, %s44
    %s59 = sphi 0, %s45
    %s65 = sphi 0, %s67
    %s68 = sphi 0, %s65
    %s69 = sphi 0, %s68
    %s85 = sphi 0, %s69
  $region4: #{discriminator_forward.4} parent=0 // loop_header_branch
    %11 = sbr.rel (%p9) target = $region8
  $region5: #{discriminator_forward.4} parent=0 // loop_body
    %s13 = ssub.s32 %s8, 1
    %s14 = ssub.s32 %s8, 2
    %s15 = sadd.s32 %s8, 1
    %s16 = ssub.s32 %s8, %s15
    %p17 = scmp.eq.s32.totalorder %s16, 0
    %s19 = sadd.s32 %s18, 1
    %s20 = scalar_select %p17, %s18, %s19
    %p23 = pneg %p17
    %p24 = scmp.eq.s32.totalorder %s8, 4
    %p25 = por %p23, %p24
    %p26 = scmp.ne.s32.totalorder %s18, %s21
    %p27 = scmp.eq.s32.totalorder %s8, 0
    %p28 = por %p26, %p27
    %p29 = scmp.ne.s32.totalorder %s18, %s21
    %p30 = scmp.eq.s32.totalorder %s13, 4
    %p31 = por %p29, %p30
    %p32 = scmp.ne.s32.totalorder %s21, %s22
    %p33 = scmp.eq.s32.totalorder %s13, 0
    %p34 = por %p32, %p33
    %p35 = scmp.ne.s32.totalorder %s21, %s22
    %p36 = scmp.eq.s32.totalorder %s14, 4
    %p37 = por %p35, %p36
    %p39 = scmp.ne.s32.totalorder %s22, %s38
    %p40 = scmp.eq.s32.totalorder %s14, 0
    %p41 = por %p39, %p40
    %s43 = sadd.s32 %s42, 1
    %p46 = scmp.eq.s32.totalorder %s8, 4
    %p47 = scmp.ne.s32.totalorder %s42, %s44
    %p48 = scmp.eq.s32.totalorder %s8, 0
    %p49 = por %p47, %p48
    %p50 = scmp.ne.s32.totalorder %s42, %s44
    %p51 = scmp.eq.s32.totalorder %s13, 4
    %p52 = por %p50, %p51
    %p53 = scmp.ne.s32.totalorder %s44, %s45
    %p54 = scmp.eq.s32.totalorder %s13, 0
    %p55 = por %p53, %p54
    %p56 = scmp.ne.s32.totalorder %s44, %s45
    %p57 = scmp.eq.s32.totalorder %s14, 4
    %p58 = por %p56, %p57
    %p60 = scmp.ne.s32.totalorder %s45, %s59
    %p61 = scmp.eq.s32.totalorder %s14, 0
    %p62 = por %p60, %p61
    %s63 = ssub.s32 %s8, %s15
    %p64 = scmp.eq.s32.totalorder %s63, 0
    %s66 = sadd.s32 %s65, 1
    %s67 = scalar_select %p64, %s65, %s66
    %p70 = pneg %p64
    %p71 = scmp.eq.s32.totalorder %s8, 4
    %p72 = por %p70, %p71
    %p73 = scmp.ne.s32.totalorder %s65, %s68
    %p74 = scmp.eq.s32.totalorder %s8, 0
    %p75 = por %p73, %p74
    %p76 = scmp.ne.s32.totalorder %s65, %s68
    %p77 = scmp.eq.s32.totalorder %s13, 4
    %p78 = por %p76, %p77
    %p79 = scmp.ne.s32.totalorder %s68, %s69
    %p80 = scmp.eq.s32.totalorder %s13, 0
    %p81 = por %p79, %p80
    %p82 = scmp.ne.s32.totalorder %s68, %s69
    %p83 = scmp.eq.s32.totalorder %s14, 4
    %p84 = por %p82, %p83
    %p86 = scmp.ne.s32.totalorder %s69, %s85
    %p87 = scmp.eq.s32.totalorder %s14, 0
    %p88 = por %p86, %p87
    %p89 = scmp.le.s32.totalorder 1, %s8
    %p90 = scmp.lt.s32.totalorder %s8, 6
    %p91 = pnand %p89, %p90
    %p92 = pneg %p91
    // Predicated region
    $region9: #{discriminator_forward.4} parent=5 // pred_check
      _
    $region10: #{discriminator_forward.4} parent=5 // pred_check_branch
      %94 = sbr.rel (%p91) target = $region12
    $region11: #{discriminator_forward.4} parent=5 // pred_region
      %s95 = ssub.s32 %s8, 1
      // Predicated region
      $region13: #{discriminator_forward.4} parent=11 // pred_check
        %p96 = pneg %p55
      $region14: #{discriminator_forward.4} parent=11 // pred_check_branch
        %98 = sbr.rel (%p96) target = $region16
      $region15: #{discriminator_forward.4} parent=11 // pred_region
        _
      $region16: #{discriminator_forward.4} parent=11 // pred_fallthru
        _
    $region12: #{discriminator_forward.4} parent=5 // pred_fallthru
      _
    %p99 = scmp.lt.s32.totalorder %s8, 5
    // Predicated region
    $region17: #{discriminator_forward.4} parent=5 // pred_check
      %p100 = pneg %p99
    $region18: #{discriminator_forward.4} parent=5 // pred_check_branch
      %102 = sbr.rel (%p100) target = $region20
    $region19: #{discriminator_forward.4} parent=5 // pred_region
      // Predicated region
      $region21: #{discriminator_forward.4} parent=19 // pred_check
        %p103 = pneg %p28
      $region22: #{discriminator_forward.4} parent=19 // pred_check_branch
        %105 = sbr.rel (%p103) target = $region24
      $region23: #{discriminator_forward.4} parent=19 // pred_region
        %s106 = smul.u32 121, %s8
        %p107 = scmp.lt.s32.totalorder %s106, 604
        %s108 = scalar_select %p107, %s106, 604
        %s109 = smul.addr %s108, 4
        %s110 = scalar_lea.vmem %s0, %s109
        %s111 = smul.u32 121, %s8
      $region24: #{discriminator_forward.4} parent=19 // pred_fallthru
        _
    $region20: #{discriminator_forward.4} parent=5 // pred_fallthru
      _
    %p112 = scmp.le.s32.totalorder 1, %s8
    %p113 = scmp.lt.s32.totalorder %s8, 6
    %p114 = pnand %p112, %p113
    %p115 = pneg %p114
    // Predicated region
    $region25: #{discriminator_forward.4} parent=5 // pred_check
      _
    $region26: #{discriminator_forward.4} parent=5 // pred_check_branch
      %117 = sbr.rel (%p114) target = $region28
    $region27: #{discriminator_forward.4} parent=5 // pred_region
      %s118 = ssub.s32 %s8, 1
      %s119 = smul.u32 121, %s13
      %p120 = scmp.lt.s32.totalorder %s119, 604
      %s121 = scalar_select %p120, %s119, 604
      %s122 = smul.addr %s121, 4
      %s123 = scalar_lea.vmem %s0, %s122
      %p124 = pneg %p34
      %p125 = pneg %p31
      %p126 = pneg %p55
      %p127 = pneg %p52
      %p128 = pneg %p81
      %p129 = pneg %p78
      %s130 = smul.u32 121, %s13
      %p131 = scmp.lt.s32.totalorder %s130, 604
      %s132 = scalar_select %p131, %s130, 604
      %s133 = smul.addr %s132, 8
      %s134 = scalar_lea.vmem %s2, %s133
      %s135 = smul.u32 121, %s13
      %p136 = scmp.lt.s32.totalorder %s135, 604
      %s137 = scalar_select %p136, %s135, 604
      %s138 = smul.addr %s137, 4
      %s139 = scalar_lea.vmem %s0, %s138
      %s140 = smul.u32 121, %s13
      %s141 = smul.u32 121, %s13
      %p142 = scmp.lt.s32.totalorder %s141, 604
      %s143 = scalar_select %p142, %s141, 604
      %s144 = smul.addr %s143, 8
      %s145 = scalar_lea.vmem %s2, %s144
      %s146 = smul.u32 121, %s13
      %v148 = vld [vmem:[%s139] sm:$0xf]
      %v149 = vld [vmem:[%s139 + $0x4] sm:$0xf]
      %v150 = vld [vmem:[%s139 + $0x8] sm:$0xf]
      %v151 = vld [vmem:[%s139 + $0xc] sm:$0xf]
      %v152 = vld [vmem:[%s139 + $0x10] sm:$0xf]
      %v153 = vld [vmem:[%s139 + $0x14] sm:$0xf]
      %v154 = vld [vmem:[%s139 + $0x18] sm:$0xf]
      %v155 = vld [vmem:[%s139 + $0x1c] sm:$0xf]
      %v156 = vld [vmem:[%s139 + $0x20] sm:$0xf]
      %v157 = vld [vmem:[%s139 + $0x24] sm:$0xf]
      %v158 = vld [vmem:[%s139 + $0x28] sm:$0xf]
      %v159 = vld [vmem:[%s139 + $0x2c] sm:$0xf]
      %v160 = vld [vmem:[%s139 + $0x30] sm:$0xf]
      %v161 = vld [vmem:[%s139 + $0x34] sm:$0xf]
      %v162 = vld [vmem:[%s139 + $0x38] sm:$0xf]
      %v163 = vld [vmem:[%s139 + $0x3c] sm:$0xf]
      %v164 = vld [vmem:[%s139 + $0x40] sm:$0xf]
      %v165 = vld [vmem:[%s139 + $0x44] sm:$0xf]
      %v166 = vld [vmem:[%s139 + $0x48] sm:$0xf]
      %v167 = vld [vmem:[%s139 + $0x4c] sm:$0xf]
      %v168 = vld [vmem:[%s139 + $0x50] sm:$0xf]
      %v169 = vld [vmem:[%s139 + $0x54] sm:$0xf]
      %v170 = vld [vmem:[%s139 + $0x58] sm:$0xf]
      %v171 = vld [vmem:[%s139 + $0x5c] sm:$0xf]
      %v172 = vld [vmem:[%s139 + $0x60] sm:$0xf]
      %v173 = vld [vmem:[%s139 + $0x64] sm:$0xf]
      %v174 = vld [vmem:[%s139 + $0x68] sm:$0xf]
      %v175 = vld [vmem:[%s139 + $0x6c] sm:$0xf]
      %v176 = vld [vmem:[%s139 + $0x70] sm:$0xf]
      %v177 = vld [vmem:[%s139 + $0x74] sm:$0xf]
      %v178 = vld [vmem:[%s139 + $0x78] sm:$0xf]
      %v179 = vld [vmem:[%s139 + $0x7c] sm:$0xf]
      %v180 = vld [vmem:[%s139 + $0x80] sm:$0xf]
      %v181 = vld [vmem:[%s139 + $0x84] sm:$0xf]
      %v182 = vld [vmem:[%s139 + $0x88] sm:$0xf]
      %v183 = vld [vmem:[%s139 + $0x8c] sm:$0xf]
      %v184 = vld [vmem:[%s139 + $0x90] sm:$0xf]
      %v185 = vld [vmem:[%s139 + $0x94] sm:$0xf]
      %v186 = vld [vmem:[%s139 + $0x98] sm:$0xf]
      %v187 = vld [vmem:[%s139 + $0x9c] sm:$0xf]
      %v188 = vld [vmem:[%s139 + $0xa0] sm:$0xf]
      %v189 = vld [vmem:[%s139 + $0xa4] sm:$0xf]
      %v190 = vld [vmem:[%s139 + $0xa8] sm:$0xf]
      %v191 = vld [vmem:[%s139 + $0xac] sm:$0xf]
      %v192 = vld [vmem:[%s139 + $0xb0] sm:$0xf]
      %v193 = vld [vmem:[%s139 + $0xb4] sm:$0xf]
      %v194 = vld [vmem:[%s139 + $0xb8] sm:$0xf]
      %v195 = vld [vmem:[%s139 + $0xbc] sm:$0xf]
      %v196 = vld [vmem:[%s139 + $0xc0] sm:$0xf]
      %v197 = vld [vmem:[%s139 + $0xc4] sm:$0xf]
      %v198 = vld [vmem:[%s139 + $0xc8] sm:$0xf]
      %v199 = vld [vmem:[%s139 + $0xcc] sm:$0xf]
      %v200 = vld [vmem:[%s139 + $0xd0] sm:$0xf]
      %v201 = vld [vmem:[%s139 + $0xd4] sm:$0xf]
      %v202 = vld [vmem:[%s139 + $0xd8] sm:$0xf]
      %v203 = vld [vmem:[%s139 + $0xdc] sm:$0xf]
      %v204 = vld [vmem:[%s139 + $0xe0] sm:$0xf]
      %v205 = vld [vmem:[%s139 + $0xe4] sm:$0xf]
      %v206 = vld [vmem:[%s139 + $0xe8] sm:$0xf]
      %v207 = vld [vmem:[%s139 + $0xec] sm:$0xf]
      %v208 = vld [vmem:[%s139 + $0xf0] sm:$0xf]
      %v209 = vld [vmem:[%s139 + $0xf4] sm:$0xf]
      %v210 = vld [vmem:[%s139 + $0xf8] sm:$0xf]
      %v211 = vld [vmem:[%s139 + $0xfc] sm:$0xf]
      %v212 = vld [vmem:[%s139 + $0x100] sm:$0xf]
      %v213 = vld [vmem:[%s139 + $0x104] sm:$0xf]
      %v214 = vld [vmem:[%s139 + $0x108] sm:$0xf]
      %v215 = vld [vmem:[%s139 + $0x10c] sm:$0xf]
      %v216 = vld [vmem:[%s139 + $0x110] sm:$0xf]
      %v217 = vld [vmem:[%s139 + $0x114] sm:$0xf]
      %v218 = vld [vmem:[%s139 + $0x118] sm:$0xf]
      %v219 = vld [vmem:[%s139 + $0x11c] sm:$0xf]
      %v220 = vld [vmem:[%s139 + $0x120] sm:$0xf]
      %v221 = vld [vmem:[%s139 + $0x124] sm:$0xf]
      %v222 = vld [vmem:[%s139 + $0x128] sm:$0xf]
      %v223 = vld [vmem:[%s139 + $0x12c] sm:$0xf]
      %v224 = vld [vmem:[%s139 + $0x130] sm:$0xf]
      %v225 = vld [vmem:[%s139 + $0x134] sm:$0xf]
      %v226 = vld [vmem:[%s139 + $0x138] sm:$0xf]
      %v227 = vld [vmem:[%s139 + $0x13c] sm:$0xf]
      %v228 = vld [vmem:[%s139 + $0x140] sm:$0xf]
      %v229 = vld [vmem:[%s139 + $0x144] sm:$0xf]
      %v230 = vld [vmem:[%s139 + $0x148] sm:$0xf]
      %v231 = vld [vmem:[%s139 + $0x14c] sm:$0xf]
      %v232 = vld [vmem:[%s139 + $0x150] sm:$0xf]
      %v233 = vld [vmem:[%s139 + $0x154] sm:$0xf]
      %v234 = vld [vmem:[%s139 + $0x158] sm:$0xf]
      %v235 = vld [vmem:[%s139 + $0x15c] sm:$0xf]
      %v236 = vld [vmem:[%s139 + $0x160] sm:$0xf]
      %v237 = vld [vmem:[%s139 + $0x164] sm:$0xf]
      %v238 = vld [vmem:[%s139 + $0x168] sm:$0xf]
      %v239 = vld [vmem:[%s139 + $0x16c] sm:$0xf]
      %v240 = vld [vmem:[%s139 + $0x170] sm:$0xf]
      %v241 = vld [vmem:[%s139 + $0x174] sm:$0xf]
      %v242 = vld [vmem:[%s139 + $0x178] sm:$0xf]
      %v243 = vld [vmem:[%s139 + $0x17c] sm:$0xf]
      %v244 = vld [vmem:[%s139 + $0x180] sm:$0xf]
      %v245 = vld [vmem:[%s139 + $0x184] sm:$0xf]
      %v246 = vld [vmem:[%s139 + $0x188] sm:$0xf]
      %v247 = vld [vmem:[%s139 + $0x18c] sm:$0xf]
      %v248 = vld [vmem:[%s139 + $0x190] sm:$0xf]
      %v249 = vld [vmem:[%s139 + $0x194] sm:$0xf]
      %v250 = vld [vmem:[%s139 + $0x198] sm:$0xf]
      %v251 = vld [vmem:[%s139 + $0x19c] sm:$0xf]
      %v252 = vld [vmem:[%s139 + $0x1a0] sm:$0xf]
      %v253 = vld [vmem:[%s139 + $0x1a4] sm:$0xf]
      %v254 = vld [vmem:[%s139 + $0x1a8] sm:$0xf]
      %v255 = vld [vmem:[%s139 + $0x1ac] sm:$0xf]
      %v256 = vld [vmem:[%s139 + $0x1b0] sm:$0xf]
      %v257 = vld [vmem:[%s139 + $0x1b4] sm:$0xf]
      %v258 = vld [vmem:[%s139 + $0x1b8] sm:$0xf]
      %v259 = vld [vmem:[%s139 + $0x1bc] sm:$0xf]
      %v260 = vld [vmem:[%s139 + $0x1c0] sm:$0xf]
      %v261 = vld [vmem:[%s139 + $0x1c4] sm:$0xf]
      %v262 = vld [vmem:[%s139 + $0x1c8] sm:$0xf]
      %v263 = vld [vmem:[%s139 + $0x1cc] sm:$0xf]
      %v264 = vld [vmem:[%s139 + $0x1d0] sm:$0xf]
      %v265 = vld [vmem:[%s139 + $0x1d4] sm:$0xf]
      %v266 = vld [vmem:[%s139 + $0x1d8] sm:$0xf]
      %v267 = vld [vmem:[%s139 + $0x1dc] sm:$0xf]
      %v268 = vld [vmem:[%s139 + $0x1e0] sm:$0xf]
      %v269 = vld [vmem:[%s1] sm:$0xf]
      %v270 = vld [vmem:[%s1 + $0x4] sm:$0xf]
      %v271 = vld [vmem:[%s1 + $0x8] sm:$0xf]
      %v272 = vld [vmem:[%s1 + $0xc] sm:$0xf]
      %v273 = vld [vmem:[%s1 + $0x10] sm:$0xf]
      %v274 = vld [vmem:[%s1 + $0x14] sm:$0xf]
      %v275 = vld [vmem:[%s1 + $0x18] sm:$0xf]
      %v276 = vld [vmem:[%s1 + $0x1c] sm:$0xf]
      %v277 = vld [vmem:[%s1 + $0x20] sm:$0xf]
      %v278 = vld [vmem:[%s1 + $0x24] sm:$0xf]
      %v279 = vld [vmem:[%s1 + $0x28] sm:$0xf]
      %v280 = vld [vmem:[%s1 + $0x2c] sm:$0xf]
      %v281 = vld [vmem:[%s1 + $0x30] sm:$0xf]
      %v282 = vld [vmem:[%s1 + $0x34] sm:$0xf]
      %v283 = vld [vmem:[%s1 + $0x38] sm:$0xf]
      %v284 = vld [vmem:[%s1 + $0x3c] sm:$0xf]
      %v406 = vunpack.c.l.b16 %v148
      %v407 = vunpack.c.l.b16 %v149
      %v408 = vunpack.c.l.b16 %v150
      %v409 = vunpack.c.l.b16 %v151
      %v410 = vunpack.c.l.b16 %v152
      %v411 = vunpack.c.l.b16 %v153
      %v412 = vunpack.c.l.b16 %v154
      %v413 = vunpack.c.l.b16 %v155
      %v414 = vunpack.c.l.b16 %v156
      %v415 = vunpack.c.l.b16 %v157
      %v416 = vunpack.c.l.b16 %v158
      %v417 = vunpack.c.l.b16 %v159
      %v418 = vunpack.c.l.b16 %v160
      %v419 = vunpack.c.l.b16 %v161
      %v420 = vunpack.c.l.b16 %v162
      %v421 = vunpack.c.l.b16 %v163
      %v422 = vunpack.c.l.b16 %v164
      %v423 = vunpack.c.l.b16 %v165
      %v424 = vunpack.c.l.b16 %v166
      %v425 = vunpack.c.l.b16 %v167
      %v426 = vunpack.c.l.b16 %v168
      %v427 = vunpack.c.l.b16 %v169
      %v428 = vunpack.c.l.b16 %v170
      %v429 = vunpack.c.l.b16 %v171
      %v430 = vunpack.c.l.b16 %v172
      %v431 = vunpack.c.l.b16 %v173
      %v432 = vunpack.c.l.b16 %v174
      %v433 = vunpack.c.l.b16 %v175
      %v434 = vunpack.c.l.b16 %v176
      %v435 = vunpack.c.l.b16 %v177
      %v436 = vunpack.c.l.b16 %v178
      %v437 = vunpack.c.l.b16 %v179
      %v438 = vunpack.c.l.b16 %v180
      %v439 = vunpack.c.l.b16 %v181
      %v440 = vunpack.c.l.b16 %v182
      %v441 = vunpack.c.l.b16 %v183
      %v442 = vunpack.c.l.b16 %v184
      %v443 = vunpack.c.l.b16 %v185
      %v444 = vunpack.c.l.b16 %v186
      %v445 = vunpack.c.l.b16 %v187
      %v446 = vunpack.c.l.b16 %v188
      %v447 = vunpack.c.l.b16 %v189
      %v448 = vunpack.c.l.b16 %v190
      %v449 = vunpack.c.l.b16 %v191
      %v450 = vunpack.c.l.b16 %v192
      %v451 = vunpack.c.l.b16 %v193
      %v452 = vunpack.c.l.b16 %v194
      %v453 = vunpack.c.l.b16 %v195
      %v454 = vunpack.c.l.b16 %v196
      %v455 = vunpack.c.l.b16 %v197
      %v456 = vunpack.c.l.b16 %v198
      %v457 = vunpack.c.l.b16 %v199
      %v458 = vunpack.c.l.b16 %v200
      %v459 = vunpack.c.l.b16 %v201
      %v460 = vunpack.c.l.b16 %v202
      %v461 = vunpack.c.l.b16 %v203
      %v462 = vunpack.c.l.b16 %v204
      %v463 = vunpack.c.l.b16 %v205
      %v464 = vunpack.c.l.b16 %v206
      %v465 = vunpack.c.l.b16 %v207
      %v466 = vunpack.c.l.b16 %v208
      %v467 = vunpack.c.l.b16 %v209
      %v468 = vunpack.c.l.b16 %v210
      %v469 = vunpack.c.l.b16 %v211
      %v470 = vunpack.c.l.b16 %v212
      %v471 = vunpack.c.l.b16 %v213
      %v472 = vunpack.c.l.b16 %v214
      %v473 = vunpack.c.l.b16 %v215
      %v474 = vunpack.c.l.b16 %v216
      %v475 = vunpack.c.l.b16 %v217
      %v476 = vunpack.c.l.b16 %v218
      %v477 = vunpack.c.l.b16 %v219
      %v478 = vunpack.c.l.b16 %v220
      %v479 = vunpack.c.l.b16 %v221
      %v480 = vunpack.c.l.b16 %v222
      %v481 = vunpack.c.l.b16 %v223
      %v482 = vunpack.c.l.b16 %v224
      %v483 = vunpack.c.l.b16 %v225
      %v484 = vunpack.c.l.b16 %v226
      %v485 = vunpack.c.l.b16 %v227
      %v486 = vunpack.c.l.b16 %v228
      %v487 = vunpack.c.l.b16 %v229
      %v488 = vunpack.c.l.b16 %v230
      %v489 = vunpack.c.l.b16 %v231
      %v490 = vunpack.c.l.b16 %v232
      %v491 = vunpack.c.l.b16 %v233
      %v492 = vunpack.c.l.b16 %v234
      %v493 = vunpack.c.l.b16 %v235
      %v494 = vunpack.c.l.b16 %v236
      %v495 = vunpack.c.l.b16 %v237
      %v496 = vunpack.c.l.b16 %v238
      %v497 = vunpack.c.l.b16 %v239
      %v498 = vunpack.c.l.b16 %v240
      %v499 = vunpack.c.l.b16 %v241
      %v500 = vunpack.c.l.b16 %v242
      %v501 = vunpack.c.l.b16 %v243
      %v502 = vunpack.c.l.b16 %v244
      %v503 = vunpack.c.l.b16 %v245
      %v504 = vunpack.c.l.b16 %v246
      %v505 = vunpack.c.l.b16 %v247
      %v506 = vunpack.c.l.b16 %v248
      %v507 = vunpack.c.l.b16 %v249
      %v508 = vunpack.c.l.b16 %v250
      %v509 = vunpack.c.l.b16 %v251
      %v510 = vunpack.c.l.b16 %v252
      %v511 = vunpack.c.l.b16 %v253
      %v512 = vunpack.c.l.b16 %v254
      %v513 = vunpack.c.l.b16 %v255
      %v514 = vunpack.c.l.b16 %v256
      %v515 = vunpack.c.l.b16 %v257
      %v516 = vunpack.c.l.b16 %v258
      %v517 = vunpack.c.l.b16 %v259
      %v518 = vunpack.c.l.b16 %v260
      %v519 = vunpack.c.l.b16 %v261
      %v520 = vunpack.c.l.b16 %v262
      %v521 = vunpack.c.l.b16 %v263
      %v522 = vunpack.c.l.b16 %v264
      %v523 = vunpack.c.l.b16 %v265
      %v524 = vunpack.c.l.b16 %v266
      %v525 = vunpack.c.l.b16 %v267
      %v526 = vunpack.c.l.b16 %v268
      %v527 = vpack.c.b16 %v407, %v406
      %v528 = vpack.c.b16 %v409, %v408
      %v529 = vpack.c.b16 %v411, %v410
      %v530 = vpack.c.b16 %v413, %v412
      %v531 = vpack.c.b16 %v415, %v414
      %v532 = vpack.c.b16 %v417, %v416
      %v533 = vpack.c.b16 %v419, %v418
      %v534 = vpack.c.b16 %v421, %v420
      %v535 = vpack.c.b16 %v423, %v422
      %v536 = vpack.c.b16 %v425, %v424
      %v537 = vpack.c.b16 %v427, %v426
      %v538 = vpack.c.b16 %v429, %v428
      %v539 = vpack.c.b16 %v431, %v430
      %v540 = vpack.c.b16 %v433, %v432
      %v541 = vpack.c.b16 %v435, %v434
      %v542 = vpack.c.b16 %v437, %v436
      %v543 = vpack.c.b16 %v439, %v438
      %v544 = vpack.c.b16 %v441, %v440
      %v545 = vpack.c.b16 %v443, %v442
      %v546 = vpack.c.b16 %v445, %v444
      %v547 = vpack.c.b16 %v447, %v446
      %v548 = vpack.c.b16 %v449, %v448
      %v549 = vpack.c.b16 %v451, %v450
      %v550 = vpack.c.b16 %v453, %v452
      %v551 = vpack.c.b16 %v455, %v454
      %v552 = vpack.c.b16 %v457, %v456
      %v553 = vpack.c.b16 %v459, %v458
      %v554 = vpack.c.b16 %v461, %v460
      %v555 = vpack.c.b16 %v463, %v462
      %v556 = vpack.c.b16 %v465, %v464
      %v557 = vpack.c.b16 %v467, %v466
      %v558 = vpack.c.b16 %v469, %v468
      %v559 = vpack.c.b16 %v471, %v470
      %v560 = vpack.c.b16 %v473, %v472
      %v561 = vpack.c.b16 %v475, %v474
      %v562 = vpack.c.b16 %v477, %v476
      %v563 = vpack.c.b16 %v479, %v478
      %v564 = vpack.c.b16 %v481, %v480
      %v565 = vpack.c.b16 %v483, %v482
      %v566 = vpack.c.b16 %v485, %v484
      %v567 = vpack.c.b16 %v487, %v486
      %v568 = vpack.c.b16 %v489, %v488
      %v569 = vpack.c.b16 %v491, %v490
      %v570 = vpack.c.b16 %v493, %v492
      %v571 = vpack.c.b16 %v495, %v494
      %v572 = vpack.c.b16 %v497, %v496
      %v573 = vpack.c.b16 %v499, %v498
      %v574 = vpack.c.b16 %v501, %v500
      %v575 = vpack.c.b16 %v503, %v502
      %v576 = vpack.c.b16 %v505, %v504
      %v577 = vpack.c.b16 %v507, %v506
      %v578 = vpack.c.b16 %v509, %v508
      %v579 = vpack.c.b16 %v511, %v510
      %v580 = vpack.c.b16 %v513, %v512
      %v581 = vpack.c.b16 %v515, %v514
      %v582 = vpack.c.b16 %v517, %v516
      %v583 = vpack.c.b16 %v519, %v518
      %v584 = vpack.c.b16 %v521, %v520
      %v585 = vpack.c.b16 %v523, %v522
      %v586 = vpack.c.b16 %v525, %v524
      %v587 = vpack.c.b16 %v526, %v526
      %v665 = vunpack.c.l.b16 %v269
      %v666 = vunpack.c.l.b16 %v270
      %v667 = vunpack.c.l.b16 %v271
      %v668 = vunpack.c.l.b16 %v272
      %v669 = vunpack.c.l.b16 %v273
      %v670 = vunpack.c.l.b16 %v274
      %v671 = vunpack.c.l.b16 %v275
      %v672 = vunpack.c.l.b16 %v276
      %v673 = vunpack.c.l.b16 %v277
      %v674 = vunpack.c.l.b16 %v278
      %v675 = vunpack.c.l.b16 %v279
      %v676 = vunpack.c.l.b16 %v280
      %v677 = vunpack.c.l.b16 %v281
      %v678 = vunpack.c.l.b16 %v282
      %v679 = vunpack.c.l.b16 %v283
      %v680 = vunpack.c.l.b16 %v284
      %v681 = vpack.c.b16 %v666, %v665
      %v682 = vpack.c.b16 %v668, %v667
      %v683 = vpack.c.b16 %v670, %v669
      %v684 = vpack.c.b16 %v672, %v671
      %v685 = vpack.c.b16 %v674, %v673
      %v686 = vpack.c.b16 %v676, %v675
      %v687 = vpack.c.b16 %v678, %v677
      %v688 = vpack.c.b16 %v680, %v679
      %697 = vmatprep.subr.bf16.mxu0 0
      %698 = vmatpush1.bf16.msra.mxu0 %v681
      %699 = vmatprep.subr.bf16.mxu0 0
      %700 = vmatpush1.bf16.msra.mxu0 %v682
      %701 = vmatprep.subr.bf16.mxu0 0
      %702 = vmatpush1.bf16.msra.mxu0 %v683
      %703 = vmatprep.subr.bf16.mxu0 0
      %704 = vmatpush1.bf16.msra.mxu0 %v684
      %705 = vmatprep.subr.bf16.mxu0 0
      %706 = vmatpush1.bf16.msra.mxu0 %v685
      %707 = vmatprep.subr.bf16.mxu0 0
      %708 = vmatpush1.bf16.msra.mxu0 %v686
      %709 = vmatprep.subr.bf16.mxu0 0
      %710 = vmatpush1.bf16.msra.mxu0 %v687
      %711 = vmatprep.subr.bf16.mxu0 0
      %712 = vmatpush1.bf16.msra.mxu0 %v688
      %713 = vmatprep.subr.bf16.mxu0 0
      %714 = vmatpush1.bf16.msra.mxu0 0
      %715 = vmatprep.subr.bf16.mxu0 0
      %716 = vmatpush1.bf16.msra.mxu0 0
      %717 = vmatprep.subr.bf16.mxu0 0
      %718 = vmatpush1.bf16.msra.mxu0 0
      %719 = vmatprep.subr.bf16.mxu0 0
      %720 = vmatpush1.bf16.msra.mxu0 0
      %721 = vmatprep.subr.bf16.mxu0 0
      %722 = vmatpush1.bf16.msra.mxu0 0
      %723 = vmatprep.subr.bf16.mxu0 0
      %724 = vmatpush1.bf16.msra.mxu0 0
      %725 = vmatprep.subr.bf16.mxu0 0
      %726 = vmatpush1.bf16.msra.mxu0 0
      %727 = vmatprep.subr.bf16.mxu0 0
      %728 = vmatpush1.bf16.msra.mxu0 0
      %729 = vmatprep.mubr.bf16.mxu0 0
      %730 = vmatmul.mubr.bf16.gmra.mrb[0].mxu0 %v527
      %v731 = vpop.f32.mrb[0].mxu0
      %v732 = vadd.f32 0.0, %v731
      %v733 = vpop.f32.mrb[0].mxu0
      %v734 = vpop.f32.mrb[0].mxu0
      %v735 = vadd.f32 0.0, %v734
      %v736 = vpop.f32.mrb[0].mxu0
      %737 = vmatprep.mubr.bf16.mxu0 0
      %738 = vmatmul.mubr.bf16.gmra.mrb[0].mxu0 %v528
      %v739 = vpop.f32.mrb[0].mxu0
      %v740 = vadd.f32 0.0, %v739
      %v741 = vpop.f32.mrb[0].mxu0
      %v742 = vpop.f32.mrb[0].mxu0
      %v743 = vadd.f32 0.0, %v742
      %v744 = vpop.f32.mrb[0].mxu0
      %745 = vmatprep.mubr.bf16.mxu0 0
      %746 = vmatmul.mubr.bf16.gmra.mrb[0].mxu0 %v529
      %v747 = vpop.f32.mrb[0].mxu0
      %v748 = vadd.f32 0.0, %v747
      %v749 = vpop.f32.mrb[0].mxu0
      %v750 = vpop.f32.mrb[0].mxu0
      %v751 = vadd.f32 0.0, %v750
      %v752 = vpop.f32.mrb[0].mxu0
      %753 = vmatprep.mubr.bf16.mxu0 0
      %754 = vmatmul.mubr.bf16.gmra.mrb[0].mxu0 %v530
      %v755 = vpop.f32.mrb[0].mxu0
      %v756 = vadd.f32 0.0, %v755
      %v757 = vpop.f32.mrb[0].mxu0
      %v758 = vpop.f32.mrb[0].mxu0
      %v759 = vadd.f32 0.0, %v758
      %v760 = vpop.f32.mrb[0].mxu0
      %761 = vmatprep.mubr.bf16.mxu0 0
      %762 = vmatmul.mubr.bf16.gmra.mrb[0].mxu0 %v531
      %v763 = vpop.f32.mrb[0].mxu0
      %v764 = vadd.f32 0.0, %v763
      %v765 = vpop.f32.mrb[0].mxu0
      %v766 = vpop.f32.mrb[0].mxu0
      %v767 = vadd.f32 0.0, %v766
      %v768 = vpop.f32.mrb[0].mxu0
      %769 = vmatprep.mubr.bf16.mxu0 0
      %770 = vmatmul.mubr.bf16.gmra.mrb[0].mxu0 %v532
      %v771 = vpop.f32.mrb[0].mxu0
      %v772 = vadd.f32 0.0, %v771
      %v773 = vpop.f32.mrb[0].mxu0
      %v774 = vpop.f32.mrb[0].mxu0
      %v775 = vadd.f32 0.0, %v774
      %v776 = vpop.f32.mrb[0].mxu0
      %777 = vmatprep.mubr.bf16.mxu0 0
      %778 = vmatmul.mubr.bf16.gmra.mrb[0].mxu0 %v533
      %v779 = vpop.f32.mrb[0].mxu0
      %v780 = vadd.f32 0.0, %v779
      %v781 = vpop.f32.mrb[0].mxu0
      %v782 = vpop.f32.mrb[0].mxu0
      %v783 = vadd.f32 0.0, %v782
      %v784 = vpop.f32.mrb[0].mxu0
      %785 = vmatprep.mubr.bf16.mxu0 0
      %786 = vmatmul.mubr.bf16.gmra.mrb[0].mxu0 %v534
      %v787 = vpop.f32.mrb[0].mxu0
      %v788 = vadd.f32 0.0, %v787
      %v789 = vpop.f32.mrb[0].mxu0
      %v790 = vpop.f32.mrb[0].mxu0
      %v791 = vadd.f32 0.0, %v790
      %v792 = vpop.f32.mrb[0].mxu0
      %793 = vmatprep.mubr.bf16.mxu0 0
      %794 = vmatmul.mubr.bf16.gmra.mrb[0].mxu0 %v535
      %v795 = vpop.f32.mrb[0].mxu0
      %v796 = vadd.f32 0.0, %v795
      %v797 = vpop.f32.mrb[0].mxu0
      %v798 = vpop.f32.mrb[0].mxu0
      %v799 = vadd.f32 0.0, %v798
      %v800 = vpop.f32.mrb[0].mxu0
      %801 = vmatprep.mubr.bf16.mxu0 0
      %802 = vmatmul.mubr.bf16.gmra.mrb[0].mxu0 %v536
      %v803 = vpop.f32.mrb[0].mxu0
      %v804 = vadd.f32 0.0, %v803
      %v805 = vpop.f32.mrb[0].mxu0
      %v806 = vpop.f32.mrb[0].mxu0
      %v807 = vadd.f32 0.0, %v806
      %v808 = vpop.f32.mrb[0].mxu0
      %809 = vmatprep.mubr.bf16.mxu0 0
      %810 = vmatmul.mubr.bf16.gmra.mrb[0].mxu0 %v537
      %v811 = vpop.f32.mrb[0].mxu0
      %v812 = vadd.f32 0.0, %v811
      %v813 = vpop.f32.mrb[0].mxu0
      %v814 = vpop.f32.mrb[0].mxu0
      %v815 = vadd.f32 0.0, %v814
      %v816 = vpop.f32.mrb[0].mxu0
      %817 = vmatprep.mubr.bf16.mxu0 0
      %818 = vmatmul.mubr.bf16.gmra.mrb[0].mxu0 %v538
      %v819 = vpop.f32.mrb[0].mxu0
      %v820 = vadd.f32 0.0, %v819
      %v821 = vpop.f32.mrb[0].mxu0
      %v822 = vpop.f32.mrb[0].mxu0
      %v823 = vadd.f32 0.0, %v822
      %v824 = vpop.f32.mrb[0].mxu0
      %825 = vmatprep.mubr.bf16.mxu0 0
      %826 = vmatmul.mubr.bf16.gmra.mrb[0].mxu0 %v539
      %v827 = vpop.f32.mrb[0].mxu0
      %v828 = vadd.f32 0.0, %v827
      %v829 = vpop.f32.mrb[0].mxu0
      %v830 = vpop.f32.mrb[0].mxu0
      %v831 = vadd.f32 0.0, %v830
      %v832 = vpop.f32.mrb[0].mxu0
      %833 = vmatprep.mubr.bf16.mxu0 0
      %834 = vmatmul.mubr.bf16.gmra.mrb[0].mxu0 %v540
      %v835 = vpop.f32.mrb[0].mxu0
      %v836 = vadd.f32 0.0, %v835
      %v837 = vpop.f32.mrb[0].mxu0
      %v838 = vpop.f32.mrb[0].mxu0
      %v839 = vadd.f32 0.0, %v838
      %v840 = vpop.f32.mrb[0].mxu0
      %841 = vmatprep.mubr.bf16.mxu0 0
      %842 = vmatmul.mubr.bf16.gmra.mrb[0].mxu0 %v541
      %v843 = vpop.f32.mrb[0].mxu0
      %v844 = vadd.f32 0.0, %v843
      %v845 = vpop.f32.mrb[0].mxu0
      %v846 = vpop.f32.mrb[0].mxu0
      %v847 = vadd.f32 0.0, %v846
      %v848 = vpop.f32.mrb[0].mxu0
      %849 = vmatprep.mubr.bf16.mxu0 0
      %850 = vmatmul.mubr.bf16.gmra.mrb[0].mxu0 %v542
      %v851 = vpop.f32.mrb[0].mxu0
      %v852 = vadd.f32 0.0, %v851
      %v853 = vpop.f32.mrb[0].mxu0
      %v854 = vpop.f32.mrb[0].mxu0
      %v855 = vadd.f32 0.0, %v854
      %v856 = vpop.f32.mrb[0].mxu0
      %857 = vmatprep.mubr.bf16.mxu0 0
      %858 = vmatmul.mubr.bf16.gmra.mrb[0].mxu0 %v543
      %v859 = vpop.f32.mrb[0].mxu0
      %v860 = vadd.f32 0.0, %v859
      %v861 = vpop.f32.mrb[0].mxu0
      %v862 = vpop.f32.mrb[0].mxu0
      %v863 = vadd.f32 0.0, %v862
      %v864 = vpop.f32.mrb[0].mxu0
      %865 = vmatprep.mubr.bf16.mxu0 0
      %866 = vmatmul.mubr.bf16.gmra.mrb[0].mxu0 %v544
      %v867 = vpop.f32.mrb[0].mxu0
      %v868 = vadd.f32 0.0, %v867
      %v869 = vpop.f32.mrb[0].mxu0
      %v870 = vpop.f32.mrb[0].mxu0
      %v871 = vadd.f32 0.0, %v870
      %v872 = vpop.f32.mrb[0].mxu0
      %873 = vmatprep.mubr.bf16.mxu0 0
      %874 = vmatmul.mubr.bf16.gmra.mrb[0].mxu0 %v545
      %v875 = vpop.f32.mrb[0].mxu0
      %v876 = vadd.f32 0.0, %v875
      %v877 = vpop.f32.mrb[0].mxu0
      %v878 = vpop.f32.mrb[0].mxu0
      %v879 = vadd.f32 0.0, %v878
      %v880 = vpop.f32.mrb[0].mxu0
      %881 = vmatprep.mubr.bf16.mxu0 0
      %882 = vmatmul.mubr.bf16.gmra.mrb[0].mxu0 %v546
      %v883 = vpop.f32.mrb[0].mxu0
      %v884 = vadd.f32 0.0, %v883
      %v885 = vpop.f32.mrb[0].mxu0
      %v886 = vpop.f32.mrb[0].mxu0
      %v887 = vadd.f32 0.0, %v886
      %v888 = vpop.f32.mrb[0].mxu0
      %889 = vmatprep.mubr.bf16.mxu0 0
      %890 = vmatmul.mubr.bf16.gmra.mrb[0].mxu0 %v547
      %v891 = vpop.f32.mrb[0].mxu0
      %v892 = vadd.f32 0.0, %v891
      %v893 = vpop.f32.mrb[0].mxu0
      %v894 = vpop.f32.mrb[0].mxu0
      %v895 = vadd.f32 0.0, %v894
      %v896 = vpop.f32.mrb[0].mxu0
      %897 = vmatprep.mubr.bf16.mxu0 0
      %898 = vmatmul.mubr.bf16.gmra.mrb[0].mxu0 %v548
      %v899 = vpop.f32.mrb[0].mxu0
      %v900 = vadd.f32 0.0, %v899
      %v901 = vpop.f32.mrb[0].mxu0
      %v902 = vpop.f32.mrb[0].mxu0
      %v903 = vadd.f32 0.0, %v902
      %v904 = vpop.f32.mrb[0].mxu0
      %905 = vmatprep.mubr.bf16.mxu0 0
      %906 = vmatmul.mubr.bf16.gmra.mrb[0].mxu0 %v549
      %v907 = vpop.f32.mrb[0].mxu0
      %v908 = vadd.f32 0.0, %v907
      %v909 = vpop.f32.mrb[0].mxu0
      %v910 = vpop.f32.mrb[0].mxu0
      %v911 = vadd.f32 0.0, %v910
      %v912 = vpop.f32.mrb[0].mxu0
      %913 = vmatprep.mubr.bf16.mxu0 0
      %914 = vmatmul.mubr.bf16.gmra.mrb[0].mxu0 %v550
      %v915 = vpop.f32.mrb[0].mxu0
      %v916 = vadd.f32 0.0, %v915
      %v917 = vpop.f32.mrb[0].mxu0
      %v918 = vpop.f32.mrb[0].mxu0
      %v919 = vadd.f32 0.0, %v918
      %v920 = vpop.f32.mrb[0].mxu0
      %921 = vmatprep.mubr.bf16.mxu0 0
      %922 = vmatmul.mubr.bf16.gmra.mrb[0].mxu0 %v551
      %v923 = vpop.f32.mrb[0].mxu0
      %v924 = vadd.f32 0.0, %v923
      %v925 = vpop.f32.mrb[0].mxu0
      %v926 = vpop.f32.mrb[0].mxu0
      %v927 = vadd.f32 0.0, %v926
      %v928 = vpop.f32.mrb[0].mxu0
      %929 = vmatprep.mubr.bf16.mxu0 0
      %930 = vmatmul.mubr.bf16.gmra.mrb[0].mxu0 %v552
      %v931 = vpop.f32.mrb[0].mxu0
      %v932 = vadd.f32 0.0, %v931
      %v933 = vpop.f32.mrb[0].mxu0
      %v934 = vpop.f32.mrb[0].mxu0
      %v935 = vadd.f32 0.0, %v934
      %v936 = vpop.f32.mrb[0].mxu0
      %937 = vmatprep.mubr.bf16.mxu0 0
      %938 = vmatmul.mubr.bf16.gmra.mrb[0].mxu0 %v553
      %v939 = vpop.f32.mrb[0].mxu0
      %v940 = vadd.f32 0.0, %v939
      %v941 = vpop.f32.mrb[0].mxu0
      %v942 = vpop.f32.mrb[0].mxu0
      %v943 = vadd.f32 0.0, %v942
      %v944 = vpop.f32.mrb[0].mxu0
      %945 = vmatprep.mubr.bf16.mxu0 0
      %946 = vmatmul.mubr.bf16.gmra.mrb[0].mxu0 %v554
      %v947 = vpop.f32.mrb[0].mxu0
      %v948 = vadd.f32 0.0, %v947
      %v949 = vpop.f32.mrb[0].mxu0
      %v950 = vpop.f32.mrb[0].mxu0
      %v951 = vadd.f32 0.0, %v950
      %v952 = vpop.f32.mrb[0].mxu0
      %953 = vmatprep.mubr.bf16.mxu0 0
      %954 = vmatmul.mubr.bf16.gmra.mrb[0].mxu0 %v555
      %v955 = vpop.f32.mrb[0].mxu0
      %v956 = vadd.f32 0.0, %v955
      %v957 = vpop.f32.mrb[0].mxu0
      %v958 = vpop.f32.mrb[0].mxu0
      %v959 = vadd.f32 0.0, %v958
      %v960 = vpop.f32.mrb[0].mxu0
      %961 = vmatprep.mubr.bf16.mxu0 0
      %962 = vmatmul.mubr.bf16.gmra.mrb[0].mxu0 %v556
      %v963 = vpop.f32.mrb[0].mxu0
      %v964 = vadd.f32 0.0, %v963
      %v965 = vpop.f32.mrb[0].mxu0
      %v966 = vpop.f32.mrb[0].mxu0
      %v967 = vadd.f32 0.0, %v966
      %v968 = vpop.f32.mrb[0].mxu0
      %969 = vmatprep.mubr.bf16.mxu0 0
      %970 = vmatmul.mubr.bf16.gmra.mrb[0].mxu0 %v557
      %v971 = vpop.f32.mrb[0].mxu0
      %v972 = vadd.f32 0.0, %v971
      %v973 = vpop.f32.mrb[0].mxu0
      %v974 = vpop.f32.mrb[0].mxu0
      %v975 = vadd.f32 0.0, %v974
      %v976 = vpop.f32.mrb[0].mxu0
      %977 = vmatprep.mubr.bf16.mxu0 0
      %978 = vmatmul.mubr.bf16.gmra.mrb[0].mxu0 %v558
      %v979 = vpop.f32.mrb[0].mxu0
      %v980 = vadd.f32 0.0, %v979
      %v981 = vpop.f32.mrb[0].mxu0
      %v982 = vpop.f32.mrb[0].mxu0
      %v983 = vadd.f32 0.0, %v982
      %v984 = vpop.f32.mrb[0].mxu0
      %985 = vmatprep.mubr.bf16.mxu0 0
      %986 = vmatmul.mubr.bf16.gmra.mrb[0].mxu0 %v559
      %v987 = vpop.f32.mrb[0].mxu0
      %v988 = vadd.f32 0.0, %v987
      %v989 = vpop.f32.mrb[0].mxu0
      %v990 = vpop.f32.mrb[0].mxu0
      %v991 = vadd.f32 0.0, %v990
      %v992 = vpop.f32.mrb[0].mxu0
      %993 = vmatprep.mubr.bf16.mxu0 0
      %994 = vmatmul.mubr.bf16.gmra.mrb[0].mxu0 %v560
      %v995 = vpop.f32.mrb[0].mxu0
      %v996 = vadd.f32 0.0, %v995
      %v997 = vpop.f32.mrb[0].mxu0
      %v998 = vpop.f32.mrb[0].mxu0
      %v999 = vadd.f32 0.0, %v998
      %v1000 = vpop.f32.mrb[0].mxu0
      %1001 = vmatprep.mubr.bf16.mxu0 0
      %1002 = vmatmul.mubr.bf16.gmra.mrb[0].mxu0 %v561
      %v1003 = vpop.f32.mrb[0].mxu0
      %v1004 = vadd.f32 0.0, %v1003
      %v1005 = vpop.f32.mrb[0].mxu0
      %v1006 = vpop.f32.mrb[0].mxu0
      %v1007 = vadd.f32 0.0, %v1006
      %v1008 = vpop.f32.mrb[0].mxu0
      %1009 = vmatprep.mubr.bf16.mxu0 0
      %1010 = vmatmul.mubr.bf16.gmra.mrb[0].mxu0 %v562
      %v1011 = vpop.f32.mrb[0].mxu0
      %v1012 = vadd.f32 0.0, %v1011
      %v1013 = vpop.f32.mrb[0].mxu0
      %v1014 = vpop.f32.mrb[0].mxu0
      %v1015 = vadd.f32 0.0, %v1014
      %v1016 = vpop.f32.mrb[0].mxu0
      %1017 = vmatprep.mubr.bf16.mxu0 0
      %1018 = vmatmul.mubr.bf16.gmra.mrb[0].mxu0 %v563
      %v1019 = vpop.f32.mrb[0].mxu0
      %v1020 = vadd.f32 0.0, %v1019
      %v1021 = vpop.f32.mrb[0].mxu0
      %v1022 = vpop.f32.mrb[0].mxu0
      %v1023 = vadd.f32 0.0, %v1022
      %v1024 = vpop.f32.mrb[0].mxu0
      %1025 = vmatprep.mubr.bf16.mxu0 0
      %1026 = vmatmul.mubr.bf16.gmra.mrb[0].mxu0 %v564
      %v1027 = vpop.f32.mrb[0].mxu0
      %v1028 = vadd.f32 0.0, %v1027
      %v1029 = vpop.f32.mrb[0].mxu0
      %v1030 = vpop.f32.mrb[0].mxu0
      %v1031 = vadd.f32 0.0, %v1030
      %v1032 = vpop.f32.mrb[0].mxu0
      %1033 = vmatprep.mubr.bf16.mxu0 0
      %1034 = vmatmul.mubr.bf16.gmra.mrb[0].mxu0 %v565
      %v1035 = vpop.f32.mrb[0].mxu0
      %v1036 = vadd.f32 0.0, %v1035
      %v1037 = vpop.f32.mrb[0].mxu0
      %v1038 = vpop.f32.mrb[0].mxu0
      %v1039 = vadd.f32 0.0, %v1038
      %v1040 = vpop.f32.mrb[0].mxu0
      %1041 = vmatprep.mubr.bf16.mxu0 0
      %1042 = vmatmul.mubr.bf16.gmra.mrb[0].mxu0 %v566
      %v1043 = vpop.f32.mrb[0].mxu0
      %v1044 = vadd.f32 0.0, %v1043
      %v1045 = vpop.f32.mrb[0].mxu0
      %v1046 = vpop.f32.mrb[0].mxu0
      %v1047 = vadd.f32 0.0, %v1046
      %v1048 = vpop.f32.mrb[0].mxu0
      %1049 = vmatprep.mubr.bf16.mxu0 0
      %1050 = vmatmul.mubr.bf16.gmra.mrb[0].mxu0 %v567
      %v1051 = vpop.f32.mrb[0].mxu0
      %v1052 = vadd.f32 0.0, %v1051
      %v1053 = vpop.f32.mrb[0].mxu0
      %v1054 = vpop.f32.mrb[0].mxu0
      %v1055 = vadd.f32 0.0, %v1054
      %v1056 = vpop.f32.mrb[0].mxu0
      %1057 = vmatprep.mubr.bf16.mxu0 0
      %1058 = vmatmul.mubr.bf16.gmra.mrb[0].mxu0 %v568
      %v1059 = vpop.f32.mrb[0].mxu0
      %v1060 = vadd.f32 0.0, %v1059
      %v1061 = vpop.f32.mrb[0].mxu0
      %v1062 = vpop.f32.mrb[0].mxu0
      %v1063 = vadd.f32 0.0, %v1062
      %v1064 = vpop.f32.mrb[0].mxu0
      %1065 = vmatprep.mubr.bf16.mxu0 0
      %1066 = vmatmul.mubr.bf16.gmra.mrb[0].mxu0 %v569
      %v1067 = vpop.f32.mrb[0].mxu0
      %v1068 = vadd.f32 0.0, %v1067
      %v1069 = vpop.f32.mrb[0].mxu0
      %v1070 = vpop.f32.mrb[0].mxu0
      %v1071 = vadd.f32 0.0, %v1070
      %v1072 = vpop.f32.mrb[0].mxu0
      %1073 = vmatprep.mubr.bf16.mxu0 0
      %1074 = vmatmul.mubr.bf16.gmra.mrb[0].mxu0 %v570
      %v1075 = vpop.f32.mrb[0].mxu0
      %v1076 = vadd.f32 0.0, %v1075
      %v1077 = vpop.f32.mrb[0].mxu0
      %v1078 = vpop.f32.mrb[0].mxu0
      %v1079 = vadd.f32 0.0, %v1078
      %v1080 = vpop.f32.mrb[0].mxu0
      %1081 = vmatprep.mubr.bf16.mxu0 0
      %1082 = vmatmul.mubr.bf16.gmra.mrb[0].mxu0 %v571
      %v1083 = vpop.f32.mrb[0].mxu0
      %v1084 = vadd.f32 0.0, %v1083
      %v1085 = vpop.f32.mrb[0].mxu0
      %v1086 = vpop.f32.mrb[0].mxu0
      %v1087 = vadd.f32 0.0, %v1086
      %v1088 = vpop.f32.mrb[0].mxu0
      %1089 = vmatprep.mubr.bf16.mxu0 0
      %1090 = vmatmul.mubr.bf16.gmra.mrb[0].mxu0 %v572
      %v1091 = vpop.f32.mrb[0].mxu0
      %v1092 = vadd.f32 0.0, %v1091
      %v1093 = vpop.f32.mrb[0].mxu0
      %v1094 = vpop.f32.mrb[0].mxu0
      %v1095 = vadd.f32 0.0, %v1094
      %v1096 = vpop.f32.mrb[0].mxu0
      %1097 = vmatprep.mubr.bf16.mxu0 0
      %1098 = vmatmul.mubr.bf16.gmra.mrb[0].mxu0 %v573
      %v1099 = vpop.f32.mrb[0].mxu0
      %v1100 = vadd.f32 0.0, %v1099
      %v1101 = vpop.f32.mrb[0].mxu0
      %v1102 = vpop.f32.mrb[0].mxu0
      %v1103 = vadd.f32 0.0, %v1102
      %v1104 = vpop.f32.mrb[0].mxu0
      %1105 = vmatprep.mubr.bf16.mxu0 0
      %1106 = vmatmul.mubr.bf16.gmra.mrb[0].mxu0 %v574
      %v1107 = vpop.f32.mrb[0].mxu0
      %v1108 = vadd.f32 0.0, %v1107
      %v1109 = vpop.f32.mrb[0].mxu0
      %v1110 = vpop.f32.mrb[0].mxu0
      %v1111 = vadd.f32 0.0, %v1110
      %v1112 = vpop.f32.mrb[0].mxu0
      %1113 = vmatprep.mubr.bf16.mxu0 0
      %1114 = vmatmul.mubr.bf16.gmra.mrb[0].mxu0 %v575
      %v1115 = vpop.f32.mrb[0].mxu0
      %v1116 = vadd.f32 0.0, %v1115
      %v1117 = vpop.f32.mrb[0].mxu0
      %v1118 = vpop.f32.mrb[0].mxu0
      %v1119 = vadd.f32 0.0, %v1118
      %v1120 = vpop.f32.mrb[0].mxu0
      %1121 = vmatprep.mubr.bf16.mxu0 0
      %1122 = vmatmul.mubr.bf16.gmra.mrb[0].mxu0 %v576
      %v1123 = vpop.f32.mrb[0].mxu0
      %v1124 = vadd.f32 0.0, %v1123
      %v1125 = vpop.f32.mrb[0].mxu0
      %v1126 = vpop.f32.mrb[0].mxu0
      %v1127 = vadd.f32 0.0, %v1126
      %v1128 = vpop.f32.mrb[0].mxu0
      %1129 = vmatprep.mubr.bf16.mxu0 0
      %1130 = vmatmul.mubr.bf16.gmra.mrb[0].mxu0 %v577
      %v1131 = vpop.f32.mrb[0].mxu0
      %v1132 = vadd.f32 0.0, %v1131
      %v1133 = vpop.f32.mrb[0].mxu0
      %v1134 = vpop.f32.mrb[0].mxu0
      %v1135 = vadd.f32 0.0, %v1134
      %v1136 = vpop.f32.mrb[0].mxu0
      %1137 = vmatprep.mubr.bf16.mxu0 0
      %1138 = vmatmul.mubr.bf16.gmra.mrb[0].mxu0 %v578
      %v1139 = vpop.f32.mrb[0].mxu0
      %v1140 = vadd.f32 0.0, %v1139
      %v1141 = vpop.f32.mrb[0].mxu0
      %v1142 = vpop.f32.mrb[0].mxu0
      %v1143 = vadd.f32 0.0, %v1142
      %v1144 = vpop.f32.mrb[0].mxu0
      %1145 = vmatprep.mubr.bf16.mxu0 0
      %1146 = vmatmul.mubr.bf16.gmra.mrb[0].mxu0 %v579
      %v1147 = vpop.f32.mrb[0].mxu0
      %v1148 = vadd.f32 0.0, %v1147
      %v1149 = vpop.f32.mrb[0].mxu0
      %v1150 = vpop.f32.mrb[0].mxu0
      %v1151 = vadd.f32 0.0, %v1150
      %v1152 = vpop.f32.mrb[0].mxu0
      %1153 = vmatprep.mubr.bf16.mxu0 0
      %1154 = vmatmul.mubr.bf16.gmra.mrb[0].mxu0 %v580
      %v1155 = vpop.f32.mrb[0].mxu0
      %v1156 = vadd.f32 0.0, %v1155
      %v1157 = vpop.f32.mrb[0].mxu0
      %v1158 = vpop.f32.mrb[0].mxu0
      %v1159 = vadd.f32 0.0, %v1158
      %v1160 = vpop.f32.mrb[0].mxu0
      %1161 = vmatprep.mubr.bf16.mxu0 0
      %1162 = vmatmul.mubr.bf16.gmra.mrb[0].mxu0 %v581
      %v1163 = vpop.f32.mrb[0].mxu0
      %v1164 = vadd.f32 0.0, %v1163
      %v1165 = vpop.f32.mrb[0].mxu0
      %v1166 = vpop.f32.mrb[0].mxu0
      %v1167 = vadd.f32 0.0, %v1166
      %v1168 = vpop.f32.mrb[0].mxu0
      %1169 = vmatprep.mubr.bf16.mxu0 0
      %1170 = vmatmul.mubr.bf16.gmra.mrb[0].mxu0 %v582
      %v1171 = vpop.f32.mrb[0].mxu0
      %v1172 = vadd.f32 0.0, %v1171
      %v1173 = vpop.f32.mrb[0].mxu0
      %v1174 = vpop.f32.mrb[0].mxu0
      %v1175 = vadd.f32 0.0, %v1174
      %v1176 = vpop.f32.mrb[0].mxu0
      %1177 = vmatprep.mubr.bf16.mxu0 0
      %1178 = vmatmul.mubr.bf16.gmra.mrb[0].mxu0 %v583
      %v1179 = vpop.f32.mrb[0].mxu0
      %v1180 = vadd.f32 0.0, %v1179
      %v1181 = vpop.f32.mrb[0].mxu0
      %v1182 = vpop.f32.mrb[0].mxu0
      %v1183 = vadd.f32 0.0, %v1182
      %v1184 = vpop.f32.mrb[0].mxu0
      %1185 = vmatprep.mubr.bf16.mxu0 0
      %1186 = vmatmul.mubr.bf16.gmra.mrb[0].mxu0 %v584
      %v1187 = vpop.f32.mrb[0].mxu0
      %v1188 = vadd.f32 0.0, %v1187
      %v1189 = vpop.f32.mrb[0].mxu0
      %v1190 = vpop.f32.mrb[0].mxu0
      %v1191 = vadd.f32 0.0, %v1190
      %v1192 = vpop.f32.mrb[0].mxu0
      %1193 = vmatprep.mubr.bf16.mxu0 0
      %1194 = vmatmul.mubr.bf16.gmra.mrb[0].mxu0 %v585
      %v1195 = vpop.f32.mrb[0].mxu0
      %v1196 = vadd.f32 0.0, %v1195
      %v1197 = vpop.f32.mrb[0].mxu0
      %v1198 = vpop.f32.mrb[0].mxu0
      %v1199 = vadd.f32 0.0, %v1198
      %v1200 = vpop.f32.mrb[0].mxu0
      %1201 = vmatprep.mubr.bf16.mxu0 0
      %1202 = vmatmul.mubr.bf16.gmra.mrb[0].mxu0 %v586
      %v1203 = vpop.f32.mrb[0].mxu0
      %v1204 = vadd.f32 0.0, %v1203
      %v1205 = vpop.f32.mrb[0].mxu0
      %v1206 = vpop.f32.mrb[0].mxu0
      %v1207 = vadd.f32 0.0, %v1206
      %v1208 = vpop.f32.mrb[0].mxu0
      %1209 = vmatprep.mubr.bf16.mxu0 0
      %1210 = vmatmul.mubr.bf16.gmra.mrb[0].mxu0 %v587
      %v1211 = vpop.f32.mrb[0].mxu0
      %v1212 = vadd.f32 0.0, %v1211
      %v1213 = vpop.f32.mrb[0].mxu0
      %v1214 = vpop.f32.mrb[0].mxu0
      %v1215 = vpop.f32.mrb[0].mxu0
      %1216 = vdwg.mxu0
      %vm1217 = vcmp.ge.f32.partialorder %v732, 0.0
      %vm1218 = vcmp.ge.f32.partialorder %v735, 0.0
      %vm1219 = vcmp.ge.f32.partialorder %v740, 0.0
      %vm1220 = vcmp.ge.f32.partialorder %v743, 0.0
      %vm1221 = vcmp.ge.f32.partialorder %v748, 0.0
      %vm1222 = vcmp.ge.f32.partialorder %v751, 0.0
      %vm1223 = vcmp.ge.f32.partialorder %v756, 0.0
      %vm1224 = vcmp.ge.f32.partialorder %v759, 0.0
      %vm1225 = vcmp.ge.f32.partialorder %v764, 0.0
      %vm1226 = vcmp.ge.f32.partialorder %v767, 0.0
      %vm1227 = vcmp.ge.f32.partialorder %v772, 0.0
      %vm1228 = vcmp.ge.f32.partialorder %v775, 0.0
      %vm1229 = vcmp.ge.f32.partialorder %v780, 0.0
      %vm1230 = vcmp.ge.f32.partialorder %v783, 0.0
      %vm1231 = vcmp.ge.f32.partialorder %v788, 0.0
      %vm1232 = vcmp.ge.f32.partialorder %v791, 0.0
      %vm1233 = vcmp.ge.f32.partialorder %v796, 0.0
      %vm1234 = vcmp.ge.f32.partialorder %v799, 0.0
      %vm1235 = vcmp.ge.f32.partialorder %v804, 0.0
      %vm1236 = vcmp.ge.f32.partialorder %v807, 0.0
      %vm1237 = vcmp.ge.f32.partialorder %v812, 0.0
      %vm1238 = vcmp.ge.f32.partialorder %v815, 0.0
      %vm1239 = vcmp.ge.f32.partialorder %v820, 0.0
      %vm1240 = vcmp.ge.f32.partialorder %v823, 0.0
      %vm1241 = vcmp.ge.f32.partialorder %v828, 0.0
      %vm1242 = vcmp.ge.f32.partialorder %v831, 0.0
      %vm1243 = vcmp.ge.f32.partialorder %v836, 0.0
      %vm1244 = vcmp.ge.f32.partialorder %v839, 0.0
      %vm1245 = vcmp.ge.f32.partialorder %v844, 0.0
      %vm1246 = vcmp.ge.f32.partialorder %v847, 0.0
      %vm1247 = vcmp.ge.f32.partialorder %v852, 0.0
      %vm1248 = vcmp.ge.f32.partialorder %v855, 0.0
      %vm1249 = vcmp.ge.f32.partialorder %v860, 0.0
      %vm1250 = vcmp.ge.f32.partialorder %v863, 0.0
      %vm1251 = vcmp.ge.f32.partialorder %v868, 0.0
      %vm1252 = vcmp.ge.f32.partialorder %v871, 0.0
      %vm1253 = vcmp.ge.f32.partialorder %v876, 0.0
      %vm1254 = vcmp.ge.f32.partialorder %v879, 0.0
      %vm1255 = vcmp.ge.f32.partialorder %v884, 0.0
      %vm1256 = vcmp.ge.f32.partialorder %v887, 0.0
      %vm1257 = vcmp.ge.f32.partialorder %v892, 0.0
      %vm1258 = vcmp.ge.f32.partialorder %v895, 0.0
      %vm1259 = vcmp.ge.f32.partialorder %v900, 0.0
      %vm1260 = vcmp.ge.f32.partialorder %v903, 0.0
      %vm1261 = vcmp.ge.f32.partialorder %v908, 0.0
      %vm1262 = vcmp.ge.f32.partialorder %v911, 0.0
      %vm1263 = vcmp.ge.f32.partialorder %v916, 0.0
      %vm1264 = vcmp.ge.f32.partialorder %v919, 0.0
      %vm1265 = vcmp.ge.f32.partialorder %v924, 0.0
      %vm1266 = vcmp.ge.f32.partialorder %v927, 0.0
      %vm1267 = vcmp.ge.f32.partialorder %v932, 0.0
      %vm1268 = vcmp.ge.f32.partialorder %v935, 0.0
      %vm1269 = vcmp.ge.f32.partialorder %v940, 0.0
      %vm1270 = vcmp.ge.f32.partialorder %v943, 0.0
      %vm1271 = vcmp.ge.f32.partialorder %v948, 0.0
      %vm1272 = vcmp.ge.f32.partialorder %v951, 0.0
      %vm1273 = vcmp.ge.f32.partialorder %v956, 0.0
      %vm1274 = vcmp.ge.f32.partialorder %v959, 0.0
      %vm1275 = vcmp.ge.f32.partialorder %v964, 0.0
      %vm1276 = vcmp.ge.f32.partialorder %v967, 0.0
      %vm1277 = vcmp.ge.f32.partialorder %v972, 0.0
      %vm1278 = vcmp.ge.f32.partialorder %v975, 0.0
      %vm1279 = vcmp.ge.f32.partialorder %v980, 0.0
      %vm1280 = vcmp.ge.f32.partialorder %v983, 0.0
      %vm1281 = vcmp.ge.f32.partialorder %v988, 0.0
      %vm1282 = vcmp.ge.f32.partialorder %v991, 0.0
      %vm1283 = vcmp.ge.f32.partialorder %v996, 0.0
      %vm1284 = vcmp.ge.f32.partialorder %v999, 0.0
      %vm1285 = vcmp.ge.f32.partialorder %v1004, 0.0
      %vm1286 = vcmp.ge.f32.partialorder %v1007, 0.0
      %vm1287 = vcmp.ge.f32.partialorder %v1012, 0.0
      %vm1288 = vcmp.ge.f32.partialorder %v1015, 0.0
      %vm1289 = vcmp.ge.f32.partialorder %v1020, 0.0
      %vm1290 = vcmp.ge.f32.partialorder %v1023, 0.0
      %vm1291 = vcmp.ge.f32.partialorder %v1028, 0.0
      %vm1292 = vcmp.ge.f32.partialorder %v1031, 0.0
      %vm1293 = vcmp.ge.f32.partialorder %v1036, 0.0
      %vm1294 = vcmp.ge.f32.partialorder %v1039, 0.0
      %vm1295 = vcmp.ge.f32.partialorder %v1044, 0.0
      %vm1296 = vcmp.ge.f32.partialorder %v1047, 0.0
      %vm1297 = vcmp.ge.f32.partialorder %v1052, 0.0
      %vm1298 = vcmp.ge.f32.partialorder %v1055, 0.0
      %vm1299 = vcmp.ge.f32.partialorder %v1060, 0.0
      %vm1300 = vcmp.ge.f32.partialorder %v1063, 0.0
      %vm1301 = vcmp.ge.f32.partialorder %v1068, 0.0
      %vm1302 = vcmp.ge.f32.partialorder %v1071, 0.0
      %vm1303 = vcmp.ge.f32.partialorder %v1076, 0.0
      %vm1304 = vcmp.ge.f32.partialorder %v1079, 0.0
      %vm1305 = vcmp.ge.f32.partialorder %v1084, 0.0
      %vm1306 = vcmp.ge.f32.partialorder %v1087, 0.0
      %vm1307 = vcmp.ge.f32.partialorder %v1092, 0.0
      %vm1308 = vcmp.ge.f32.partialorder %v1095, 0.0
      %vm1309 = vcmp.ge.f32.partialorder %v1100, 0.0
      %vm1310 = vcmp.ge.f32.partialorder %v1103, 0.0
      %vm1311 = vcmp.ge.f32.partialorder %v1108, 0.0
      %vm1312 = vcmp.ge.f32.partialorder %v1111, 0.0
      %vm1313 = vcmp.ge.f32.partialorder %v1116, 0.0
      %vm1314 = vcmp.ge.f32.partialorder %v1119, 0.0
      %vm1315 = vcmp.ge.f32.partialorder %v1124, 0.0
      %vm1316 = vcmp.ge.f32.partialorder %v1127, 0.0
      %vm1317 = vcmp.ge.f32.partialorder %v1132, 0.0
      %vm1318 = vcmp.ge.f32.partialorder %v1135, 0.0
      %vm1319 = vcmp.ge.f32.partialorder %v1140, 0.0
      %vm1320 = vcmp.ge.f32.partialorder %v1143, 0.0
      %vm1321 = vcmp.ge.f32.partialorder %v1148, 0.0
      %vm1322 = vcmp.ge.f32.partialorder %v1151, 0.0
      %vm1323 = vcmp.ge.f32.partialorder %v1156, 0.0
      %vm1324 = vcmp.ge.f32.partialorder %v1159, 0.0
      %vm1325 = vcmp.ge.f32.partialorder %v1164, 0.0
      %vm1326 = vcmp.ge.f32.partialorder %v1167, 0.0
      %vm1327 = vcmp.ge.f32.partialorder %v1172, 0.0
      %vm1328 = vcmp.ge.f32.partialorder %v1175, 0.0
      %vm1329 = vcmp.ge.f32.partialorder %v1180, 0.0
      %vm1330 = vcmp.ge.f32.partialorder %v1183, 0.0
      %vm1331 = vcmp.ge.f32.partialorder %v1188, 0.0
      %vm1332 = vcmp.ge.f32.partialorder %v1191, 0.0
      %vm1333 = vcmp.ge.f32.partialorder %v1196, 0.0
      %vm1334 = vcmp.ge.f32.partialorder %v1199, 0.0
      %vm1335 = vcmp.ge.f32.partialorder %v1204, 0.0
      %vm1336 = vcmp.ge.f32.partialorder %v1207, 0.0
      %vm1337 = vcmp.ge.f32.partialorder %v1212, 0.0
      %v1338 = vmul.f32 %v732, 0.2
      %v1339 = vmul.f32 %v735, 0.2
      %v1340 = vmul.f32 %v740, 0.2
      %v1341 = vmul.f32 %v743, 0.2
      %v1342 = vmul.f32 %v748, 0.2
      %v1343 = vmul.f32 %v751, 0.2
      %v1344 = vmul.f32 %v756, 0.2
      %v1345 = vmul.f32 %v759, 0.2
      %v1346 = vmul.f32 %v764, 0.2
      %v1347 = vmul.f32 %v767, 0.2
      %v1348 = vmul.f32 %v772, 0.2
      %v1349 = vmul.f32 %v775, 0.2
      %v1350 = vmul.f32 %v780, 0.2
      %v1351 = vmul.f32 %v783, 0.2
      %v1352 = vmul.f32 %v788, 0.2
      %v1353 = vmul.f32 %v791, 0.2
      %v1354 = vmul.f32 %v796, 0.2
      %v1355 = vmul.f32 %v799, 0.2
      %v1356 = vmul.f32 %v804, 0.2
      %v1357 = vmul.f32 %v807, 0.2
      %v1358 = vmul.f32 %v812, 0.2
      %v1359 = vmul.f32 %v815, 0.2
      %v1360 = vmul.f32 %v820, 0.2
      %v1361 = vmul.f32 %v823, 0.2
      %v1362 = vmul.f32 %v828, 0.2
      %v1363 = vmul.f32 %v831, 0.2
      %v1364 = vmul.f32 %v836, 0.2
      %v1365 = vmul.f32 %v839, 0.2
      %v1366 = vmul.f32 %v844, 0.2
      %v1367 = vmul.f32 %v847, 0.2
      %v1368 = vmul.f32 %v852, 0.2
      %v1369 = vmul.f32 %v855, 0.2
      %v1370 = vmul.f32 %v860, 0.2
      %v1371 = vmul.f32 %v863, 0.2
      %v1372 = vmul.f32 %v868, 0.2
      %v1373 = vmul.f32 %v871, 0.2
      %v1374 = vmul.f32 %v876, 0.2
      %v1375 = vmul.f32 %v879, 0.2
      %v1376 = vmul.f32 %v884, 0.2
      %v1377 = vmul.f32 %v887, 0.2
      %v1378 = vmul.f32 %v892, 0.2
      %v1379 = vmul.f32 %v895, 0.2
      %v1380 = vmul.f32 %v900, 0.2
      %v1381 = vmul.f32 %v903, 0.2
      %v1382 = vmul.f32 %v908, 0.2
      %v1383 = vmul.f32 %v911, 0.2
      %v1384 = vmul.f32 %v916, 0.2
      %v1385 = vmul.f32 %v919, 0.2
      %v1386 = vmul.f32 %v924, 0.2
      %v1387 = vmul.f32 %v927, 0.2
      %v1388 = vmul.f32 %v932, 0.2
      %v1389 = vmul.f32 %v935, 0.2
      %v1390 = vmul.f32 %v940, 0.2
      %v1391 = vmul.f32 %v943, 0.2
      %v1392 = vmul.f32 %v948, 0.2
      %v1393 = vmul.f32 %v951, 0.2
      %v1394 = vmul.f32 %v956, 0.2
      %v1395 = vmul.f32 %v959, 0.2
      %v1396 = vmul.f32 %v964, 0.2
      %v1397 = vmul.f32 %v967, 0.2
      %v1398 = vmul.f32 %v972, 0.2
      %v1399 = vmul.f32 %v975, 0.2
      %v1400 = vmul.f32 %v980, 0.2
      %v1401 = vmul.f32 %v983, 0.2
      %v1402 = vmul.f32 %v988, 0.2
      %v1403 = vmul.f32 %v991, 0.2
      %v1404 = vmul.f32 %v996, 0.2
      %v1405 = vmul.f32 %v999, 0.2
      %v1406 = vmul.f32 %v1004, 0.2
      %v1407 = vmul.f32 %v1007, 0.2
      %v1408 = vmul.f32 %v1012, 0.2
      %v1409 = vmul.f32 %v1015, 0.2
      %v1410 = vmul.f32 %v1020, 0.2
      %v1411 = vmul.f32 %v1023, 0.2
      %v1412 = vmul.f32 %v1028, 0.2
      %v1413 = vmul.f32 %v1031, 0.2
      %v1414 = vmul.f32 %v1036, 0.2
      %v1415 = vmul.f32 %v1039, 0.2
      %v1416 = vmul.f32 %v1044, 0.2
      %v1417 = vmul.f32 %v1047, 0.2
      %v1418 = vmul.f32 %v1052, 0.2
      %v1419 = vmul.f32 %v1055, 0.2
      %v1420 = vmul.f32 %v1060, 0.2
      %v1421 = vmul.f32 %v1063, 0.2
      %v1422 = vmul.f32 %v1068, 0.2
      %v1423 = vmul.f32 %v1071, 0.2
      %v1424 = vmul.f32 %v1076, 0.2
      %v1425 = vmul.f32 %v1079, 0.2
      %v1426 = vmul.f32 %v1084, 0.2
      %v1427 = vmul.f32 %v1087, 0.2
      %v1428 = vmul.f32 %v1092, 0.2
      %v1429 = vmul.f32 %v1095, 0.2
      %v1430 = vmul.f32 %v1100, 0.2
      %v1431 = vmul.f32 %v1103, 0.2
      %v1432 = vmul.f32 %v1108, 0.2
      %v1433 = vmul.f32 %v1111, 0.2
      %v1434 = vmul.f32 %v1116, 0.2
      %v1435 = vmul.f32 %v1119, 0.2
      %v1436 = vmul.f32 %v1124, 0.2
      %v1437 = vmul.f32 %v1127, 0.2
      %v1438 = vmul.f32 %v1132, 0.2
      %v1439 = vmul.f32 %v1135, 0.2
      %v1440 = vmul.f32 %v1140, 0.2
      %v1441 = vmul.f32 %v1143, 0.2
      %v1442 = vmul.f32 %v1148, 0.2
      %v1443 = vmul.f32 %v1151, 0.2
      %v1444 = vmul.f32 %v1156, 0.2
      %v1445 = vmul.f32 %v1159, 0.2
      %v1446 = vmul.f32 %v1164, 0.2
      %v1447 = vmul.f32 %v1167, 0.2
      %v1448 = vmul.f32 %v1172, 0.2
      %v1449 = vmul.f32 %v1175, 0.2
      %v1450 = vmul.f32 %v1180, 0.2
      %v1451 = vmul.f32 %v1183, 0.2
      %v1452 = vmul.f32 %v1188, 0.2
      %v1453 = vmul.f32 %v1191, 0.2
      %v1454 = vmul.f32 %v1196, 0.2
      %v1455 = vmul.f32 %v1199, 0.2
      %v1456 = vmul.f32 %v1204, 0.2
      %v1457 = vmul.f32 %v1207, 0.2
      %v1458 = vmul.f32 %v1212, 0.2
      %v1459 = vsel %vm1217, %v732, %v1338
      %v1460 = vsel %vm1218, %v735, %v1339
      %v1461 = vsel %vm1219, %v740, %v1340
      %v1462 = vsel %vm1220, %v743, %v1341
      %v1463 = vsel %vm1221, %v748, %v1342
      %v1464 = vsel %vm1222, %v751, %v1343
      %v1465 = vsel %vm1223, %v756, %v1344
      %v1466 = vsel %vm1224, %v759, %v1345
      %v1467 = vsel %vm1225, %v764, %v1346
      %v1468 = vsel %vm1226, %v767, %v1347
      %v1469 = vsel %vm1227, %v772, %v1348
      %v1470 = vsel %vm1228, %v775, %v1349
      %v1471 = vsel %vm1229, %v780, %v1350
      %v1472 = vsel %vm1230, %v783, %v1351
      %v1473 = vsel %vm1231, %v788, %v1352
      %v1474 = vsel %vm1232, %v791, %v1353
      %v1475 = vsel %vm1233, %v796, %v1354
      %v1476 = vsel %vm1234, %v799, %v1355
      %v1477 = vsel %vm1235, %v804, %v1356
      %v1478 = vsel %vm1236, %v807, %v1357
      %v1479 = vsel %vm1237, %v812, %v1358
      %v1480 = vsel %vm1238, %v815, %v1359
      %v1481 = vsel %vm1239, %v820, %v1360
      %v1482 = vsel %vm1240, %v823, %v1361
      %v1483 = vsel %vm1241, %v828, %v1362
      %v1484 = vsel %vm1242, %v831, %v1363
      %v1485 = vsel %vm1243, %v836, %v1364
      %v1486 = vsel %vm1244, %v839, %v1365
      %v1487 = vsel %vm1245, %v844, %v1366
      %v1488 = vsel %vm1246, %v847, %v1367
      %v1489 = vsel %vm1247, %v852, %v1368
      %v1490 = vsel %vm1248, %v855, %v1369
      %v1491 = vsel %vm1249, %v860, %v1370
      %v1492 = vsel %vm1250, %v863, %v1371
      %v1493 = vsel %vm1251, %v868, %v1372
      %v1494 = vsel %vm1252, %v871, %v1373
      %v1495 = vsel %vm1253, %v876, %v1374
      %v1496 = vsel %vm1254, %v879, %v1375
      %v1497 = vsel %vm1255, %v884, %v1376
      %v1498 = vsel %vm1256, %v887, %v1377
      %v1499 = vsel %vm1257, %v892, %v1378
      %v1500 = vsel %vm1258, %v895, %v1379
      %v1501 = vsel %vm1259, %v900, %v1380
      %v1502 = vsel %vm1260, %v903, %v1381
      %v1503 = vsel %vm1261, %v908, %v1382
      %v1504 = vsel %vm1262, %v911, %v1383
      %v1505 = vsel %vm1263, %v916, %v1384
      %v1506 = vsel %vm1264, %v919, %v1385
      %v1507 = vsel %vm1265, %v924, %v1386
      %v1508 = vsel %vm1266, %v927, %v1387
      %v1509 = vsel %vm1267, %v932, %v1388
      %v1510 = vsel %vm1268, %v935, %v1389
      %v1511 = vsel %vm1269, %v940, %v1390
      %v1512 = vsel %vm1270, %v943, %v1391
      %v1513 = vsel %vm1271, %v948, %v1392
      %v1514 = vsel %vm1272, %v951, %v1393
      %v1515 = vsel %vm1273, %v956, %v1394
      %v1516 = vsel %vm1274, %v959, %v1395
      %v1517 = vsel %vm1275, %v964, %v1396
      %v1518 = vsel %vm1276, %v967, %v1397
      %v1519 = vsel %vm1277, %v972, %v1398
      %v1520 = vsel %vm1278, %v975, %v1399
      %v1521 = vsel %vm1279, %v980, %v1400
      %v1522 = vsel %vm1280, %v983, %v1401
      %v1523 = vsel %vm1281, %v988, %v1402
      %v1524 = vsel %vm1282, %v991, %v1403
      %v1525 = vsel %vm1283, %v996, %v1404
      %v1526 = vsel %vm1284, %v999, %v1405
      %v1527 = vsel %vm1285, %v1004, %v1406
      %v1528 = vsel %vm1286, %v1007, %v1407
      %v1529 = vsel %vm1287, %v1012, %v1408
      %v1530 = vsel %vm1288, %v1015, %v1409
      %v1531 = vsel %vm1289, %v1020, %v1410
      %v1532 = vsel %vm1290, %v1023, %v1411
      %v1533 = vsel %vm1291, %v1028, %v1412
      %v1534 = vsel %vm1292, %v1031, %v1413
      %v1535 = vsel %vm1293, %v1036, %v1414
      %v1536 = vsel %vm1294, %v1039, %v1415
      %v1537 = vsel %vm1295, %v1044, %v1416
      %v1538 = vsel %vm1296, %v1047, %v1417
      %v1539 = vsel %vm1297, %v1052, %v1418
      %v1540 = vsel %vm1298, %v1055, %v1419
      %v1541 = vsel %vm1299, %v1060, %v1420
      %v1542 = vsel %vm1300, %v1063, %v1421
      %v1543 = vsel %vm1301, %v1068, %v1422
      %v1544 = vsel %vm1302, %v1071, %v1423
      %v1545 = vsel %vm1303, %v1076, %v1424
      %v1546 = vsel %vm1304, %v1079, %v1425
      %v1547 = vsel %vm1305, %v1084, %v1426
      %v1548 = vsel %vm1306, %v1087, %v1427
      %v1549 = vsel %vm1307, %v1092, %v1428
      %v1550 = vsel %vm1308, %v1095, %v1429
      %v1551 = vsel %vm1309, %v1100, %v1430
      %v1552 = vsel %vm1310, %v1103, %v1431
      %v1553 = vsel %vm1311, %v1108, %v1432
      %v1554 = vsel %vm1312, %v1111, %v1433
      %v1555 = vsel %vm1313, %v1116, %v1434
      %v1556 = vsel %vm1314, %v1119, %v1435
      %v1557 = vsel %vm1315, %v1124, %v1436
      %v1558 = vsel %vm1316, %v1127, %v1437
      %v1559 = vsel %vm1317, %v1132, %v1438
      %v1560 = vsel %vm1318, %v1135, %v1439
      %v1561 = vsel %vm1319, %v1140, %v1440
      %v1562 = vsel %vm1320, %v1143, %v1441
      %v1563 = vsel %vm1321, %v1148, %v1442
      %v1564 = vsel %vm1322, %v1151, %v1443
      %v1565 = vsel %vm1323, %v1156, %v1444
      %v1566 = vsel %vm1324, %v1159, %v1445
      %v1567 = vsel %vm1325, %v1164, %v1446
      %v1568 = vsel %vm1326, %v1167, %v1447
      %v1569 = vsel %vm1327, %v1172, %v1448
      %v1570 = vsel %vm1328, %v1175, %v1449
      %v1571 = vsel %vm1329, %v1180, %v1450
      %v1572 = vsel %vm1330, %v1183, %v1451
      %v1573 = vsel %vm1331, %v1188, %v1452
      %v1574 = vsel %vm1332, %v1191, %v1453
      %v1575 = vsel %vm1333, %v1196, %v1454
      %v1576 = vsel %vm1334, %v1199, %v1455
      %v1577 = vsel %vm1335, %v1204, %v1456
      %v1578 = vsel %vm1336, %v1207, %v1457
      %v1579 = vsel %vm1337, %v1212, %v1458
      %1580 = vst [vmem:[%s145] sm:$0xff] %v1459
      %1581 = vst [vmem:[%s145 + $0x8] sm:$0xff] %v1460
      %1582 = vst [vmem:[%s145 + $0x10] sm:$0xff] %v1461
      %1583 = vst [vmem:[%s145 + $0x18] sm:$0xff] %v1462
      %1584 = vst [vmem:[%s145 + $0x20] sm:$0xff] %v1463
      %1585 = vst [vmem:[%s145 + $0x28] sm:$0xff] %v1464
      %1586 = vst [vmem:[%s145 + $0x30] sm:$0xff] %v1465
      %1587 = vst [vmem:[%s145 + $0x38] sm:$0xff] %v1466
      %1588 = vst [vmem:[%s145 + $0x40] sm:$0xff] %v1467
      %1589 = vst [vmem:[%s145 + $0x48] sm:$0xff] %v1468
      %1590 = vst [vmem:[%s145 + $0x50] sm:$0xff] %v1469
      %1591 = vst [vmem:[%s145 + $0x58] sm:$0xff] %v1470
      %1592 = vst [vmem:[%s145 + $0x60] sm:$0xff] %v1471
      %1593 = vst [vmem:[%s145 + $0x68] sm:$0xff] %v1472
      %1594 = vst [vmem:[%s145 + $0x70] sm:$0xff] %v1473
      %1595 = vst [vmem:[%s145 + $0x78] sm:$0xff] %v1474
      %1596 = vst [vmem:[%s145 + $0x80] sm:$0xff] %v1475
      %1597 = vst [vmem:[%s145 + $0x88] sm:$0xff] %v1476
      %1598 = vst [vmem:[%s145 + $0x90] sm:$0xff] %v1477
      %1599 = vst [vmem:[%s145 + $0x98] sm:$0xff] %v1478
      %1600 = vst [vmem:[%s145 + $0xa0] sm:$0xff] %v1479
      %1601 = vst [vmem:[%s145 + $0xa8] sm:$0xff] %v1480
      %1602 = vst [vmem:[%s145 + $0xb0] sm:$0xff] %v1481
      %1603 = vst [vmem:[%s145 + $0xb8] sm:$0xff] %v1482
      %1604 = vst [vmem:[%s145 + $0xc0] sm:$0xff] %v1483
      %1605 = vst [vmem:[%s145 + $0xc8] sm:$0xff] %v1484
      %1606 = vst [vmem:[%s145 + $0xd0] sm:$0xff] %v1485
      %1607 = vst [vmem:[%s145 + $0xd8] sm:$0xff] %v1486
      %1608 = vst [vmem:[%s145 + $0xe0] sm:$0xff] %v1487
      %1609 = vst [vmem:[%s145 + $0xe8] sm:$0xff] %v1488
      %1610 = vst [vmem:[%s145 + $0xf0] sm:$0xff] %v1489
      %1611 = vst [vmem:[%s145 + $0xf8] sm:$0xff] %v1490
      %1612 = vst [vmem:[%s145 + $0x100] sm:$0xff] %v1491
      %1613 = vst [vmem:[%s145 + $0x108] sm:$0xff] %v1492
      %1614 = vst [vmem:[%s145 + $0x110] sm:$0xff] %v1493
      %1615 = vst [vmem:[%s145 + $0x118] sm:$0xff] %v1494
      %1616 = vst [vmem:[%s145 + $0x120] sm:$0xff] %v1495
      %1617 = vst [vmem:[%s145 + $0x128] sm:$0xff] %v1496
      %1618 = vst [vmem:[%s145 + $0x130] sm:$0xff] %v1497
      %1619 = vst [vmem:[%s145 + $0x138] sm:$0xff] %v1498
      %1620 = vst [vmem:[%s145 + $0x140] sm:$0xff] %v1499
      %1621 = vst [vmem:[%s145 + $0x148] sm:$0xff] %v1500
      %1622 = vst [vmem:[%s145 + $0x150] sm:$0xff] %v1501
      %1623 = vst [vmem:[%s145 + $0x158] sm:$0xff] %v1502
      %1624 = vst [vmem:[%s145 + $0x160] sm:$0xff] %v1503
      %1625 = vst [vmem:[%s145 + $0x168] sm:$0xff] %v1504
      %1626 = vst [vmem:[%s145 + $0x170] sm:$0xff] %v1505
      %1627 = vst [vmem:[%s145 + $0x178] sm:$0xff] %v1506
      %1628 = vst [vmem:[%s145 + $0x180] sm:$0xff] %v1507
      %1629 = vst [vmem:[%s145 + $0x188] sm:$0xff] %v1508
      %1630 = vst [vmem:[%s145 + $0x190] sm:$0xff] %v1509
      %1631 = vst [vmem:[%s145 + $0x198] sm:$0xff] %v1510
      %1632 = vst [vmem:[%s145 + $0x1a0] sm:$0xff] %v1511
      %1633 = vst [vmem:[%s145 + $0x1a8] sm:$0xff] %v1512
      %1634 = vst [vmem:[%s145 + $0x1b0] sm:$0xff] %v1513
      %1635 = vst [vmem:[%s145 + $0x1b8] sm:$0xff] %v1514
      %1636 = vst [vmem:[%s145 + $0x1c0] sm:$0xff] %v1515
      %1637 = vst [vmem:[%s145 + $0x1c8] sm:$0xff] %v1516
      %1638 = vst [vmem:[%s145 + $0x1d0] sm:$0xff] %v1517
      %1639 = vst [vmem:[%s145 + $0x1d8] sm:$0xff] %v1518
      %1640 = vst [vmem:[%s145 + $0x1e0] sm:$0xff] %v1519
      %1641 = vst [vmem:[%s145 + $0x1e8] sm:$0xff] %v1520
      %1642 = vst [vmem:[%s145 + $0x1f0] sm:$0xff] %v1521
      %1643 = vst [vmem:[%s145 + $0x1f8] sm:$0xff] %v1522
      %1644 = vst [vmem:[%s145 + $0x200] sm:$0xff] %v1523
      %1645 = vst [vmem:[%s145 + $0x208] sm:$0xff] %v1524
      %1646 = vst [vmem:[%s145 + $0x210] sm:$0xff] %v1525
      %1647 = vst [vmem:[%s145 + $0x218] sm:$0xff] %v1526
      %1648 = vst [vmem:[%s145 + $0x220] sm:$0xff] %v1527
      %1649 = vst [vmem:[%s145 + $0x228] sm:$0xff] %v1528
      %1650 = vst [vmem:[%s145 + $0x230] sm:$0xff] %v1529
      %1651 = vst [vmem:[%s145 + $0x238] sm:$0xff] %v1530
      %1652 = vst [vmem:[%s145 + $0x240] sm:$0xff] %v1531
      %1653 = vst [vmem:[%s145 + $0x248] sm:$0xff] %v1532
      %1654 = vst [vmem:[%s145 + $0x250] sm:$0xff] %v1533
      %1655 = vst [vmem:[%s145 + $0x258] sm:$0xff] %v1534
      %1656 = vst [vmem:[%s145 + $0x260] sm:$0xff] %v1535
      %1657 = vst [vmem:[%s145 + $0x268] sm:$0xff] %v1536
      %1658 = vst [vmem:[%s145 + $0x270] sm:$0xff] %v1537
      %1659 = vst [vmem:[%s145 + $0x278] sm:$0xff] %v1538
      %1660 = vst [vmem:[%s145 + $0x280] sm:$0xff] %v1539
      %1661 = vst [vmem:[%s145 + $0x288] sm:$0xff] %v1540
      %1662 = vst [vmem:[%s145 + $0x290] sm:$0xff] %v1541
      %1663 = vst [vmem:[%s145 + $0x298] sm:$0xff] %v1542
      %1664 = vst [vmem:[%s145 + $0x2a0] sm:$0xff] %v1543
      %1665 = vst [vmem:[%s145 + $0x2a8] sm:$0xff] %v1544
      %1666 = vst [vmem:[%s145 + $0x2b0] sm:$0xff] %v1545
      %1667 = vst [vmem:[%s145 + $0x2b8] sm:$0xff] %v1546
      %1668 = vst [vmem:[%s145 + $0x2c0] sm:$0xff] %v1547
      %1669 = vst [vmem:[%s145 + $0x2c8] sm:$0xff] %v1548
      %1670 = vst [vmem:[%s145 + $0x2d0] sm:$0xff] %v1549
      %1671 = vst [vmem:[%s145 + $0x2d8] sm:$0xff] %v1550
      %1672 = vst [vmem:[%s145 + $0x2e0] sm:$0xff] %v1551
      %1673 = vst [vmem:[%s145 + $0x2e8] sm:$0xff] %v1552
      %1674 = vst [vmem:[%s145 + $0x2f0] sm:$0xff] %v1553
      %1675 = vst [vmem:[%s145 + $0x2f8] sm:$0xff] %v1554
      %1676 = vst [vmem:[%s145 + $0x300] sm:$0xff] %v1555
      %1677 = vst [vmem:[%s145 + $0x308] sm:$0xff] %v1556
      %1678 = vst [vmem:[%s145 + $0x310] sm:$0xff] %v1557
      %1679 = vst [vmem:[%s145 + $0x318] sm:$0xff] %v1558
      %1680 = vst [vmem:[%s145 + $0x320] sm:$0xff] %v1559
      %1681 = vst [vmem:[%s145 + $0x328] sm:$0xff] %v1560
      %1682 = vst [vmem:[%s145 + $0x330] sm:$0xff] %v1561
      %1683 = vst [vmem:[%s145 + $0x338] sm:$0xff] %v1562
      %1684 = vst [vmem:[%s145 + $0x340] sm:$0xff] %v1563
      %1685 = vst [vmem:[%s145 + $0x348] sm:$0xff] %v1564
      %1686 = vst [vmem:[%s145 + $0x350] sm:$0xff] %v1565
      %1687 = vst [vmem:[%s145 + $0x358] sm:$0xff] %v1566
      %1688 = vst [vmem:[%s145 + $0x360] sm:$0xff] %v1567
      %1689 = vst [vmem:[%s145 + $0x368] sm:$0xff] %v1568
      %1690 = vst [vmem:[%s145 + $0x370] sm:$0xff] %v1569
      %1691 = vst [vmem:[%s145 + $0x378] sm:$0xff] %v1570
      %1692 = vst [vmem:[%s145 + $0x380] sm:$0xff] %v1571
      %1693 = vst [vmem:[%s145 + $0x388] sm:$0xff] %v1572
      %1694 = vst [vmem:[%s145 + $0x390] sm:$0xff] %v1573
      %1695 = vst [vmem:[%s145 + $0x398] sm:$0xff] %v1574
      %1696 = vst [vmem:[%s145 + $0x3a0] sm:$0xff] %v1575
      %1697 = vst [vmem:[%s145 + $0x3a8] sm:$0xff] %v1576
      %1698 = vst [vmem:[%s145 + $0x3b0] sm:$0xff] %v1577
      %1699 = vst [vmem:[%s145 + $0x3b8] sm:$0xff] %v1578
      %1700 = vst [vmem:[%s145 + $0x3c0] sm:$0xff] %v1579
      %s1701 = smul.u32 121, %s13
      %p1702 = scmp.lt.s32.totalorder %s1701, 604
      %s1703 = scalar_select %p1702, %s1701, 604
      %s1704 = smul.addr %s1703, 8
      %s1705 = scalar_lea.vmem %s2, %s1704
      // Predicated region
      $region29: #{discriminator_forward.4} parent=27 // pred_check
        %p1706 = pneg %p78
      $region30: #{discriminator_forward.4} parent=27 // pred_check_branch
        %1708 = sbr.rel (%p1706) target = $region32
      $region31: #{discriminator_forward.4} parent=27 // pred_region
        %s1709 = smul.u32 121, %s13
      $region32: #{discriminator_forward.4} parent=27 // pred_fallthru
        _
    $region28: #{discriminator_forward.4} parent=5 // pred_fallthru
      _
    %p1710 = scmp.le.s32.totalorder 2, %s8
    // Predicated region
    $region33: #{discriminator_forward.4} parent=5 // pred_check
      %p1711 = pneg %p1710
    $region34: #{discriminator_forward.4} parent=5 // pred_check_branch
      %1713 = sbr.rel (%p1711) target = $region36
    $region35: #{discriminator_forward.4} parent=5 // pred_region
      %s1714 = ssub.s32 %s8, 2
      // Predicated region
      $region37: #{discriminator_forward.4} parent=35 // pred_check
        %p1715 = pneg %p84
      $region38: #{discriminator_forward.4} parent=35 // pred_check_branch
        %1717 = sbr.rel (%p1715) target = $region40
      $region39: #{discriminator_forward.4} parent=35 // pred_region
        %s1718 = smul.u32 121, %s14
        %p1719 = scmp.lt.s32.totalorder %s1718, 604
        %s1720 = scalar_select %p1719, %s1718, 604
        %s1721 = smul.addr %s1720, 8
        %s1722 = scalar_lea.vmem %s2, %s1721
      $region40: #{discriminator_forward.4} parent=35 // pred_fallthru
        _
    $region36: #{discriminator_forward.4} parent=5 // pred_fallthru
      _
  $region6: #{discriminator_forward.4} parent=0 // loop_footer
    %s12 = sadd.s32 1, %s8
  $region7: #{discriminator_forward.4} parent=0 // loop_footer_branch
    %7 = sbr.rel target = $region3
  $region8: #{discriminator_forward.4} parent=0 // loop_exit
    _

// kernel: discriminator_forward.5
$region0: #{discriminator_forward.5}
  #allocation0 [shape = 'u32[]', space=smem, size = 0x4, offset = 0x4, fixed_abs, tag = 'smem constant byte address 0x4 - core index']
  #allocation1 [shape = 'u32[144,128]{1,0:T(1,128)}', space=vmem, size = 0x12000, scoped, tag = 'internal scratch']
  %s0 = inlined_call_operand.vmem [shape: bf16[1152,1152], index: 0, kind: input, shape index: {}]
  %s1 = inlined_call_operand.vmem [shape: bf16[1152,128], index: 1, kind: input, shape index: {}]
  %s2 = inlined_call_operand.vmem [shape: f32[1152,128], index: 2, kind: output, shape index: {}]
  %s3 = sld [smem:[#allocation0]]
  $region41: #{discriminator_forward.5} parent=0
    _
  %s5 = ssub.s32 1, %s3
  %s6 = scalar_select 0, %s5, %s3
  loop: start=0, step=1, limit=4
  $region2: #{discriminator_forward.5} parent=0 // loop_pre_header
    _
  $region3: #{discriminator_forward.5} parent=0 // loop_header
    %s8 = sphi 0, %s12
    %p9 = scmp.ge.s32.totalorder %s8, 4
    %s18 = sphi 0, %s20
    %s21 = sphi 0, %s18
    %s22 = sphi 0, %s21
    %s38 = sphi 0, %s22
    %s42 = sphi 0, %s42
    %s44 = sphi 0, %s42
    %s45 = sphi 0, %s44
    %s59 = sphi 0, %s45
    %s65 = sphi 0, %s67
    %s68 = sphi 0, %s65
    %s69 = sphi 0, %s68
    %s85 = sphi 0, %s69
  $region4: #{discriminator_forward.5} parent=0 // loop_header_branch
    %11 = sbr.rel (%p9) target = $region8
  $region5: #{discriminator_forward.5} parent=0 // loop_body
    %s13 = ssub.s32 %s8, 1
    %s14 = ssub.s32 %s8, 2
    %s15 = sadd.s32 %s8, 1
    %s16 = ssub.s32 %s8, %s15
    %p17 = scmp.eq.s32.totalorder %s16, 0
    %s19 = sadd.s32 %s18, 1
    %s20 = scalar_select %p17, %s18, %s19
    %p23 = pneg %p17
    %p24 = scmp.eq.s32.totalorder %s8, 1
    %p25 = por %p23, %p24
    %p26 = scmp.ne.s32.totalorder %s18, %s21
    %p27 = scmp.eq.s32.totalorder %s8, 0
    %p28 = por %p26, %p27
    %p29 = scmp.ne.s32.totalorder %s18, %s21
    %p30 = scmp.eq.s32.totalorder %s13, 1
    %p31 = por %p29, %p30
    %p32 = scmp.ne.s32.totalorder %s21, %s22
    %p33 = scmp.eq.s32.totalorder %s13, 0
    %p34 = por %p32, %p33
    %p35 = scmp.ne.s32.totalorder %s21, %s22
    %p36 = scmp.eq.s32.totalorder %s14, 1
    %p37 = por %p35, %p36
    %p39 = scmp.ne.s32.totalorder %s22, %s38
    %p40 = scmp.eq.s32.totalorder %s14, 0
    %p41 = por %p39, %p40
    %s43 = sadd.s32 %s42, 1
    %p46 = scmp.eq.s32.totalorder %s8, 1
    %p47 = scmp.ne.s32.totalorder %s42, %s44
    %p48 = scmp.eq.s32.totalorder %s8, 0
    %p49 = por %p47, %p48
    %p50 = scmp.ne.s32.totalorder %s42, %s44
    %p51 = scmp.eq.s32.totalorder %s13, 1
    %p52 = por %p50, %p51
    %p53 = scmp.ne.s32.totalorder %s44, %s45
    %p54 = scmp.eq.s32.totalorder %s13, 0
    %p55 = por %p53, %p54
    %p56 = scmp.ne.s32.totalorder %s44, %s45
    %p57 = scmp.eq.s32.totalorder %s14, 1
    %p58 = por %p56, %p57
    %p60 = scmp.ne.s32.totalorder %s45, %s59
    %p61 = scmp.eq.s32.totalorder %s14, 0
    %p62 = por %p60, %p61
    %s63 = ssub.s32 %s8, %s15
    %p64 = scmp.eq.s32.totalorder %s63, 0
    %s66 = sadd.s32 %s65, 1
    %s67 = scalar_select %p64, %s65, %s66
    %p70 = pneg %p64
    %p71 = scmp.eq.s32.totalorder %s8, 1
    %p72 = por %p70, %p71
    %p73 = scmp.ne.s32.totalorder %s65, %s68
    %p74 = scmp.eq.s32.totalorder %s8, 0
    %p75 = por %p73, %p74
    %p76 = scmp.ne.s32.totalorder %s65, %s68
    %p77 = scmp.eq.s32.totalorder %s13, 1
    %p78 = por %p76, %p77
    %p79 = scmp.ne.s32.totalorder %s68, %s69
    %p80 = scmp.eq.s32.totalorder %s13, 0
    %p81 = por %p79, %p80
    %p82 = scmp.ne.s32.totalorder %s68, %s69
    %p83 = scmp.eq.s32.totalorder %s14, 1
    %p84 = por %p82, %p83
    %p86 = scmp.ne.s32.totalorder %s69, %s85
    %p87 = scmp.eq.s32.totalorder %s14, 0
    %p88 = por %p86, %p87
    %p89 = scmp.le.s32.totalorder 1, %s8
    %p90 = scmp.lt.s32.totalorder %s8, 3
    %p91 = pnand %p89, %p90
    %p92 = pneg %p91
    // Predicated region
    $region9: #{discriminator_forward.5} parent=5 // pred_check
      _
    $region10: #{discriminator_forward.5} parent=5 // pred_check_branch
      %94 = sbr.rel (%p91) target = $region12
    $region11: #{discriminator_forward.5} parent=5 // pred_region
      %s95 = ssub.s32 %s8, 1
      // Predicated region
      $region13: #{discriminator_forward.5} parent=11 // pred_check
        %p96 = pneg %p55
      $region14: #{discriminator_forward.5} parent=11 // pred_check_branch
        %98 = sbr.rel (%p96) target = $region16
      $region15: #{discriminator_forward.5} parent=11 // pred_region
        _
      $region16: #{discriminator_forward.5} parent=11 // pred_fallthru
        _
    $region12: #{discriminator_forward.5} parent=5 // pred_fallthru
      _
    %p99 = scmp.lt.s32.totalorder %s8, 2
    // Predicated region
    $region17: #{discriminator_forward.5} parent=5 // pred_check
      %p100 = pneg %p99
    $region18: #{discriminator_forward.5} parent=5 // pred_check_branch
      %102 = sbr.rel (%p100) target = $region20
    $region19: #{discriminator_forward.5} parent=5 // pred_region
      // Predicated region
      $region21: #{discriminator_forward.5} parent=19 // pred_check
        %p103 = pneg %p28
      $region22: #{discriminator_forward.5} parent=19 // pred_check_branch
        %105 = sbr.rel (%p103) target = $region24
      $region23: #{discriminator_forward.5} parent=19 // pred_region
        %s106 = smul.u32 72, %s8
        %p107 = scmp.lt.s32.totalorder %s106, 143
        %s108 = scalar_select %p107, %s106, 143
        %s109 = smul.addr %s108, 9
        %s110 = smul.addr %s109, 4
        %s111 = scalar_lea.vmem %s0, %s110
        %s112 = smul.u32 72, %s8
      $region24: #{discriminator_forward.5} parent=19 // pred_fallthru
        _
    $region20: #{discriminator_forward.5} parent=5 // pred_fallthru
      _
    %p113 = scmp.le.s32.totalorder 1, %s8
    %p114 = scmp.lt.s32.totalorder %s8, 3
    %p115 = pnand %p113, %p114
    %p116 = pneg %p115
    // Predicated region
    $region25: #{discriminator_forward.5} parent=5 // pred_check
      _
    $region26: #{discriminator_forward.5} parent=5 // pred_check_branch
      %118 = sbr.rel (%p115) target = $region28
    $region27: #{discriminator_forward.5} parent=5 // pred_region
      %s119 = ssub.s32 %s8, 1
      %s120 = smul.u32 72, %s13
      %p121 = scmp.lt.s32.totalorder %s120, 143
      %s122 = scalar_select %p121, %s120, 143
      %s123 = smul.addr %s122, 9
      %s124 = smul.addr %s123, 4
      %s125 = scalar_lea.vmem %s0, %s124
      %p126 = pneg %p34
      %p127 = pneg %p31
      %p128 = pneg %p55
      %p129 = pneg %p52
      %p130 = pneg %p81
      %p131 = pneg %p78
      %s132 = smul.u32 72, %s13
      %p133 = scmp.lt.s32.totalorder %s132, 143
      %s134 = scalar_select %p133, %s132, 143
      %s135 = smul.addr %s134, 8
      %s136 = scalar_lea.vmem %s2, %s135
      %s137 = smul.u32 72, %s13
      %p138 = scmp.lt.s32.totalorder %s137, 143
      %s139 = scalar_select %p138, %s137, 143
      %s140 = smul.addr %s139, 9
      %s141 = smul.addr %s140, 4
      %s142 = scalar_lea.vmem %s0, %s141
      %s143 = smul.u32 72, %s13
      %s144 = smul.u32 72, %s13
      %p145 = scmp.lt.s32.totalorder %s144, 143
      %s146 = scalar_select %p145, %s144, 143
      %s147 = smul.addr %s146, 8
      %s148 = scalar_lea.vmem %s2, %s147
      %s149 = smul.u32 72, %s13
      %v151 = vld [vmem:[%s142] sm:$0xff]
      %v152 = vld [vmem:[%s142 + $0x8] sm:$0xff]
      %v153 = vld [vmem:[%s142 + $0x10] sm:$0xff]
      %v154 = vld [vmem:[%s142 + $0x18] sm:$0xff]
      %v155 = vld [vmem:[%s142 + $0x20] sm:$0xf]
      %v156 = vld [vmem:[%s142 + $0x24] sm:$0xff]
      %v157 = vld [vmem:[%s142 + $0x2c] sm:$0xff]
      %v158 = vld [vmem:[%s142 + $0x34] sm:$0xff]
      %v159 = vld [vmem:[%s142 + $0x3c] sm:$0xff]
      %v160 = vld [vmem:[%s142 + $0x44] sm:$0xf]
      %v161 = vld [vmem:[%s142 + $0x48] sm:$0xff]
      %v162 = vld [vmem:[%s142 + $0x50] sm:$0xff]
      %v163 = vld [vmem:[%s142 + $0x58] sm:$0xff]
      %v164 = vld [vmem:[%s142 + $0x60] sm:$0xff]
      %v165 = vld [vmem:[%s142 + $0x68] sm:$0xf]
      %v166 = vld [vmem:[%s142 + $0x6c] sm:$0xff]
      %v167 = vld [vmem:[%s142 + $0x74] sm:$0xff]
      %v168 = vld [vmem:[%s142 + $0x7c] sm:$0xff]
      %v169 = vld [vmem:[%s142 + $0x84] sm:$0xff]
      %v170 = vld [vmem:[%s142 + $0x8c] sm:$0xf]
      %v171 = vld [vmem:[%s142 + $0x90] sm:$0xff]
      %v172 = vld [vmem:[%s142 + $0x98] sm:$0xff]
      %v173 = vld [vmem:[%s142 + $0xa0] sm:$0xff]
      %v174 = vld [vmem:[%s142 + $0xa8] sm:$0xff]
      %v175 = vld [vmem:[%s142 + $0xb0] sm:$0xf]
      %v176 = vld [vmem:[%s142 + $0xb4] sm:$0xff]
      %v177 = vld [vmem:[%s142 + $0xbc] sm:$0xff]
      %v178 = vld [vmem:[%s142 + $0xc4] sm:$0xff]
      %v179 = vld [vmem:[%s142 + $0xcc] sm:$0xff]
      %v180 = vld [vmem:[%s142 + $0xd4] sm:$0xf]
      %v181 = vld [vmem:[%s142 + $0xd8] sm:$0xff]
      %v182 = vld [vmem:[%s142 + $0xe0] sm:$0xff]
      %v183 = vld [vmem:[%s142 + $0xe8] sm:$0xff]
      %v184 = vld [vmem:[%s142 + $0xf0] sm:$0xff]
      %v185 = vld [vmem:[%s142 + $0xf8] sm:$0xf]
      %v186 = vld [vmem:[%s142 + $0xfc] sm:$0xff]
      %v187 = vld [vmem:[%s142 + $0x104] sm:$0xff]
      %v188 = vld [vmem:[%s142 + $0x10c] sm:$0xff]
      %v189 = vld [vmem:[%s142 + $0x114] sm:$0xff]
      %v190 = vld [vmem:[%s142 + $0x11c] sm:$0xf]
      %v191 = vld [vmem:[%s142 + $0x120] sm:$0xff]
      %v192 = vld [vmem:[%s142 + $0x128] sm:$0xff]
      %v193 = vld [vmem:[%s142 + $0x130] sm:$0xff]
      %v194 = vld [vmem:[%s142 + $0x138] sm:$0xff]
      %v195 = vld [vmem:[%s142 + $0x140] sm:$0xf]
      %v196 = vld [vmem:[%s142 + $0x144] sm:$0xff]
      %v197 = vld [vmem:[%s142 + $0x14c] sm:$0xff]
      %v198 = vld [vmem:[%s142 + $0x154] sm:$0xff]
      %v199 = vld [vmem:[%s142 + $0x15c] sm:$0xff]
      %v200 = vld [vmem:[%s142 + $0x164] sm:$0xf]
      %v201 = vld [vmem:[%s142 + $0x168] sm:$0xff]
      %v202 = vld [vmem:[%s142 + $0x170] sm:$0xff]
      %v203 = vld [vmem:[%s142 + $0x178] sm:$0xff]
      %v204 = vld [vmem:[%s142 + $0x180] sm:$0xff]
      %v205 = vld [vmem:[%s142 + $0x188] sm:$0xf]
      %v206 = vld [vmem:[%s142 + $0x18c] sm:$0xff]
      %v207 = vld [vmem:[%s142 + $0x194] sm:$0xff]
      %v208 = vld [vmem:[%s142 + $0x19c] sm:$0xff]
      %v209 = vld [vmem:[%s142 + $0x1a4] sm:$0xff]
      %v210 = vld [vmem:[%s142 + $0x1ac] sm:$0xf]
      %v211 = vld [vmem:[%s142 + $0x1b0] sm:$0xff]
      %v212 = vld [vmem:[%s142 + $0x1b8] sm:$0xff]
      %v213 = vld [vmem:[%s142 + $0x1c0] sm:$0xff]
      %v214 = vld [vmem:[%s142 + $0x1c8] sm:$0xff]
      %v215 = vld [vmem:[%s142 + $0x1d0] sm:$0xf]
      %v216 = vld [vmem:[%s142 + $0x1d4] sm:$0xff]
      %v217 = vld [vmem:[%s142 + $0x1dc] sm:$0xff]
      %v218 = vld [vmem:[%s142 + $0x1e4] sm:$0xff]
      %v219 = vld [vmem:[%s142 + $0x1ec] sm:$0xff]
      %v220 = vld [vmem:[%s142 + $0x1f4] sm:$0xf]
      %v221 = vld [vmem:[%s142 + $0x1f8] sm:$0xff]
      %v222 = vld [vmem:[%s142 + $0x200] sm:$0xff]
      %v223 = vld [vmem:[%s142 + $0x208] sm:$0xff]
      %v224 = vld [vmem:[%s142 + $0x210] sm:$0xff]
      %v225 = vld [vmem:[%s142 + $0x218] sm:$0xf]
      %v226 = vld [vmem:[%s142 + $0x21c] sm:$0xff]
      %v227 = vld [vmem:[%s142 + $0x224] sm:$0xff]
      %v228 = vld [vmem:[%s142 + $0x22c] sm:$0xff]
      %v229 = vld [vmem:[%s142 + $0x234] sm:$0xff]
      %v230 = vld [vmem:[%s142 + $0x23c] sm:$0xf]
      %v231 = vld [vmem:[%s142 + $0x240] sm:$0xff]
      %v232 = vld [vmem:[%s142 + $0x248] sm:$0xff]
      %v233 = vld [vmem:[%s142 + $0x250] sm:$0xff]
      %v234 = vld [vmem:[%s142 + $0x258] sm:$0xff]
      %v235 = vld [vmem:[%s142 + $0x260] sm:$0xf]
      %v236 = vld [vmem:[%s142 + $0x264] sm:$0xff]
      %v237 = vld [vmem:[%s142 + $0x26c] sm:$0xff]
      %v238 = vld [vmem:[%s142 + $0x274] sm:$0xff]
      %v239 = vld [vmem:[%s142 + $0x27c] sm:$0xff]
      %v240 = vld [vmem:[%s142 + $0x284] sm:$0xf]
      %v241 = vld [vmem:[%s142 + $0x288] sm:$0xff]
      %v242 = vld [vmem:[%s142 + $0x290] sm:$0xff]
      %v243 = vld [vmem:[%s142 + $0x298] sm:$0xff]
      %v244 = vld [vmem:[%s142 + $0x2a0] sm:$0xff]
      %v245 = vld [vmem:[%s142 + $0x2a8] sm:$0xf]
      %v246 = vld [vmem:[%s142 + $0x2ac] sm:$0xff]
      %v247 = vld [vmem:[%s142 + $0x2b4] sm:$0xff]
      %v248 = vld [vmem:[%s142 + $0x2bc] sm:$0xff]
      %v249 = vld [vmem:[%s142 + $0x2c4] sm:$0xff]
      %v250 = vld [vmem:[%s142 + $0x2cc] sm:$0xf]
      %v251 = vld [vmem:[%s142 + $0x2d0] sm:$0xff]
      %v252 = vld [vmem:[%s142 + $0x2d8] sm:$0xff]
      %v253 = vld [vmem:[%s142 + $0x2e0] sm:$0xff]
      %v254 = vld [vmem:[%s142 + $0x2e8] sm:$0xff]
      %v255 = vld [vmem:[%s142 + $0x2f0] sm:$0xf]
      %v256 = vld [vmem:[%s142 + $0x2f4] sm:$0xff]
      %v257 = vld [vmem:[%s142 + $0x2fc] sm:$0xff]
      %v258 = vld [vmem:[%s142 + $0x304] sm:$0xff]
      %v259 = vld [vmem:[%s142 + $0x30c] sm:$0xff]
      %v260 = vld [vmem:[%s142 + $0x314] sm:$0xf]
      %v261 = vld [vmem:[%s142 + $0x318] sm:$0xff]
      %v262 = vld [vmem:[%s142 + $0x320] sm:$0xff]
      %v263 = vld [vmem:[%s142 + $0x328] sm:$0xff]
      %v264 = vld [vmem:[%s142 + $0x330] sm:$0xff]
      %v265 = vld [vmem:[%s142 + $0x338] sm:$0xf]
      %v266 = vld [vmem:[%s142 + $0x33c] sm:$0xff]
      %v267 = vld [vmem:[%s142 + $0x344] sm:$0xff]
      %v268 = vld [vmem:[%s142 + $0x34c] sm:$0xff]
      %v269 = vld [vmem:[%s142 + $0x354] sm:$0xff]
      %v270 = vld [vmem:[%s142 + $0x35c] sm:$0xf]
      %v271 = vld [vmem:[%s142 + $0x360] sm:$0xff]
      %v272 = vld [vmem:[%s142 + $0x368] sm:$0xff]
      %v273 = vld [vmem:[%s142 + $0x370] sm:$0xff]
      %v274 = vld [vmem:[%s142 + $0x378] sm:$0xff]
      %v275 = vld [vmem:[%s142 + $0x380] sm:$0xf]
      %v276 = vld [vmem:[%s142 + $0x384] sm:$0xff]
      %v277 = vld [vmem:[%s142 + $0x38c] sm:$0xff]
      %v278 = vld [vmem:[%s142 + $0x394] sm:$0xff]
      %v279 = vld [vmem:[%s142 + $0x39c] sm:$0xff]
      %v280 = vld [vmem:[%s142 + $0x3a4] sm:$0xf]
      %v281 = vld [vmem:[%s142 + $0x3a8] sm:$0xff]
      %v282 = vld [vmem:[%s142 + $0x3b0] sm:$0xff]
      %v283 = vld [vmem:[%s142 + $0x3b8] sm:$0xff]
      %v284 = vld [vmem:[%s142 + $0x3c0] sm:$0xff]
      %v285 = vld [vmem:[%s142 + $0x3c8] sm:$0xf]
      %v286 = vld [vmem:[%s142 + $0x3cc] sm:$0xff]
      %v287 = vld [vmem:[%s142 + $0x3d4] sm:$0xff]
      %v288 = vld [vmem:[%s142 + $0x3dc] sm:$0xff]
      %v289 = vld [vmem:[%s142 + $0x3e4] sm:$0xff]
      %v290 = vld [vmem:[%s142 + $0x3ec] sm:$0xf]
      %v291 = vld [vmem:[%s142 + $0x3f0] sm:$0xff]
      %v292 = vld [vmem:[%s142 + $0x3f8] sm:$0xff]
      %v293 = vld [vmem:[%s142 + $0x400] sm:$0xff]
      %v294 = vld [vmem:[%s142 + $0x408] sm:$0xff]
      %v295 = vld [vmem:[%s142 + $0x410] sm:$0xf]
      %v296 = vld [vmem:[%s142 + $0x414] sm:$0xff]
      %v297 = vld [vmem:[%s142 + $0x41c] sm:$0xff]
      %v298 = vld [vmem:[%s142 + $0x424] sm:$0xff]
      %v299 = vld [vmem:[%s142 + $0x42c] sm:$0xff]
      %v300 = vld [vmem:[%s142 + $0x434] sm:$0xf]
      %v301 = vld [vmem:[%s142 + $0x438] sm:$0xff]
      %v302 = vld [vmem:[%s142 + $0x440] sm:$0xff]
      %v303 = vld [vmem:[%s142 + $0x448] sm:$0xff]
      %v304 = vld [vmem:[%s142 + $0x450] sm:$0xff]
      %v305 = vld [vmem:[%s142 + $0x458] sm:$0xf]
      %v306 = vld [vmem:[%s142 + $0x45c] sm:$0xff]
      %v307 = vld [vmem:[%s142 + $0x464] sm:$0xff]
      %v308 = vld [vmem:[%s142 + $0x46c] sm:$0xff]
      %v309 = vld [vmem:[%s142 + $0x474] sm:$0xff]
      %v310 = vld [vmem:[%s142 + $0x47c] sm:$0xf]
      %v311 = vld [vmem:[%s142 + $0x480] sm:$0xff]
      %v312 = vld [vmem:[%s142 + $0x488] sm:$0xff]
      %v313 = vld [vmem:[%s142 + $0x490] sm:$0xff]
      %v314 = vld [vmem:[%s142 + $0x498] sm:$0xff]
      %v315 = vld [vmem:[%s142 + $0x4a0] sm:$0xf]
      %v316 = vld [vmem:[%s142 + $0x4a4] sm:$0xff]
      %v317 = vld [vmem:[%s142 + $0x4ac] sm:$0xff]
      %v318 = vld [vmem:[%s142 + $0x4b4] sm:$0xff]
      %v319 = vld [vmem:[%s142 + $0x4bc] sm:$0xff]
      %v320 = vld [vmem:[%s142 + $0x4c4] sm:$0xf]
      %v321 = vld [vmem:[%s142 + $0x4c8] sm:$0xff]
      %v322 = vld [vmem:[%s142 + $0x4d0] sm:$0xff]
      %v323 = vld [vmem:[%s142 + $0x4d8] sm:$0xff]
      %v324 = vld [vmem:[%s142 + $0x4e0] sm:$0xff]
      %v325 = vld [vmem:[%s142 + $0x4e8] sm:$0xf]
      %v326 = vld [vmem:[%s142 + $0x4ec] sm:$0xff]
      %v327 = vld [vmem:[%s142 + $0x4f4] sm:$0xff]
      %v328 = vld [vmem:[%s142 + $0x4fc] sm:$0xff]
      %v329 = vld [vmem:[%s142 + $0x504] sm:$0xff]
      %v330 = vld [vmem:[%s142 + $0x50c] sm:$0xf]
      %v331 = vld [vmem:[%s142 + $0x510] sm:$0xff]
      %v332 = vld [vmem:[%s142 + $0x518] sm:$0xff]
      %v333 = vld [vmem:[%s142 + $0x520] sm:$0xff]
      %v334 = vld [vmem:[%s142 + $0x528] sm:$0xff]
      %v335 = vld [vmem:[%s142 + $0x530] sm:$0xf]
      %v336 = vld [vmem:[%s142 + $0x534] sm:$0xff]
      %v337 = vld [vmem:[%s142 + $0x53c] sm:$0xff]
      %v338 = vld [vmem:[%s142 + $0x544] sm:$0xff]
      %v339 = vld [vmem:[%s142 + $0x54c] sm:$0xff]
      %v340 = vld [vmem:[%s142 + $0x554] sm:$0xf]
      %v341 = vld [vmem:[%s142 + $0x558] sm:$0xff]
      %v342 = vld [vmem:[%s142 + $0x560] sm:$0xff]
      %v343 = vld [vmem:[%s142 + $0x568] sm:$0xff]
      %v344 = vld [vmem:[%s142 + $0x570] sm:$0xff]
      %v345 = vld [vmem:[%s142 + $0x578] sm:$0xf]
      %v346 = vld [vmem:[%s142 + $0x57c] sm:$0xff]
      %v347 = vld [vmem:[%s142 + $0x584] sm:$0xff]
      %v348 = vld [vmem:[%s142 + $0x58c] sm:$0xff]
      %v349 = vld [vmem:[%s142 + $0x594] sm:$0xff]
      %v350 = vld [vmem:[%s142 + $0x59c] sm:$0xf]
      %v351 = vld [vmem:[%s142 + $0x5a0] sm:$0xff]
      %v352 = vld [vmem:[%s142 + $0x5a8] sm:$0xff]
      %v353 = vld [vmem:[%s142 + $0x5b0] sm:$0xff]
      %v354 = vld [vmem:[%s142 + $0x5b8] sm:$0xff]
      %v355 = vld [vmem:[%s142 + $0x5c0] sm:$0xf]
      %v356 = vld [vmem:[%s142 + $0x5c4] sm:$0xff]
      %v357 = vld [vmem:[%s142 + $0x5cc] sm:$0xff]
      %v358 = vld [vmem:[%s142 + $0x5d4] sm:$0xff]
      %v359 = vld [vmem:[%s142 + $0x5dc] sm:$0xff]
      %v360 = vld [vmem:[%s142 + $0x5e4] sm:$0xf]
      %v361 = vld [vmem:[%s142 + $0x5e8] sm:$0xff]
      %v362 = vld [vmem:[%s142 + $0x5f0] sm:$0xff]
      %v363 = vld [vmem:[%s142 + $0x5f8] sm:$0xff]
      %v364 = vld [vmem:[%s142 + $0x600] sm:$0xff]
      %v365 = vld [vmem:[%s142 + $0x608] sm:$0xf]
      %v366 = vld [vmem:[%s142 + $0x60c] sm:$0xff]
      %v367 = vld [vmem:[%s142 + $0x614] sm:$0xff]
      %v368 = vld [vmem:[%s142 + $0x61c] sm:$0xff]
      %v369 = vld [vmem:[%s142 + $0x624] sm:$0xff]
      %v370 = vld [vmem:[%s142 + $0x62c] sm:$0xf]
      %v371 = vld [vmem:[%s142 + $0x630] sm:$0xff]
      %v372 = vld [vmem:[%s142 + $0x638] sm:$0xff]
      %v373 = vld [vmem:[%s142 + $0x640] sm:$0xff]
      %v374 = vld [vmem:[%s142 + $0x648] sm:$0xff]
      %v375 = vld [vmem:[%s142 + $0x650] sm:$0xf]
      %v376 = vld [vmem:[%s142 + $0x654] sm:$0xff]
      %v377 = vld [vmem:[%s142 + $0x65c] sm:$0xff]
      %v378 = vld [vmem:[%s142 + $0x664] sm:$0xff]
      %v379 = vld [vmem:[%s142 + $0x66c] sm:$0xff]
      %v380 = vld [vmem:[%s142 + $0x674] sm:$0xf]
      %v381 = vld [vmem:[%s142 + $0x678] sm:$0xff]
      %v382 = vld [vmem:[%s142 + $0x680] sm:$0xff]
      %v383 = vld [vmem:[%s142 + $0x688] sm:$0xff]
      %v384 = vld [vmem:[%s142 + $0x690] sm:$0xff]
      %v385 = vld [vmem:[%s142 + $0x698] sm:$0xf]
      %v386 = vld [vmem:[%s142 + $0x69c] sm:$0xff]
      %v387 = vld [vmem:[%s142 + $0x6a4] sm:$0xff]
      %v388 = vld [vmem:[%s142 + $0x6ac] sm:$0xff]
      %v389 = vld [vmem:[%s142 + $0x6b4] sm:$0xff]
      %v390 = vld [vmem:[%s142 + $0x6bc] sm:$0xf]
      %v391 = vld [vmem:[%s142 + $0x6c0] sm:$0xff]
      %v392 = vld [vmem:[%s142 + $0x6c8] sm:$0xff]
      %v393 = vld [vmem:[%s142 + $0x6d0] sm:$0xff]
      %v394 = vld [vmem:[%s142 + $0x6d8] sm:$0xff]
      %v395 = vld [vmem:[%s142 + $0x6e0] sm:$0xf]
      %v396 = vld [vmem:[%s142 + $0x6e4] sm:$0xff]
      %v397 = vld [vmem:[%s142 + $0x6ec] sm:$0xff]
      %v398 = vld [vmem:[%s142 + $0x6f4] sm:$0xff]
      %v399 = vld [vmem:[%s142 + $0x6fc] sm:$0xff]
      %v400 = vld [vmem:[%s142 + $0x704] sm:$0xf]
      %v401 = vld [vmem:[%s142 + $0x708] sm:$0xff]
      %v402 = vld [vmem:[%s142 + $0x710] sm:$0xff]
      %v403 = vld [vmem:[%s142 + $0x718] sm:$0xff]
      %v404 = vld [vmem:[%s142 + $0x720] sm:$0xff]
      %v405 = vld [vmem:[%s142 + $0x728] sm:$0xf]
      %v406 = vld [vmem:[%s142 + $0x72c] sm:$0xff]
      %v407 = vld [vmem:[%s142 + $0x734] sm:$0xff]
      %v408 = vld [vmem:[%s142 + $0x73c] sm:$0xff]
      %v409 = vld [vmem:[%s142 + $0x744] sm:$0xff]
      %v410 = vld [vmem:[%s142 + $0x74c] sm:$0xf]
      %v411 = vld [vmem:[%s142 + $0x750] sm:$0xff]
      %v412 = vld [vmem:[%s142 + $0x758] sm:$0xff]
      %v413 = vld [vmem:[%s142 + $0x760] sm:$0xff]
      %v414 = vld [vmem:[%s142 + $0x768] sm:$0xff]
      %v415 = vld [vmem:[%s142 + $0x770] sm:$0xf]
      %v416 = vld [vmem:[%s142 + $0x774] sm:$0xff]
      %v417 = vld [vmem:[%s142 + $0x77c] sm:$0xff]
      %v418 = vld [vmem:[%s142 + $0x784] sm:$0xff]
      %v419 = vld [vmem:[%s142 + $0x78c] sm:$0xff]
      %v420 = vld [vmem:[%s142 + $0x794] sm:$0xf]
      %v421 = vld [vmem:[%s142 + $0x798] sm:$0xff]
      %v422 = vld [vmem:[%s142 + $0x7a0] sm:$0xff]
      %v423 = vld [vmem:[%s142 + $0x7a8] sm:$0xff]
      %v424 = vld [vmem:[%s142 + $0x7b0] sm:$0xff]
      %v425 = vld [vmem:[%s142 + $0x7b8] sm:$0xf]
      %v426 = vld [vmem:[%s142 + $0x7bc] sm:$0xff]
      %v427 = vld [vmem:[%s142 + $0x7c4] sm:$0xff]
      %v428 = vld [vmem:[%s142 + $0x7cc] sm:$0xff]
      %v429 = vld [vmem:[%s142 + $0x7d4] sm:$0xff]
      %v430 = vld [vmem:[%s142 + $0x7dc] sm:$0xf]
      %v431 = vld [vmem:[%s142 + $0x7e0] sm:$0xff]
      %v432 = vld [vmem:[%s142 + $0x7e8] sm:$0xff]
      %v433 = vld [vmem:[%s142 + $0x7f0] sm:$0xff]
      %v434 = vld [vmem:[%s142 + $0x7f8] sm:$0xff]
      %v435 = vld [vmem:[%s142 + $0x800] sm:$0xf]
      %v436 = vld [vmem:[%s142 + $0x804] sm:$0xff]
      %v437 = vld [vmem:[%s142 + $0x80c] sm:$0xff]
      %v438 = vld [vmem:[%s142 + $0x814] sm:$0xff]
      %v439 = vld [vmem:[%s142 + $0x81c] sm:$0xff]
      %v440 = vld [vmem:[%s142 + $0x824] sm:$0xf]
      %v441 = vld [vmem:[%s142 + $0x828] sm:$0xff]
      %v442 = vld [vmem:[%s142 + $0x830] sm:$0xff]
      %v443 = vld [vmem:[%s142 + $0x838] sm:$0xff]
      %v444 = vld [vmem:[%s142 + $0x840] sm:$0xff]
      %v445 = vld [vmem:[%s142 + $0x848] sm:$0xf]
      %v446 = vld [vmem:[%s142 + $0x84c] sm:$0xff]
      %v447 = vld [vmem:[%s142 + $0x854] sm:$0xff]
      %v448 = vld [vmem:[%s142 + $0x85c] sm:$0xff]
      %v449 = vld [vmem:[%s142 + $0x864] sm:$0xff]
      %v450 = vld [vmem:[%s142 + $0x86c] sm:$0xf]
      %v451 = vld [vmem:[%s142 + $0x870] sm:$0xff]
      %v452 = vld [vmem:[%s142 + $0x878] sm:$0xff]
      %v453 = vld [vmem:[%s142 + $0x880] sm:$0xff]
      %v454 = vld [vmem:[%s142 + $0x888] sm:$0xff]
      %v455 = vld [vmem:[%s142 + $0x890] sm:$0xf]
      %v456 = vld [vmem:[%s142 + $0x894] sm:$0xff]
      %v457 = vld [vmem:[%s142 + $0x89c] sm:$0xff]
      %v458 = vld [vmem:[%s142 + $0x8a4] sm:$0xff]
      %v459 = vld [vmem:[%s142 + $0x8ac] sm:$0xff]
      %v460 = vld [vmem:[%s142 + $0x8b4] sm:$0xf]
      %v461 = vld [vmem:[%s142 + $0x8b8] sm:$0xff]
      %v462 = vld [vmem:[%s142 + $0x8c0] sm:$0xff]
      %v463 = vld [vmem:[%s142 + $0x8c8] sm:$0xff]
      %v464 = vld [vmem:[%s142 + $0x8d0] sm:$0xff]
      %v465 = vld [vmem:[%s142 + $0x8d8] sm:$0xf]
      %v466 = vld [vmem:[%s142 + $0x8dc] sm:$0xff]
      %v467 = vld [vmem:[%s142 + $0x8e4] sm:$0xff]
      %v468 = vld [vmem:[%s142 + $0x8ec] sm:$0xff]
      %v469 = vld [vmem:[%s142 + $0x8f4] sm:$0xff]
      %v470 = vld [vmem:[%s142 + $0x8fc] sm:$0xf]
      %v471 = vld [vmem:[%s142 + $0x900] sm:$0xff]
      %v472 = vld [vmem:[%s142 + $0x908] sm:$0xff]
      %v473 = vld [vmem:[%s142 + $0x910] sm:$0xff]
      %v474 = vld [vmem:[%s142 + $0x918] sm:$0xff]
      %v475 = vld [vmem:[%s142 + $0x920] sm:$0xf]
      %v476 = vld [vmem:[%s142 + $0x924] sm:$0xff]
      %v477 = vld [vmem:[%s142 + $0x92c] sm:$0xff]
      %v478 = vld [vmem:[%s142 + $0x934] sm:$0xff]
      %v479 = vld [vmem:[%s142 + $0x93c] sm:$0xff]
      %v480 = vld [vmem:[%s142 + $0x944] sm:$0xf]
      %v481 = vld [vmem:[%s142 + $0x948] sm:$0xff]
      %v482 = vld [vmem:[%s142 + $0x950] sm:$0xff]
      %v483 = vld [vmem:[%s142 + $0x958] sm:$0xff]
      %v484 = vld [vmem:[%s142 + $0x960] sm:$0xff]
      %v485 = vld [vmem:[%s142 + $0x968] sm:$0xf]
      %v486 = vld [vmem:[%s142 + $0x96c] sm:$0xff]
      %v487 = vld [vmem:[%s142 + $0x974] sm:$0xff]
      %v488 = vld [vmem:[%s142 + $0x97c] sm:$0xff]
      %v489 = vld [vmem:[%s142 + $0x984] sm:$0xff]
      %v490 = vld [vmem:[%s142 + $0x98c] sm:$0xf]
      %v491 = vld [vmem:[%s142 + $0x990] sm:$0xff]
      %v492 = vld [vmem:[%s142 + $0x998] sm:$0xff]
      %v493 = vld [vmem:[%s142 + $0x9a0] sm:$0xff]
      %v494 = vld [vmem:[%s142 + $0x9a8] sm:$0xff]
      %v495 = vld [vmem:[%s142 + $0x9b0] sm:$0xf]
      %v496 = vld [vmem:[%s142 + $0x9b4] sm:$0xff]
      %v497 = vld [vmem:[%s142 + $0x9bc] sm:$0xff]
      %v498 = vld [vmem:[%s142 + $0x9c4] sm:$0xff]
      %v499 = vld [vmem:[%s142 + $0x9cc] sm:$0xff]
      %v500 = vld [vmem:[%s142 + $0x9d4] sm:$0xf]
      %v501 = vld [vmem:[%s142 + $0x9d8] sm:$0xff]
      %v502 = vld [vmem:[%s142 + $0x9e0] sm:$0xff]
      %v503 = vld [vmem:[%s142 + $0x9e8] sm:$0xff]
      %v504 = vld [vmem:[%s142 + $0x9f0] sm:$0xff]
      %v505 = vld [vmem:[%s142 + $0x9f8] sm:$0xf]
      %v506 = vld [vmem:[%s142 + $0x9fc] sm:$0xff]
      %v507 = vld [vmem:[%s142 + $0xa04] sm:$0xff]
      %v508 = vld [vmem:[%s142 + $0xa0c] sm:$0xff]
      %v509 = vld [vmem:[%s142 + $0xa14] sm:$0xff]
      %v510 = vld [vmem:[%s142 + $0xa1c] sm:$0xf]
      %v511 = vld [vmem:[%s1] sm:$0xf]
      %v512 = vld [vmem:[%s1 + $0x4] sm:$0xf]
      %v513 = vld [vmem:[%s1 + $0x8] sm:$0xf]
      %v514 = vld [vmem:[%s1 + $0xc] sm:$0xf]
      %v515 = vld [vmem:[%s1 + $0x10] sm:$0xf]
      %v516 = vld [vmem:[%s1 + $0x14] sm:$0xf]
      %v517 = vld [vmem:[%s1 + $0x18] sm:$0xf]
      %v518 = vld [vmem:[%s1 + $0x1c] sm:$0xf]
      %v519 = vld [vmem:[%s1 + $0x20] sm:$0xf]
      %v520 = vld [vmem:[%s1 + $0x24] sm:$0xf]
      %v521 = vld [vmem:[%s1 + $0x28] sm:$0xf]
      %v522 = vld [vmem:[%s1 + $0x2c] sm:$0xf]
      %v523 = vld [vmem:[%s1 + $0x30] sm:$0xf]
      %v524 = vld [vmem:[%s1 + $0x34] sm:$0xf]
      %v525 = vld [vmem:[%s1 + $0x38] sm:$0xf]
      %v526 = vld [vmem:[%s1 + $0x3c] sm:$0xf]
      %v527 = vld [vmem:[%s1 + $0x40] sm:$0xf]
      %v528 = vld [vmem:[%s1 + $0x44] sm:$0xf]
      %v529 = vld [vmem:[%s1 + $0x48] sm:$0xf]
      %v530 = vld [vmem:[%s1 + $0x4c] sm:$0xf]
      %v531 = vld [vmem:[%s1 + $0x50] sm:$0xf]
      %v532 = vld [vmem:[%s1 + $0x54] sm:$0xf]
      %v533 = vld [vmem:[%s1 + $0x58] sm:$0xf]
      %v534 = vld [vmem:[%s1 + $0x5c] sm:$0xf]
      %v535 = vld [vmem:[%s1 + $0x60] sm:$0xf]
      %v536 = vld [vmem:[%s1 + $0x64] sm:$0xf]
      %v537 = vld [vmem:[%s1 + $0x68] sm:$0xf]
      %v538 = vld [vmem:[%s1 + $0x6c] sm:$0xf]
      %v539 = vld [vmem:[%s1 + $0x70] sm:$0xf]
      %v540 = vld [vmem:[%s1 + $0x74] sm:$0xf]
      %v541 = vld [vmem:[%s1 + $0x78] sm:$0xf]
      %v542 = vld [vmem:[%s1 + $0x7c] sm:$0xf]
      %v543 = vld [vmem:[%s1 + $0x80] sm:$0xf]
      %v544 = vld [vmem:[%s1 + $0x84] sm:$0xf]
      %v545 = vld [vmem:[%s1 + $0x88] sm:$0xf]
      %v546 = vld [vmem:[%s1 + $0x8c] sm:$0xf]
      %v547 = vld [vmem:[%s1 + $0x90] sm:$0xf]
      %v548 = vld [vmem:[%s1 + $0x94] sm:$0xf]
      %v549 = vld [vmem:[%s1 + $0x98] sm:$0xf]
      %v550 = vld [vmem:[%s1 + $0x9c] sm:$0xf]
      %v551 = vld [vmem:[%s1 + $0xa0] sm:$0xf]
      %v552 = vld [vmem:[%s1 + $0xa4] sm:$0xf]
      %v553 = vld [vmem:[%s1 + $0xa8] sm:$0xf]
      %v554 = vld [vmem:[%s1 + $0xac] sm:$0xf]
      %v555 = vld [vmem:[%s1 + $0xb0] sm:$0xf]
      %v556 = vld [vmem:[%s1 + $0xb4] sm:$0xf]
      %v557 = vld [vmem:[%s1 + $0xb8] sm:$0xf]
      %v558 = vld [vmem:[%s1 + $0xbc] sm:$0xf]
      %v559 = vld [vmem:[%s1 + $0xc0] sm:$0xf]
      %v560 = vld [vmem:[%s1 + $0xc4] sm:$0xf]
      %v561 = vld [vmem:[%s1 + $0xc8] sm:$0xf]
      %v562 = vld [vmem:[%s1 + $0xcc] sm:$0xf]
      %v563 = vld [vmem:[%s1 + $0xd0] sm:$0xf]
      %v564 = vld [vmem:[%s1 + $0xd4] sm:$0xf]
      %v565 = vld [vmem:[%s1 + $0xd8] sm:$0xf]
      %v566 = vld [vmem:[%s1 + $0xdc] sm:$0xf]
      %v567 = vld [vmem:[%s1 + $0xe0] sm:$0xf]
      %v568 = vld [vmem:[%s1 + $0xe4] sm:$0xf]
      %v569 = vld [vmem:[%s1 + $0xe8] sm:$0xf]
      %v570 = vld [vmem:[%s1 + $0xec] sm:$0xf]
      %v571 = vld [vmem:[%s1 + $0xf0] sm:$0xf]
      %v572 = vld [vmem:[%s1 + $0xf4] sm:$0xf]
      %v573 = vld [vmem:[%s1 + $0xf8] sm:$0xf]
      %v574 = vld [vmem:[%s1 + $0xfc] sm:$0xf]
      %v575 = vld [vmem:[%s1 + $0x100] sm:$0xf]
      %v576 = vld [vmem:[%s1 + $0x104] sm:$0xf]
      %v577 = vld [vmem:[%s1 + $0x108] sm:$0xf]
      %v578 = vld [vmem:[%s1 + $0x10c] sm:$0xf]
      %v579 = vld [vmem:[%s1 + $0x110] sm:$0xf]
      %v580 = vld [vmem:[%s1 + $0x114] sm:$0xf]
      %v581 = vld [vmem:[%s1 + $0x118] sm:$0xf]
      %v582 = vld [vmem:[%s1 + $0x11c] sm:$0xf]
      %v583 = vld [vmem:[%s1 + $0x120] sm:$0xf]
      %v584 = vld [vmem:[%s1 + $0x124] sm:$0xf]
      %v585 = vld [vmem:[%s1 + $0x128] sm:$0xf]
      %v586 = vld [vmem:[%s1 + $0x12c] sm:$0xf]
      %v587 = vld [vmem:[%s1 + $0x130] sm:$0xf]
      %v588 = vld [vmem:[%s1 + $0x134] sm:$0xf]
      %v589 = vld [vmem:[%s1 + $0x138] sm:$0xf]
      %v590 = vld [vmem:[%s1 + $0x13c] sm:$0xf]
      %v591 = vld [vmem:[%s1 + $0x140] sm:$0xf]
      %v592 = vld [vmem:[%s1 + $0x144] sm:$0xf]
      %v593 = vld [vmem:[%s1 + $0x148] sm:$0xf]
      %v594 = vld [vmem:[%s1 + $0x14c] sm:$0xf]
      %v595 = vld [vmem:[%s1 + $0x150] sm:$0xf]
      %v596 = vld [vmem:[%s1 + $0x154] sm:$0xf]
      %v597 = vld [vmem:[%s1 + $0x158] sm:$0xf]
      %v598 = vld [vmem:[%s1 + $0x15c] sm:$0xf]
      %v599 = vld [vmem:[%s1 + $0x160] sm:$0xf]
      %v600 = vld [vmem:[%s1 + $0x164] sm:$0xf]
      %v601 = vld [vmem:[%s1 + $0x168] sm:$0xf]
      %v602 = vld [vmem:[%s1 + $0x16c] sm:$0xf]
      %v603 = vld [vmem:[%s1 + $0x170] sm:$0xf]
      %v604 = vld [vmem:[%s1 + $0x174] sm:$0xf]
      %v605 = vld [vmem:[%s1 + $0x178] sm:$0xf]
      %v606 = vld [vmem:[%s1 + $0x17c] sm:$0xf]
      %v607 = vld [vmem:[%s1 + $0x180] sm:$0xf]
      %v608 = vld [vmem:[%s1 + $0x184] sm:$0xf]
      %v609 = vld [vmem:[%s1 + $0x188] sm:$0xf]
      %v610 = vld [vmem:[%s1 + $0x18c] sm:$0xf]
      %v611 = vld [vmem:[%s1 + $0x190] sm:$0xf]
      %v612 = vld [vmem:[%s1 + $0x194] sm:$0xf]
      %v613 = vld [vmem:[%s1 + $0x198] sm:$0xf]
      %v614 = vld [vmem:[%s1 + $0x19c] sm:$0xf]
      %v615 = vld [vmem:[%s1 + $0x1a0] sm:$0xf]
      %v616 = vld [vmem:[%s1 + $0x1a4] sm:$0xf]
      %v617 = vld [vmem:[%s1 + $0x1a8] sm:$0xf]
      %v618 = vld [vmem:[%s1 + $0x1ac] sm:$0xf]
      %v619 = vld [vmem:[%s1 + $0x1b0] sm:$0xf]
      %v620 = vld [vmem:[%s1 + $0x1b4] sm:$0xf]
      %v621 = vld [vmem:[%s1 + $0x1b8] sm:$0xf]
      %v622 = vld [vmem:[%s1 + $0x1bc] sm:$0xf]
      %v623 = vld [vmem:[%s1 + $0x1c0] sm:$0xf]
      %v624 = vld [vmem:[%s1 + $0x1c4] sm:$0xf]
      %v625 = vld [vmem:[%s1 + $0x1c8] sm:$0xf]
      %v626 = vld [vmem:[%s1 + $0x1cc] sm:$0xf]
      %v627 = vld [vmem:[%s1 + $0x1d0] sm:$0xf]
      %v628 = vld [vmem:[%s1 + $0x1d4] sm:$0xf]
      %v629 = vld [vmem:[%s1 + $0x1d8] sm:$0xf]
      %v630 = vld [vmem:[%s1 + $0x1dc] sm:$0xf]
      %v631 = vld [vmem:[%s1 + $0x1e0] sm:$0xf]
      %v632 = vld [vmem:[%s1 + $0x1e4] sm:$0xf]
      %v633 = vld [vmem:[%s1 + $0x1e8] sm:$0xf]
      %v634 = vld [vmem:[%s1 + $0x1ec] sm:$0xf]
      %v635 = vld [vmem:[%s1 + $0x1f0] sm:$0xf]
      %v636 = vld [vmem:[%s1 + $0x1f4] sm:$0xf]
      %v637 = vld [vmem:[%s1 + $0x1f8] sm:$0xf]
      %v638 = vld [vmem:[%s1 + $0x1fc] sm:$0xf]
      %v639 = vld [vmem:[%s1 + $0x200] sm:$0xf]
      %v640 = vld [vmem:[%s1 + $0x204] sm:$0xf]
      %v641 = vld [vmem:[%s1 + $0x208] sm:$0xf]
      %v642 = vld [vmem:[%s1 + $0x20c] sm:$0xf]
      %v643 = vld [vmem:[%s1 + $0x210] sm:$0xf]
      %v644 = vld [vmem:[%s1 + $0x214] sm:$0xf]
      %v645 = vld [vmem:[%s1 + $0x218] sm:$0xf]
      %v646 = vld [vmem:[%s1 + $0x21c] sm:$0xf]
      %v647 = vld [vmem:[%s1 + $0x220] sm:$0xf]
      %v648 = vld [vmem:[%s1 + $0x224] sm:$0xf]
      %v649 = vld [vmem:[%s1 + $0x228] sm:$0xf]
      %v650 = vld [vmem:[%s1 + $0x22c] sm:$0xf]
      %v651 = vld [vmem:[%s1 + $0x230] sm:$0xf]
      %v652 = vld [vmem:[%s1 + $0x234] sm:$0xf]
      %v653 = vld [vmem:[%s1 + $0x238] sm:$0xf]
      %v654 = vld [vmem:[%s1 + $0x23c] sm:$0xf]
      %v1015 = vunpack.c.l.b16 %v151
      %v1016 = vunpack.c.h.b16 %v151
      %v1017 = vunpack.c.l.b16 %v152
      %v1018 = vunpack.c.h.b16 %v152
      %v1019 = vunpack.c.l.b16 %v153
      %v1020 = vunpack.c.h.b16 %v153
      %v1021 = vunpack.c.l.b16 %v154
      %v1022 = vunpack.c.h.b16 %v154
      %v1023 = vunpack.c.l.b16 %v155
      %v1024 = vunpack.c.l.b16 %v156
      %v1025 = vunpack.c.h.b16 %v156
      %v1026 = vunpack.c.l.b16 %v157
      %v1027 = vunpack.c.h.b16 %v157
      %v1028 = vunpack.c.l.b16 %v158
      %v1029 = vunpack.c.h.b16 %v158
      %v1030 = vunpack.c.l.b16 %v159
      %v1031 = vunpack.c.h.b16 %v159
      %v1032 = vunpack.c.l.b16 %v160
      %v1033 = vunpack.c.l.b16 %v161
      %v1034 = vunpack.c.h.b16 %v161
      %v1035 = vunpack.c.l.b16 %v162
      %v1036 = vunpack.c.h.b16 %v162
      %v1037 = vunpack.c.l.b16 %v163
      %v1038 = vunpack.c.h.b16 %v163
      %v1039 = vunpack.c.l.b16 %v164
      %v1040 = vunpack.c.h.b16 %v164
      %v1041 = vunpack.c.l.b16 %v165
      %v1042 = vunpack.c.l.b16 %v166
      %v1043 = vunpack.c.h.b16 %v166
      %v1044 = vunpack.c.l.b16 %v167
      %v1045 = vunpack.c.h.b16 %v167
      %v1046 = vunpack.c.l.b16 %v168
      %v1047 = vunpack.c.h.b16 %v168
      %v1048 = vunpack.c.l.b16 %v169
      %v1049 = vunpack.c.h.b16 %v169
      %v1050 = vunpack.c.l.b16 %v170
      %v1051 = vunpack.c.l.b16 %v171
      %v1052 = vunpack.c.h.b16 %v171
      %v1053 = vunpack.c.l.b16 %v172
      %v1054 = vunpack.c.h.b16 %v172
      %v1055 = vunpack.c.l.b16 %v173
      %v1056 = vunpack.c.h.b16 %v173
      %v1057 = vunpack.c.l.b16 %v174
      %v1058 = vunpack.c.h.b16 %v174
      %v1059 = vunpack.c.l.b16 %v175
      %v1060 = vunpack.c.l.b16 %v176
      %v1061 = vunpack.c.h.b16 %v176
      %v1062 = vunpack.c.l.b16 %v177
      %v1063 = vunpack.c.h.b16 %v177
      %v1064 = vunpack.c.l.b16 %v178
      %v1065 = vunpack.c.h.b16 %v178
      %v1066 = vunpack.c.l.b16 %v179
      %v1067 = vunpack.c.h.b16 %v179
      %v1068 = vunpack.c.l.b16 %v180
      %v1069 = vunpack.c.l.b16 %v181
      %v1070 = vunpack.c.h.b16 %v181
      %v1071 = vunpack.c.l.b16 %v182
      %v1072 = vunpack.c.h.b16 %v182
      %v1073 = vunpack.c.l.b16 %v183
      %v1074 = vunpack.c.h.b16 %v183
      %v1075 = vunpack.c.l.b16 %v184
      %v1076 = vunpack.c.h.b16 %v184
      %v1077 = vunpack.c.l.b16 %v185
      %v1078 = vunpack.c.l.b16 %v186
      %v1079 = vunpack.c.h.b16 %v186
      %v1080 = vunpack.c.l.b16 %v187
      %v1081 = vunpack.c.h.b16 %v187
      %v1082 = vunpack.c.l.b16 %v188
      %v1083 = vunpack.c.h.b16 %v188
      %v1084 = vunpack.c.l.b16 %v189
      %v1085 = vunpack.c.h.b16 %v189
      %v1086 = vunpack.c.l.b16 %v190
      %v1087 = vunpack.c.l.b16 %v191
      %v1088 = vunpack.c.h.b16 %v191
      %v1089 = vunpack.c.l.b16 %v192
      %v1090 = vunpack.c.h.b16 %v192
      %v1091 = vunpack.c.l.b16 %v193
      %v1092 = vunpack.c.h.b16 %v193
      %v1093 = vunpack.c.l.b16 %v194
      %v1094 = vunpack.c.h.b16 %v194
      %v1095 = vunpack.c.l.b16 %v195
      %v1096 = vunpack.c.l.b16 %v196
      %v1097 = vunpack.c.h.b16 %v196
      %v1098 = vunpack.c.l.b16 %v197
      %v1099 = vunpack.c.h.b16 %v197
      %v1100 = vunpack.c.l.b16 %v198
      %v1101 = vunpack.c.h.b16 %v198
      %v1102 = vunpack.c.l.b16 %v199
      %v1103 = vunpack.c.h.b16 %v199
      %v1104 = vunpack.c.l.b16 %v200
      %v1105 = vunpack.c.l.b16 %v201
      %v1106 = vunpack.c.h.b16 %v201
      %v1107 = vunpack.c.l.b16 %v202
      %v1108 = vunpack.c.h.b16 %v202
      %v1109 = vunpack.c.l.b16 %v203
      %v1110 = vunpack.c.h.b16 %v203
      %v1111 = vunpack.c.l.b16 %v204
      %v1112 = vunpack.c.h.b16 %v204
      %v1113 = vunpack.c.l.b16 %v205
      %v1114 = vunpack.c.l.b16 %v206
      %v1115 = vunpack.c.h.b16 %v206
      %v1116 = vunpack.c.l.b16 %v207
      %v1117 = vunpack.c.h.b16 %v207
      %v1118 = vunpack.c.l.b16 %v208
      %v1119 = vunpack.c.h.b16 %v208
      %v1120 = vunpack.c.l.b16 %v209
      %v1121 = vunpack.c.h.b16 %v209
      %v1122 = vunpack.c.l.b16 %v210
      %v1123 = vunpack.c.l.b16 %v211
      %v1124 = vunpack.c.h.b16 %v211
      %v1125 = vunpack.c.l.b16 %v212
      %v1126 = vunpack.c.h.b16 %v212
      %v1127 = vunpack.c.l.b16 %v213
      %v1128 = vunpack.c.h.b16 %v213
      %v1129 = vunpack.c.l.b16 %v214
      %v1130 = vunpack.c.h.b16 %v214
      %v1131 = vunpack.c.l.b16 %v215
      %v1132 = vunpack.c.l.b16 %v216
      %v1133 = vunpack.c.h.b16 %v216
      %v1134 = vunpack.c.l.b16 %v217
      %v1135 = vunpack.c.h.b16 %v217
      %v1136 = vunpack.c.l.b16 %v218
      %v1137 = vunpack.c.h.b16 %v218
      %v1138 = vunpack.c.l.b16 %v219
      %v1139 = vunpack.c.h.b16 %v219
      %v1140 = vunpack.c.l.b16 %v220
      %v1141 = vunpack.c.l.b16 %v221
      %v1142 = vunpack.c.h.b16 %v221
      %v1143 = vunpack.c.l.b16 %v222
      %v1144 = vunpack.c.h.b16 %v222
      %v1145 = vunpack.c.l.b16 %v223
      %v1146 = vunpack.c.h.b16 %v223
      %v1147 = vunpack.c.l.b16 %v224
      %v1148 = vunpack.c.h.b16 %v224
      %v1149 = vunpack.c.l.b16 %v225
      %v1150 = vunpack.c.l.b16 %v226
      %v1151 = vunpack.c.h.b16 %v226
      %v1152 = vunpack.c.l.b16 %v227
      %v1153 = vunpack.c.h.b16 %v227
      %v1154 = vunpack.c.l.b16 %v228
      %v1155 = vunpack.c.h.b16 %v228
      %v1156 = vunpack.c.l.b16 %v229
      %v1157 = vunpack.c.h.b16 %v229
      %v1158 = vunpack.c.l.b16 %v230
      %v1159 = vunpack.c.l.b16 %v231
      %v1160 = vunpack.c.h.b16 %v231
      %v1161 = vunpack.c.l.b16 %v232
      %v1162 = vunpack.c.h.b16 %v232
      %v1163 = vunpack.c.l.b16 %v233
      %v1164 = vunpack.c.h.b16 %v233
      %v1165 = vunpack.c.l.b16 %v234
      %v1166 = vunpack.c.h.b16 %v234
      %v1167 = vunpack.c.l.b16 %v235
      %v1168 = vunpack.c.l.b16 %v236
      %v1169 = vunpack.c.h.b16 %v236
      %v1170 = vunpack.c.l.b16 %v237
      %v1171 = vunpack.c.h.b16 %v237
      %v1172 = vunpack.c.l.b16 %v238
      %v1173 = vunpack.c.h.b16 %v238
      %v1174 = vunpack.c.l.b16 %v239
      %v1175 = vunpack.c.h.b16 %v239
      %v1176 = vunpack.c.l.b16 %v240
      %v1177 = vunpack.c.l.b16 %v241
      %v1178 = vunpack.c.h.b16 %v241
      %v1179 = vunpack.c.l.b16 %v242
      %v1180 = vunpack.c.h.b16 %v242
      %v1181 = vunpack.c.l.b16 %v243
      %v1182 = vunpack.c.h.b16 %v243
      %v1183 = vunpack.c.l.b16 %v244
      %v1184 = vunpack.c.h.b16 %v244
      %v1185 = vunpack.c.l.b16 %v245
      %v1186 = vunpack.c.l.b16 %v246
      %v1187 = vunpack.c.h.b16 %v246
      %v1188 = vunpack.c.l.b16 %v247
      %v1189 = vunpack.c.h.b16 %v247
      %v1190 = vunpack.c.l.b16 %v248
      %v1191 = vunpack.c.h.b16 %v248
      %v1192 = vunpack.c.l.b16 %v249
      %v1193 = vunpack.c.h.b16 %v249
      %v1194 = vunpack.c.l.b16 %v250
      %v1195 = vunpack.c.l.b16 %v251
      %v1196 = vunpack.c.h.b16 %v251
      %v1197 = vunpack.c.l.b16 %v252
      %v1198 = vunpack.c.h.b16 %v252
      %v1199 = vunpack.c.l.b16 %v253
      %v1200 = vunpack.c.h.b16 %v253
      %v1201 = vunpack.c.l.b16 %v254
      %v1202 = vunpack.c.h.b16 %v254
      %v1203 = vunpack.c.l.b16 %v255
      %v1204 = vunpack.c.l.b16 %v256
      %v1205 = vunpack.c.h.b16 %v256
      %v1206 = vunpack.c.l.b16 %v257
      %v1207 = vunpack.c.h.b16 %v257
      %v1208 = vunpack.c.l.b16 %v258
      %v1209 = vunpack.c.h.b16 %v258
      %v1210 = vunpack.c.l.b16 %v259
      %v1211 = vunpack.c.h.b16 %v259
      %v1212 = vunpack.c.l.b16 %v260
      %v1213 = vunpack.c.l.b16 %v261
      %v1214 = vunpack.c.h.b16 %v261
      %v1215 = vunpack.c.l.b16 %v262
      %v1216 = vunpack.c.h.b16 %v262
      %v1217 = vunpack.c.l.b16 %v263
      %v1218 = vunpack.c.h.b16 %v263
      %v1219 = vunpack.c.l.b16 %v264
      %v1220 = vunpack.c.h.b16 %v264
      %v1221 = vunpack.c.l.b16 %v265
      %v1222 = vunpack.c.l.b16 %v266
      %v1223 = vunpack.c.h.b16 %v266
      %v1224 = vunpack.c.l.b16 %v267
      %v1225 = vunpack.c.h.b16 %v267
      %v1226 = vunpack.c.l.b16 %v268
      %v1227 = vunpack.c.h.b16 %v268
      %v1228 = vunpack.c.l.b16 %v269
      %v1229 = vunpack.c.h.b16 %v269
      %v1230 = vunpack.c.l.b16 %v270
      %v1231 = vunpack.c.l.b16 %v271
      %v1232 = vunpack.c.h.b16 %v271
      %v1233 = vunpack.c.l.b16 %v272
      %v1234 = vunpack.c.h.b16 %v272
      %v1235 = vunpack.c.l.b16 %v273
      %v1236 = vunpack.c.h.b16 %v273
      %v1237 = vunpack.c.l.b16 %v274
      %v1238 = vunpack.c.h.b16 %v274
      %v1239 = vunpack.c.l.b16 %v275
      %v1240 = vunpack.c.l.b16 %v276
      %v1241 = vunpack.c.h.b16 %v276
      %v1242 = vunpack.c.l.b16 %v277
      %v1243 = vunpack.c.h.b16 %v277
      %v1244 = vunpack.c.l.b16 %v278
      %v1245 = vunpack.c.h.b16 %v278
      %v1246 = vunpack.c.l.b16 %v279
      %v1247 = vunpack.c.h.b16 %v279
      %v1248 = vunpack.c.l.b16 %v280
      %v1249 = vunpack.c.l.b16 %v281
      %v1250 = vunpack.c.h.b16 %v281
      %v1251 = vunpack.c.l.b16 %v282
      %v1252 = vunpack.c.h.b16 %v282
      %v1253 = vunpack.c.l.b16 %v283
      %v1254 = vunpack.c.h.b16 %v283
      %v1255 = vunpack.c.l.b16 %v284
      %v1256 = vunpack.c.h.b16 %v284
      %v1257 = vunpack.c.l.b16 %v285
      %v1258 = vunpack.c.l.b16 %v286
      %v1259 = vunpack.c.h.b16 %v286
      %v1260 = vunpack.c.l.b16 %v287
      %v1261 = vunpack.c.h.b16 %v287
      %v1262 = vunpack.c.l.b16 %v288
      %v1263 = vunpack.c.h.b16 %v288
      %v1264 = vunpack.c.l.b16 %v289
      %v1265 = vunpack.c.h.b16 %v289
      %v1266 = vunpack.c.l.b16 %v290
      %v1267 = vunpack.c.l.b16 %v291
      %v1268 = vunpack.c.h.b16 %v291
      %v1269 = vunpack.c.l.b16 %v292
      %v1270 = vunpack.c.h.b16 %v292
      %v1271 = vunpack.c.l.b16 %v293
      %v1272 = vunpack.c.h.b16 %v293
      %v1273 = vunpack.c.l.b16 %v294
      %v1274 = vunpack.c.h.b16 %v294
      %v1275 = vunpack.c.l.b16 %v295
      %v1276 = vunpack.c.l.b16 %v296
      %v1277 = vunpack.c.h.b16 %v296
      %v1278 = vunpack.c.l.b16 %v297
      %v1279 = vunpack.c.h.b16 %v297
      %v1280 = vunpack.c.l.b16 %v298
      %v1281 = vunpack.c.h.b16 %v298
      %v1282 = vunpack.c.l.b16 %v299
      %v1283 = vunpack.c.h.b16 %v299
      %v1284 = vunpack.c.l.b16 %v300
      %v1285 = vunpack.c.l.b16 %v301
      %v1286 = vunpack.c.h.b16 %v301
      %v1287 = vunpack.c.l.b16 %v302
      %v1288 = vunpack.c.h.b16 %v302
      %v1289 = vunpack.c.l.b16 %v303
      %v1290 = vunpack.c.h.b16 %v303
      %v1291 = vunpack.c.l.b16 %v304
      %v1292 = vunpack.c.h.b16 %v304
      %v1293 = vunpack.c.l.b16 %v305
      %v1294 = vunpack.c.l.b16 %v306
      %v1295 = vunpack.c.h.b16 %v306
      %v1296 = vunpack.c.l.b16 %v307
      %v1297 = vunpack.c.h.b16 %v307
      %v1298 = vunpack.c.l.b16 %v308
      %v1299 = vunpack.c.h.b16 %v308
      %v1300 = vunpack.c.l.b16 %v309
      %v1301 = vunpack.c.h.b16 %v309
      %v1302 = vunpack.c.l.b16 %v310
      %v1303 = vunpack.c.l.b16 %v311
      %v1304 = vunpack.c.h.b16 %v311
      %v1305 = vunpack.c.l.b16 %v312
      %v1306 = vunpack.c.h.b16 %v312
      %v1307 = vunpack.c.l.b16 %v313
      %v1308 = vunpack.c.h.b16 %v313
      %v1309 = vunpack.c.l.b16 %v314
      %v1310 = vunpack.c.h.b16 %v314
      %v1311 = vunpack.c.l.b16 %v315
      %v1312 = vunpack.c.l.b16 %v316
      %v1313 = vunpack.c.h.b16 %v316
      %v1314 = vunpack.c.l.b16 %v317
      %v1315 = vunpack.c.h.b16 %v317
      %v1316 = vunpack.c.l.b16 %v318
      %v1317 = vunpack.c.h.b16 %v318
      %v1318 = vunpack.c.l.b16 %v319
      %v1319 = vunpack.c.h.b16 %v319
      %v1320 = vunpack.c.l.b16 %v320
      %v1321 = vunpack.c.l.b16 %v321
      %v1322 = vunpack.c.h.b16 %v321
      %v1323 = vunpack.c.l.b16 %v322
      %v1324 = vunpack.c.h.b16 %v322
      %v1325 = vunpack.c.l.b16 %v323
      %v1326 = vunpack.c.h.b16 %v323
      %v1327 = vunpack.c.l.b16 %v324
      %v1328 = vunpack.c.h.b16 %v324
      %v1329 = vunpack.c.l.b16 %v325
      %v1330 = vunpack.c.l.b16 %v326
      %v1331 = vunpack.c.h.b16 %v326
      %v1332 = vunpack.c.l.b16 %v327
      %v1333 = vunpack.c.h.b16 %v327
      %v1334 = vunpack.c.l.b16 %v328
      %v1335 = vunpack.c.h.b16 %v328
      %v1336 = vunpack.c.l.b16 %v329
      %v1337 = vunpack.c.h.b16 %v329
      %v1338 = vunpack.c.l.b16 %v330
      %v1339 = vunpack.c.l.b16 %v331
      %v1340 = vunpack.c.h.b16 %v331
      %v1341 = vunpack.c.l.b16 %v332
      %v1342 = vunpack.c.h.b16 %v332
      %v1343 = vunpack.c.l.b16 %v333
      %v1344 = vunpack.c.h.b16 %v333
      %v1345 = vunpack.c.l.b16 %v334
      %v1346 = vunpack.c.h.b16 %v334
      %v1347 = vunpack.c.l.b16 %v335
      %v1348 = vunpack.c.l.b16 %v336
      %v1349 = vunpack.c.h.b16 %v336
      %v1350 = vunpack.c.l.b16 %v337
      %v1351 = vunpack.c.h.b16 %v337
      %v1352 = vunpack.c.l.b16 %v338
      %v1353 = vunpack.c.h.b16 %v338
      %v1354 = vunpack.c.l.b16 %v339
      %v1355 = vunpack.c.h.b16 %v339
      %v1356 = vunpack.c.l.b16 %v340
      %v1357 = vunpack.c.l.b16 %v341
      %v1358 = vunpack.c.h.b16 %v341
      %v1359 = vunpack.c.l.b16 %v342
      %v1360 = vunpack.c.h.b16 %v342
      %v1361 = vunpack.c.l.b16 %v343
      %v1362 = vunpack.c.h.b16 %v343
      %v1363 = vunpack.c.l.b16 %v344
      %v1364 = vunpack.c.h.b16 %v344
      %v1365 = vunpack.c.l.b16 %v345
      %v1366 = vunpack.c.l.b16 %v346
      %v1367 = vunpack.c.h.b16 %v346
      %v1368 = vunpack.c.l.b16 %v347
      %v1369 = vunpack.c.h.b16 %v347
      %v1370 = vunpack.c.l.b16 %v348
      %v1371 = vunpack.c.h.b16 %v348
      %v1372 = vunpack.c.l.b16 %v349
      %v1373 = vunpack.c.h.b16 %v349
      %v1374 = vunpack.c.l.b16 %v350
      %v1375 = vunpack.c.l.b16 %v351
      %v1376 = vunpack.c.h.b16 %v351
      %v1377 = vunpack.c.l.b16 %v352
      %v1378 = vunpack.c.h.b16 %v352
      %v1379 = vunpack.c.l.b16 %v353
      %v1380 = vunpack.c.h.b16 %v353
      %v1381 = vunpack.c.l.b16 %v354
      %v1382 = vunpack.c.h.b16 %v354
      %v1383 = vunpack.c.l.b16 %v355
      %v1384 = vunpack.c.l.b16 %v356
      %v1385 = vunpack.c.h.b16 %v356
      %v1386 = vunpack.c.l.b16 %v357
      %v1387 = vunpack.c.h.b16 %v357
      %v1388 = vunpack.c.l.b16 %v358
      %v1389 = vunpack.c.h.b16 %v358
      %v1390 = vunpack.c.l.b16 %v359
      %v1391 = vunpack.c.h.b16 %v359
      %v1392 = vunpack.c.l.b16 %v360
      %v1393 = vunpack.c.l.b16 %v361
      %v1394 = vunpack.c.h.b16 %v361
      %v1395 = vunpack.c.l.b16 %v362
      %v1396 = vunpack.c.h.b16 %v362
      %v1397 = vunpack.c.l.b16 %v363
      %v1398 = vunpack.c.h.b16 %v363
      %v1399 = vunpack.c.l.b16 %v364
      %v1400 = vunpack.c.h.b16 %v364
      %v1401 = vunpack.c.l.b16 %v365
      %v1402 = vunpack.c.l.b16 %v366
      %v1403 = vunpack.c.h.b16 %v366
      %v1404 = vunpack.c.l.b16 %v367
      %v1405 = vunpack.c.h.b16 %v367
      %v1406 = vunpack.c.l.b16 %v368
      %v1407 = vunpack.c.h.b16 %v368
      %v1408 = vunpack.c.l.b16 %v369
      %v1409 = vunpack.c.h.b16 %v369
      %v1410 = vunpack.c.l.b16 %v370
      %v1411 = vunpack.c.l.b16 %v371
      %v1412 = vunpack.c.h.b16 %v371
      %v1413 = vunpack.c.l.b16 %v372
      %v1414 = vunpack.c.h.b16 %v372
      %v1415 = vunpack.c.l.b16 %v373
      %v1416 = vunpack.c.h.b16 %v373
      %v1417 = vunpack.c.l.b16 %v374
      %v1418 = vunpack.c.h.b16 %v374
      %v1419 = vunpack.c.l.b16 %v375
      %v1420 = vunpack.c.l.b16 %v376
      %v1421 = vunpack.c.h.b16 %v376
      %v1422 = vunpack.c.l.b16 %v377
      %v1423 = vunpack.c.h.b16 %v377
      %v1424 = vunpack.c.l.b16 %v378
      %v1425 = vunpack.c.h.b16 %v378
      %v1426 = vunpack.c.l.b16 %v379
      %v1427 = vunpack.c.h.b16 %v379
      %v1428 = vunpack.c.l.b16 %v380
      %v1429 = vunpack.c.l.b16 %v381
      %v1430 = vunpack.c.h.b16 %v381
      %v1431 = vunpack.c.l.b16 %v382
      %v1432 = vunpack.c.h.b16 %v382
      %v1433 = vunpack.c.l.b16 %v383
      %v1434 = vunpack.c.h.b16 %v383
      %v1435 = vunpack.c.l.b16 %v384
      %v1436 = vunpack.c.h.b16 %v384
      %v1437 = vunpack.c.l.b16 %v385
      %v1438 = vunpack.c.l.b16 %v386
      %v1439 = vunpack.c.h.b16 %v386
      %v1440 = vunpack.c.l.b16 %v387
      %v1441 = vunpack.c.h.b16 %v387
      %v1442 = vunpack.c.l.b16 %v388
      %v1443 = vunpack.c.h.b16 %v388
      %v1444 = vunpack.c.l.b16 %v389
      %v1445 = vunpack.c.h.b16 %v389
      %v1446 = vunpack.c.l.b16 %v390
      %v1447 = vunpack.c.l.b16 %v391
      %v1448 = vunpack.c.h.b16 %v391
      %v1449 = vunpack.c.l.b16 %v392
      %v1450 = vunpack.c.h.b16 %v392
      %v1451 = vunpack.c.l.b16 %v393
      %v1452 = vunpack.c.h.b16 %v393
      %v1453 = vunpack.c.l.b16 %v394
      %v1454 = vunpack.c.h.b16 %v394
      %v1455 = vunpack.c.l.b16 %v395
      %v1456 = vunpack.c.l.b16 %v396
      %v1457 = vunpack.c.h.b16 %v396
      %v1458 = vunpack.c.l.b16 %v397
      %v1459 = vunpack.c.h.b16 %v397
      %v1460 = vunpack.c.l.b16 %v398
      %v1461 = vunpack.c.h.b16 %v398
      %v1462 = vunpack.c.l.b16 %v399
      %v1463 = vunpack.c.h.b16 %v399
      %v1464 = vunpack.c.l.b16 %v400
      %v1465 = vunpack.c.l.b16 %v401
      %v1466 = vunpack.c.h.b16 %v401
      %v1467 = vunpack.c.l.b16 %v402
      %v1468 = vunpack.c.h.b16 %v402
      %v1469 = vunpack.c.l.b16 %v403
      %v1470 = vunpack.c.h.b16 %v403
      %v1471 = vunpack.c.l.b16 %v404
      %v1472 = vunpack.c.h.b16 %v404
      %v1473 = vunpack.c.l.b16 %v405
      %v1474 = vunpack.c.l.b16 %v406
      %v1475 = vunpack.c.h.b16 %v406
      %v1476 = vunpack.c.l.b16 %v407
      %v1477 = vunpack.c.h.b16 %v407
      %v1478 = vunpack.c.l.b16 %v408
      %v1479 = vunpack.c.h.b16 %v408
      %v1480 = vunpack.c.l.b16 %v409
      %v1481 = vunpack.c.h.b16 %v409
      %v1482 = vunpack.c.l.b16 %v410
      %v1483 = vunpack.c.l.b16 %v411
      %v1484 = vunpack.c.h.b16 %v411
      %v1485 = vunpack.c.l.b16 %v412
      %v1486 = vunpack.c.h.b16 %v412
      %v1487 = vunpack.c.l.b16 %v413
      %v1488 = vunpack.c.h.b16 %v413
      %v1489 = vunpack.c.l.b16 %v414
      %v1490 = vunpack.c.h.b16 %v414
      %v1491 = vunpack.c.l.b16 %v415
      %v1492 = vunpack.c.l.b16 %v416
      %v1493 = vunpack.c.h.b16 %v416
      %v1494 = vunpack.c.l.b16 %v417
      %v1495 = vunpack.c.h.b16 %v417
      %v1496 = vunpack.c.l.b16 %v418
      %v1497 = vunpack.c.h.b16 %v418
      %v1498 = vunpack.c.l.b16 %v419
      %v1499 = vunpack.c.h.b16 %v419
      %v1500 = vunpack.c.l.b16 %v420
      %v1501 = vunpack.c.l.b16 %v421
      %v1502 = vunpack.c.h.b16 %v421
      %v1503 = vunpack.c.l.b16 %v422
      %v1504 = vunpack.c.h.b16 %v422
      %v1505 = vunpack.c.l.b16 %v423
      %v1506 = vunpack.c.h.b16 %v423
      %v1507 = vunpack.c.l.b16 %v424
      %v1508 = vunpack.c.h.b16 %v424
      %v1509 = vunpack.c.l.b16 %v425
      %v1510 = vunpack.c.l.b16 %v426
      %v1511 = vunpack.c.h.b16 %v426
      %v1512 = vunpack.c.l.b16 %v427
      %v1513 = vunpack.c.h.b16 %v427
      %v1514 = vunpack.c.l.b16 %v428
      %v1515 = vunpack.c.h.b16 %v428
      %v1516 = vunpack.c.l.b16 %v429
      %v1517 = vunpack.c.h.b16 %v429
      %v1518 = vunpack.c.l.b16 %v430
      %v1519 = vunpack.c.l.b16 %v431
      %v1520 = vunpack.c.h.b16 %v431
      %v1521 = vunpack.c.l.b16 %v432
      %v1522 = vunpack.c.h.b16 %v432
      %v1523 = vunpack.c.l.b16 %v433
      %v1524 = vunpack.c.h.b16 %v433
      %v1525 = vunpack.c.l.b16 %v434
      %v1526 = vunpack.c.h.b16 %v434
      %v1527 = vunpack.c.l.b16 %v435
      %v1528 = vunpack.c.l.b16 %v436
      %v1529 = vunpack.c.h.b16 %v436
      %v1530 = vunpack.c.l.b16 %v437
      %v1531 = vunpack.c.h.b16 %v437
      %v1532 = vunpack.c.l.b16 %v438
      %v1533 = vunpack.c.h.b16 %v438
      %v1534 = vunpack.c.l.b16 %v439
      %v1535 = vunpack.c.h.b16 %v439
      %v1536 = vunpack.c.l.b16 %v440
      %v1537 = vunpack.c.l.b16 %v441
      %v1538 = vunpack.c.h.b16 %v441
      %v1539 = vunpack.c.l.b16 %v442
      %v1540 = vunpack.c.h.b16 %v442
      %v1541 = vunpack.c.l.b16 %v443
      %v1542 = vunpack.c.h.b16 %v443
      %v1543 = vunpack.c.l.b16 %v444
      %v1544 = vunpack.c.h.b16 %v444
      %v1545 = vunpack.c.l.b16 %v445
      %v1546 = vunpack.c.l.b16 %v446
      %v1547 = vunpack.c.h.b16 %v446
      %v1548 = vunpack.c.l.b16 %v447
      %v1549 = vunpack.c.h.b16 %v447
      %v1550 = vunpack.c.l.b16 %v448
      %v1551 = vunpack.c.h.b16 %v448
      %v1552 = vunpack.c.l.b16 %v449
      %v1553 = vunpack.c.h.b16 %v449
      %v1554 = vunpack.c.l.b16 %v450
      %v1555 = vunpack.c.l.b16 %v451
      %v1556 = vunpack.c.h.b16 %v451
      %v1557 = vunpack.c.l.b16 %v452
      %v1558 = vunpack.c.h.b16 %v452
      %v1559 = vunpack.c.l.b16 %v453
      %v1560 = vunpack.c.h.b16 %v453
      %v1561 = vunpack.c.l.b16 %v454
      %v1562 = vunpack.c.h.b16 %v454
      %v1563 = vunpack.c.l.b16 %v455
      %v1564 = vunpack.c.l.b16 %v456
      %v1565 = vunpack.c.h.b16 %v456
      %v1566 = vunpack.c.l.b16 %v457
      %v1567 = vunpack.c.h.b16 %v457
      %v1568 = vunpack.c.l.b16 %v458
      %v1569 = vunpack.c.h.b16 %v458
      %v1570 = vunpack.c.l.b16 %v459
      %v1571 = vunpack.c.h.b16 %v459
      %v1572 = vunpack.c.l.b16 %v460
      %v1573 = vunpack.c.l.b16 %v461
      %v1574 = vunpack.c.h.b16 %v461
      %v1575 = vunpack.c.l.b16 %v462
      %v1576 = vunpack.c.h.b16 %v462
      %v1577 = vunpack.c.l.b16 %v463
      %v1578 = vunpack.c.h.b16 %v463
      %v1579 = vunpack.c.l.b16 %v464
      %v1580 = vunpack.c.h.b16 %v464
      %v1581 = vunpack.c.l.b16 %v465
      %v1582 = vunpack.c.l.b16 %v466
      %v1583 = vunpack.c.h.b16 %v466
      %v1584 = vunpack.c.l.b16 %v467
      %v1585 = vunpack.c.h.b16 %v467
      %v1586 = vunpack.c.l.b16 %v468
      %v1587 = vunpack.c.h.b16 %v468
      %v1588 = vunpack.c.l.b16 %v469
      %v1589 = vunpack.c.h.b16 %v469
      %v1590 = vunpack.c.l.b16 %v470
      %v1591 = vunpack.c.l.b16 %v471
      %v1592 = vunpack.c.h.b16 %v471
      %v1593 = vunpack.c.l.b16 %v472
      %v1594 = vunpack.c.h.b16 %v472
      %v1595 = vunpack.c.l.b16 %v473
      %v1596 = vunpack.c.h.b16 %v473
      %v1597 = vunpack.c.l.b16 %v474
      %v1598 = vunpack.c.h.b16 %v474
      %v1599 = vunpack.c.l.b16 %v475
      %v1600 = vunpack.c.l.b16 %v476
      %v1601 = vunpack.c.h.b16 %v476
      %v1602 = vunpack.c.l.b16 %v477
      %v1603 = vunpack.c.h.b16 %v477
      %v1604 = vunpack.c.l.b16 %v478
      %v1605 = vunpack.c.h.b16 %v478
      %v1606 = vunpack.c.l.b16 %v479
      %v1607 = vunpack.c.h.b16 %v479
      %v1608 = vunpack.c.l.b16 %v480
      %v1609 = vunpack.c.l.b16 %v481
      %v1610 = vunpack.c.h.b16 %v481
      %v1611 = vunpack.c.l.b16 %v482
      %v1612 = vunpack.c.h.b16 %v482
      %v1613 = vunpack.c.l.b16 %v483
      %v1614 = vunpack.c.h.b16 %v483
      %v1615 = vunpack.c.l.b16 %v484
      %v1616 = vunpack.c.h.b16 %v484
      %v1617 = vunpack.c.l.b16 %v485
      %v1618 = vunpack.c.l.b16 %v486
      %v1619 = vunpack.c.h.b16 %v486
      %v1620 = vunpack.c.l.b16 %v487
      %v1621 = vunpack.c.h.b16 %v487
      %v1622 = vunpack.c.l.b16 %v488
      %v1623 = vunpack.c.h.b16 %v488
      %v1624 = vunpack.c.l.b16 %v489
      %v1625 = vunpack.c.h.b16 %v489
      %v1626 = vunpack.c.l.b16 %v490
      %v1627 = vunpack.c.l.b16 %v491
      %v1628 = vunpack.c.h.b16 %v491
      %v1629 = vunpack.c.l.b16 %v492
      %v1630 = vunpack.c.h.b16 %v492
      %v1631 = vunpack.c.l.b16 %v493
      %v1632 = vunpack.c.h.b16 %v493
      %v1633 = vunpack.c.l.b16 %v494
      %v1634 = vunpack.c.h.b16 %v494
      %v1635 = vunpack.c.l.b16 %v495
      %v1636 = vunpack.c.l.b16 %v496
      %v1637 = vunpack.c.h.b16 %v496
      %v1638 = vunpack.c.l.b16 %v497
      %v1639 = vunpack.c.h.b16 %v497
      %v1640 = vunpack.c.l.b16 %v498
      %v1641 = vunpack.c.h.b16 %v498
      %v1642 = vunpack.c.l.b16 %v499
      %v1643 = vunpack.c.h.b16 %v499
      %v1644 = vunpack.c.l.b16 %v500
      %v1645 = vunpack.c.l.b16 %v501
      %v1646 = vunpack.c.h.b16 %v501
      %v1647 = vunpack.c.l.b16 %v502
      %v1648 = vunpack.c.h.b16 %v502
      %v1649 = vunpack.c.l.b16 %v503
      %v1650 = vunpack.c.h.b16 %v503
      %v1651 = vunpack.c.l.b16 %v504
      %v1652 = vunpack.c.h.b16 %v504
      %v1653 = vunpack.c.l.b16 %v505
      %v1654 = vunpack.c.l.b16 %v506
      %v1655 = vunpack.c.h.b16 %v506
      %v1656 = vunpack.c.l.b16 %v507
      %v1657 = vunpack.c.h.b16 %v507
      %v1658 = vunpack.c.l.b16 %v508
      %v1659 = vunpack.c.h.b16 %v508
      %v1660 = vunpack.c.l.b16 %v509
      %v1661 = vunpack.c.h.b16 %v509
      %v1662 = vunpack.c.l.b16 %v510
      %v1663 = vpack.c.b16 %v1024, %v1015
      %v1664 = vpack.c.b16 %v1025, %v1016
      %v1665 = vpack.c.b16 %v1026, %v1017
      %v1666 = vpack.c.b16 %v1027, %v1018
      %v1667 = vpack.c.b16 %v1028, %v1019
      %v1668 = vpack.c.b16 %v1029, %v1020
      %v1669 = vpack.c.b16 %v1030, %v1021
      %v1670 = vpack.c.b16 %v1031, %v1022
      %v1671 = vpack.c.b16 %v1032, %v1023
      %v1672 = vpack.c.b16 %v1042, %v1033
      %v1673 = vpack.c.b16 %v1043, %v1034
      %v1674 = vpack.c.b16 %v1044, %v1035
      %v1675 = vpack.c.b16 %v1045, %v1036
      %v1676 = vpack.c.b16 %v1046, %v1037
      %v1677 = vpack.c.b16 %v1047, %v1038
      %v1678 = vpack.c.b16 %v1048, %v1039
      %v1679 = vpack.c.b16 %v1049, %v1040
      %v1680 = vpack.c.b16 %v1050, %v1041
      %v1681 = vpack.c.b16 %v1060, %v1051
      %v1682 = vpack.c.b16 %v1061, %v1052
      %v1683 = vpack.c.b16 %v1062, %v1053
      %v1684 = vpack.c.b16 %v1063, %v1054
      %v1685 = vpack.c.b16 %v1064, %v1055
      %v1686 = vpack.c.b16 %v1065, %v1056
      %v1687 = vpack.c.b16 %v1066, %v1057
      %v1688 = vpack.c.b16 %v1067, %v1058
      %v1689 = vpack.c.b16 %v1068, %v1059
      %v1690 = vpack.c.b16 %v1078, %v1069
      %v1691 = vpack.c.b16 %v1079, %v1070
      %v1692 = vpack.c.b16 %v1080, %v1071
      %v1693 = vpack.c.b16 %v1081, %v1072
      %v1694 = vpack.c.b16 %v1082, %v1073
      %v1695 = vpack.c.b16 %v1083, %v1074
      %v1696 = vpack.c.b16 %v1084, %v1075
      %v1697 = vpack.c.b16 %v1085, %v1076
      %v1698 = vpack.c.b16 %v1086, %v1077
      %v1699 = vpack.c.b16 %v1096, %v1087
      %v1700 = vpack.c.b16 %v1097, %v1088
      %v1701 = vpack.c.b16 %v1098, %v1089
      %v1702 = vpack.c.b16 %v1099, %v1090
      %v1703 = vpack.c.b16 %v1100, %v1091
      %v1704 = vpack.c.b16 %v1101, %v1092
      %v1705 = vpack.c.b16 %v1102, %v1093
      %v1706 = vpack.c.b16 %v1103, %v1094
      %v1707 = vpack.c.b16 %v1104, %v1095
      %v1708 = vpack.c.b16 %v1114, %v1105
      %v1709 = vpack.c.b16 %v1115, %v1106
      %v1710 = vpack.c.b16 %v1116, %v1107
      %v1711 = vpack.c.b16 %v1117, %v1108
      %v1712 = vpack.c.b16 %v1118, %v1109
      %v1713 = vpack.c.b16 %v1119, %v1110
      %v1714 = vpack.c.b16 %v1120, %v1111
      %v1715 = vpack.c.b16 %v1121, %v1112
      %v1716 = vpack.c.b16 %v1122, %v1113
      %v1717 = vpack.c.b16 %v1132, %v1123
      %v1718 = vpack.c.b16 %v1133, %v1124
      %v1719 = vpack.c.b16 %v1134, %v1125
      %v1720 = vpack.c.b16 %v1135, %v1126
      %v1721 = vpack.c.b16 %v1136, %v1127
      %v1722 = vpack.c.b16 %v1137, %v1128
      %v1723 = vpack.c.b16 %v1138, %v1129
      %v1724 = vpack.c.b16 %v1139, %v1130
      %v1725 = vpack.c.b16 %v1140, %v1131
      %v1726 = vpack.c.b16 %v1150, %v1141
      %v1727 = vpack.c.b16 %v1151, %v1142
      %v1728 = vpack.c.b16 %v1152, %v1143
      %v1729 = vpack.c.b16 %v1153, %v1144
      %v1730 = vpack.c.b16 %v1154, %v1145
      %v1731 = vpack.c.b16 %v1155, %v1146
      %v1732 = vpack.c.b16 %v1156, %v1147
      %v1733 = vpack.c.b16 %v1157, %v1148
      %v1734 = vpack.c.b16 %v1158, %v1149
      %v1735 = vpack.c.b16 %v1168, %v1159
      %v1736 = vpack.c.b16 %v1169, %v1160
      %v1737 = vpack.c.b16 %v1170, %v1161
      %v1738 = vpack.c.b16 %v1171, %v1162
      %v1739 = vpack.c.b16 %v1172, %v1163
      %v1740 = vpack.c.b16 %v1173, %v1164
      %v1741 = vpack.c.b16 %v1174, %v1165
      %v1742 = vpack.c.b16 %v1175, %v1166
      %v1743 = vpack.c.b16 %v1176, %v1167
      %v1744 = vpack.c.b16 %v1186, %v1177
      %v1745 = vpack.c.b16 %v1187, %v1178
      %v1746 = vpack.c.b16 %v1188, %v1179
      %v1747 = vpack.c.b16 %v1189, %v1180
      %v1748 = vpack.c.b16 %v1190, %v1181
      %v1749 = vpack.c.b16 %v1191, %v1182
      %v1750 = vpack.c.b16 %v1192, %v1183
      %v1751 = vpack.c.b16 %v1193, %v1184
      %v1752 = vpack.c.b16 %v1194, %v1185
      %v1753 = vpack.c.b16 %v1204, %v1195
      %v1754 = vpack.c.b16 %v1205, %v1196
      %v1755 = vpack.c.b16 %v1206, %v1197
      %v1756 = vpack.c.b16 %v1207, %v1198
      %v1757 = vpack.c.b16 %v1208, %v1199
      %v1758 = vpack.c.b16 %v1209, %v1200
      %v1759 = vpack.c.b16 %v1210, %v1201
      %v1760 = vpack.c.b16 %v1211, %v1202
      %v1761 = vpack.c.b16 %v1212, %v1203
      %v1762 = vpack.c.b16 %v1222, %v1213
      %v1763 = vpack.c.b16 %v1223, %v1214
      %v1764 = vpack.c.b16 %v1224, %v1215
      %v1765 = vpack.c.b16 %v1225, %v1216
      %v1766 = vpack.c.b16 %v1226, %v1217
      %v1767 = vpack.c.b16 %v1227, %v1218
      %v1768 = vpack.c.b16 %v1228, %v1219
      %v1769 = vpack.c.b16 %v1229, %v1220
      %v1770 = vpack.c.b16 %v1230, %v1221
      %v1771 = vpack.c.b16 %v1240, %v1231
      %v1772 = vpack.c.b16 %v1241, %v1232
      %v1773 = vpack.c.b16 %v1242, %v1233
      %v1774 = vpack.c.b16 %v1243, %v1234
      %v1775 = vpack.c.b16 %v1244, %v1235
      %v1776 = vpack.c.b16 %v1245, %v1236
      %v1777 = vpack.c.b16 %v1246, %v1237
      %v1778 = vpack.c.b16 %v1247, %v1238
      %v1779 = vpack.c.b16 %v1248, %v1239
      %v1780 = vpack.c.b16 %v1258, %v1249
      %v1781 = vpack.c.b16 %v1259, %v1250
      %v1782 = vpack.c.b16 %v1260, %v1251
      %v1783 = vpack.c.b16 %v1261, %v1252
      %v1784 = vpack.c.b16 %v1262, %v1253
      %v1785 = vpack.c.b16 %v1263, %v1254
      %v1786 = vpack.c.b16 %v1264, %v1255
      %v1787 = vpack.c.b16 %v1265, %v1256
      %v1788 = vpack.c.b16 %v1266, %v1257
      %v1789 = vpack.c.b16 %v1276, %v1267
      %v1790 = vpack.c.b16 %v1277, %v1268
      %v1791 = vpack.c.b16 %v1278, %v1269
      %v1792 = vpack.c.b16 %v1279, %v1270
      %v1793 = vpack.c.b16 %v1280, %v1271
      %v1794 = vpack.c.b16 %v1281, %v1272
      %v1795 = vpack.c.b16 %v1282, %v1273
      %v1796 = vpack.c.b16 %v1283, %v1274
      %v1797 = vpack.c.b16 %v1284, %v1275
      %v1798 = vpack.c.b16 %v1294, %v1285
      %v1799 = vpack.c.b16 %v1295, %v1286
      %v1800 = vpack.c.b16 %v1296, %v1287
      %v1801 = vpack.c.b16 %v1297, %v1288
      %v1802 = vpack.c.b16 %v1298, %v1289
      %v1803 = vpack.c.b16 %v1299, %v1290
      %v1804 = vpack.c.b16 %v1300, %v1291
      %v1805 = vpack.c.b16 %v1301, %v1292
      %v1806 = vpack.c.b16 %v1302, %v1293
      %v1807 = vpack.c.b16 %v1312, %v1303
      %v1808 = vpack.c.b16 %v1313, %v1304
      %v1809 = vpack.c.b16 %v1314, %v1305
      %v1810 = vpack.c.b16 %v1315, %v1306
      %v1811 = vpack.c.b16 %v1316, %v1307
      %v1812 = vpack.c.b16 %v1317, %v1308
      %v1813 = vpack.c.b16 %v1318, %v1309
      %v1814 = vpack.c.b16 %v1319, %v1310
      %v1815 = vpack.c.b16 %v1320, %v1311
      %v1816 = vpack.c.b16 %v1330, %v1321
      %v1817 = vpack.c.b16 %v1331, %v1322
      %v1818 = vpack.c.b16 %v1332, %v1323
      %v1819 = vpack.c.b16 %v1333, %v1324
      %v1820 = vpack.c.b16 %v1334, %v1325
      %v1821 = vpack.c.b16 %v1335, %v1326
      %v1822 = vpack.c.b16 %v1336, %v1327
      %v1823 = vpack.c.b16 %v1337, %v1328
      %v1824 = vpack.c.b16 %v1338, %v1329
      %v1825 = vpack.c.b16 %v1348, %v1339
      %v1826 = vpack.c.b16 %v1349, %v1340
      %v1827 = vpack.c.b16 %v1350, %v1341
      %v1828 = vpack.c.b16 %v1351, %v1342
      %v1829 = vpack.c.b16 %v1352, %v1343
      %v1830 = vpack.c.b16 %v1353, %v1344
      %v1831 = vpack.c.b16 %v1354, %v1345
      %v1832 = vpack.c.b16 %v1355, %v1346
      %v1833 = vpack.c.b16 %v1356, %v1347
      %v1834 = vpack.c.b16 %v1366, %v1357
      %v1835 = vpack.c.b16 %v1367, %v1358
      %v1836 = vpack.c.b16 %v1368, %v1359
      %v1837 = vpack.c.b16 %v1369, %v1360
      %v1838 = vpack.c.b16 %v1370, %v1361
      %v1839 = vpack.c.b16 %v1371, %v1362
      %v1840 = vpack.c.b16 %v1372, %v1363
      %v1841 = vpack.c.b16 %v1373, %v1364
      %v1842 = vpack.c.b16 %v1374, %v1365
      %v1843 = vpack.c.b16 %v1384, %v1375
      %v1844 = vpack.c.b16 %v1385, %v1376
      %v1845 = vpack.c.b16 %v1386, %v1377
      %v1846 = vpack.c.b16 %v1387, %v1378
      %v1847 = vpack.c.b16 %v1388, %v1379
      %v1848 = vpack.c.b16 %v1389, %v1380
      %v1849 = vpack.c.b16 %v1390, %v1381
      %v1850 = vpack.c.b16 %v1391, %v1382
      %v1851 = vpack.c.b16 %v1392, %v1383
      %v1852 = vpack.c.b16 %v1402, %v1393
      %v1853 = vpack.c.b16 %v1403, %v1394
      %v1854 = vpack.c.b16 %v1404, %v1395
      %v1855 = vpack.c.b16 %v1405, %v1396
      %v1856 = vpack.c.b16 %v1406, %v1397
      %v1857 = vpack.c.b16 %v1407, %v1398
      %v1858 = vpack.c.b16 %v1408, %v1399
      %v1859 = vpack.c.b16 %v1409, %v1400
      %v1860 = vpack.c.b16 %v1410, %v1401
      %v1861 = vpack.c.b16 %v1420, %v1411
      %v1862 = vpack.c.b16 %v1421, %v1412
      %v1863 = vpack.c.b16 %v1422, %v1413
      %v1864 = vpack.c.b16 %v1423, %v1414
      %v1865 = vpack.c.b16 %v1424, %v1415
      %v1866 = vpack.c.b16 %v1425, %v1416
      %v1867 = vpack.c.b16 %v1426, %v1417
      %v1868 = vpack.c.b16 %v1427, %v1418
      %v1869 = vpack.c.b16 %v1428, %v1419
      %v1870 = vpack.c.b16 %v1438, %v1429
      %v1871 = vpack.c.b16 %v1439, %v1430
      %v1872 = vpack.c.b16 %v1440, %v1431
      %v1873 = vpack.c.b16 %v1441, %v1432
      %v1874 = vpack.c.b16 %v1442, %v1433
      %v1875 = vpack.c.b16 %v1443, %v1434
      %v1876 = vpack.c.b16 %v1444, %v1435
      %v1877 = vpack.c.b16 %v1445, %v1436
      %v1878 = vpack.c.b16 %v1446, %v1437
      %v1879 = vpack.c.b16 %v1456, %v1447
      %v1880 = vpack.c.b16 %v1457, %v1448
      %v1881 = vpack.c.b16 %v1458, %v1449
      %v1882 = vpack.c.b16 %v1459, %v1450
      %v1883 = vpack.c.b16 %v1460, %v1451
      %v1884 = vpack.c.b16 %v1461, %v1452
      %v1885 = vpack.c.b16 %v1462, %v1453
      %v1886 = vpack.c.b16 %v1463, %v1454
      %v1887 = vpack.c.b16 %v1464, %v1455
      %v1888 = vpack.c.b16 %v1474, %v1465
      %v1889 = vpack.c.b16 %v1475, %v1466
      %v1890 = vpack.c.b16 %v1476, %v1467
      %v1891 = vpack.c.b16 %v1477, %v1468
      %v1892 = vpack.c.b16 %v1478, %v1469
      %v1893 = vpack.c.b16 %v1479, %v1470
      %v1894 = vpack.c.b16 %v1480, %v1471
      %v1895 = vpack.c.b16 %v1481, %v1472
      %v1896 = vpack.c.b16 %v1482, %v1473
      %v1897 = vpack.c.b16 %v1492, %v1483
      %v1898 = vpack.c.b16 %v1493, %v1484
      %v1899 = vpack.c.b16 %v1494, %v1485
      %v1900 = vpack.c.b16 %v1495, %v1486
      %v1901 = vpack.c.b16 %v1496, %v1487
      %v1902 = vpack.c.b16 %v1497, %v1488
      %v1903 = vpack.c.b16 %v1498, %v1489
      %v1904 = vpack.c.b16 %v1499, %v1490
      %v1905 = vpack.c.b16 %v1500, %v1491
      %v1906 = vpack.c.b16 %v1510, %v1501
      %v1907 = vpack.c.b16 %v1511, %v1502
      %v1908 = vpack.c.b16 %v1512, %v1503
      %v1909 = vpack.c.b16 %v1513, %v1504
      %v1910 = vpack.c.b16 %v1514, %v1505
      %v1911 = vpack.c.b16 %v1515, %v1506
      %v1912 = vpack.c.b16 %v1516, %v1507
      %v1913 = vpack.c.b16 %v1517, %v1508
      %v1914 = vpack.c.b16 %v1518, %v1509
      %v1915 = vpack.c.b16 %v1528, %v1519
      %v1916 = vpack.c.b16 %v1529, %v1520
      %v1917 = vpack.c.b16 %v1530, %v1521
      %v1918 = vpack.c.b16 %v1531, %v1522
      %v1919 = vpack.c.b16 %v1532, %v1523
      %v1920 = vpack.c.b16 %v1533, %v1524
      %v1921 = vpack.c.b16 %v1534, %v1525
      %v1922 = vpack.c.b16 %v1535, %v1526
      %v1923 = vpack.c.b16 %v1536, %v1527
      %v1924 = vpack.c.b16 %v1546, %v1537
      %v1925 = vpack.c.b16 %v1547, %v1538
      %v1926 = vpack.c.b16 %v1548, %v1539
      %v1927 = vpack.c.b16 %v1549, %v1540
      %v1928 = vpack.c.b16 %v1550, %v1541
      %v1929 = vpack.c.b16 %v1551, %v1542
      %v1930 = vpack.c.b16 %v1552, %v1543
      %v1931 = vpack.c.b16 %v1553, %v1544
      %v1932 = vpack.c.b16 %v1554, %v1545
      %v1933 = vpack.c.b16 %v1564, %v1555
      %v1934 = vpack.c.b16 %v1565, %v1556
      %v1935 = vpack.c.b16 %v1566, %v1557
      %v1936 = vpack.c.b16 %v1567, %v1558
      %v1937 = vpack.c.b16 %v1568, %v1559
      %v1938 = vpack.c.b16 %v1569, %v1560
      %v1939 = vpack.c.b16 %v1570, %v1561
      %v1940 = vpack.c.b16 %v1571, %v1562
      %v1941 = vpack.c.b16 %v1572, %v1563
      %v1942 = vpack.c.b16 %v1582, %v1573
      %v1943 = vpack.c.b16 %v1583, %v1574
      %v1944 = vpack.c.b16 %v1584, %v1575
      %v1945 = vpack.c.b16 %v1585, %v1576
      %v1946 = vpack.c.b16 %v1586, %v1577
      %v1947 = vpack.c.b16 %v1587, %v1578
      %v1948 = vpack.c.b16 %v1588, %v1579
      %v1949 = vpack.c.b16 %v1589, %v1580
      %v1950 = vpack.c.b16 %v1590, %v1581
      %v1951 = vpack.c.b16 %v1600, %v1591
      %v1952 = vpack.c.b16 %v1601, %v1592
      %v1953 = vpack.c.b16 %v1602, %v1593
      %v1954 = vpack.c.b16 %v1603, %v1594
      %v1955 = vpack.c.b16 %v1604, %v1595
      %v1956 = vpack.c.b16 %v1605, %v1596
      %v1957 = vpack.c.b16 %v1606, %v1597
      %v1958 = vpack.c.b16 %v1607, %v1598
      %v1959 = vpack.c.b16 %v1608, %v1599
      %v1960 = vpack.c.b16 %v1618, %v1609
      %v1961 = vpack.c.b16 %v1619, %v1610
      %v1962 = vpack.c.b16 %v1620, %v1611
      %v1963 = vpack.c.b16 %v1621, %v1612
      %v1964 = vpack.c.b16 %v1622, %v1613
      %v1965 = vpack.c.b16 %v1623, %v1614
      %v1966 = vpack.c.b16 %v1624, %v1615
      %v1967 = vpack.c.b16 %v1625, %v1616
      %v1968 = vpack.c.b16 %v1626, %v1617
      %v1969 = vpack.c.b16 %v1636, %v1627
      %v1970 = vpack.c.b16 %v1637, %v1628
      %v1971 = vpack.c.b16 %v1638, %v1629
      %v1972 = vpack.c.b16 %v1639, %v1630
      %v1973 = vpack.c.b16 %v1640, %v1631
      %v1974 = vpack.c.b16 %v1641, %v1632
      %v1975 = vpack.c.b16 %v1642, %v1633
      %v1976 = vpack.c.b16 %v1643, %v1634
      %v1977 = vpack.c.b16 %v1644, %v1635
      %v1978 = vpack.c.b16 %v1654, %v1645
      %v1979 = vpack.c.b16 %v1655, %v1646
      %v1980 = vpack.c.b16 %v1656, %v1647
      %v1981 = vpack.c.b16 %v1657, %v1648
      %v1982 = vpack.c.b16 %v1658, %v1649
      %v1983 = vpack.c.b16 %v1659, %v1650
      %v1984 = vpack.c.b16 %v1660, %v1651
      %v1985 = vpack.c.b16 %v1661, %v1652
      %v1986 = vpack.c.b16 %v1662, %v1653
      %v2455 = vunpack.c.l.b16 %v511
      %v2456 = vunpack.c.l.b16 %v512
      %v2457 = vunpack.c.l.b16 %v513
      %v2458 = vunpack.c.l.b16 %v514
      %v2459 = vunpack.c.l.b16 %v515
      %v2460 = vunpack.c.l.b16 %v516
      %v2461 = vunpack.c.l.b16 %v517
      %v2462 = vunpack.c.l.b16 %v518
      %v2463 = vunpack.c.l.b16 %v519
      %v2464 = vunpack.c.l.b16 %v520
      %v2465 = vunpack.c.l.b16 %v521
      %v2466 = vunpack.c.l.b16 %v522
      %v2467 = vunpack.c.l.b16 %v523
      %v2468 = vunpack.c.l.b16 %v524
      %v2469 = vunpack.c.l.b16 %v525
      %v2470 = vunpack.c.l.b16 %v526
      %v2471 = vunpack.c.l.b16 %v527
      %v2472 = vunpack.c.l.b16 %v528
      %v2473 = vunpack.c.l.b16 %v529
      %v2474 = vunpack.c.l.b16 %v530
      %v2475 = vunpack.c.l.b16 %v531
      %v2476 = vunpack.c.l.b16 %v532
      %v2477 = vunpack.c.l.b16 %v533
      %v2478 = vunpack.c.l.b16 %v534
      %v2479 = vunpack.c.l.b16 %v535
      %v2480 = vunpack.c.l.b16 %v536
      %v2481 = vunpack.c.l.b16 %v537
      %v2482 = vunpack.c.l.b16 %v538
      %v2483 = vunpack.c.l.b16 %v539
      %v2484 = vunpack.c.l.b16 %v540
      %v2485 = vunpack.c.l.b16 %v541
      %v2486 = vunpack.c.l.b16 %v542
      %v2487 = vunpack.c.l.b16 %v543
      %v2488 = vunpack.c.l.b16 %v544
      %v2489 = vunpack.c.l.b16 %v545
      %v2490 = vunpack.c.l.b16 %v546
      %v2491 = vunpack.c.l.b16 %v547
      %v2492 = vunpack.c.l.b16 %v548
      %v2493 = vunpack.c.l.b16 %v549
      %v2494 = vunpack.c.l.b16 %v550
      %v2495 = vunpack.c.l.b16 %v551
      %v2496 = vunpack.c.l.b16 %v552
      %v2497 = vunpack.c.l.b16 %v553
      %v2498 = vunpack.c.l.b16 %v554
      %v2499 = vunpack.c.l.b16 %v555
      %v2500 = vunpack.c.l.b16 %v556
      %v2501 = vunpack.c.l.b16 %v557
      %v2502 = vunpack.c.l.b16 %v558
      %v2503 = vunpack.c.l.b16 %v559
      %v2504 = vunpack.c.l.b16 %v560
      %v2505 = vunpack.c.l.b16 %v561
      %v2506 = vunpack.c.l.b16 %v562
      %v2507 = vunpack.c.l.b16 %v563
      %v2508 = vunpack.c.l.b16 %v564
      %v2509 = vunpack.c.l.b16 %v565
      %v2510 = vunpack.c.l.b16 %v566
      %v2511 = vunpack.c.l.b16 %v567
      %v2512 = vunpack.c.l.b16 %v568
      %v2513 = vunpack.c.l.b16 %v569
      %v2514 = vunpack.c.l.b16 %v570
      %v2515 = vunpack.c.l.b16 %v571
      %v2516 = vunpack.c.l.b16 %v572
      %v2517 = vunpack.c.l.b16 %v573
      %v2518 = vunpack.c.l.b16 %v574
      %v2519 = vunpack.c.l.b16 %v575
      %v2520 = vunpack.c.l.b16 %v576
      %v2521 = vunpack.c.l.b16 %v577
      %v2522 = vunpack.c.l.b16 %v578
      %v2523 = vunpack.c.l.b16 %v579
      %v2524 = vunpack.c.l.b16 %v580
      %v2525 = vunpack.c.l.b16 %v581
      %v2526 = vunpack.c.l.b16 %v582
      %v2527 = vunpack.c.l.b16 %v583
      %v2528 = vunpack.c.l.b16 %v584
      %v2529 = vunpack.c.l.b16 %v585
      %v2530 = vunpack.c.l.b16 %v586
      %v2531 = vunpack.c.l.b16 %v587
      %v2532 = vunpack.c.l.b16 %v588
      %v2533 = vunpack.c.l.b16 %v589
      %v2534 = vunpack.c.l.b16 %v590
      %v2535 = vunpack.c.l.b16 %v591
      %v2536 = vunpack.c.l.b16 %v592
      %v2537 = vunpack.c.l.b16 %v593
      %v2538 = vunpack.c.l.b16 %v594
      %v2539 = vunpack.c.l.b16 %v595
      %v2540 = vunpack.c.l.b16 %v596
      %v2541 = vunpack.c.l.b16 %v597
      %v2542 = vunpack.c.l.b16 %v598
      %v2543 = vunpack.c.l.b16 %v599
      %v2544 = vunpack.c.l.b16 %v600
      %v2545 = vunpack.c.l.b16 %v601
      %v2546 = vunpack.c.l.b16 %v602
      %v2547 = vunpack.c.l.b16 %v603
      %v2548 = vunpack.c.l.b16 %v604
      %v2549 = vunpack.c.l.b16 %v605
      %v2550 = vunpack.c.l.b16 %v606
      %v2551 = vunpack.c.l.b16 %v607
      %v2552 = vunpack.c.l.b16 %v608
      %v2553 = vunpack.c.l.b16 %v609
      %v2554 = vunpack.c.l.b16 %v610
      %v2555 = vunpack.c.l.b16 %v611
      %v2556 = vunpack.c.l.b16 %v612
      %v2557 = vunpack.c.l.b16 %v613
      %v2558 = vunpack.c.l.b16 %v614
      %v2559 = vunpack.c.l.b16 %v615
      %v2560 = vunpack.c.l.b16 %v616
      %v2561 = vunpack.c.l.b16 %v617
      %v2562 = vunpack.c.l.b16 %v618
      %v2563 = vunpack.c.l.b16 %v619
      %v2564 = vunpack.c.l.b16 %v620
      %v2565 = vunpack.c.l.b16 %v621
      %v2566 = vunpack.c.l.b16 %v622
      %v2567 = vunpack.c.l.b16 %v623
      %v2568 = vunpack.c.l.b16 %v624
      %v2569 = vunpack.c.l.b16 %v625
      %v2570 = vunpack.c.l.b16 %v626
      %v2571 = vunpack.c.l.b16 %v627
      %v2572 = vunpack.c.l.b16 %v628
      %v2573 = vunpack.c.l.b16 %v629
      %v2574 = vunpack.c.l.b16 %v630
      %v2575 = vunpack.c.l.b16 %v631
      %v2576 = vunpack.c.l.b16 %v632
      %v2577 = vunpack.c.l.b16 %v633
      %v2578 = vunpack.c.l.b16 %v634
      %v2579 = vunpack.c.l.b16 %v635
      %v2580 = vunpack.c.l.b16 %v636
      %v2581 = vunpack.c.l.b16 %v637
      %v2582 = vunpack.c.l.b16 %v638
      %v2583 = vunpack.c.l.b16 %v639
      %v2584 = vunpack.c.l.b16 %v640
      %v2585 = vunpack.c.l.b16 %v641
      %v2586 = vunpack.c.l.b16 %v642
      %v2587 = vunpack.c.l.b16 %v643
      %v2588 = vunpack.c.l.b16 %v644
      %v2589 = vunpack.c.l.b16 %v645
      %v2590 = vunpack.c.l.b16 %v646
      %v2591 = vunpack.c.l.b16 %v647
      %v2592 = vunpack.c.l.b16 %v648
      %v2593 = vunpack.c.l.b16 %v649
      %v2594 = vunpack.c.l.b16 %v650
      %v2595 = vunpack.c.l.b16 %v651
      %v2596 = vunpack.c.l.b16 %v652
      %v2597 = vunpack.c.l.b16 %v653
      %v2598 = vunpack.c.l.b16 %v654
      %v2599 = vpack.c.b16 %v2456, %v2455
      %v2600 = vpack.c.b16 %v2458, %v2457
      %v2601 = vpack.c.b16 %v2460, %v2459
      %v2602 = vpack.c.b16 %v2462, %v2461
      %v2603 = vpack.c.b16 %v2464, %v2463
      %v2604 = vpack.c.b16 %v2466, %v2465
      %v2605 = vpack.c.b16 %v2468, %v2467
      %v2606 = vpack.c.b16 %v2470, %v2469
      %v2607 = vpack.c.b16 %v2472, %v2471
      %v2608 = vpack.c.b16 %v2474, %v2473
      %v2609 = vpack.c.b16 %v2476, %v2475
      %v2610 = vpack.c.b16 %v2478, %v2477
      %v2611 = vpack.c.b16 %v2480, %v2479
      %v2612 = vpack.c.b16 %v2482, %v2481
      %v2613 = vpack.c.b16 %v2484, %v2483
      %v2614 = vpack.c.b16 %v2486, %v2485
      %v2615 = vpack.c.b16 %v2488, %v2487
      %v2616 = vpack.c.b16 %v2490, %v2489
      %v2617 = vpack.c.b16 %v2492, %v2491
      %v2618 = vpack.c.b16 %v2494, %v2493
      %v2619 = vpack.c.b16 %v2496, %v2495
      %v2620 = vpack.c.b16 %v2498, %v2497
      %v2621 = vpack.c.b16 %v2500, %v2499
      %v2622 = vpack.c.b16 %v2502, %v2501
      %v2623 = vpack.c.b16 %v2504, %v2503
      %v2624 = vpack.c.b16 %v2506, %v2505
      %v2625 = vpack.c.b16 %v2508, %v2507
      %v2626 = vpack.c.b16 %v2510, %v2509
      %v2627 = vpack.c.b16 %v2512, %v2511
      %v2628 = vpack.c.b16 %v2514, %v2513
      %v2629 = vpack.c.b16 %v2516, %v2515
      %v2630 = vpack.c.b16 %v2518, %v2517
      %v2631 = vpack.c.b16 %v2520, %v2519
      %v2632 = vpack.c.b16 %v2522, %v2521
      %v2633 = vpack.c.b16 %v2524, %v2523
      %v2634 = vpack.c.b16 %v2526, %v2525
      %v2635 = vpack.c.b16 %v2528, %v2527
      %v2636 = vpack.c.b16 %v2530, %v2529
      %v2637 = vpack.c.b16 %v2532, %v2531
      %v2638 = vpack.c.b16 %v2534, %v2533
      %v2639 = vpack.c.b16 %v2536, %v2535
      %v2640 = vpack.c.b16 %v2538, %v2537
      %v2641 = vpack.c.b16 %v2540, %v2539
      %v2642 = vpack.c.b16 %v2542, %v2541
      %v2643 = vpack.c.b16 %v2544, %v2543
      %v2644 = vpack.c.b16 %v2546, %v2545
      %v2645 = vpack.c.b16 %v2548, %v2547
      %v2646 = vpack.c.b16 %v2550, %v2549
      %v2647 = vpack.c.b16 %v2552, %v2551
      %v2648 = vpack.c.b16 %v2554, %v2553
      %v2649 = vpack.c.b16 %v2556, %v2555
      %v2650 = vpack.c.b16 %v2558, %v2557
      %v2651 = vpack.c.b16 %v2560, %v2559
      %v2652 = vpack.c.b16 %v2562, %v2561
      %v2653 = vpack.c.b16 %v2564, %v2563
      %v2654 = vpack.c.b16 %v2566, %v2565
      %v2655 = vpack.c.b16 %v2568, %v2567
      %v2656 = vpack.c.b16 %v2570, %v2569
      %v2657 = vpack.c.b16 %v2572, %v2571
      %v2658 = vpack.c.b16 %v2574, %v2573
      %v2659 = vpack.c.b16 %v2576, %v2575
      %v2660 = vpack.c.b16 %v2578, %v2577
      %v2661 = vpack.c.b16 %v2580, %v2579
      %v2662 = vpack.c.b16 %v2582, %v2581
      %v2663 = vpack.c.b16 %v2584, %v2583
      %v2664 = vpack.c.b16 %v2586, %v2585
      %v2665 = vpack.c.b16 %v2588, %v2587
      %v2666 = vpack.c.b16 %v2590, %v2589
      %v2667 = vpack.c.b16 %v2592, %v2591
      %v2668 = vpack.c.b16 %v2594, %v2593
      %v2669 = vpack.c.b16 %v2596, %v2595
      %v2670 = vpack.c.b16 %v2598, %v2597
      %2743 = vmatprep.subr.bf16.mxu0 0
      %2744 = vmatpush1.bf16.msra.mxu0 %v2599
      %2745 = vmatprep.subr.bf16.mxu0 0
      %2746 = vmatpush1.bf16.msra.mxu0 %v2600
      %2747 = vmatprep.subr.bf16.mxu0 0
      %2748 = vmatpush1.bf16.msra.mxu0 %v2601
      %2749 = vmatprep.subr.bf16.mxu0 0
      %2750 = vmatpush1.bf16.msra.mxu0 %v2602
      %2751 = vmatprep.subr.bf16.mxu0 0
      %2752 = vmatpush1.bf16.msra.mxu0 %v2603
      %2753 = vmatprep.subr.bf16.mxu0 0
      %2754 = vmatpush1.bf16.msra.mxu0 %v2604
      %2755 = vmatprep.subr.bf16.mxu0 0
      %2756 = vmatpush1.bf16.msra.mxu0 %v2605
      %2757 = vmatprep.subr.bf16.mxu0 0
      %2758 = vmatpush1.bf16.msra.mxu0 %v2606
      %2759 = vmatprep.subr.bf16.mxu0 0
      %2760 = vmatpush1.bf16.msra.mxu0 %v2607
      %2761 = vmatprep.subr.bf16.mxu0 0
      %2762 = vmatpush1.bf16.msra.mxu0 %v2608
      %2763 = vmatprep.subr.bf16.mxu0 0
      %2764 = vmatpush1.bf16.msra.mxu0 %v2609
      %2765 = vmatprep.subr.bf16.mxu0 0
      %2766 = vmatpush1.bf16.msra.mxu0 %v2610
      %2767 = vmatprep.subr.bf16.mxu0 0
      %2768 = vmatpush1.bf16.msra.mxu0 %v2611
      %2769 = vmatprep.subr.bf16.mxu0 0
      %2770 = vmatpush1.bf16.msra.mxu0 %v2612
      %2771 = vmatprep.subr.bf16.mxu0 0
      %2772 = vmatpush1.bf16.msra.mxu0 %v2613
      %2773 = vmatprep.subr.bf16.mxu0 0
      %2774 = vmatpush1.bf16.msra.mxu0 %v2614
      %2775 = vmatprep.mubr.bf16.mxu0 %v1664
      %2776 = vmatmul.mubr.bf16.gmra.mrb[0].mxu0 %v1663
      %v2777 = vpop.f32.mrb[0].mxu0
      %v2778 = vadd.f32 0.0, %v2777
      %v2779 = vpop.f32.mrb[0].mxu0
      %v2780 = vpop.f32.mrb[0].mxu0
      %v2781 = vadd.f32 0.0, %v2780
      %v2782 = vpop.f32.mrb[0].mxu0
      %2783 = vmatprep.mubr.bf16.mxu0 %v1673
      %2784 = vmatmul.mubr.bf16.gmra.mrb[0].mxu0 %v1672
      %v2785 = vpop.f32.mrb[0].mxu0
      %v2786 = vadd.f32 0.0, %v2785
      %v2787 = vpop.f32.mrb[0].mxu0
      %v2788 = vpop.f32.mrb[0].mxu0
      %v2789 = vadd.f32 0.0, %v2788
      %v2790 = vpop.f32.mrb[0].mxu0
      %2791 = vmatprep.mubr.bf16.mxu0 %v1682
      %2792 = vmatmul.mubr.bf16.gmra.mrb[0].mxu0 %v1681
      %v2793 = vpop.f32.mrb[0].mxu0
      %v2794 = vadd.f32 0.0, %v2793
      %v2795 = vpop.f32.mrb[0].mxu0
      %v2796 = vpop.f32.mrb[0].mxu0
      %v2797 = vadd.f32 0.0, %v2796
      %v2798 = vpop.f32.mrb[0].mxu0
      %2799 = vmatprep.mubr.bf16.mxu0 %v1691
      %2800 = vmatmul.mubr.bf16.gmra.mrb[0].mxu0 %v1690
      %v2801 = vpop.f32.mrb[0].mxu0
      %v2802 = vadd.f32 0.0, %v2801
      %v2803 = vpop.f32.mrb[0].mxu0
      %v2804 = vpop.f32.mrb[0].mxu0
      %v2805 = vadd.f32 0.0, %v2804
      %v2806 = vpop.f32.mrb[0].mxu0
      %2807 = vmatprep.mubr.bf16.mxu0 %v1700
      %2808 = vmatmul.mubr.bf16.gmra.mrb[0].mxu0 %v1699
      %v2809 = vpop.f32.mrb[0].mxu0
      %v2810 = vadd.f32 0.0, %v2809
      %v2811 = vpop.f32.mrb[0].mxu0
      %v2812 = vpop.f32.mrb[0].mxu0
      %v2813 = vadd.f32 0.0, %v2812
      %v2814 = vpop.f32.mrb[0].mxu0
      %2815 = vmatprep.mubr.bf16.mxu0 %v1709
      %2816 = vmatmul.mubr.bf16.gmra.mrb[0].mxu0 %v1708
      %v2817 = vpop.f32.mrb[0].mxu0
      %v2818 = vadd.f32 0.0, %v2817
      %v2819 = vpop.f32.mrb[0].mxu0
      %v2820 = vpop.f32.mrb[0].mxu0
      %v2821 = vadd.f32 0.0, %v2820
      %v2822 = vpop.f32.mrb[0].mxu0
      %2823 = vmatprep.mubr.bf16.mxu0 %v1718
      %2824 = vmatmul.mubr.bf16.gmra.mrb[0].mxu0 %v1717
      %v2825 = vpop.f32.mrb[0].mxu0
      %v2826 = vadd.f32 0.0, %v2825
      %v2827 = vpop.f32.mrb[0].mxu0
      %v2828 = vpop.f32.mrb[0].mxu0
      %v2829 = vadd.f32 0.0, %v2828
      %v2830 = vpop.f32.mrb[0].mxu0
      %2831 = vmatprep.mubr.bf16.mxu0 %v1727
      %2832 = vmatmul.mubr.bf16.gmra.mrb[0].mxu0 %v1726
      %v2833 = vpop.f32.mrb[0].mxu0
      %v2834 = vadd.f32 0.0, %v2833
      %v2835 = vpop.f32.mrb[0].mxu0
      %v2836 = vpop.f32.mrb[0].mxu0
      %v2837 = vadd.f32 0.0, %v2836
      %v2838 = vpop.f32.mrb[0].mxu0
      %2839 = vmatprep.mubr.bf16.mxu0 %v1736
      %2840 = vmatmul.mubr.bf16.gmra.mrb[0].mxu0 %v1735
      %v2841 = vpop.f32.mrb[0].mxu0
      %v2842 = vadd.f32 0.0, %v2841
      %v2843 = vpop.f32.mrb[0].mxu0
      %v2844 = vpop.f32.mrb[0].mxu0
      %v2845 = vadd.f32 0.0, %v2844
      %v2846 = vpop.f32.mrb[0].mxu0
      %2847 = vmatprep.mubr.bf16.mxu0 %v1745
      %2848 = vmatmul.mubr.bf16.gmra.mrb[0].mxu0 %v1744
      %v2849 = vpop.f32.mrb[0].mxu0
      %v2850 = vadd.f32 0.0, %v2849
      %v2851 = vpop.f32.mrb[0].mxu0
      %v2852 = vpop.f32.mrb[0].mxu0
      %v2853 = vadd.f32 0.0, %v2852
      %v2854 = vpop.f32.mrb[0].mxu0
      %2855 = vmatprep.mubr.bf16.mxu0 %v1754
      %2856 = vmatmul.mubr.bf16.gmra.mrb[0].mxu0 %v1753
      %v2857 = vpop.f32.mrb[0].mxu0
      %v2858 = vadd.f32 0.0, %v2857
      %v2859 = vpop.f32.mrb[0].mxu0
      %v2860 = vpop.f32.mrb[0].mxu0
      %v2861 = vadd.f32 0.0, %v2860
      %v2862 = vpop.f32.mrb[0].mxu0
      %2863 = vmatprep.mubr.bf16.mxu0 %v1763
      %2864 = vmatmul.mubr.bf16.gmra.mrb[0].mxu0 %v1762
      %v2865 = vpop.f32.mrb[0].mxu0
      %v2866 = vadd.f32 0.0, %v2865
      %v2867 = vpop.f32.mrb[0].mxu0
      %v2868 = vpop.f32.mrb[0].mxu0
      %v2869 = vadd.f32 0.0, %v2868
      %v2870 = vpop.f32.mrb[0].mxu0
      %2871 = vmatprep.mubr.bf16.mxu0 %v1772
      %2872 = vmatmul.mubr.bf16.gmra.mrb[0].mxu0 %v1771
      %v2873 = vpop.f32.mrb[0].mxu0
      %v2874 = vadd.f32 0.0, %v2873
      %v2875 = vpop.f32.mrb[0].mxu0
      %v2876 = vpop.f32.mrb[0].mxu0
      %v2877 = vadd.f32 0.0, %v2876
      %v2878 = vpop.f32.mrb[0].mxu0
      %2879 = vmatprep.mubr.bf16.mxu0 %v1781
      %2880 = vmatmul.mubr.bf16.gmra.mrb[0].mxu0 %v1780
      %v2881 = vpop.f32.mrb[0].mxu0
      %v2882 = vadd.f32 0.0, %v2881
      %v2883 = vpop.f32.mrb[0].mxu0
      %v2884 = vpop.f32.mrb[0].mxu0
      %v2885 = vadd.f32 0.0, %v2884
      %v2886 = vpop.f32.mrb[0].mxu0
      %2887 = vmatprep.mubr.bf16.mxu0 %v1790
      %2888 = vmatmul.mubr.bf16.gmra.mrb[0].mxu0 %v1789
      %v2889 = vpop.f32.mrb[0].mxu0
      %v2890 = vadd.f32 0.0, %v2889
      %v2891 = vpop.f32.mrb[0].mxu0
      %v2892 = vpop.f32.mrb[0].mxu0
      %v2893 = vadd.f32 0.0, %v2892
      %v2894 = vpop.f32.mrb[0].mxu0
      %2895 = vmatprep.mubr.bf16.mxu0 %v1799
      %2896 = vmatmul.mubr.bf16.gmra.mrb[0].mxu0 %v1798
      %v2897 = vpop.f32.mrb[0].mxu0
      %v2898 = vadd.f32 0.0, %v2897
      %v2899 = vpop.f32.mrb[0].mxu0
      %v2900 = vpop.f32.mrb[0].mxu0
      %v2901 = vadd.f32 0.0, %v2900
      %v2902 = vpop.f32.mrb[0].mxu0
      %2903 = vmatprep.mubr.bf16.mxu0 %v1808
      %2904 = vmatmul.mubr.bf16.gmra.mrb[0].mxu0 %v1807
      %v2905 = vpop.f32.mrb[0].mxu0
      %v2906 = vadd.f32 0.0, %v2905
      %v2907 = vpop.f32.mrb[0].mxu0
      %v2908 = vpop.f32.mrb[0].mxu0
      %v2909 = vadd.f32 0.0, %v2908
      %v2910 = vpop.f32.mrb[0].mxu0
      %2911 = vmatprep.mubr.bf16.mxu0 %v1817
      %2912 = vmatmul.mubr.bf16.gmra.mrb[0].mxu0 %v1816
      %v2913 = vpop.f32.mrb[0].mxu0
      %v2914 = vadd.f32 0.0, %v2913
      %v2915 = vpop.f32.mrb[0].mxu0
      %v2916 = vpop.f32.mrb[0].mxu0
      %v2917 = vadd.f32 0.0, %v2916
      %v2918 = vpop.f32.mrb[0].mxu0
      %2919 = vmatprep.mubr.bf16.mxu0 %v1826
      %2920 = vmatmul.mubr.bf16.gmra.mrb[0].mxu0 %v1825
      %v2921 = vpop.f32.mrb[0].mxu0
      %v2922 = vadd.f32 0.0, %v2921
      %v2923 = vpop.f32.mrb[0].mxu0
      %v2924 = vpop.f32.mrb[0].mxu0
      %v2925 = vadd.f32 0.0, %v2924
      %v2926 = vpop.f32.mrb[0].mxu0
      %2927 = vmatprep.mubr.bf16.mxu0 %v1835
      %2928 = vmatmul.mubr.bf16.gmra.mrb[0].mxu0 %v1834
      %v2929 = vpop.f32.mrb[0].mxu0
      %v2930 = vadd.f32 0.0, %v2929
      %v2931 = vpop.f32.mrb[0].mxu0
      %v2932 = vpop.f32.mrb[0].mxu0
      %v2933 = vadd.f32 0.0, %v2932
      %v2934 = vpop.f32.mrb[0].mxu0
      %2935 = vmatprep.mubr.bf16.mxu0 %v1844
      %2936 = vmatmul.mubr.bf16.gmra.mrb[0].mxu0 %v1843
      %v2937 = vpop.f32.mrb[0].mxu0
      %v2938 = vadd.f32 0.0, %v2937
      %v2939 = vpop.f32.mrb[0].mxu0
      %v2940 = vpop.f32.mrb[0].mxu0
      %v2941 = vadd.f32 0.0, %v2940
      %v2942 = vpop.f32.mrb[0].mxu0
      %2943 = vmatprep.mubr.bf16.mxu0 %v1853
      %2944 = vmatmul.mubr.bf16.gmra.mrb[0].mxu0 %v1852
      %v2945 = vpop.f32.mrb[0].mxu0
      %v2946 = vadd.f32 0.0, %v2945
      %v2947 = vpop.f32.mrb[0].mxu0
      %v2948 = vpop.f32.mrb[0].mxu0
      %v2949 = vadd.f32 0.0, %v2948
      %v2950 = vpop.f32.mrb[0].mxu0
      %2951 = vmatprep.mubr.bf16.mxu0 %v1862
      %2952 = vmatmul.mubr.bf16.gmra.mrb[0].mxu0 %v1861
      %v2953 = vpop.f32.mrb[0].mxu0
      %v2954 = vadd.f32 0.0, %v2953
      %v2955 = vpop.f32.mrb[0].mxu0
      %v2956 = vpop.f32.mrb[0].mxu0
      %v2957 = vadd.f32 0.0, %v2956
      %v2958 = vpop.f32.mrb[0].mxu0
      %2959 = vmatprep.mubr.bf16.mxu0 %v1871
      %2960 = vmatmul.mubr.bf16.gmra.mrb[0].mxu0 %v1870
      %v2961 = vpop.f32.mrb[0].mxu0
      %v2962 = vadd.f32 0.0, %v2961
      %v2963 = vpop.f32.mrb[0].mxu0
      %v2964 = vpop.f32.mrb[0].mxu0
      %v2965 = vadd.f32 0.0, %v2964
      %v2966 = vpop.f32.mrb[0].mxu0
      %2967 = vmatprep.mubr.bf16.mxu0 %v1880
      %2968 = vmatmul.mubr.bf16.gmra.mrb[0].mxu0 %v1879
      %v2969 = vpop.f32.mrb[0].mxu0
      %v2970 = vadd.f32 0.0, %v2969
      %v2971 = vpop.f32.mrb[0].mxu0
      %v2972 = vpop.f32.mrb[0].mxu0
      %v2973 = vadd.f32 0.0, %v2972
      %v2974 = vpop.f32.mrb[0].mxu0
      %2975 = vmatprep.mubr.bf16.mxu0 %v1889
      %2976 = vmatmul.mubr.bf16.gmra.mrb[0].mxu0 %v1888
      %v2977 = vpop.f32.mrb[0].mxu0
      %v2978 = vadd.f32 0.0, %v2977
      %v2979 = vpop.f32.mrb[0].mxu0
      %v2980 = vpop.f32.mrb[0].mxu0
      %v2981 = vadd.f32 0.0, %v2980
      %v2982 = vpop.f32.mrb[0].mxu0
      %2983 = vmatprep.mubr.bf16.mxu0 %v1898
      %2984 = vmatmul.mubr.bf16.gmra.mrb[0].mxu0 %v1897
      %v2985 = vpop.f32.mrb[0].mxu0
      %v2986 = vadd.f32 0.0, %v2985
      %v2987 = vpop.f32.mrb[0].mxu0
      %v2988 = vpop.f32.mrb[0].mxu0
      %v2989 = vadd.f32 0.0, %v2988
      %v2990 = vpop.f32.mrb[0].mxu0
      %2991 = vmatprep.mubr.bf16.mxu0 %v1907
      %2992 = vmatmul.mubr.bf16.gmra.mrb[0].mxu0 %v1906
      %v2993 = vpop.f32.mrb[0].mxu0
      %v2994 = vadd.f32 0.0, %v2993
      %v2995 = vpop.f32.mrb[0].mxu0
      %v2996 = vpop.f32.mrb[0].mxu0
      %v2997 = vadd.f32 0.0, %v2996
      %v2998 = vpop.f32.mrb[0].mxu0
      %2999 = vmatprep.mubr.bf16.mxu0 %v1916
      %3000 = vmatmul.mubr.bf16.gmra.mrb[0].mxu0 %v1915
      %v3001 = vpop.f32.mrb[0].mxu0
      %v3002 = vadd.f32 0.0, %v3001
      %v3003 = vpop.f32.mrb[0].mxu0
      %v3004 = vpop.f32.mrb[0].mxu0
      %v3005 = vadd.f32 0.0, %v3004
      %v3006 = vpop.f32.mrb[0].mxu0
      %3007 = vmatprep.mubr.bf16.mxu0 %v1925
      %3008 = vmatmul.mubr.bf16.gmra.mrb[0].mxu0 %v1924
      %v3009 = vpop.f32.mrb[0].mxu0
      %v3010 = vadd.f32 0.0, %v3009
      %v3011 = vpop.f32.mrb[0].mxu0
      %v3012 = vpop.f32.mrb[0].mxu0
      %v3013 = vadd.f32 0.0, %v3012
      %v3014 = vpop.f32.mrb[0].mxu0
      %3015 = vmatprep.mubr.bf16.mxu0 %v1934
      %3016 = vmatmul.mubr.bf16.gmra.mrb[0].mxu0 %v1933
      %v3017 = vpop.f32.mrb[0].mxu0
      %v3018 = vadd.f32 0.0, %v3017
      %v3019 = vpop.f32.mrb[0].mxu0
      %v3020 = vpop.f32.mrb[0].mxu0
      %v3021 = vadd.f32 0.0, %v3020
      %v3022 = vpop.f32.mrb[0].mxu0
      %3023 = vmatprep.mubr.bf16.mxu0 %v1943
      %3024 = vmatmul.mubr.bf16.gmra.mrb[0].mxu0 %v1942
      %v3025 = vpop.f32.mrb[0].mxu0
      %v3026 = vadd.f32 0.0, %v3025
      %v3027 = vpop.f32.mrb[0].mxu0
      %v3028 = vpop.f32.mrb[0].mxu0
      %v3029 = vadd.f32 0.0, %v3028
      %v3030 = vpop.f32.mrb[0].mxu0
      %3031 = vmatprep.mubr.bf16.mxu0 %v1952
      %3032 = vmatmul.mubr.bf16.gmra.mrb[0].mxu0 %v1951
      %v3033 = vpop.f32.mrb[0].mxu0
      %v3034 = vadd.f32 0.0, %v3033
      %v3035 = vpop.f32.mrb[0].mxu0
      %v3036 = vpop.f32.mrb[0].mxu0
      %v3037 = vadd.f32 0.0, %v3036
      %v3038 = vpop.f32.mrb[0].mxu0
      %3039 = vmatprep.mubr.bf16.mxu0 %v1961
      %3040 = vmatmul.mubr.bf16.gmra.mrb[0].mxu0 %v1960
      %v3041 = vpop.f32.mrb[0].mxu0
      %v3042 = vadd.f32 0.0, %v3041
      %v3043 = vpop.f32.mrb[0].mxu0
      %v3044 = vpop.f32.mrb[0].mxu0
      %v3045 = vadd.f32 0.0, %v3044
      %v3046 = vpop.f32.mrb[0].mxu0
      %3047 = vmatprep.mubr.bf16.mxu0 %v1970
      %3048 = vmatmul.mubr.bf16.gmra.mrb[0].mxu0 %v1969
      %v3049 = vpop.f32.mrb[0].mxu0
      %v3050 = vadd.f32 0.0, %v3049
      %v3051 = vpop.f32.mrb[0].mxu0
      %v3052 = vpop.f32.mrb[0].mxu0
      %v3053 = vadd.f32 0.0, %v3052
      %v3054 = vpop.f32.mrb[0].mxu0
      %3055 = vmatprep.mubr.bf16.mxu0 %v1979
      %3056 = vmatmul.mubr.bf16.gmra.mrb[0].mxu0 %v1978
      %v3057 = vpop.f32.mrb[0].mxu0
      %v3058 = vadd.f32 0.0, %v3057
      %v3059 = vpop.f32.mrb[0].mxu0
      %v3060 = vpop.f32.mrb[0].mxu0
      %v3061 = vadd.f32 0.0, %v3060
      %v3062 = vpop.f32.mrb[0].mxu0
      %3063 = vdwg.mxu0
      %3064 = vmatprep.subr.bf16.mxu0 0
      %3065 = vmatpush1.bf16.msra.mxu0 %v2615
      %3066 = vmatprep.subr.bf16.mxu0 0
      %3067 = vmatpush1.bf16.msra.mxu0 %v2616
      %3068 = vmatprep.subr.bf16.mxu0 0
      %3069 = vmatpush1.bf16.msra.mxu0 %v2617
      %3070 = vmatprep.subr.bf16.mxu0 0
      %3071 = vmatpush1.bf16.msra.mxu0 %v2618
      %3072 = vmatprep.subr.bf16.mxu0 0
      %3073 = vmatpush1.bf16.msra.mxu0 %v2619
      %3074 = vmatprep.subr.bf16.mxu0 0
      %3075 = vmatpush1.bf16.msra.mxu0 %v2620
      %3076 = vmatprep.subr.bf16.mxu0 0
      %3077 = vmatpush1.bf16.msra.mxu0 %v2621
      %3078 = vmatprep.subr.bf16.mxu0 0
      %3079 = vmatpush1.bf16.msra.mxu0 %v2622
      %3080 = vmatprep.subr.bf16.mxu0 0
      %3081 = vmatpush1.bf16.msra.mxu0 %v2623
      %3082 = vmatprep.subr.bf16.mxu0 0
      %3083 = vmatpush1.bf16.msra.mxu0 %v2624
      %3084 = vmatprep.subr.bf16.mxu0 0
      %3085 = vmatpush1.bf16.msra.mxu0 %v2625
      %3086 = vmatprep.subr.bf16.mxu0 0
      %3087 = vmatpush1.bf16.msra.mxu0 %v2626
      %3088 = vmatprep.subr.bf16.mxu0 0
      %3089 = vmatpush1.bf16.msra.mxu0 %v2627
      %3090 = vmatprep.subr.bf16.mxu0 0
      %3091 = vmatpush1.bf16.msra.mxu0 %v2628
      %3092 = vmatprep.subr.bf16.mxu0 0
      %3093 = vmatpush1.bf16.msra.mxu0 %v2629
      %3094 = vmatprep.subr.bf16.mxu0 0
      %3095 = vmatpush1.bf16.msra.mxu0 %v2630
      %3096 = vmatprep.mubr.bf16.mxu0 %v1666
      %3097 = vmatmul.mubr.bf16.gmra.mrb[0].mxu0 %v1665
      %v3098 = vpop.f32.mrb[0].mxu0
      %v3099 = vadd.f32 %v2778, %v3098
      %v3100 = vpop.f32.mrb[0].mxu0
      %v3101 = vpop.f32.mrb[0].mxu0
      %v3102 = vadd.f32 %v2781, %v3101
      %v3103 = vpop.f32.mrb[0].mxu0
      %3104 = vmatprep.mubr.bf16.mxu0 %v1675
      %3105 = vmatmul.mubr.bf16.gmra.mrb[0].mxu0 %v1674
      %v3106 = vpop.f32.mrb[0].mxu0
      %v3107 = vadd.f32 %v2786, %v3106
      %v3108 = vpop.f32.mrb[0].mxu0
      %v3109 = vpop.f32.mrb[0].mxu0
      %v3110 = vadd.f32 %v2789, %v3109
      %v3111 = vpop.f32.mrb[0].mxu0
      %3112 = vmatprep.mubr.bf16.mxu0 %v1684
      %3113 = vmatmul.mubr.bf16.gmra.mrb[0].mxu0 %v1683
      %v3114 = vpop.f32.mrb[0].mxu0
      %v3115 = vadd.f32 %v2794, %v3114
      %v3116 = vpop.f32.mrb[0].mxu0
      %v3117 = vpop.f32.mrb[0].mxu0
      %v3118 = vadd.f32 %v2797, %v3117
      %v3119 = vpop.f32.mrb[0].mxu0
      %3120 = vmatprep.mubr.bf16.mxu0 %v1693
      %3121 = vmatmul.mubr.bf16.gmra.mrb[0].mxu0 %v1692
      %v3122 = vpop.f32.mrb[0].mxu0
      %v3123 = vadd.f32 %v2802, %v3122
      %v3124 = vpop.f32.mrb[0].mxu0
      %v3125 = vpop.f32.mrb[0].mxu0
      %v3126 = vadd.f32 %v2805, %v3125
      %v3127 = vpop.f32.mrb[0].mxu0
      %3128 = vmatprep.mubr.bf16.mxu0 %v1702
      %3129 = vmatmul.mubr.bf16.gmra.mrb[0].mxu0 %v1701
      %v3130 = vpop.f32.mrb[0].mxu0
      %v3131 = vadd.f32 %v2810, %v3130
      %v3132 = vpop.f32.mrb[0].mxu0
      %v3133 = vpop.f32.mrb[0].mxu0
      %v3134 = vadd.f32 %v2813, %v3133
      %v3135 = vpop.f32.mrb[0].mxu0
      %3136 = vmatprep.mubr.bf16.mxu0 %v1711
      %3137 = vmatmul.mubr.bf16.gmra.mrb[0].mxu0 %v1710
      %v3138 = vpop.f32.mrb[0].mxu0
      %v3139 = vadd.f32 %v2818, %v3138
      %v3140 = vpop.f32.mrb[0].mxu0
      %v3141 = vpop.f32.mrb[0].mxu0
      %v3142 = vadd.f32 %v2821, %v3141
      %v3143 = vpop.f32.mrb[0].mxu0
      %3144 = vmatprep.mubr.bf16.mxu0 %v1720
      %3145 = vmatmul.mubr.bf16.gmra.mrb[0].mxu0 %v1719
      %v3146 = vpop.f32.mrb[0].mxu0
      %v3147 = vadd.f32 %v2826, %v3146
      %v3148 = vpop.f32.mrb[0].mxu0
      %v3149 = vpop.f32.mrb[0].mxu0
      %v3150 = vadd.f32 %v2829, %v3149
      %v3151 = vpop.f32.mrb[0].mxu0
      %3152 = vmatprep.mubr.bf16.mxu0 %v1729
      %3153 = vmatmul.mubr.bf16.gmra.mrb[0].mxu0 %v1728
      %v3154 = vpop.f32.mrb[0].mxu0
      %v3155 = vadd.f32 %v2834, %v3154
      %v3156 = vpop.f32.mrb[0].mxu0
      %v3157 = vpop.f32.mrb[0].mxu0
      %v3158 = vadd.f32 %v2837, %v3157
      %v3159 = vpop.f32.mrb[0].mxu0
      %3160 = vmatprep.mubr.bf16.mxu0 %v1738
      %3161 = vmatmul.mubr.bf16.gmra.mrb[0].mxu0 %v1737
      %v3162 = vpop.f32.mrb[0].mxu0
      %v3163 = vadd.f32 %v2842, %v3162
      %v3164 = vpop.f32.mrb[0].mxu0
      %v3165 = vpop.f32.mrb[0].mxu0
      %v3166 = vadd.f32 %v2845, %v3165
      %v3167 = vpop.f32.mrb[0].mxu0
      %3168 = vmatprep.mubr.bf16.mxu0 %v1747
      %3169 = vmatmul.mubr.bf16.gmra.mrb[0].mxu0 %v1746
      %v3170 = vpop.f32.mrb[0].mxu0
      %v3171 = vadd.f32 %v2850, %v3170
      %v3172 = vpop.f32.mrb[0].mxu0
      %v3173 = vpop.f32.mrb[0].mxu0
      %v3174 = vadd.f32 %v2853, %v3173
      %v3175 = vpop.f32.mrb[0].mxu0
      %3176 = vmatprep.mubr.bf16.mxu0 %v1756
      %3177 = vmatmul.mubr.bf16.gmra.mrb[0].mxu0 %v1755
      %v3178 = vpop.f32.mrb[0].mxu0
      %v3179 = vadd.f32 %v2858, %v3178
      %v3180 = vpop.f32.mrb[0].mxu0
      %v3181 = vpop.f32.mrb[0].mxu0
      %v3182 = vadd.f32 %v2861, %v3181
      %v3183 = vpop.f32.mrb[0].mxu0
      %3184 = vmatprep.mubr.bf16.mxu0 %v1765
      %3185 = vmatmul.mubr.bf16.gmra.mrb[0].mxu0 %v1764
      %v3186 = vpop.f32.mrb[0].mxu0
      %v3187 = vadd.f32 %v2866, %v3186
      %v3188 = vpop.f32.mrb[0].mxu0
      %v3189 = vpop.f32.mrb[0].mxu0
      %v3190 = vadd.f32 %v2869, %v3189
      %v3191 = vpop.f32.mrb[0].mxu0
      %3192 = vmatprep.mubr.bf16.mxu0 %v1774
      %3193 = vmatmul.mubr.bf16.gmra.mrb[0].mxu0 %v1773
      %v3194 = vpop.f32.mrb[0].mxu0
      %v3195 = vadd.f32 %v2874, %v3194
      %v3196 = vpop.f32.mrb[0].mxu0
      %v3197 = vpop.f32.mrb[0].mxu0
      %v3198 = vadd.f32 %v2877, %v3197
      %v3199 = vpop.f32.mrb[0].mxu0
      %3200 = vmatprep.mubr.bf16.mxu0 %v1783
      %3201 = vmatmul.mubr.bf16.gmra.mrb[0].mxu0 %v1782
      %v3202 = vpop.f32.mrb[0].mxu0
      %v3203 = vadd.f32 %v2882, %v3202
      %v3204 = vpop.f32.mrb[0].mxu0
      %v3205 = vpop.f32.mrb[0].mxu0
      %v3206 = vadd.f32 %v2885, %v3205
      %v3207 = vpop.f32.mrb[0].mxu0
      %3208 = vmatprep.mubr.bf16.mxu0 %v1792
      %3209 = vmatmul.mubr.bf16.gmra.mrb[0].mxu0 %v1791
      %v3210 = vpop.f32.mrb[0].mxu0
      %v3211 = vadd.f32 %v2890, %v3210
      %v3212 = vpop.f32.mrb[0].mxu0
      %v3213 = vpop.f32.mrb[0].mxu0
      %v3214 = vadd.f32 %v2893, %v3213
      %v3215 = vpop.f32.mrb[0].mxu0
      %3216 = vmatprep.mubr.bf16.mxu0 %v1801
      %3217 = vmatmul.mubr.bf16.gmra.mrb[0].mxu0 %v1800
      %v3218 = vpop.f32.mrb[0].mxu0
      %v3219 = vadd.f32 %v2898, %v3218
      %v3220 = vpop.f32.mrb[0].mxu0
      %v3221 = vpop.f32.mrb[0].mxu0
      %v3222 = vadd.f32 %v2901, %v3221
      %v3223 = vpop.f32.mrb[0].mxu0
      %3224 = vmatprep.mubr.bf16.mxu0 %v1810
      %3225 = vmatmul.mubr.bf16.gmra.mrb[0].mxu0 %v1809
      %v3226 = vpop.f32.mrb[0].mxu0
      %v3227 = vadd.f32 %v2906, %v3226
      %v3228 = vpop.f32.mrb[0].mxu0
      %v3229 = vpop.f32.mrb[0].mxu0
      %v3230 = vadd.f32 %v2909, %v3229
      %v3231 = vpop.f32.mrb[0].mxu0
      %3232 = vmatprep.mubr.bf16.mxu0 %v1819
      %3233 = vmatmul.mubr.bf16.gmra.mrb[0].mxu0 %v1818
      %v3234 = vpop.f32.mrb[0].mxu0
      %v3235 = vadd.f32 %v2914, %v3234
      %v3236 = vpop.f32.mrb[0].mxu0
      %v3237 = vpop.f32.mrb[0].mxu0
      %v3238 = vadd.f32 %v2917, %v3237
      %v3239 = vpop.f32.mrb[0].mxu0
      %3240 = vmatprep.mubr.bf16.mxu0 %v1828
      %3241 = vmatmul.mubr.bf16.gmra.mrb[0].mxu0 %v1827
      %v3242 = vpop.f32.mrb[0].mxu0
      %v3243 = vadd.f32 %v2922, %v3242
      %v3244 = vpop.f32.mrb[0].mxu0
      %v3245 = vpop.f32.mrb[0].mxu0
      %v3246 = vadd.f32 %v2925, %v3245
      %v3247 = vpop.f32.mrb[0].mxu0
      %3248 = vmatprep.mubr.bf16.mxu0 %v1837
      %3249 = vmatmul.mubr.bf16.gmra.mrb[0].mxu0 %v1836
      %v3250 = vpop.f32.mrb[0].mxu0
      %v3251 = vadd.f32 %v2930, %v3250
      %v3252 = vpop.f32.mrb[0].mxu0
      %v3253 = vpop.f32.mrb[0].mxu0
      %v3254 = vadd.f32 %v2933, %v3253
      %v3255 = vpop.f32.mrb[0].mxu0
      %3256 = vmatprep.mubr.bf16.mxu0 %v1846
      %3257 = vmatmul.mubr.bf16.gmra.mrb[0].mxu0 %v1845
      %v3258 = vpop.f32.mrb[0].mxu0
      %v3259 = vadd.f32 %v2938, %v3258
      %v3260 = vpop.f32.mrb[0].mxu0
      %v3261 = vpop.f32.mrb[0].mxu0
      %v3262 = vadd.f32 %v2941, %v3261
      %v3263 = vpop.f32.mrb[0].mxu0
      %3264 = vmatprep.mubr.bf16.mxu0 %v1855
      %3265 = vmatmul.mubr.bf16.gmra.mrb[0].mxu0 %v1854
      %v3266 = vpop.f32.mrb[0].mxu0
      %v3267 = vadd.f32 %v2946, %v3266
      %v3268 = vpop.f32.mrb[0].mxu0
      %v3269 = vpop.f32.mrb[0].mxu0
      %v3270 = vadd.f32 %v2949, %v3269
      %v3271 = vpop.f32.mrb[0].mxu0
      %3272 = vmatprep.mubr.bf16.mxu0 %v1864
      %3273 = vmatmul.mubr.bf16.gmra.mrb[0].mxu0 %v1863
      %v3274 = vpop.f32.mrb[0].mxu0
      %v3275 = vadd.f32 %v2954, %v3274
      %v3276 = vpop.f32.mrb[0].mxu0
      %v3277 = vpop.f32.mrb[0].mxu0
      %v3278 = vadd.f32 %v2957, %v3277
      %v3279 = vpop.f32.mrb[0].mxu0
      %3280 = vmatprep.mubr.bf16.mxu0 %v1873
      %3281 = vmatmul.mubr.bf16.gmra.mrb[0].mxu0 %v1872
      %v3282 = vpop.f32.mrb[0].mxu0
      %v3283 = vadd.f32 %v2962, %v3282
      %v3284 = vpop.f32.mrb[0].mxu0
      %v3285 = vpop.f32.mrb[0].mxu0
      %v3286 = vadd.f32 %v2965, %v3285
      %v3287 = vpop.f32.mrb[0].mxu0
      %3288 = vmatprep.mubr.bf16.mxu0 %v1882
      %3289 = vmatmul.mubr.bf16.gmra.mrb[0].mxu0 %v1881
      %v3290 = vpop.f32.mrb[0].mxu0
      %v3291 = vadd.f32 %v2970, %v3290
      %v3292 = vpop.f32.mrb[0].mxu0
      %v3293 = vpop.f32.mrb[0].mxu0
      %v3294 = vadd.f32 %v2973, %v3293
      %v3295 = vpop.f32.mrb[0].mxu0
      %3296 = vmatprep.mubr.bf16.mxu0 %v1891
      %3297 = vmatmul.mubr.bf16.gmra.mrb[0].mxu0 %v1890
      %v3298 = vpop.f32.mrb[0].mxu0
      %v3299 = vadd.f32 %v2978, %v3298
      %v3300 = vpop.f32.mrb[0].mxu0
      %v3301 = vpop.f32.mrb[0].mxu0
      %v3302 = vadd.f32 %v2981, %v3301
      %v3303 = vpop.f32.mrb[0].mxu0
      %3304 = vmatprep.mubr.bf16.mxu0 %v1900
      %3305 = vmatmul.mubr.bf16.gmra.mrb[0].mxu0 %v1899
      %v3306 = vpop.f32.mrb[0].mxu0
      %v3307 = vadd.f32 %v2986, %v3306
      %v3308 = vpop.f32.mrb[0].mxu0
      %v3309 = vpop.f32.mrb[0].mxu0
      %v3310 = vadd.f32 %v2989, %v3309
      %v3311 = vpop.f32.mrb[0].mxu0
      %3312 = vmatprep.mubr.bf16.mxu0 %v1909
      %3313 = vmatmul.mubr.bf16.gmra.mrb[0].mxu0 %v1908
      %v3314 = vpop.f32.mrb[0].mxu0
      %v3315 = vadd.f32 %v2994, %v3314
      %v3316 = vpop.f32.mrb[0].mxu0
      %v3317 = vpop.f32.mrb[0].mxu0
      %v3318 = vadd.f32 %v2997, %v3317
      %v3319 = vpop.f32.mrb[0].mxu0
      %3320 = vmatprep.mubr.bf16.mxu0 %v1918
      %3321 = vmatmul.mubr.bf16.gmra.mrb[0].mxu0 %v1917
      %v3322 = vpop.f32.mrb[0].mxu0
      %v3323 = vadd.f32 %v3002, %v3322
      %v3324 = vpop.f32.mrb[0].mxu0
      %v3325 = vpop.f32.mrb[0].mxu0
      %v3326 = vadd.f32 %v3005, %v3325
      %v3327 = vpop.f32.mrb[0].mxu0
      %3328 = vmatprep.mubr.bf16.mxu0 %v1927
      %3329 = vmatmul.mubr.bf16.gmra.mrb[0].mxu0 %v1926
      %v3330 = vpop.f32.mrb[0].mxu0
      %v3331 = vadd.f32 %v3010, %v3330
      %v3332 = vpop.f32.mrb[0].mxu0
      %v3333 = vpop.f32.mrb[0].mxu0
      %v3334 = vadd.f32 %v3013, %v3333
      %v3335 = vpop.f32.mrb[0].mxu0
      %3336 = vmatprep.mubr.bf16.mxu0 %v1936
      %3337 = vmatmul.mubr.bf16.gmra.mrb[0].mxu0 %v1935
      %v3338 = vpop.f32.mrb[0].mxu0
      %v3339 = vadd.f32 %v3018, %v3338
      %v3340 = vpop.f32.mrb[0].mxu0
      %v3341 = vpop.f32.mrb[0].mxu0
      %v3342 = vadd.f32 %v3021, %v3341
      %v3343 = vpop.f32.mrb[0].mxu0
      %3344 = vmatprep.mubr.bf16.mxu0 %v1945
      %3345 = vmatmul.mubr.bf16.gmra.mrb[0].mxu0 %v1944
      %v3346 = vpop.f32.mrb[0].mxu0
      %v3347 = vadd.f32 %v3026, %v3346
      %v3348 = vpop.f32.mrb[0].mxu0
      %v3349 = vpop.f32.mrb[0].mxu0
      %v3350 = vadd.f32 %v3029, %v3349
      %v3351 = vpop.f32.mrb[0].mxu0
      %3352 = vmatprep.mubr.bf16.mxu0 %v1954
      %3353 = vmatmul.mubr.bf16.gmra.mrb[0].mxu0 %v1953
      %v3354 = vpop.f32.mrb[0].mxu0
      %v3355 = vadd.f32 %v3034, %v3354
      %v3356 = vpop.f32.mrb[0].mxu0
      %v3357 = vpop.f32.mrb[0].mxu0
      %v3358 = vadd.f32 %v3037, %v3357
      %v3359 = vpop.f32.mrb[0].mxu0
      %3360 = vmatprep.mubr.bf16.mxu0 %v1963
      %3361 = vmatmul.mubr.bf16.gmra.mrb[0].mxu0 %v1962
      %v3362 = vpop.f32.mrb[0].mxu0
      %v3363 = vadd.f32 %v3042, %v3362
      %v3364 = vpop.f32.mrb[0].mxu0
      %v3365 = vpop.f32.mrb[0].mxu0
      %v3366 = vadd.f32 %v3045, %v3365
      %v3367 = vpop.f32.mrb[0].mxu0
      %3368 = vmatprep.mubr.bf16.mxu0 %v1972
      %3369 = vmatmul.mubr.bf16.gmra.mrb[0].mxu0 %v1971
      %v3370 = vpop.f32.mrb[0].mxu0
      %v3371 = vadd.f32 %v3050, %v3370
      %v3372 = vpop.f32.mrb[0].mxu0
      %v3373 = vpop.f32.mrb[0].mxu0
      %v3374 = vadd.f32 %v3053, %v3373
      %v3375 = vpop.f32.mrb[0].mxu0
      %3376 = vmatprep.mubr.bf16.mxu0 %v1981
      %3377 = vmatmul.mubr.bf16.gmra.mrb[0].mxu0 %v1980
      %v3378 = vpop.f32.mrb[0].mxu0
      %v3379 = vadd.f32 %v3058, %v3378
      %v3380 = vpop.f32.mrb[0].mxu0
      %v3381 = vpop.f32.mrb[0].mxu0
      %v3382 = vadd.f32 %v3061, %v3381
      %v3383 = vpop.f32.mrb[0].mxu0
      %3384 = vdwg.mxu0
      %3385 = vmatprep.subr.bf16.mxu0 0
      %3386 = vmatpush1.bf16.msra.mxu0 %v2631
      %3387 = vmatprep.subr.bf16.mxu0 0
      %3388 = vmatpush1.bf16.msra.mxu0 %v2632
      %3389 = vmatprep.subr.bf16.mxu0 0
      %3390 = vmatpush1.bf16.msra.mxu0 %v2633
      %3391 = vmatprep.subr.bf16.mxu0 0
      %3392 = vmatpush1.bf16.msra.mxu0 %v2634
      %3393 = vmatprep.subr.bf16.mxu0 0
      %3394 = vmatpush1.bf16.msra.mxu0 %v2635
      %3395 = vmatprep.subr.bf16.mxu0 0
      %3396 = vmatpush1.bf16.msra.mxu0 %v2636
      %3397 = vmatprep.subr.bf16.mxu0 0
      %3398 = vmatpush1.bf16.msra.mxu0 %v2637
      %3399 = vmatprep.subr.bf16.mxu0 0
      %3400 = vmatpush1.bf16.msra.mxu0 %v2638
      %3401 = vmatprep.subr.bf16.mxu0 0
      %3402 = vmatpush1.bf16.msra.mxu0 %v2639
      %3403 = vmatprep.subr.bf16.mxu0 0
      %3404 = vmatpush1.bf16.msra.mxu0 %v2640
      %3405 = vmatprep.subr.bf16.mxu0 0
      %3406 = vmatpush1.bf16.msra.mxu0 %v2641
      %3407 = vmatprep.subr.bf16.mxu0 0
      %3408 = vmatpush1.bf16.msra.mxu0 %v2642
      %3409 = vmatprep.subr.bf16.mxu0 0
      %3410 = vmatpush1.bf16.msra.mxu0 %v2643
      %3411 = vmatprep.subr.bf16.mxu0 0
      %3412 = vmatpush1.bf16.msra.mxu0 %v2644
      %3413 = vmatprep.subr.bf16.mxu0 0
      %3414 = vmatpush1.bf16.msra.mxu0 %v2645
      %3415 = vmatprep.subr.bf16.mxu0 0
      %3416 = vmatpush1.bf16.msra.mxu0 %v2646
      %3417 = vmatprep.mubr.bf16.mxu0 %v1668
      %3418 = vmatmul.mubr.bf16.gmra.mrb[0].mxu0 %v1667
      %v3419 = vpop.f32.mrb[0].mxu0
      %v3420 = vadd.f32 %v3099, %v3419
      %v3421 = vpop.f32.mrb[0].mxu0
      %v3422 = vpop.f32.mrb[0].mxu0
      %v3423 = vadd.f32 %v3102, %v3422
      %v3424 = vpop.f32.mrb[0].mxu0
      %3425 = vmatprep.mubr.bf16.mxu0 %v1677
      %3426 = vmatmul.mubr.bf16.gmra.mrb[0].mxu0 %v1676
      %v3427 = vpop.f32.mrb[0].mxu0
      %v3428 = vadd.f32 %v3107, %v3427
      %v3429 = vpop.f32.mrb[0].mxu0
      %v3430 = vpop.f32.mrb[0].mxu0
      %v3431 = vadd.f32 %v3110, %v3430
      %v3432 = vpop.f32.mrb[0].mxu0
      %3433 = vmatprep.mubr.bf16.mxu0 %v1686
      %3434 = vmatmul.mubr.bf16.gmra.mrb[0].mxu0 %v1685
      %v3435 = vpop.f32.mrb[0].mxu0
      %v3436 = vadd.f32 %v3115, %v3435
      %v3437 = vpop.f32.mrb[0].mxu0
      %v3438 = vpop.f32.mrb[0].mxu0
      %v3439 = vadd.f32 %v3118, %v3438
      %v3440 = vpop.f32.mrb[0].mxu0
      %3441 = vmatprep.mubr.bf16.mxu0 %v1695
      %3442 = vmatmul.mubr.bf16.gmra.mrb[0].mxu0 %v1694
      %v3443 = vpop.f32.mrb[0].mxu0
      %v3444 = vadd.f32 %v3123, %v3443
      %v3445 = vpop.f32.mrb[0].mxu0
      %v3446 = vpop.f32.mrb[0].mxu0
      %v3447 = vadd.f32 %v3126, %v3446
      %v3448 = vpop.f32.mrb[0].mxu0
      %3449 = vmatprep.mubr.bf16.mxu0 %v1704
      %3450 = vmatmul.mubr.bf16.gmra.mrb[0].mxu0 %v1703
      %v3451 = vpop.f32.mrb[0].mxu0
      %v3452 = vadd.f32 %v3131, %v3451
      %v3453 = vpop.f32.mrb[0].mxu0
      %v3454 = vpop.f32.mrb[0].mxu0
      %v3455 = vadd.f32 %v3134, %v3454
      %v3456 = vpop.f32.mrb[0].mxu0
      %3457 = vmatprep.mubr.bf16.mxu0 %v1713
      %3458 = vmatmul.mubr.bf16.gmra.mrb[0].mxu0 %v1712
      %v3459 = vpop.f32.mrb[0].mxu0
      %v3460 = vadd.f32 %v3139, %v3459
      %v3461 = vpop.f32.mrb[0].mxu0
      %v3462 = vpop.f32.mrb[0].mxu0
      %v3463 = vadd.f32 %v3142, %v3462
      %v3464 = vpop.f32.mrb[0].mxu0
      %3465 = vmatprep.mubr.bf16.mxu0 %v1722
      %3466 = vmatmul.mubr.bf16.gmra.mrb[0].mxu0 %v1721
      %v3467 = vpop.f32.mrb[0].mxu0
      %v3468 = vadd.f32 %v3147, %v3467
      %v3469 = vpop.f32.mrb[0].mxu0
      %v3470 = vpop.f32.mrb[0].mxu0
      %v3471 = vadd.f32 %v3150, %v3470
      %v3472 = vpop.f32.mrb[0].mxu0
      %3473 = vmatprep.mubr.bf16.mxu0 %v1731
      %3474 = vmatmul.mubr.bf16.gmra.mrb[0].mxu0 %v1730
      %v3475 = vpop.f32.mrb[0].mxu0
      %v3476 = vadd.f32 %v3155, %v3475
      %v3477 = vpop.f32.mrb[0].mxu0
      %v3478 = vpop.f32.mrb[0].mxu0
      %v3479 = vadd.f32 %v3158, %v3478
      %v3480 = vpop.f32.mrb[0].mxu0
      %3481 = vmatprep.mubr.bf16.mxu0 %v1740
      %3482 = vmatmul.mubr.bf16.gmra.mrb[0].mxu0 %v1739
      %v3483 = vpop.f32.mrb[0].mxu0
      %v3484 = vadd.f32 %v3163, %v3483
      %v3485 = vpop.f32.mrb[0].mxu0
      %v3486 = vpop.f32.mrb[0].mxu0
      %v3487 = vadd.f32 %v3166, %v3486
      %v3488 = vpop.f32.mrb[0].mxu0
      %3489 = vmatprep.mubr.bf16.mxu0 %v1749
      %3490 = vmatmul.mubr.bf16.gmra.mrb[0].mxu0 %v1748
      %v3491 = vpop.f32.mrb[0].mxu0
      %v3492 = vadd.f32 %v3171, %v3491
      %v3493 = vpop.f32.mrb[0].mxu0
      %v3494 = vpop.f32.mrb[0].mxu0
      %v3495 = vadd.f32 %v3174, %v3494
      %v3496 = vpop.f32.mrb[0].mxu0
      %3497 = vmatprep.mubr.bf16.mxu0 %v1758
      %3498 = vmatmul.mubr.bf16.gmra.mrb[0].mxu0 %v1757
      %v3499 = vpop.f32.mrb[0].mxu0
      %v3500 = vadd.f32 %v3179, %v3499
      %v3501 = vpop.f32.mrb[0].mxu0
      %v3502 = vpop.f32.mrb[0].mxu0
      %v3503 = vadd.f32 %v3182, %v3502
      %v3504 = vpop.f32.mrb[0].mxu0
      %3505 = vmatprep.mubr.bf16.mxu0 %v1767
      %3506 = vmatmul.mubr.bf16.gmra.mrb[0].mxu0 %v1766
      %v3507 = vpop.f32.mrb[0].mxu0
      %v3508 = vadd.f32 %v3187, %v3507
      %v3509 = vpop.f32.mrb[0].mxu0
      %v3510 = vpop.f32.mrb[0].mxu0
      %v3511 = vadd.f32 %v3190, %v3510
      %v3512 = vpop.f32.mrb[0].mxu0
      %3513 = vmatprep.mubr.bf16.mxu0 %v1776
      %3514 = vmatmul.mubr.bf16.gmra.mrb[0].mxu0 %v1775
      %v3515 = vpop.f32.mrb[0].mxu0
      %v3516 = vadd.f32 %v3195, %v3515
      %v3517 = vpop.f32.mrb[0].mxu0
      %v3518 = vpop.f32.mrb[0].mxu0
      %v3519 = vadd.f32 %v3198, %v3518
      %v3520 = vpop.f32.mrb[0].mxu0
      %3521 = vmatprep.mubr.bf16.mxu0 %v1785
      %3522 = vmatmul.mubr.bf16.gmra.mrb[0].mxu0 %v1784
      %v3523 = vpop.f32.mrb[0].mxu0
      %v3524 = vadd.f32 %v3203, %v3523
      %v3525 = vpop.f32.mrb[0].mxu0
      %v3526 = vpop.f32.mrb[0].mxu0
      %v3527 = vadd.f32 %v3206, %v3526
      %v3528 = vpop.f32.mrb[0].mxu0
      %3529 = vmatprep.mubr.bf16.mxu0 %v1794
      %3530 = vmatmul.mubr.bf16.gmra.mrb[0].mxu0 %v1793
      %v3531 = vpop.f32.mrb[0].mxu0
      %v3532 = vadd.f32 %v3211, %v3531
      %v3533 = vpop.f32.mrb[0].mxu0
      %v3534 = vpop.f32.mrb[0].mxu0
      %v3535 = vadd.f32 %v3214, %v3534
      %v3536 = vpop.f32.mrb[0].mxu0
      %3537 = vmatprep.mubr.bf16.mxu0 %v1803
      %3538 = vmatmul.mubr.bf16.gmra.mrb[0].mxu0 %v1802
      %v3539 = vpop.f32.mrb[0].mxu0
      %v3540 = vadd.f32 %v3219, %v3539
      %v3541 = vpop.f32.mrb[0].mxu0
      %v3542 = vpop.f32.mrb[0].mxu0
      %v3543 = vadd.f32 %v3222, %v3542
      %v3544 = vpop.f32.mrb[0].mxu0
      %3545 = vmatprep.mubr.bf16.mxu0 %v1812
      %3546 = vmatmul.mubr.bf16.gmra.mrb[0].mxu0 %v1811
      %v3547 = vpop.f32.mrb[0].mxu0
      %v3548 = vadd.f32 %v3227, %v3547
      %v3549 = vpop.f32.mrb[0].mxu0
      %v3550 = vpop.f32.mrb[0].mxu0
      %v3551 = vadd.f32 %v3230, %v3550
      %v3552 = vpop.f32.mrb[0].mxu0
      %3553 = vmatprep.mubr.bf16.mxu0 %v1821
      %3554 = vmatmul.mubr.bf16.gmra.mrb[0].mxu0 %v1820
      %v3555 = vpop.f32.mrb[0].mxu0
      %v3556 = vadd.f32 %v3235, %v3555
      %v3557 = vpop.f32.mrb[0].mxu0
      %v3558 = vpop.f32.mrb[0].mxu0
      %v3559 = vadd.f32 %v3238, %v3558
      %v3560 = vpop.f32.mrb[0].mxu0
      %3561 = vmatprep.mubr.bf16.mxu0 %v1830
      %3562 = vmatmul.mubr.bf16.gmra.mrb[0].mxu0 %v1829
      %v3563 = vpop.f32.mrb[0].mxu0
      %v3564 = vadd.f32 %v3243, %v3563
      %v3565 = vpop.f32.mrb[0].mxu0
      %v3566 = vpop.f32.mrb[0].mxu0
      %v3567 = vadd.f32 %v3246, %v3566
      %v3568 = vpop.f32.mrb[0].mxu0
      %3569 = vmatprep.mubr.bf16.mxu0 %v1839
      %3570 = vmatmul.mubr.bf16.gmra.mrb[0].mxu0 %v1838
      %v3571 = vpop.f32.mrb[0].mxu0
      %v3572 = vadd.f32 %v3251, %v3571
      %v3573 = vpop.f32.mrb[0].mxu0
      %v3574 = vpop.f32.mrb[0].mxu0
      %v3575 = vadd.f32 %v3254, %v3574
      %v3576 = vpop.f32.mrb[0].mxu0
      %3577 = vmatprep.mubr.bf16.mxu0 %v1848
      %3578 = vmatmul.mubr.bf16.gmra.mrb[0].mxu0 %v1847
      %v3579 = vpop.f32.mrb[0].mxu0
      %v3580 = vadd.f32 %v3259, %v3579
      %v3581 = vpop.f32.mrb[0].mxu0
      %v3582 = vpop.f32.mrb[0].mxu0
      %v3583 = vadd.f32 %v3262, %v3582
      %v3584 = vpop.f32.mrb[0].mxu0
      %3585 = vmatprep.mubr.bf16.mxu0 %v1857
      %3586 = vmatmul.mubr.bf16.gmra.mrb[0].mxu0 %v1856
      %v3587 = vpop.f32.mrb[0].mxu0
      %v3588 = vadd.f32 %v3267, %v3587
      %v3589 = vpop.f32.mrb[0].mxu0
      %v3590 = vpop.f32.mrb[0].mxu0
      %v3591 = vadd.f32 %v3270, %v3590
      %v3592 = vpop.f32.mrb[0].mxu0
      %3593 = vmatprep.mubr.bf16.mxu0 %v1866
      %3594 = vmatmul.mubr.bf16.gmra.mrb[0].mxu0 %v1865
      %v3595 = vpop.f32.mrb[0].mxu0
      %v3596 = vadd.f32 %v3275, %v3595
      %v3597 = vpop.f32.mrb[0].mxu0
      %v3598 = vpop.f32.mrb[0].mxu0
      %v3599 = vadd.f32 %v3278, %v3598
      %v3600 = vpop.f32.mrb[0].mxu0
      %3601 = vmatprep.mubr.bf16.mxu0 %v1875
      %3602 = vmatmul.mubr.bf16.gmra.mrb[0].mxu0 %v1874
      %v3603 = vpop.f32.mrb[0].mxu0
      %v3604 = vadd.f32 %v3283, %v3603
      %v3605 = vpop.f32.mrb[0].mxu0
      %v3606 = vpop.f32.mrb[0].mxu0
      %v3607 = vadd.f32 %v3286, %v3606
      %v3608 = vpop.f32.mrb[0].mxu0
      %3609 = vmatprep.mubr.bf16.mxu0 %v1884
      %3610 = vmatmul.mubr.bf16.gmra.mrb[0].mxu0 %v1883
      %v3611 = vpop.f32.mrb[0].mxu0
      %v3612 = vadd.f32 %v3291, %v3611
      %v3613 = vpop.f32.mrb[0].mxu0
      %v3614 = vpop.f32.mrb[0].mxu0
      %v3615 = vadd.f32 %v3294, %v3614
      %v3616 = vpop.f32.mrb[0].mxu0
      %3617 = vmatprep.mubr.bf16.mxu0 %v1893
      %3618 = vmatmul.mubr.bf16.gmra.mrb[0].mxu0 %v1892
      %v3619 = vpop.f32.mrb[0].mxu0
      %v3620 = vadd.f32 %v3299, %v3619
      %v3621 = vpop.f32.mrb[0].mxu0
      %v3622 = vpop.f32.mrb[0].mxu0
      %v3623 = vadd.f32 %v3302, %v3622
      %v3624 = vpop.f32.mrb[0].mxu0
      %3625 = vmatprep.mubr.bf16.mxu0 %v1902
      %3626 = vmatmul.mubr.bf16.gmra.mrb[0].mxu0 %v1901
      %v3627 = vpop.f32.mrb[0].mxu0
      %v3628 = vadd.f32 %v3307, %v3627
      %v3629 = vpop.f32.mrb[0].mxu0
      %v3630 = vpop.f32.mrb[0].mxu0
      %v3631 = vadd.f32 %v3310, %v3630
      %v3632 = vpop.f32.mrb[0].mxu0
      %3633 = vmatprep.mubr.bf16.mxu0 %v1911
      %3634 = vmatmul.mubr.bf16.gmra.mrb[0].mxu0 %v1910
      %v3635 = vpop.f32.mrb[0].mxu0
      %v3636 = vadd.f32 %v3315, %v3635
      %v3637 = vpop.f32.mrb[0].mxu0
      %v3638 = vpop.f32.mrb[0].mxu0
      %v3639 = vadd.f32 %v3318, %v3638
      %v3640 = vpop.f32.mrb[0].mxu0
      %3641 = vmatprep.mubr.bf16.mxu0 %v1920
      %3642 = vmatmul.mubr.bf16.gmra.mrb[0].mxu0 %v1919
      %v3643 = vpop.f32.mrb[0].mxu0
      %v3644 = vadd.f32 %v3323, %v3643
      %v3645 = vpop.f32.mrb[0].mxu0
      %v3646 = vpop.f32.mrb[0].mxu0
      %v3647 = vadd.f32 %v3326, %v3646
      %v3648 = vpop.f32.mrb[0].mxu0
      %3649 = vmatprep.mubr.bf16.mxu0 %v1929
      %3650 = vmatmul.mubr.bf16.gmra.mrb[0].mxu0 %v1928
      %v3651 = vpop.f32.mrb[0].mxu0
      %v3652 = vadd.f32 %v3331, %v3651
      %v3653 = vpop.f32.mrb[0].mxu0
      %v3654 = vpop.f32.mrb[0].mxu0
      %v3655 = vadd.f32 %v3334, %v3654
      %v3656 = vpop.f32.mrb[0].mxu0
      %3657 = vmatprep.mubr.bf16.mxu0 %v1938
      %3658 = vmatmul.mubr.bf16.gmra.mrb[0].mxu0 %v1937
      %v3659 = vpop.f32.mrb[0].mxu0
      %v3660 = vadd.f32 %v3339, %v3659
      %v3661 = vpop.f32.mrb[0].mxu0
      %v3662 = vpop.f32.mrb[0].mxu0
      %v3663 = vadd.f32 %v3342, %v3662
      %v3664 = vpop.f32.mrb[0].mxu0
      %3665 = vmatprep.mubr.bf16.mxu0 %v1947
      %3666 = vmatmul.mubr.bf16.gmra.mrb[0].mxu0 %v1946
      %v3667 = vpop.f32.mrb[0].mxu0
      %v3668 = vadd.f32 %v3347, %v3667
      %v3669 = vpop.f32.mrb[0].mxu0
      %v3670 = vpop.f32.mrb[0].mxu0
      %v3671 = vadd.f32 %v3350, %v3670
      %v3672 = vpop.f32.mrb[0].mxu0
      %3673 = vmatprep.mubr.bf16.mxu0 %v1956
      %3674 = vmatmul.mubr.bf16.gmra.mrb[0].mxu0 %v1955
      %v3675 = vpop.f32.mrb[0].mxu0
      %v3676 = vadd.f32 %v3355, %v3675
      %v3677 = vpop.f32.mrb[0].mxu0
      %v3678 = vpop.f32.mrb[0].mxu0
      %v3679 = vadd.f32 %v3358, %v3678
      %v3680 = vpop.f32.mrb[0].mxu0
      %3681 = vmatprep.mubr.bf16.mxu0 %v1965
      %3682 = vmatmul.mubr.bf16.gmra.mrb[0].mxu0 %v1964
      %v3683 = vpop.f32.mrb[0].mxu0
      %v3684 = vadd.f32 %v3363, %v3683
      %v3685 = vpop.f32.mrb[0].mxu0
      %v3686 = vpop.f32.mrb[0].mxu0
      %v3687 = vadd.f32 %v3366, %v3686
      %v3688 = vpop.f32.mrb[0].mxu0
      %3689 = vmatprep.mubr.bf16.mxu0 %v1974
      %3690 = vmatmul.mubr.bf16.gmra.mrb[0].mxu0 %v1973
      %v3691 = vpop.f32.mrb[0].mxu0
      %v3692 = vadd.f32 %v3371, %v3691
      %v3693 = vpop.f32.mrb[0].mxu0
      %v3694 = vpop.f32.mrb[0].mxu0
      %v3695 = vadd.f32 %v3374, %v3694
      %v3696 = vpop.f32.mrb[0].mxu0
      %3697 = vmatprep.mubr.bf16.mxu0 %v1983
      %3698 = vmatmul.mubr.bf16.gmra.mrb[0].mxu0 %v1982
      %v3699 = vpop.f32.mrb[0].mxu0
      %v3700 = vadd.f32 %v3379, %v3699
      %v3701 = vpop.f32.mrb[0].mxu0
      %v3702 = vpop.f32.mrb[0].mxu0
      %v3703 = vadd.f32 %v3382, %v3702
      %v3704 = vpop.f32.mrb[0].mxu0
      %3705 = vdwg.mxu0
      %3706 = vmatprep.subr.bf16.mxu0 0
      %3707 = vmatpush1.bf16.msra.mxu0 %v2647
      %3708 = vmatprep.subr.bf16.mxu0 0
      %3709 = vmatpush1.bf16.msra.mxu0 %v2648
      %3710 = vmatprep.subr.bf16.mxu0 0
      %3711 = vmatpush1.bf16.msra.mxu0 %v2649
      %3712 = vmatprep.subr.bf16.mxu0 0
      %3713 = vmatpush1.bf16.msra.mxu0 %v2650
      %3714 = vmatprep.subr.bf16.mxu0 0
      %3715 = vmatpush1.bf16.msra.mxu0 %v2651
      %3716 = vmatprep.subr.bf16.mxu0 0
      %3717 = vmatpush1.bf16.msra.mxu0 %v2652
      %3718 = vmatprep.subr.bf16.mxu0 0
      %3719 = vmatpush1.bf16.msra.mxu0 %v2653
      %3720 = vmatprep.subr.bf16.mxu0 0
      %3721 = vmatpush1.bf16.msra.mxu0 %v2654
      %3722 = vmatprep.subr.bf16.mxu0 0
      %3723 = vmatpush1.bf16.msra.mxu0 %v2655
      %3724 = vmatprep.subr.bf16.mxu0 0
      %3725 = vmatpush1.bf16.msra.mxu0 %v2656
      %3726 = vmatprep.subr.bf16.mxu0 0
      %3727 = vmatpush1.bf16.msra.mxu0 %v2657
      %3728 = vmatprep.subr.bf16.mxu0 0
      %3729 = vmatpush1.bf16.msra.mxu0 %v2658
      %3730 = vmatprep.subr.bf16.mxu0 0
      %3731 = vmatpush1.bf16.msra.mxu0 %v2659
      %3732 = vmatprep.subr.bf16.mxu0 0
      %3733 = vmatpush1.bf16.msra.mxu0 %v2660
      %3734 = vmatprep.subr.bf16.mxu0 0
      %3735 = vmatpush1.bf16.msra.mxu0 %v2661
      %3736 = vmatprep.subr.bf16.mxu0 0
      %3737 = vmatpush1.bf16.msra.mxu0 %v2662
      %3738 = vmatprep.mubr.bf16.mxu0 %v1670
      %3739 = vmatmul.mubr.bf16.gmra.mrb[0].mxu0 %v1669
      %v3740 = vpop.f32.mrb[0].mxu0
      %v3741 = vadd.f32 %v3420, %v3740
      %v3742 = vpop.f32.mrb[0].mxu0
      %v3743 = vpop.f32.mrb[0].mxu0
      %v3744 = vadd.f32 %v3423, %v3743
      %v3745 = vpop.f32.mrb[0].mxu0
      %3746 = vmatprep.mubr.bf16.mxu0 %v1679
      %3747 = vmatmul.mubr.bf16.gmra.mrb[0].mxu0 %v1678
      %v3748 = vpop.f32.mrb[0].mxu0
      %v3749 = vadd.f32 %v3428, %v3748
      %v3750 = vpop.f32.mrb[0].mxu0
      %v3751 = vpop.f32.mrb[0].mxu0
      %v3752 = vadd.f32 %v3431, %v3751
      %v3753 = vpop.f32.mrb[0].mxu0
      %3754 = vmatprep.mubr.bf16.mxu0 %v1688
      %3755 = vmatmul.mubr.bf16.gmra.mrb[0].mxu0 %v1687
      %v3756 = vpop.f32.mrb[0].mxu0
      %v3757 = vadd.f32 %v3436, %v3756
      %v3758 = vpop.f32.mrb[0].mxu0
      %v3759 = vpop.f32.mrb[0].mxu0
      %v3760 = vadd.f32 %v3439, %v3759
      %v3761 = vpop.f32.mrb[0].mxu0
      %3762 = vmatprep.mubr.bf16.mxu0 %v1697
      %3763 = vmatmul.mubr.bf16.gmra.mrb[0].mxu0 %v1696
      %v3764 = vpop.f32.mrb[0].mxu0
      %v3765 = vadd.f32 %v3444, %v3764
      %v3766 = vpop.f32.mrb[0].mxu0
      %v3767 = vpop.f32.mrb[0].mxu0
      %v3768 = vadd.f32 %v3447, %v3767
      %v3769 = vpop.f32.mrb[0].mxu0
      %3770 = vmatprep.mubr.bf16.mxu0 %v1706
      %3771 = vmatmul.mubr.bf16.gmra.mrb[0].mxu0 %v1705
      %v3772 = vpop.f32.mrb[0].mxu0
      %v3773 = vadd.f32 %v3452, %v3772
      %v3774 = vpop.f32.mrb[0].mxu0
      %v3775 = vpop.f32.mrb[0].mxu0
      %v3776 = vadd.f32 %v3455, %v3775
      %v3777 = vpop.f32.mrb[0].mxu0
      %3778 = vmatprep.mubr.bf16.mxu0 %v1715
      %3779 = vmatmul.mubr.bf16.gmra.mrb[0].mxu0 %v1714
      %v3780 = vpop.f32.mrb[0].mxu0
      %v3781 = vadd.f32 %v3460, %v3780
      %v3782 = vpop.f32.mrb[0].mxu0
      %v3783 = vpop.f32.mrb[0].mxu0
      %v3784 = vadd.f32 %v3463, %v3783
      %v3785 = vpop.f32.mrb[0].mxu0
      %3786 = vmatprep.mubr.bf16.mxu0 %v1724
      %3787 = vmatmul.mubr.bf16.gmra.mrb[0].mxu0 %v1723
      %v3788 = vpop.f32.mrb[0].mxu0
      %v3789 = vadd.f32 %v3468, %v3788
      %v3790 = vpop.f32.mrb[0].mxu0
      %v3791 = vpop.f32.mrb[0].mxu0
      %v3792 = vadd.f32 %v3471, %v3791
      %v3793 = vpop.f32.mrb[0].mxu0
      %3794 = vmatprep.mubr.bf16.mxu0 %v1733
      %3795 = vmatmul.mubr.bf16.gmra.mrb[0].mxu0 %v1732
      %v3796 = vpop.f32.mrb[0].mxu0
      %v3797 = vadd.f32 %v3476, %v3796
      %v3798 = vpop.f32.mrb[0].mxu0
      %v3799 = vpop.f32.mrb[0].mxu0
      %v3800 = vadd.f32 %v3479, %v3799
      %v3801 = vpop.f32.mrb[0].mxu0
      %3802 = vmatprep.mubr.bf16.mxu0 %v1742
      %3803 = vmatmul.mubr.bf16.gmra.mrb[0].mxu0 %v1741
      %v3804 = vpop.f32.mrb[0].mxu0
      %v3805 = vadd.f32 %v3484, %v3804
      %v3806 = vpop.f32.mrb[0].mxu0
      %v3807 = vpop.f32.mrb[0].mxu0
      %v3808 = vadd.f32 %v3487, %v3807
      %v3809 = vpop.f32.mrb[0].mxu0
      %3810 = vmatprep.mubr.bf16.mxu0 %v1751
      %3811 = vmatmul.mubr.bf16.gmra.mrb[0].mxu0 %v1750
      %v3812 = vpop.f32.mrb[0].mxu0
      %v3813 = vadd.f32 %v3492, %v3812
      %v3814 = vpop.f32.mrb[0].mxu0
      %v3815 = vpop.f32.mrb[0].mxu0
      %v3816 = vadd.f32 %v3495, %v3815
      %v3817 = vpop.f32.mrb[0].mxu0
      %3818 = vmatprep.mubr.bf16.mxu0 %v1760
      %3819 = vmatmul.mubr.bf16.gmra.mrb[0].mxu0 %v1759
      %v3820 = vpop.f32.mrb[0].mxu0
      %v3821 = vadd.f32 %v3500, %v3820
      %v3822 = vpop.f32.mrb[0].mxu0
      %v3823 = vpop.f32.mrb[0].mxu0
      %v3824 = vadd.f32 %v3503, %v3823
      %v3825 = vpop.f32.mrb[0].mxu0
      %3826 = vmatprep.mubr.bf16.mxu0 %v1769
      %3827 = vmatmul.mubr.bf16.gmra.mrb[0].mxu0 %v1768
      %v3828 = vpop.f32.mrb[0].mxu0
      %v3829 = vadd.f32 %v3508, %v3828
      %v3830 = vpop.f32.mrb[0].mxu0
      %v3831 = vpop.f32.mrb[0].mxu0
      %v3832 = vadd.f32 %v3511, %v3831
      %v3833 = vpop.f32.mrb[0].mxu0
      %3834 = vmatprep.mubr.bf16.mxu0 %v1778
      %3835 = vmatmul.mubr.bf16.gmra.mrb[0].mxu0 %v1777
      %v3836 = vpop.f32.mrb[0].mxu0
      %v3837 = vadd.f32 %v3516, %v3836
      %v3838 = vpop.f32.mrb[0].mxu0
      %v3839 = vpop.f32.mrb[0].mxu0
      %v3840 = vadd.f32 %v3519, %v3839
      %v3841 = vpop.f32.mrb[0].mxu0
      %3842 = vmatprep.mubr.bf16.mxu0 %v1787
      %3843 = vmatmul.mubr.bf16.gmra.mrb[0].mxu0 %v1786
      %v3844 = vpop.f32.mrb[0].mxu0
      %v3845 = vadd.f32 %v3524, %v3844
      %v3846 = vpop.f32.mrb[0].mxu0
      %v3847 = vpop.f32.mrb[0].mxu0
      %v3848 = vadd.f32 %v3527, %v3847
      %v3849 = vpop.f32.mrb[0].mxu0
      %3850 = vmatprep.mubr.bf16.mxu0 %v1796
      %3851 = vmatmul.mubr.bf16.gmra.mrb[0].mxu0 %v1795
      %v3852 = vpop.f32.mrb[0].mxu0
      %v3853 = vadd.f32 %v3532, %v3852
      %v3854 = vpop.f32.mrb[0].mxu0
      %v3855 = vpop.f32.mrb[0].mxu0
      %v3856 = vadd.f32 %v3535, %v3855
      %v3857 = vpop.f32.mrb[0].mxu0
      %3858 = vmatprep.mubr.bf16.mxu0 %v1805
      %3859 = vmatmul.mubr.bf16.gmra.mrb[0].mxu0 %v1804
      %v3860 = vpop.f32.mrb[0].mxu0
      %v3861 = vadd.f32 %v3540, %v3860
      %v3862 = vpop.f32.mrb[0].mxu0
      %v3863 = vpop.f32.mrb[0].mxu0
      %v3864 = vadd.f32 %v3543, %v3863
      %v3865 = vpop.f32.mrb[0].mxu0
      %3866 = vmatprep.mubr.bf16.mxu0 %v1814
      %3867 = vmatmul.mubr.bf16.gmra.mrb[0].mxu0 %v1813
      %v3868 = vpop.f32.mrb[0].mxu0
      %v3869 = vadd.f32 %v3548, %v3868
      %v3870 = vpop.f32.mrb[0].mxu0
      %v3871 = vpop.f32.mrb[0].mxu0
      %v3872 = vadd.f32 %v3551, %v3871
      %v3873 = vpop.f32.mrb[0].mxu0
      %3874 = vmatprep.mubr.bf16.mxu0 %v1823
      %3875 = vmatmul.mubr.bf16.gmra.mrb[0].mxu0 %v1822
      %v3876 = vpop.f32.mrb[0].mxu0
      %v3877 = vadd.f32 %v3556, %v3876
      %v3878 = vpop.f32.mrb[0].mxu0
      %v3879 = vpop.f32.mrb[0].mxu0
      %v3880 = vadd.f32 %v3559, %v3879
      %v3881 = vpop.f32.mrb[0].mxu0
      %3882 = vmatprep.mubr.bf16.mxu0 %v1832
      %3883 = vmatmul.mubr.bf16.gmra.mrb[0].mxu0 %v1831
      %v3884 = vpop.f32.mrb[0].mxu0
      %v3885 = vadd.f32 %v3564, %v3884
      %v3886 = vpop.f32.mrb[0].mxu0
      %v3887 = vpop.f32.mrb[0].mxu0
      %v3888 = vadd.f32 %v3567, %v3887
      %v3889 = vpop.f32.mrb[0].mxu0
      %3890 = vmatprep.mubr.bf16.mxu0 %v1841
      %3891 = vmatmul.mubr.bf16.gmra.mrb[0].mxu0 %v1840
      %v3892 = vpop.f32.mrb[0].mxu0
      %v3893 = vadd.f32 %v3572, %v3892
      %v3894 = vpop.f32.mrb[0].mxu0
      %v3895 = vpop.f32.mrb[0].mxu0
      %v3896 = vadd.f32 %v3575, %v3895
      %v3897 = vpop.f32.mrb[0].mxu0
      %3898 = vmatprep.mubr.bf16.mxu0 %v1850
      %3899 = vmatmul.mubr.bf16.gmra.mrb[0].mxu0 %v1849
      %v3900 = vpop.f32.mrb[0].mxu0
      %v3901 = vadd.f32 %v3580, %v3900
      %v3902 = vpop.f32.mrb[0].mxu0
      %v3903 = vpop.f32.mrb[0].mxu0
      %v3904 = vadd.f32 %v3583, %v3903
      %v3905 = vpop.f32.mrb[0].mxu0
      %3906 = vmatprep.mubr.bf16.mxu0 %v1859
      %3907 = vmatmul.mubr.bf16.gmra.mrb[0].mxu0 %v1858
      %v3908 = vpop.f32.mrb[0].mxu0
      %v3909 = vadd.f32 %v3588, %v3908
      %v3910 = vpop.f32.mrb[0].mxu0
      %v3911 = vpop.f32.mrb[0].mxu0
      %v3912 = vadd.f32 %v3591, %v3911
      %v3913 = vpop.f32.mrb[0].mxu0
      %3914 = vmatprep.mubr.bf16.mxu0 %v1868
      %3915 = vmatmul.mubr.bf16.gmra.mrb[0].mxu0 %v1867
      %v3916 = vpop.f32.mrb[0].mxu0
      %v3917 = vadd.f32 %v3596, %v3916
      %v3918 = vpop.f32.mrb[0].mxu0
      %v3919 = vpop.f32.mrb[0].mxu0
      %v3920 = vadd.f32 %v3599, %v3919
      %v3921 = vpop.f32.mrb[0].mxu0
      %3922 = vmatprep.mubr.bf16.mxu0 %v1877
      %3923 = vmatmul.mubr.bf16.gmra.mrb[0].mxu0 %v1876
      %v3924 = vpop.f32.mrb[0].mxu0
      %v3925 = vadd.f32 %v3604, %v3924
      %v3926 = vpop.f32.mrb[0].mxu0
      %v3927 = vpop.f32.mrb[0].mxu0
      %v3928 = vadd.f32 %v3607, %v3927
      %v3929 = vpop.f32.mrb[0].mxu0
      %3930 = vmatprep.mubr.bf16.mxu0 %v1886
      %3931 = vmatmul.mubr.bf16.gmra.mrb[0].mxu0 %v1885
      %v3932 = vpop.f32.mrb[0].mxu0
      %v3933 = vadd.f32 %v3612, %v3932
      %v3934 = vpop.f32.mrb[0].mxu0
      %v3935 = vpop.f32.mrb[0].mxu0
      %v3936 = vadd.f32 %v3615, %v3935
      %v3937 = vpop.f32.mrb[0].mxu0
      %3938 = vmatprep.mubr.bf16.mxu0 %v1895
      %3939 = vmatmul.mubr.bf16.gmra.mrb[0].mxu0 %v1894
      %v3940 = vpop.f32.mrb[0].mxu0
      %v3941 = vadd.f32 %v3620, %v3940
      %v3942 = vpop.f32.mrb[0].mxu0
      %v3943 = vpop.f32.mrb[0].mxu0
      %v3944 = vadd.f32 %v3623, %v3943
      %v3945 = vpop.f32.mrb[0].mxu0
      %3946 = vmatprep.mubr.bf16.mxu0 %v1904
      %3947 = vmatmul.mubr.bf16.gmra.mrb[0].mxu0 %v1903
      %v3948 = vpop.f32.mrb[0].mxu0
      %v3949 = vadd.f32 %v3628, %v3948
      %v3950 = vpop.f32.mrb[0].mxu0
      %v3951 = vpop.f32.mrb[0].mxu0
      %v3952 = vadd.f32 %v3631, %v3951
      %v3953 = vpop.f32.mrb[0].mxu0
      %3954 = vmatprep.mubr.bf16.mxu0 %v1913
      %3955 = vmatmul.mubr.bf16.gmra.mrb[0].mxu0 %v1912
      %v3956 = vpop.f32.mrb[0].mxu0
      %v3957 = vadd.f32 %v3636, %v3956
      %v3958 = vpop.f32.mrb[0].mxu0
      %v3959 = vpop.f32.mrb[0].mxu0
      %v3960 = vadd.f32 %v3639, %v3959
      %v3961 = vpop.f32.mrb[0].mxu0
      %3962 = vmatprep.mubr.bf16.mxu0 %v1922
      %3963 = vmatmul.mubr.bf16.gmra.mrb[0].mxu0 %v1921
      %v3964 = vpop.f32.mrb[0].mxu0
      %v3965 = vadd.f32 %v3644, %v3964
      %v3966 = vpop.f32.mrb[0].mxu0
      %v3967 = vpop.f32.mrb[0].mxu0
      %v3968 = vadd.f32 %v3647, %v3967
      %v3969 = vpop.f32.mrb[0].mxu0
      %3970 = vmatprep.mubr.bf16.mxu0 %v1931
      %3971 = vmatmul.mubr.bf16.gmra.mrb[0].mxu0 %v1930
      %v3972 = vpop.f32.mrb[0].mxu0
      %v3973 = vadd.f32 %v3652, %v3972
      %v3974 = vpop.f32.mrb[0].mxu0
      %v3975 = vpop.f32.mrb[0].mxu0
      %v3976 = vadd.f32 %v3655, %v3975
      %v3977 = vpop.f32.mrb[0].mxu0
      %3978 = vmatprep.mubr.bf16.mxu0 %v1940
      %3979 = vmatmul.mubr.bf16.gmra.mrb[0].mxu0 %v1939
      %v3980 = vpop.f32.mrb[0].mxu0
      %v3981 = vadd.f32 %v3660, %v3980
      %v3982 = vpop.f32.mrb[0].mxu0
      %v3983 = vpop.f32.mrb[0].mxu0
      %v3984 = vadd.f32 %v3663, %v3983
      %v3985 = vpop.f32.mrb[0].mxu0
      %3986 = vmatprep.mubr.bf16.mxu0 %v1949
      %3987 = vmatmul.mubr.bf16.gmra.mrb[0].mxu0 %v1948
      %v3988 = vpop.f32.mrb[0].mxu0
      %v3989 = vadd.f32 %v3668, %v3988
      %v3990 = vpop.f32.mrb[0].mxu0
      %v3991 = vpop.f32.mrb[0].mxu0
      %v3992 = vadd.f32 %v3671, %v3991
      %v3993 = vpop.f32.mrb[0].mxu0
      %3994 = vmatprep.mubr.bf16.mxu0 %v1958
      %3995 = vmatmul.mubr.bf16.gmra.mrb[0].mxu0 %v1957
      %v3996 = vpop.f32.mrb[0].mxu0
      %v3997 = vadd.f32 %v3676, %v3996
      %v3998 = vpop.f32.mrb[0].mxu0
      %v3999 = vpop.f32.mrb[0].mxu0
      %v4000 = vadd.f32 %v3679, %v3999
      %v4001 = vpop.f32.mrb[0].mxu0
      %4002 = vmatprep.mubr.bf16.mxu0 %v1967
      %4003 = vmatmul.mubr.bf16.gmra.mrb[0].mxu0 %v1966
      %v4004 = vpop.f32.mrb[0].mxu0
      %v4005 = vadd.f32 %v3684, %v4004
      %v4006 = vpop.f32.mrb[0].mxu0
      %v4007 = vpop.f32.mrb[0].mxu0
      %v4008 = vadd.f32 %v3687, %v4007
      %v4009 = vpop.f32.mrb[0].mxu0
      %4010 = vmatprep.mubr.bf16.mxu0 %v1976
      %4011 = vmatmul.mubr.bf16.gmra.mrb[0].mxu0 %v1975
      %v4012 = vpop.f32.mrb[0].mxu0
      %v4013 = vadd.f32 %v3692, %v4012
      %v4014 = vpop.f32.mrb[0].mxu0
      %v4015 = vpop.f32.mrb[0].mxu0
      %v4016 = vadd.f32 %v3695, %v4015
      %v4017 = vpop.f32.mrb[0].mxu0
      %4018 = vmatprep.mubr.bf16.mxu0 %v1985
      %4019 = vmatmul.mubr.bf16.gmra.mrb[0].mxu0 %v1984
      %v4020 = vpop.f32.mrb[0].mxu0
      %v4021 = vadd.f32 %v3700, %v4020
      %v4022 = vpop.f32.mrb[0].mxu0
      %v4023 = vpop.f32.mrb[0].mxu0
      %v4024 = vadd.f32 %v3703, %v4023
      %v4025 = vpop.f32.mrb[0].mxu0
      %4026 = vdwg.mxu0
      %4027 = vmatprep.subr.bf16.mxu0 0
      %4028 = vmatpush1.bf16.msra.mxu0 %v2663
      %4029 = vmatprep.subr.bf16.mxu0 0
      %4030 = vmatpush1.bf16.msra.mxu0 %v2664
      %4031 = vmatprep.subr.bf16.mxu0 0
      %4032 = vmatpush1.bf16.msra.mxu0 %v2665
      %4033 = vmatprep.subr.bf16.mxu0 0
      %4034 = vmatpush1.bf16.msra.mxu0 %v2666
      %4035 = vmatprep.subr.bf16.mxu0 0
      %4036 = vmatpush1.bf16.msra.mxu0 %v2667
      %4037 = vmatprep.subr.bf16.mxu0 0
      %4038 = vmatpush1.bf16.msra.mxu0 %v2668
      %4039 = vmatprep.subr.bf16.mxu0 0
      %4040 = vmatpush1.bf16.msra.mxu0 %v2669
      %4041 = vmatprep.subr.bf16.mxu0 0
      %4042 = vmatpush1.bf16.msra.mxu0 %v2670
      %4043 = vmatprep.subr.bf16.mxu0 0
      %4044 = vmatpush1.bf16.msra.mxu0 0
      %4045 = vmatprep.subr.bf16.mxu0 0
      %4046 = vmatpush1.bf16.msra.mxu0 0
      %4047 = vmatprep.subr.bf16.mxu0 0
      %4048 = vmatpush1.bf16.msra.mxu0 0
      %4049 = vmatprep.subr.bf16.mxu0 0
      %4050 = vmatpush1.bf16.msra.mxu0 0
      %4051 = vmatprep.subr.bf16.mxu0 0
      %4052 = vmatpush1.bf16.msra.mxu0 0
      %4053 = vmatprep.subr.bf16.mxu0 0
      %4054 = vmatpush1.bf16.msra.mxu0 0
      %4055 = vmatprep.subr.bf16.mxu0 0
      %4056 = vmatpush1.bf16.msra.mxu0 0
      %4057 = vmatprep.subr.bf16.mxu0 0
      %4058 = vmatpush1.bf16.msra.mxu0 0
      %4059 = vmatprep.mubr.bf16.mxu0 0
      %4060 = vmatmul.mubr.bf16.gmra.mrb[0].mxu0 %v1671
      %v4061 = vpop.f32.mrb[0].mxu0
      %v4062 = vadd.f32 %v3741, %v4061
      %v4063 = vpop.f32.mrb[0].mxu0
      %v4064 = vpop.f32.mrb[0].mxu0
      %v4065 = vadd.f32 %v3744, %v4064
      %v4066 = vpop.f32.mrb[0].mxu0
      %4067 = vmatprep.mubr.bf16.mxu0 0
      %4068 = vmatmul.mubr.bf16.gmra.mrb[0].mxu0 %v1680
      %v4069 = vpop.f32.mrb[0].mxu0
      %v4070 = vadd.f32 %v3749, %v4069
      %v4071 = vpop.f32.mrb[0].mxu0
      %v4072 = vpop.f32.mrb[0].mxu0
      %v4073 = vadd.f32 %v3752, %v4072
      %v4074 = vpop.f32.mrb[0].mxu0
      %4075 = vmatprep.mubr.bf16.mxu0 0
      %4076 = vmatmul.mubr.bf16.gmra.mrb[0].mxu0 %v1689
      %v4077 = vpop.f32.mrb[0].mxu0
      %v4078 = vadd.f32 %v3757, %v4077
      %v4079 = vpop.f32.mrb[0].mxu0
      %v4080 = vpop.f32.mrb[0].mxu0
      %v4081 = vadd.f32 %v3760, %v4080
      %v4082 = vpop.f32.mrb[0].mxu0
      %4083 = vmatprep.mubr.bf16.mxu0 0
      %4084 = vmatmul.mubr.bf16.gmra.mrb[0].mxu0 %v1698
      %v4085 = vpop.f32.mrb[0].mxu0
      %v4086 = vadd.f32 %v3765, %v4085
      %v4087 = vpop.f32.mrb[0].mxu0
      %v4088 = vpop.f32.mrb[0].mxu0
      %v4089 = vadd.f32 %v3768, %v4088
      %v4090 = vpop.f32.mrb[0].mxu0
      %4091 = vmatprep.mubr.bf16.mxu0 0
      %4092 = vmatmul.mubr.bf16.gmra.mrb[0].mxu0 %v1707
      %v4093 = vpop.f32.mrb[0].mxu0
      %v4094 = vadd.f32 %v3773, %v4093
      %v4095 = vpop.f32.mrb[0].mxu0
      %v4096 = vpop.f32.mrb[0].mxu0
      %v4097 = vadd.f32 %v3776, %v4096
      %v4098 = vpop.f32.mrb[0].mxu0
      %4099 = vmatprep.mubr.bf16.mxu0 0
      %4100 = vmatmul.mubr.bf16.gmra.mrb[0].mxu0 %v1716
      %v4101 = vpop.f32.mrb[0].mxu0
      %v4102 = vadd.f32 %v3781, %v4101
      %v4103 = vpop.f32.mrb[0].mxu0
      %v4104 = vpop.f32.mrb[0].mxu0
      %v4105 = vadd.f32 %v3784, %v4104
      %v4106 = vpop.f32.mrb[0].mxu0
      %4107 = vmatprep.mubr.bf16.mxu0 0
      %4108 = vmatmul.mubr.bf16.gmra.mrb[0].mxu0 %v1725
      %v4109 = vpop.f32.mrb[0].mxu0
      %v4110 = vadd.f32 %v3789, %v4109
      %v4111 = vpop.f32.mrb[0].mxu0
      %v4112 = vpop.f32.mrb[0].mxu0
      %v4113 = vadd.f32 %v3792, %v4112
      %v4114 = vpop.f32.mrb[0].mxu0
      %4115 = vmatprep.mubr.bf16.mxu0 0
      %4116 = vmatmul.mubr.bf16.gmra.mrb[0].mxu0 %v1734
      %v4117 = vpop.f32.mrb[0].mxu0
      %v4118 = vadd.f32 %v3797, %v4117
      %v4119 = vpop.f32.mrb[0].mxu0
      %v4120 = vpop.f32.mrb[0].mxu0
      %v4121 = vadd.f32 %v3800, %v4120
      %v4122 = vpop.f32.mrb[0].mxu0
      %4123 = vmatprep.mubr.bf16.mxu0 0
      %4124 = vmatmul.mubr.bf16.gmra.mrb[0].mxu0 %v1743
      %v4125 = vpop.f32.mrb[0].mxu0
      %v4126 = vadd.f32 %v3805, %v4125
      %v4127 = vpop.f32.mrb[0].mxu0
      %v4128 = vpop.f32.mrb[0].mxu0
      %v4129 = vadd.f32 %v3808, %v4128
      %v4130 = vpop.f32.mrb[0].mxu0
      %4131 = vmatprep.mubr.bf16.mxu0 0
      %4132 = vmatmul.mubr.bf16.gmra.mrb[0].mxu0 %v1752
      %v4133 = vpop.f32.mrb[0].mxu0
      %v4134 = vadd.f32 %v3813, %v4133
      %v4135 = vpop.f32.mrb[0].mxu0
      %v4136 = vpop.f32.mrb[0].mxu0
      %v4137 = vadd.f32 %v3816, %v4136
      %v4138 = vpop.f32.mrb[0].mxu0
      %4139 = vmatprep.mubr.bf16.mxu0 0
      %4140 = vmatmul.mubr.bf16.gmra.mrb[0].mxu0 %v1761
      %v4141 = vpop.f32.mrb[0].mxu0
      %v4142 = vadd.f32 %v3821, %v4141
      %v4143 = vpop.f32.mrb[0].mxu0
      %v4144 = vpop.f32.mrb[0].mxu0
      %v4145 = vadd.f32 %v3824, %v4144
      %v4146 = vpop.f32.mrb[0].mxu0
      %4147 = vmatprep.mubr.bf16.mxu0 0
      %4148 = vmatmul.mubr.bf16.gmra.mrb[0].mxu0 %v1770
      %v4149 = vpop.f32.mrb[0].mxu0
      %v4150 = vadd.f32 %v3829, %v4149
      %v4151 = vpop.f32.mrb[0].mxu0
      %v4152 = vpop.f32.mrb[0].mxu0
      %v4153 = vadd.f32 %v3832, %v4152
      %v4154 = vpop.f32.mrb[0].mxu0
      %4155 = vmatprep.mubr.bf16.mxu0 0
      %4156 = vmatmul.mubr.bf16.gmra.mrb[0].mxu0 %v1779
      %v4157 = vpop.f32.mrb[0].mxu0
      %v4158 = vadd.f32 %v3837, %v4157
      %v4159 = vpop.f32.mrb[0].mxu0
      %v4160 = vpop.f32.mrb[0].mxu0
      %v4161 = vadd.f32 %v3840, %v4160
      %v4162 = vpop.f32.mrb[0].mxu0
      %4163 = vmatprep.mubr.bf16.mxu0 0
      %4164 = vmatmul.mubr.bf16.gmra.mrb[0].mxu0 %v1788
      %v4165 = vpop.f32.mrb[0].mxu0
      %v4166 = vadd.f32 %v3845, %v4165
      %v4167 = vpop.f32.mrb[0].mxu0
      %v4168 = vpop.f32.mrb[0].mxu0
      %v4169 = vadd.f32 %v3848, %v4168
      %v4170 = vpop.f32.mrb[0].mxu0
      %4171 = vmatprep.mubr.bf16.mxu0 0
      %4172 = vmatmul.mubr.bf16.gmra.mrb[0].mxu0 %v1797
      %v4173 = vpop.f32.mrb[0].mxu0
      %v4174 = vadd.f32 %v3853, %v4173
      %v4175 = vpop.f32.mrb[0].mxu0
      %v4176 = vpop.f32.mrb[0].mxu0
      %v4177 = vadd.f32 %v3856, %v4176
      %v4178 = vpop.f32.mrb[0].mxu0
      %4179 = vmatprep.mubr.bf16.mxu0 0
      %4180 = vmatmul.mubr.bf16.gmra.mrb[0].mxu0 %v1806
      %v4181 = vpop.f32.mrb[0].mxu0
      %v4182 = vadd.f32 %v3861, %v4181
      %v4183 = vpop.f32.mrb[0].mxu0
      %v4184 = vpop.f32.mrb[0].mxu0
      %v4185 = vadd.f32 %v3864, %v4184
      %v4186 = vpop.f32.mrb[0].mxu0
      %4187 = vmatprep.mubr.bf16.mxu0 0
      %4188 = vmatmul.mubr.bf16.gmra.mrb[0].mxu0 %v1815
      %v4189 = vpop.f32.mrb[0].mxu0
      %v4190 = vadd.f32 %v3869, %v4189
      %v4191 = vpop.f32.mrb[0].mxu0
      %v4192 = vpop.f32.mrb[0].mxu0
      %v4193 = vadd.f32 %v3872, %v4192
      %v4194 = vpop.f32.mrb[0].mxu0
      %4195 = vmatprep.mubr.bf16.mxu0 0
      %4196 = vmatmul.mubr.bf16.gmra.mrb[0].mxu0 %v1824
      %v4197 = vpop.f32.mrb[0].mxu0
      %v4198 = vadd.f32 %v3877, %v4197
      %v4199 = vpop.f32.mrb[0].mxu0
      %v4200 = vpop.f32.mrb[0].mxu0
      %v4201 = vadd.f32 %v3880, %v4200
      %v4202 = vpop.f32.mrb[0].mxu0
      %4203 = vmatprep.mubr.bf16.mxu0 0
      %4204 = vmatmul.mubr.bf16.gmra.mrb[0].mxu0 %v1833
      %v4205 = vpop.f32.mrb[0].mxu0
      %v4206 = vadd.f32 %v3885, %v4205
      %v4207 = vpop.f32.mrb[0].mxu0
      %v4208 = vpop.f32.mrb[0].mxu0
      %v4209 = vadd.f32 %v3888, %v4208
      %v4210 = vpop.f32.mrb[0].mxu0
      %4211 = vmatprep.mubr.bf16.mxu0 0
      %4212 = vmatmul.mubr.bf16.gmra.mrb[0].mxu0 %v1842
      %v4213 = vpop.f32.mrb[0].mxu0
      %v4214 = vadd.f32 %v3893, %v4213
      %v4215 = vpop.f32.mrb[0].mxu0
      %v4216 = vpop.f32.mrb[0].mxu0
      %v4217 = vadd.f32 %v3896, %v4216
      %v4218 = vpop.f32.mrb[0].mxu0
      %4219 = vmatprep.mubr.bf16.mxu0 0
      %4220 = vmatmul.mubr.bf16.gmra.mrb[0].mxu0 %v1851
      %v4221 = vpop.f32.mrb[0].mxu0
      %v4222 = vadd.f32 %v3901, %v4221
      %v4223 = vpop.f32.mrb[0].mxu0
      %v4224 = vpop.f32.mrb[0].mxu0
      %v4225 = vadd.f32 %v3904, %v4224
      %v4226 = vpop.f32.mrb[0].mxu0
      %4227 = vmatprep.mubr.bf16.mxu0 0
      %4228 = vmatmul.mubr.bf16.gmra.mrb[0].mxu0 %v1860
      %v4229 = vpop.f32.mrb[0].mxu0
      %v4230 = vadd.f32 %v3909, %v4229
      %v4231 = vpop.f32.mrb[0].mxu0
      %v4232 = vpop.f32.mrb[0].mxu0
      %v4233 = vadd.f32 %v3912, %v4232
      %v4234 = vpop.f32.mrb[0].mxu0
      %4235 = vmatprep.mubr.bf16.mxu0 0
      %4236 = vmatmul.mubr.bf16.gmra.mrb[0].mxu0 %v1869
      %v4237 = vpop.f32.mrb[0].mxu0
      %v4238 = vadd.f32 %v3917, %v4237
      %v4239 = vpop.f32.mrb[0].mxu0
      %v4240 = vpop.f32.mrb[0].mxu0
      %v4241 = vadd.f32 %v3920, %v4240
      %v4242 = vpop.f32.mrb[0].mxu0
      %4243 = vmatprep.mubr.bf16.mxu0 0
      %4244 = vmatmul.mubr.bf16.gmra.mrb[0].mxu0 %v1878
      %v4245 = vpop.f32.mrb[0].mxu0
      %v4246 = vadd.f32 %v3925, %v4245
      %v4247 = vpop.f32.mrb[0].mxu0
      %v4248 = vpop.f32.mrb[0].mxu0
      %v4249 = vadd.f32 %v3928, %v4248
      %v4250 = vpop.f32.mrb[0].mxu0
      %4251 = vmatprep.mubr.bf16.mxu0 0
      %4252 = vmatmul.mubr.bf16.gmra.mrb[0].mxu0 %v1887
      %v4253 = vpop.f32.mrb[0].mxu0
      %v4254 = vadd.f32 %v3933, %v4253
      %v4255 = vpop.f32.mrb[0].mxu0
      %v4256 = vpop.f32.mrb[0].mxu0
      %v4257 = vadd.f32 %v3936, %v4256
      %v4258 = vpop.f32.mrb[0].mxu0
      %4259 = vmatprep.mubr.bf16.mxu0 0
      %4260 = vmatmul.mubr.bf16.gmra.mrb[0].mxu0 %v1896
      %v4261 = vpop.f32.mrb[0].mxu0
      %v4262 = vadd.f32 %v3941, %v4261
      %v4263 = vpop.f32.mrb[0].mxu0
      %v4264 = vpop.f32.mrb[0].mxu0
      %v4265 = vadd.f32 %v3944, %v4264
      %v4266 = vpop.f32.mrb[0].mxu0
      %4267 = vmatprep.mubr.bf16.mxu0 0
      %4268 = vmatmul.mubr.bf16.gmra.mrb[0].mxu0 %v1905
      %v4269 = vpop.f32.mrb[0].mxu0
      %v4270 = vadd.f32 %v3949, %v4269
      %v4271 = vpop.f32.mrb[0].mxu0
      %v4272 = vpop.f32.mrb[0].mxu0
      %v4273 = vadd.f32 %v3952, %v4272
      %v4274 = vpop.f32.mrb[0].mxu0
      %4275 = vmatprep.mubr.bf16.mxu0 0
      %4276 = vmatmul.mubr.bf16.gmra.mrb[0].mxu0 %v1914
      %v4277 = vpop.f32.mrb[0].mxu0
      %v4278 = vadd.f32 %v3957, %v4277
      %v4279 = vpop.f32.mrb[0].mxu0
      %v4280 = vpop.f32.mrb[0].mxu0
      %v4281 = vadd.f32 %v3960, %v4280
      %v4282 = vpop.f32.mrb[0].mxu0
      %4283 = vmatprep.mubr.bf16.mxu0 0
      %4284 = vmatmul.mubr.bf16.gmra.mrb[0].mxu0 %v1923
      %v4285 = vpop.f32.mrb[0].mxu0
      %v4286 = vadd.f32 %v3965, %v4285
      %v4287 = vpop.f32.mrb[0].mxu0
      %v4288 = vpop.f32.mrb[0].mxu0
      %v4289 = vadd.f32 %v3968, %v4288
      %v4290 = vpop.f32.mrb[0].mxu0
      %4291 = vmatprep.mubr.bf16.mxu0 0
      %4292 = vmatmul.mubr.bf16.gmra.mrb[0].mxu0 %v1932
      %v4293 = vpop.f32.mrb[0].mxu0
      %v4294 = vadd.f32 %v3973, %v4293
      %v4295 = vpop.f32.mrb[0].mxu0
      %v4296 = vpop.f32.mrb[0].mxu0
      %v4297 = vadd.f32 %v3976, %v4296
      %v4298 = vpop.f32.mrb[0].mxu0
      %4299 = vmatprep.mubr.bf16.mxu0 0
      %4300 = vmatmul.mubr.bf16.gmra.mrb[0].mxu0 %v1941
      %v4301 = vpop.f32.mrb[0].mxu0
      %v4302 = vadd.f32 %v3981, %v4301
      %v4303 = vpop.f32.mrb[0].mxu0
      %v4304 = vpop.f32.mrb[0].mxu0
      %v4305 = vadd.f32 %v3984, %v4304
      %v4306 = vpop.f32.mrb[0].mxu0
      %4307 = vmatprep.mubr.bf16.mxu0 0
      %4308 = vmatmul.mubr.bf16.gmra.mrb[0].mxu0 %v1950
      %v4309 = vpop.f32.mrb[0].mxu0
      %v4310 = vadd.f32 %v3989, %v4309
      %v4311 = vpop.f32.mrb[0].mxu0
      %v4312 = vpop.f32.mrb[0].mxu0
      %v4313 = vadd.f32 %v3992, %v4312
      %v4314 = vpop.f32.mrb[0].mxu0
      %4315 = vmatprep.mubr.bf16.mxu0 0
      %4316 = vmatmul.mubr.bf16.gmra.mrb[0].mxu0 %v1959
      %v4317 = vpop.f32.mrb[0].mxu0
      %v4318 = vadd.f32 %v3997, %v4317
      %v4319 = vpop.f32.mrb[0].mxu0
      %v4320 = vpop.f32.mrb[0].mxu0
      %v4321 = vadd.f32 %v4000, %v4320
      %v4322 = vpop.f32.mrb[0].mxu0
      %4323 = vmatprep.mubr.bf16.mxu0 0
      %4324 = vmatmul.mubr.bf16.gmra.mrb[0].mxu0 %v1968
      %v4325 = vpop.f32.mrb[0].mxu0
      %v4326 = vadd.f32 %v4005, %v4325
      %v4327 = vpop.f32.mrb[0].mxu0
      %v4328 = vpop.f32.mrb[0].mxu0
      %v4329 = vadd.f32 %v4008, %v4328
      %v4330 = vpop.f32.mrb[0].mxu0
      %4331 = vmatprep.mubr.bf16.mxu0 0
      %4332 = vmatmul.mubr.bf16.gmra.mrb[0].mxu0 %v1977
      %v4333 = vpop.f32.mrb[0].mxu0
      %v4334 = vadd.f32 %v4013, %v4333
      %v4335 = vpop.f32.mrb[0].mxu0
      %v4336 = vpop.f32.mrb[0].mxu0
      %v4337 = vadd.f32 %v4016, %v4336
      %v4338 = vpop.f32.mrb[0].mxu0
      %4339 = vmatprep.mubr.bf16.mxu0 0
      %4340 = vmatmul.mubr.bf16.gmra.mrb[0].mxu0 %v1986
      %v4341 = vpop.f32.mrb[0].mxu0
      %v4342 = vadd.f32 %v4021, %v4341
      %v4343 = vpop.f32.mrb[0].mxu0
      %v4344 = vpop.f32.mrb[0].mxu0
      %v4345 = vadd.f32 %v4024, %v4344
      %v4346 = vpop.f32.mrb[0].mxu0
      %4347 = vdwg.mxu0
      %vm4348 = vcmp.ge.f32.partialorder %v4062, 0.0
      %vm4349 = vcmp.ge.f32.partialorder %v4065, 0.0
      %vm4350 = vcmp.ge.f32.partialorder %v4070, 0.0
      %vm4351 = vcmp.ge.f32.partialorder %v4073, 0.0
      %vm4352 = vcmp.ge.f32.partialorder %v4078, 0.0
      %vm4353 = vcmp.ge.f32.partialorder %v4081, 0.0
      %vm4354 = vcmp.ge.f32.partialorder %v4086, 0.0
      %vm4355 = vcmp.ge.f32.partialorder %v4089, 0.0
      %vm4356 = vcmp.ge.f32.partialorder %v4094, 0.0
      %vm4357 = vcmp.ge.f32.partialorder %v4097, 0.0
      %vm4358 = vcmp.ge.f32.partialorder %v4102, 0.0
      %vm4359 = vcmp.ge.f32.partialorder %v4105, 0.0
      %vm4360 = vcmp.ge.f32.partialorder %v4110, 0.0
      %vm4361 = vcmp.ge.f32.partialorder %v4113, 0.0
      %vm4362 = vcmp.ge.f32.partialorder %v4118, 0.0
      %vm4363 = vcmp.ge.f32.partialorder %v4121, 0.0
      %vm4364 = vcmp.ge.f32.partialorder %v4126, 0.0
      %vm4365 = vcmp.ge.f32.partialorder %v4129, 0.0
      %vm4366 = vcmp.ge.f32.partialorder %v4134, 0.0
      %vm4367 = vcmp.ge.f32.partialorder %v4137, 0.0
      %vm4368 = vcmp.ge.f32.partialorder %v4142, 0.0
      %vm4369 = vcmp.ge.f32.partialorder %v4145, 0.0
      %vm4370 = vcmp.ge.f32.partialorder %v4150, 0.0
      %vm4371 = vcmp.ge.f32.partialorder %v4153, 0.0
      %vm4372 = vcmp.ge.f32.partialorder %v4158, 0.0
      %vm4373 = vcmp.ge.f32.partialorder %v4161, 0.0
      %vm4374 = vcmp.ge.f32.partialorder %v4166, 0.0
      %vm4375 = vcmp.ge.f32.partialorder %v4169, 0.0
      %vm4376 = vcmp.ge.f32.partialorder %v4174, 0.0
      %vm4377 = vcmp.ge.f32.partialorder %v4177, 0.0
      %vm4378 = vcmp.ge.f32.partialorder %v4182, 0.0
      %vm4379 = vcmp.ge.f32.partialorder %v4185, 0.0
      %vm4380 = vcmp.ge.f32.partialorder %v4190, 0.0
      %vm4381 = vcmp.ge.f32.partialorder %v4193, 0.0
      %vm4382 = vcmp.ge.f32.partialorder %v4198, 0.0
      %vm4383 = vcmp.ge.f32.partialorder %v4201, 0.0
      %vm4384 = vcmp.ge.f32.partialorder %v4206, 0.0
      %vm4385 = vcmp.ge.f32.partialorder %v4209, 0.0
      %vm4386 = vcmp.ge.f32.partialorder %v4214, 0.0
      %vm4387 = vcmp.ge.f32.partialorder %v4217, 0.0
      %vm4388 = vcmp.ge.f32.partialorder %v4222, 0.0
      %vm4389 = vcmp.ge.f32.partialorder %v4225, 0.0
      %vm4390 = vcmp.ge.f32.partialorder %v4230, 0.0
      %vm4391 = vcmp.ge.f32.partialorder %v4233, 0.0
      %vm4392 = vcmp.ge.f32.partialorder %v4238, 0.0
      %vm4393 = vcmp.ge.f32.partialorder %v4241, 0.0
      %vm4394 = vcmp.ge.f32.partialorder %v4246, 0.0
      %vm4395 = vcmp.ge.f32.partialorder %v4249, 0.0
      %vm4396 = vcmp.ge.f32.partialorder %v4254, 0.0
      %vm4397 = vcmp.ge.f32.partialorder %v4257, 0.0
      %vm4398 = vcmp.ge.f32.partialorder %v4262, 0.0
      %vm4399 = vcmp.ge.f32.partialorder %v4265, 0.0
      %vm4400 = vcmp.ge.f32.partialorder %v4270, 0.0
      %vm4401 = vcmp.ge.f32.partialorder %v4273, 0.0
      %vm4402 = vcmp.ge.f32.partialorder %v4278, 0.0
      %vm4403 = vcmp.ge.f32.partialorder %v4281, 0.0
      %vm4404 = vcmp.ge.f32.partialorder %v4286, 0.0
      %vm4405 = vcmp.ge.f32.partialorder %v4289, 0.0
      %vm4406 = vcmp.ge.f32.partialorder %v4294, 0.0
      %vm4407 = vcmp.ge.f32.partialorder %v4297, 0.0
      %vm4408 = vcmp.ge.f32.partialorder %v4302, 0.0
      %vm4409 = vcmp.ge.f32.partialorder %v4305, 0.0
      %vm4410 = vcmp.ge.f32.partialorder %v4310, 0.0
      %vm4411 = vcmp.ge.f32.partialorder %v4313, 0.0
      %vm4412 = vcmp.ge.f32.partialorder %v4318, 0.0
      %vm4413 = vcmp.ge.f32.partialorder %v4321, 0.0
      %vm4414 = vcmp.ge.f32.partialorder %v4326, 0.0
      %vm4415 = vcmp.ge.f32.partialorder %v4329, 0.0
      %vm4416 = vcmp.ge.f32.partialorder %v4334, 0.0
      %vm4417 = vcmp.ge.f32.partialorder %v4337, 0.0
      %vm4418 = vcmp.ge.f32.partialorder %v4342, 0.0
      %vm4419 = vcmp.ge.f32.partialorder %v4345, 0.0
      %v4420 = vmul.f32 %v4062, 0.2
      %v4421 = vmul.f32 %v4065, 0.2
      %v4422 = vmul.f32 %v4070, 0.2
      %v4423 = vmul.f32 %v4073, 0.2
      %v4424 = vmul.f32 %v4078, 0.2
      %v4425 = vmul.f32 %v4081, 0.2
      %v4426 = vmul.f32 %v4086, 0.2
      %v4427 = vmul.f32 %v4089, 0.2
      %v4428 = vmul.f32 %v4094, 0.2
      %v4429 = vmul.f32 %v4097, 0.2
      %v4430 = vmul.f32 %v4102, 0.2
      %v4431 = vmul.f32 %v4105, 0.2
      %v4432 = vmul.f32 %v4110, 0.2
      %v4433 = vmul.f32 %v4113, 0.2
      %v4434 = vmul.f32 %v4118, 0.2
      %v4435 = vmul.f32 %v4121, 0.2
      %v4436 = vmul.f32 %v4126, 0.2
      %v4437 = vmul.f32 %v4129, 0.2
      %v4438 = vmul.f32 %v4134, 0.2
      %v4439 = vmul.f32 %v4137, 0.2
      %v4440 = vmul.f32 %v4142, 0.2
      %v4441 = vmul.f32 %v4145, 0.2
      %v4442 = vmul.f32 %v4150, 0.2
      %v4443 = vmul.f32 %v4153, 0.2
      %v4444 = vmul.f32 %v4158, 0.2
      %v4445 = vmul.f32 %v4161, 0.2
      %v4446 = vmul.f32 %v4166, 0.2
      %v4447 = vmul.f32 %v4169, 0.2
      %v4448 = vmul.f32 %v4174, 0.2
      %v4449 = vmul.f32 %v4177, 0.2
      %v4450 = vmul.f32 %v4182, 0.2
      %v4451 = vmul.f32 %v4185, 0.2
      %v4452 = vmul.f32 %v4190, 0.2
      %v4453 = vmul.f32 %v4193, 0.2
      %v4454 = vmul.f32 %v4198, 0.2
      %v4455 = vmul.f32 %v4201, 0.2
      %v4456 = vmul.f32 %v4206, 0.2
      %v4457 = vmul.f32 %v4209, 0.2
      %v4458 = vmul.f32 %v4214, 0.2
      %v4459 = vmul.f32 %v4217, 0.2
      %v4460 = vmul.f32 %v4222, 0.2
      %v4461 = vmul.f32 %v4225, 0.2
      %v4462 = vmul.f32 %v4230, 0.2
      %v4463 = vmul.f32 %v4233, 0.2
      %v4464 = vmul.f32 %v4238, 0.2
      %v4465 = vmul.f32 %v4241, 0.2
      %v4466 = vmul.f32 %v4246, 0.2
      %v4467 = vmul.f32 %v4249, 0.2
      %v4468 = vmul.f32 %v4254, 0.2
      %v4469 = vmul.f32 %v4257, 0.2
      %v4470 = vmul.f32 %v4262, 0.2
      %v4471 = vmul.f32 %v4265, 0.2
      %v4472 = vmul.f32 %v4270, 0.2
      %v4473 = vmul.f32 %v4273, 0.2
      %v4474 = vmul.f32 %v4278, 0.2
      %v4475 = vmul.f32 %v4281, 0.2
      %v4476 = vmul.f32 %v4286, 0.2
      %v4477 = vmul.f32 %v4289, 0.2
      %v4478 = vmul.f32 %v4294, 0.2
      %v4479 = vmul.f32 %v4297, 0.2
      %v4480 = vmul.f32 %v4302, 0.2
      %v4481 = vmul.f32 %v4305, 0.2
      %v4482 = vmul.f32 %v4310, 0.2
      %v4483 = vmul.f32 %v4313, 0.2
      %v4484 = vmul.f32 %v4318, 0.2
      %v4485 = vmul.f32 %v4321, 0.2
      %v4486 = vmul.f32 %v4326, 0.2
      %v4487 = vmul.f32 %v4329, 0.2
      %v4488 = vmul.f32 %v4334, 0.2
      %v4489 = vmul.f32 %v4337, 0.2
      %v4490 = vmul.f32 %v4342, 0.2
      %v4491 = vmul.f32 %v4345, 0.2
      %v4492 = vsel %vm4348, %v4062, %v4420
      %v4493 = vsel %vm4349, %v4065, %v4421
      %v4494 = vsel %vm4350, %v4070, %v4422
      %v4495 = vsel %vm4351, %v4073, %v4423
      %v4496 = vsel %vm4352, %v4078, %v4424
      %v4497 = vsel %vm4353, %v4081, %v4425
      %v4498 = vsel %vm4354, %v4086, %v4426
      %v4499 = vsel %vm4355, %v4089, %v4427
      %v4500 = vsel %vm4356, %v4094, %v4428
      %v4501 = vsel %vm4357, %v4097, %v4429
      %v4502 = vsel %vm4358, %v4102, %v4430
      %v4503 = vsel %vm4359, %v4105, %v4431
      %v4504 = vsel %vm4360, %v4110, %v4432
      %v4505 = vsel %vm4361, %v4113, %v4433
      %v4506 = vsel %vm4362, %v4118, %v4434
      %v4507 = vsel %vm4363, %v4121, %v4435
      %v4508 = vsel %vm4364, %v4126, %v4436
      %v4509 = vsel %vm4365, %v4129, %v4437
      %v4510 = vsel %vm4366, %v4134, %v4438
      %v4511 = vsel %vm4367, %v4137, %v4439
      %v4512 = vsel %vm4368, %v4142, %v4440
      %v4513 = vsel %vm4369, %v4145, %v4441
      %v4514 = vsel %vm4370, %v4150, %v4442
      %v4515 = vsel %vm4371, %v4153, %v4443
      %v4516 = vsel %vm4372, %v4158, %v4444
      %v4517 = vsel %vm4373, %v4161, %v4445
      %v4518 = vsel %vm4374, %v4166, %v4446
      %v4519 = vsel %vm4375, %v4169, %v4447
      %v4520 = vsel %vm4376, %v4174, %v4448
      %v4521 = vsel %vm4377, %v4177, %v4449
      %v4522 = vsel %vm4378, %v4182, %v4450
      %v4523 = vsel %vm4379, %v4185, %v4451
      %v4524 = vsel %vm4380, %v4190, %v4452
      %v4525 = vsel %vm4381, %v4193, %v4453
      %v4526 = vsel %vm4382, %v4198, %v4454
      %v4527 = vsel %vm4383, %v4201, %v4455
      %v4528 = vsel %vm4384, %v4206, %v4456
      %v4529 = vsel %vm4385, %v4209, %v4457
      %v4530 = vsel %vm4386, %v4214, %v4458
      %v4531 = vsel %vm4387, %v4217, %v4459
      %v4532 = vsel %vm4388, %v4222, %v4460
      %v4533 = vsel %vm4389, %v4225, %v4461
      %v4534 = vsel %vm4390, %v4230, %v4462
      %v4535 = vsel %vm4391, %v4233, %v4463
      %v4536 = vsel %vm4392, %v4238, %v4464
      %v4537 = vsel %vm4393, %v4241, %v4465
      %v4538 = vsel %vm4394, %v4246, %v4466
      %v4539 = vsel %vm4395, %v4249, %v4467
      %v4540 = vsel %vm4396, %v4254, %v4468
      %v4541 = vsel %vm4397, %v4257, %v4469
      %v4542 = vsel %vm4398, %v4262, %v4470
      %v4543 = vsel %vm4399, %v4265, %v4471
      %v4544 = vsel %vm4400, %v4270, %v4472
      %v4545 = vsel %vm4401, %v4273, %v4473
      %v4546 = vsel %vm4402, %v4278, %v4474
      %v4547 = vsel %vm4403, %v4281, %v4475
      %v4548 = vsel %vm4404, %v4286, %v4476
      %v4549 = vsel %vm4405, %v4289, %v4477
      %v4550 = vsel %vm4406, %v4294, %v4478
      %v4551 = vsel %vm4407, %v4297, %v4479
      %v4552 = vsel %vm4408, %v4302, %v4480
      %v4553 = vsel %vm4409, %v4305, %v4481
      %v4554 = vsel %vm4410, %v4310, %v4482
      %v4555 = vsel %vm4411, %v4313, %v4483
      %v4556 = vsel %vm4412, %v4318, %v4484
      %v4557 = vsel %vm4413, %v4321, %v4485
      %v4558 = vsel %vm4414, %v4326, %v4486
      %v4559 = vsel %vm4415, %v4329, %v4487
      %v4560 = vsel %vm4416, %v4334, %v4488
      %v4561 = vsel %vm4417, %v4337, %v4489
      %v4562 = vsel %vm4418, %v4342, %v4490
      %v4563 = vsel %vm4419, %v4345, %v4491
      %4564 = vst [vmem:[%s148] sm:$0xff] %v4492
      %4565 = vst [vmem:[%s148 + $0x8] sm:$0xff] %v4493
      %4566 = vst [vmem:[%s148 + $0x10] sm:$0xff] %v4494
      %4567 = vst [vmem:[%s148 + $0x18] sm:$0xff] %v4495
      %4568 = vst [vmem:[%s148 + $0x20] sm:$0xff] %v4496
      %4569 = vst [vmem:[%s148 + $0x28] sm:$0xff] %v4497
      %4570 = vst [vmem:[%s148 + $0x30] sm:$0xff] %v4498
      %4571 = vst [vmem:[%s148 + $0x38] sm:$0xff] %v4499
      %4572 = vst [vmem:[%s148 + $0x40] sm:$0xff] %v4500
      %4573 = vst [vmem:[%s148 + $0x48] sm:$0xff] %v4501
      %4574 = vst [vmem:[%s148 + $0x50] sm:$0xff] %v4502
      %4575 = vst [vmem:[%s148 + $0x58] sm:$0xff] %v4503
      %4576 = vst [vmem:[%s148 + $0x60] sm:$0xff] %v4504
      %4577 = vst [vmem:[%s148 + $0x68] sm:$0xff] %v4505
      %4578 = vst [vmem:[%s148 + $0x70] sm:$0xff] %v4506
      %4579 = vst [vmem:[%s148 + $0x78] sm:$0xff] %v4507
      %4580 = vst [vmem:[%s148 + $0x80] sm:$0xff] %v4508
      %4581 = vst [vmem:[%s148 + $0x88] sm:$0xff] %v4509
      %4582 = vst [vmem:[%s148 + $0x90] sm:$0xff] %v4510
      %4583 = vst [vmem:[%s148 + $0x98] sm:$0xff] %v4511
      %4584 = vst [vmem:[%s148 + $0xa0] sm:$0xff] %v4512
      %4585 = vst [vmem:[%s148 + $0xa8] sm:$0xff] %v4513
      %4586 = vst [vmem:[%s148 + $0xb0] sm:$0xff] %v4514
      %4587 = vst [vmem:[%s148 + $0xb8] sm:$0xff] %v4515
      %4588 = vst [vmem:[%s148 + $0xc0] sm:$0xff] %v4516
      %4589 = vst [vmem:[%s148 + $0xc8] sm:$0xff] %v4517
      %4590 = vst [vmem:[%s148 + $0xd0] sm:$0xff] %v4518
      %4591 = vst [vmem:[%s148 + $0xd8] sm:$0xff] %v4519
      %4592 = vst [vmem:[%s148 + $0xe0] sm:$0xff] %v4520
      %4593 = vst [vmem:[%s148 + $0xe8] sm:$0xff] %v4521
      %4594 = vst [vmem:[%s148 + $0xf0] sm:$0xff] %v4522
      %4595 = vst [vmem:[%s148 + $0xf8] sm:$0xff] %v4523
      %4596 = vst [vmem:[%s148 + $0x100] sm:$0xff] %v4524
      %4597 = vst [vmem:[%s148 + $0x108] sm:$0xff] %v4525
      %4598 = vst [vmem:[%s148 + $0x110] sm:$0xff] %v4526
      %4599 = vst [vmem:[%s148 + $0x118] sm:$0xff] %v4527
      %4600 = vst [vmem:[%s148 + $0x120] sm:$0xff] %v4528
      %4601 = vst [vmem:[%s148 + $0x128] sm:$0xff] %v4529
      %4602 = vst [vmem:[%s148 + $0x130] sm:$0xff] %v4530
      %4603 = vst [vmem:[%s148 + $0x138] sm:$0xff] %v4531
      %4604 = vst [vmem:[%s148 + $0x140] sm:$0xff] %v4532
      %4605 = vst [vmem:[%s148 + $0x148] sm:$0xff] %v4533
      %4606 = vst [vmem:[%s148 + $0x150] sm:$0xff] %v4534
      %4607 = vst [vmem:[%s148 + $0x158] sm:$0xff] %v4535
      %4608 = vst [vmem:[%s148 + $0x160] sm:$0xff] %v4536
      %4609 = vst [vmem:[%s148 + $0x168] sm:$0xff] %v4537
      %4610 = vst [vmem:[%s148 + $0x170] sm:$0xff] %v4538
      %4611 = vst [vmem:[%s148 + $0x178] sm:$0xff] %v4539
      %4612 = vst [vmem:[%s148 + $0x180] sm:$0xff] %v4540
      %4613 = vst [vmem:[%s148 + $0x188] sm:$0xff] %v4541
      %4614 = vst [vmem:[%s148 + $0x190] sm:$0xff] %v4542
      %4615 = vst [vmem:[%s148 + $0x198] sm:$0xff] %v4543
      %4616 = vst [vmem:[%s148 + $0x1a0] sm:$0xff] %v4544
      %4617 = vst [vmem:[%s148 + $0x1a8] sm:$0xff] %v4545
      %4618 = vst [vmem:[%s148 + $0x1b0] sm:$0xff] %v4546
      %4619 = vst [vmem:[%s148 + $0x1b8] sm:$0xff] %v4547
      %4620 = vst [vmem:[%s148 + $0x1c0] sm:$0xff] %v4548
      %4621 = vst [vmem:[%s148 + $0x1c8] sm:$0xff] %v4549
      %4622 = vst [vmem:[%s148 + $0x1d0] sm:$0xff] %v4550
      %4623 = vst [vmem:[%s148 + $0x1d8] sm:$0xff] %v4551
      %4624 = vst [vmem:[%s148 + $0x1e0] sm:$0xff] %v4552
      %4625 = vst [vmem:[%s148 + $0x1e8] sm:$0xff] %v4553
      %4626 = vst [vmem:[%s148 + $0x1f0] sm:$0xff] %v4554
      %4627 = vst [vmem:[%s148 + $0x1f8] sm:$0xff] %v4555
      %4628 = vst [vmem:[%s148 + $0x200] sm:$0xff] %v4556
      %4629 = vst [vmem:[%s148 + $0x208] sm:$0xff] %v4557
      %4630 = vst [vmem:[%s148 + $0x210] sm:$0xff] %v4558
      %4631 = vst [vmem:[%s148 + $0x218] sm:$0xff] %v4559
      %4632 = vst [vmem:[%s148 + $0x220] sm:$0xff] %v4560
      %4633 = vst [vmem:[%s148 + $0x228] sm:$0xff] %v4561
      %4634 = vst [vmem:[%s148 + $0x230] sm:$0xff] %v4562
      %4635 = vst [vmem:[%s148 + $0x238] sm:$0xff] %v4563
      %s4636 = smul.u32 72, %s13
      %p4637 = scmp.lt.s32.totalorder %s4636, 143
      %s4638 = scalar_select %p4637, %s4636, 143
      %s4639 = smul.addr %s4638, 8
      %s4640 = scalar_lea.vmem %s2, %s4639
      // Predicated region
      $region29: #{discriminator_forward.5} parent=27 // pred_check
        %p4641 = pneg %p78
      $region30: #{discriminator_forward.5} parent=27 // pred_check_branch
        %4643 = sbr.rel (%p4641) target = $region32
      $region31: #{discriminator_forward.5} parent=27 // pred_region
        %s4644 = smul.u32 72, %s13
      $region32: #{discriminator_forward.5} parent=27 // pred_fallthru
        _
    $region28: #{discriminator_forward.5} parent=5 // pred_fallthru
      _
    %p4645 = scmp.le.s32.totalorder 2, %s8
    // Predicated region
    $region33: #{discriminator_forward.5} parent=5 // pred_check
      %p4646 = pneg %p4645
    $region34: #{discriminator_forward.5} parent=5 // pred_check_branch
      %4648 = sbr.rel (%p4646) target = $region36
    $region35: #{discriminator_forward.5} parent=5 // pred_region
      %s4649 = ssub.s32 %s8, 2
      // Predicated region
      $region37: #{discriminator_forward.5} parent=35 // pred_check
        %p4650 = pneg %p84
      $region38: #{discriminator_forward.5} parent=35 // pred_check_branch
        %4652 = sbr.rel (%p4650) target = $region40
      $region39: #{discriminator_forward.5} parent=35 // pred_region
        %s4653 = smul.u32 72, %s14
        %p4654 = scmp.lt.s32.totalorder %s4653, 143
        %s4655 = scalar_select %p4654, %s4653, 143
        %s4656 = smul.addr %s4655, 8
        %s4657 = scalar_lea.vmem %s2, %s4656
      $region40: #{discriminator_forward.5} parent=35 // pred_fallthru
        _
    $region36: #{discriminator_forward.5} parent=5 // pred_fallthru
      _
  $region6: #{discriminator_forward.5} parent=0 // loop_footer
    %s12 = sadd.s32 1, %s8
  $region7: #{discriminator_forward.5} parent=0 // loop_footer_branch
    %7 = sbr.rel target = $region3
  $region8: #{discriminator_forward.5} parent=0 // loop_exit
    _

// kernel: tile.7
$region0: #{tile.7}
  %s0 = inlined_call_operand.vmem [shape: f32[2,25,32], index: 0, kind: input, shape index: {}]
  %s1 = inlined_call_operand.vmem [shape: f32[50,32], index: 1, kind: output, shape index: {}]
  $region1: #{tile.7} parent=0
    #allocation0 [shape = 'u8[131072]{0}', space=vmem, size = 0x20000, scoped, tag = 'scoped mem for input reshape']
    %s3 = sshllo.u32 0, 2
    %s4 = smul.addr 2, 31
    %s5 = scalar_lea.vmem %s0, %s4
    %v6 = vld [vmem:[%s5] sm:%s3]
    %s7 = scalar_lea.vmem [#allocation0], 248
    %8 = vst [vmem:[%s7] sm:%s3] %v6
    %s9 = smul.addr 2, 30
    %s10 = scalar_lea.vmem %s0, %s9
    %v11 = vld [vmem:[%s10] sm:%s3]
    %s12 = scalar_lea.vmem [#allocation0], 240
    %13 = vst [vmem:[%s12] sm:%s3] %v11
    %s14 = smul.addr 2, 29
    %s15 = scalar_lea.vmem %s0, %s14
    %v16 = vld [vmem:[%s15] sm:%s3]
    %s17 = scalar_lea.vmem [#allocation0], 232
    %18 = vst [vmem:[%s17] sm:%s3] %v16
    %s19 = smul.addr 2, 28
    %s20 = scalar_lea.vmem %s0, %s19
    %v21 = vld [vmem:[%s20] sm:%s3]
    %s22 = scalar_lea.vmem [#allocation0], 224
    %23 = vst [vmem:[%s22] sm:%s3] %v21
    %s24 = smul.addr 2, 27
    %s25 = scalar_lea.vmem %s0, %s24
    %v26 = vld [vmem:[%s25] sm:%s3]
    %s27 = scalar_lea.vmem [#allocation0], 216
    %28 = vst [vmem:[%s27] sm:%s3] %v26
    %s29 = smul.addr 2, 26
    %s30 = scalar_lea.vmem %s0, %s29
    %v31 = vld [vmem:[%s30] sm:%s3]
    %s32 = scalar_lea.vmem [#allocation0], 208
    %33 = vst [vmem:[%s32] sm:%s3] %v31
    %s34 = smul.addr 2, 25
    %s35 = scalar_lea.vmem %s0, %s34
    %v36 = vld [vmem:[%s35] sm:%s3]
    %s37 = scalar_lea.vmem [#allocation0], 200
    %38 = vst [vmem:[%s37] sm:%s3] %v36
    %s39 = smul.addr 2, 24
    %s40 = scalar_lea.vmem %s0, %s39
    %v41 = vld [vmem:[%s40] sm:%s3]
    %s42 = scalar_lea.vmem [#allocation0], 192
    %43 = vst [vmem:[%s42] sm:%s3] %v41
    %s44 = smul.addr 2, 23
    %s45 = scalar_lea.vmem %s0, %s44
    %v46 = vld [vmem:[%s45] sm:%s3]
    %s47 = scalar_lea.vmem [#allocation0], 184
    %48 = vst [vmem:[%s47] sm:%s3] %v46
    %s49 = smul.addr 2, 22
    %s50 = scalar_lea.vmem %s0, %s49
    %v51 = vld [vmem:[%s50] sm:%s3]
    %s52 = scalar_lea.vmem [#allocation0], 176
    %53 = vst [vmem:[%s52] sm:%s3] %v51
    %s54 = smul.addr 2, 21
    %s55 = scalar_lea.vmem %s0, %s54
    %v56 = vld [vmem:[%s55] sm:%s3]
    %s57 = scalar_lea.vmem [#allocation0], 168
    %58 = vst [vmem:[%s57] sm:%s3] %v56
    %s59 = smul.addr 2, 20
    %s60 = scalar_lea.vmem %s0, %s59
    %v61 = vld [vmem:[%s60] sm:%s3]
    %s62 = scalar_lea.vmem [#allocation0], 160
    %63 = vst [vmem:[%s62] sm:%s3] %v61
    %s64 = smul.addr 2, 19
    %s65 = scalar_lea.vmem %s0, %s64
    %v66 = vld [vmem:[%s65] sm:%s3]
    %s67 = scalar_lea.vmem [#allocation0], 152
    %68 = vst [vmem:[%s67] sm:%s3] %v66
    %s69 = smul.addr 2, 18
    %s70 = scalar_lea.vmem %s0, %s69
    %v71 = vld [vmem:[%s70] sm:%s3]
    %s72 = scalar_lea.vmem [#allocation0], 144
    %73 = vst [vmem:[%s72] sm:%s3] %v71
    %s74 = smul.addr 2, 17
    %s75 = scalar_lea.vmem %s0, %s74
    %v76 = vld [vmem:[%s75] sm:%s3]
    %s77 = scalar_lea.vmem [#allocation0], 136
    %78 = vst [vmem:[%s77] sm:%s3] %v76
    %s79 = smul.addr 2, 16
    %s80 = scalar_lea.vmem %s0, %s79
    %v81 = vld [vmem:[%s80] sm:%s3]
    %s82 = scalar_lea.vmem [#allocation0], 128
    %83 = vst [vmem:[%s82] sm:%s3] %v81
    %s84 = smul.addr 2, 15
    %s85 = scalar_lea.vmem %s0, %s84
    %v86 = vld [vmem:[%s85] sm:%s3]
    %s87 = scalar_lea.vmem [#allocation0], 120
    %88 = vst [vmem:[%s87] sm:%s3] %v86
    %s89 = smul.addr 2, 14
    %s90 = scalar_lea.vmem %s0, %s89
    %v91 = vld [vmem:[%s90] sm:%s3]
    %s92 = scalar_lea.vmem [#allocation0], 112
    %93 = vst [vmem:[%s92] sm:%s3] %v91
    %s94 = smul.addr 2, 13
    %s95 = scalar_lea.vmem %s0, %s94
    %v96 = vld [vmem:[%s95] sm:%s3]
    %s97 = scalar_lea.vmem [#allocation0], 104
    %98 = vst [vmem:[%s97] sm:%s3] %v96
    %s99 = smul.addr 2, 12
    %s100 = scalar_lea.vmem %s0, %s99
    %v101 = vld [vmem:[%s100] sm:%s3]
    %s102 = scalar_lea.vmem [#allocation0], 96
    %103 = vst [vmem:[%s102] sm:%s3] %v101
    %s104 = smul.addr 2, 11
    %s105 = scalar_lea.vmem %s0, %s104
    %v106 = vld [vmem:[%s105] sm:%s3]
    %s107 = scalar_lea.vmem [#allocation0], 88
    %108 = vst [vmem:[%s107] sm:%s3] %v106
    %s109 = smul.addr 2, 10
    %s110 = scalar_lea.vmem %s0, %s109
    %v111 = vld [vmem:[%s110] sm:%s3]
    %s112 = scalar_lea.vmem [#allocation0], 80
    %113 = vst [vmem:[%s112] sm:%s3] %v111
    %s114 = smul.addr 2, 9
    %s115 = scalar_lea.vmem %s0, %s114
    %v116 = vld [vmem:[%s115] sm:%s3]
    %s117 = scalar_lea.vmem [#allocation0], 72
    %118 = vst [vmem:[%s117] sm:%s3] %v116
    %s119 = smul.addr 2, 8
    %s120 = scalar_lea.vmem %s0, %s119
    %v121 = vld [vmem:[%s120] sm:%s3]
    %s122 = scalar_lea.vmem [#allocation0], 64
    %123 = vst [vmem:[%s122] sm:%s3] %v121
    %s124 = smul.addr 2, 7
    %s125 = scalar_lea.vmem %s0, %s124
    %v126 = vld [vmem:[%s125] sm:%s3]
    %s127 = scalar_lea.vmem [#allocation0], 56
    %128 = vst [vmem:[%s127] sm:%s3] %v126
    %s129 = smul.addr 2, 6
    %s130 = scalar_lea.vmem %s0, %s129
    %v131 = vld [vmem:[%s130] sm:%s3]
    %s132 = scalar_lea.vmem [#allocation0], 48
    %133 = vst [vmem:[%s132] sm:%s3] %v131
    %s134 = smul.addr 2, 5
    %s135 = scalar_lea.vmem %s0, %s134
    %v136 = vld [vmem:[%s135] sm:%s3]
    %s137 = scalar_lea.vmem [#allocation0], 40
    %138 = vst [vmem:[%s137] sm:%s3] %v136
    %s139 = smul.addr 2, 4
    %s140 = scalar_lea.vmem %s0, %s139
    %v141 = vld [vmem:[%s140] sm:%s3]
    %s142 = scalar_lea.vmem [#allocation0], 32
    %143 = vst [vmem:[%s142] sm:%s3] %v141
    %s144 = smul.addr 2, 3
    %s145 = scalar_lea.vmem %s0, %s144
    %v146 = vld [vmem:[%s145] sm:%s3]
    %s147 = scalar_lea.vmem [#allocation0], 24
    %148 = vst [vmem:[%s147] sm:%s3] %v146
    %s149 = smul.addr 2, 2
    %s150 = scalar_lea.vmem %s0, %s149
    %v151 = vld [vmem:[%s150] sm:%s3]
    %s152 = scalar_lea.vmem [#allocation0], 16
    %153 = vst [vmem:[%s152] sm:%s3] %v151
    %s154 = scalar_lea.vmem %s0, 2
    %v155 = vld [vmem:[%s154] sm:%s3]
    %s156 = scalar_lea.vmem [#allocation0], 8
    %157 = vst [vmem:[%s156] sm:%s3] %v155
    %v158 = vld [vmem:[%s0] sm:%s3]
    %159 = vst [vmem:[#allocation0] sm:%s3] %v158
    %v160 = vld [vmem:[#allocation0] ss:$8 sm:$0xf]
    %v161 = vld [vmem:[#allocation0] ss:$8 sm:$0xf0]
    %vm162 = vcmask 1047556
    %v163 = vsel %vm162, %v161, %v160
    %vm164 = vcmask 203776
    %165 = vst.msk [vmem:[%s1] sm:$0xff] %vm164, %v163
    %s166 = scalar_lea.vmem [#allocation0], 64
    %v167 = vld [vmem:[%s166] ss:$8 sm:$0xf]
    %s168 = scalar_lea.vmem [#allocation0], 64
    %v169 = vld [vmem:[%s168] ss:$8 sm:$0xf0]
    %vm170 = vcmask 1047556
    %v171 = vsel %vm170, %v169, %v167
    %vm172 = vcmask 203776
    %s173 = scalar_lea.vmem %s1, 8
    %174 = vst.msk [vmem:[%s173] sm:$0xff] %vm172, %v171
    %s175 = scalar_lea.vmem [#allocation0], 128
    %v176 = vld [vmem:[%s175] ss:$8 sm:$0xf]
    %s177 = scalar_lea.vmem [#allocation0], 128
    %v178 = vld [vmem:[%s177] ss:$8 sm:$0xf0]
    %vm179 = vcmask 1047556
    %v180 = vsel %vm179, %v178, %v176
    %vm181 = vcmask 203776
    %s182 = scalar_lea.vmem %s1, 16
    %183 = vst.msk [vmem:[%s182] sm:$0xff] %vm181, %v180
    %s184 = scalar_lea.vmem [#allocation0], 192
    %v185 = vld [vmem:[%s184] ss:$8 sm:$0xf]
    %s186 = scalar_lea.vmem [#allocation0], 192
    %v187 = vld [vmem:[%s186] ss:$8 sm:$0xf0]
    %vm188 = vcmask 1047556
    %v189 = vsel %vm188, %v187, %v185
    %vm190 = vcmask 203776
    %s191 = scalar_lea.vmem %s1, 24
    %192 = vst.msk [vmem:[%s191] sm:$0xff] %vm190, %v189
    %s193 = scalar_lea.vmem [#allocation0], 1
    %v194 = vld [vmem:[%s193] ss:$8 sm:$0xf]
    %s195 = scalar_lea.vmem [#allocation0], 1
    %v196 = vld [vmem:[%s195] ss:$8 sm:$0xf0]
    %vm197 = vcmask 1047556
    %v198 = vsel %vm197, %v196, %v194
    %199 = vrot.lane.b32.xlu0 %v198, 25
    %v200 = vpop.permute.xlu0 %199
    %vm201 = vcmask 408776
    %202 = vst.msk [vmem:[%s1] sm:$0xff] %vm201, %v200
    %s203 = scalar_lea.vmem [#allocation0], 65
    %v204 = vld [vmem:[%s203] ss:$8 sm:$0xf]
    %s205 = scalar_lea.vmem [#allocation0], 65
    %v206 = vld [vmem:[%s205] ss:$8 sm:$0xf0]
    %vm207 = vcmask 1047556
    %v208 = vsel %vm207, %v206, %v204
    %209 = vrot.lane.b32.xlu0 %v208, 25
    %v210 = vpop.permute.xlu0 %209
    %vm211 = vcmask 408776
    %s212 = scalar_lea.vmem %s1, 8
    %213 = vst.msk [vmem:[%s212] sm:$0xff] %vm211, %v210
    %s214 = scalar_lea.vmem [#allocation0], 129
    %v215 = vld [vmem:[%s214] ss:$8 sm:$0xf]
    %s216 = scalar_lea.vmem [#allocation0], 129
    %v217 = vld [vmem:[%s216] ss:$8 sm:$0xf0]
    %vm218 = vcmask 1047556
    %v219 = vsel %vm218, %v217, %v215
    %220 = vrot.lane.b32.xlu0 %v219, 25
    %v221 = vpop.permute.xlu0 %220
    %vm222 = vcmask 408776
    %s223 = scalar_lea.vmem %s1, 16
    %224 = vst.msk [vmem:[%s223] sm:$0xff] %vm222, %v221
    %s225 = scalar_lea.vmem [#allocation0], 193
    %v226 = vld [vmem:[%s225] ss:$8 sm:$0xf]
    %s227 = scalar_lea.vmem [#allocation0], 193
    %v228 = vld [vmem:[%s227] ss:$8 sm:$0xf0]
    %vm229 = vcmask 1047556
    %v230 = vsel %vm229, %v228, %v226
    %231 = vrot.lane.b32.xlu0 %v230, 25
    %v232 = vpop.permute.xlu0 %231
    %vm233 = vcmask 408776
    %s234 = scalar_lea.vmem %s1, 24
    %235 = vst.msk [vmem:[%s234] sm:$0xff] %vm233, %v232

// kernel: discriminator_forward.6
$region0: #{discriminator_forward.6}
  #allocation0 [shape = 'u32[]', space=smem, size = 0x4, offset = 0x4, fixed_abs, tag = 'smem constant byte address 0x4 - core index']
  #allocation1 [shape = 'u32[144,128]{1,0:T(1,128)}', space=vmem, size = 0x12000, scoped, tag = 'internal scratch']
  %s0 = inlined_call_operand.vmem [shape: bf16[248,2048], index: 0, kind: input, shape index: {}]
  %s1 = inlined_call_operand.vmem [shape: bf16[2048,128], index: 1, kind: input, shape index: {}]
  %s2 = inlined_call_operand.vmem [shape: f32[248,128], index: 2, kind: output, shape index: {}]
  %s3 = sld [smem:[#allocation0]]
  $region18: #{discriminator_forward.6} parent=0
    _
  %s5 = ssub.s32 1, %s3
  %s6 = scalar_select 0, %s5, %s3
  // Predicated region
  $region2: #{discriminator_forward.6} parent=0 // pred_check
    _
  $region3: #{discriminator_forward.6} parent=0 // pred_check_branch
    %8 = sbr.rel (0) target = $region5
  $region4: #{discriminator_forward.6} parent=0 // pred_region
    _
  $region5: #{discriminator_forward.6} parent=0 // pred_fallthru
    _
  // Predicated region
  $region6: #{discriminator_forward.6} parent=0 // pred_check
    _
  $region7: #{discriminator_forward.6} parent=0 // pred_check_branch
    %10 = sbr.rel (0) target = $region9
  $region8: #{discriminator_forward.6} parent=0 // pred_region
    _
  $region9: #{discriminator_forward.6} parent=0 // pred_fallthru
    _
  %v12 = vld [vmem:[%s0] sm:$0xff]
  %v13 = vld [vmem:[%s0 + $0x8] sm:$0xff]
  %v14 = vld [vmem:[%s0 + $0x10] sm:$0xff]
  %v15 = vld [vmem:[%s0 + $0x18] sm:$0xff]
  %v16 = vld [vmem:[%s0 + $0x20] sm:$0xff]
  %v17 = vld [vmem:[%s0 + $0x28] sm:$0xff]
  %v18 = vld [vmem:[%s0 + $0x30] sm:$0xff]
  %v19 = vld [vmem:[%s0 + $0x38] sm:$0xff]
  %v20 = vld [vmem:[%s0 + $0x40] sm:$0xff]
  %v21 = vld [vmem:[%s0 + $0x48] sm:$0xff]
  %v22 = vld [vmem:[%s0 + $0x50] sm:$0xff]
  %v23 = vld [vmem:[%s0 + $0x58] sm:$0xff]
  %v24 = vld [vmem:[%s0 + $0x60] sm:$0xff]
  %v25 = vld [vmem:[%s0 + $0x68] sm:$0xff]
  %v26 = vld [vmem:[%s0 + $0x70] sm:$0xff]
  %v27 = vld [vmem:[%s0 + $0x78] sm:$0xff]
  %v28 = vld [vmem:[%s0 + $0x80] sm:$0xff]
  %v29 = vld [vmem:[%s0 + $0x88] sm:$0xff]
  %v30 = vld [vmem:[%s0 + $0x90] sm:$0xff]
  %v31 = vld [vmem:[%s0 + $0x98] sm:$0xff]
  %v32 = vld [vmem:[%s0 + $0xa0] sm:$0xff]
  %v33 = vld [vmem:[%s0 + $0xa8] sm:$0xff]
  %v34 = vld [vmem:[%s0 + $0xb0] sm:$0xff]
  %v35 = vld [vmem:[%s0 + $0xb8] sm:$0xff]
  %v36 = vld [vmem:[%s0 + $0xc0] sm:$0xff]
  %v37 = vld [vmem:[%s0 + $0xc8] sm:$0xff]
  %v38 = vld [vmem:[%s0 + $0xd0] sm:$0xff]
  %v39 = vld [vmem:[%s0 + $0xd8] sm:$0xff]
  %v40 = vld [vmem:[%s0 + $0xe0] sm:$0xff]
  %v41 = vld [vmem:[%s0 + $0xe8] sm:$0xff]
  %v42 = vld [vmem:[%s0 + $0xf0] sm:$0xff]
  %v43 = vld [vmem:[%s0 + $0xf8] sm:$0xff]
  %v44 = vld [vmem:[%s0 + $0x100] sm:$0xff]
  %v45 = vld [vmem:[%s0 + $0x108] sm:$0xff]
  %v46 = vld [vmem:[%s0 + $0x110] sm:$0xff]
  %v47 = vld [vmem:[%s0 + $0x118] sm:$0xff]
  %v48 = vld [vmem:[%s0 + $0x120] sm:$0xff]
  %v49 = vld [vmem:[%s0 + $0x128] sm:$0xff]
  %v50 = vld [vmem:[%s0 + $0x130] sm:$0xff]
  %v51 = vld [vmem:[%s0 + $0x138] sm:$0xff]
  %v52 = vld [vmem:[%s0 + $0x140] sm:$0xff]
  %v53 = vld [vmem:[%s0 + $0x148] sm:$0xff]
  %v54 = vld [vmem:[%s0 + $0x150] sm:$0xff]
  %v55 = vld [vmem:[%s0 + $0x158] sm:$0xff]
  %v56 = vld [vmem:[%s0 + $0x160] sm:$0xff]
  %v57 = vld [vmem:[%s0 + $0x168] sm:$0xff]
  %v58 = vld [vmem:[%s0 + $0x170] sm:$0xff]
  %v59 = vld [vmem:[%s0 + $0x178] sm:$0xff]
  %v60 = vld [vmem:[%s0 + $0x180] sm:$0xff]
  %v61 = vld [vmem:[%s0 + $0x188] sm:$0xff]
  %v62 = vld [vmem:[%s0 + $0x190] sm:$0xff]
  %v63 = vld [vmem:[%s0 + $0x198] sm:$0xff]
  %v64 = vld [vmem:[%s0 + $0x1a0] sm:$0xff]
  %v65 = vld [vmem:[%s0 + $0x1a8] sm:$0xff]
  %v66 = vld [vmem:[%s0 + $0x1b0] sm:$0xff]
  %v67 = vld [vmem:[%s0 + $0x1b8] sm:$0xff]
  %v68 = vld [vmem:[%s0 + $0x1c0] sm:$0xff]
  %v69 = vld [vmem:[%s0 + $0x1c8] sm:$0xff]
  %v70 = vld [vmem:[%s0 + $0x1d0] sm:$0xff]
  %v71 = vld [vmem:[%s0 + $0x1d8] sm:$0xff]
  %v72 = vld [vmem:[%s0 + $0x1e0] sm:$0xff]
  %v73 = vld [vmem:[%s0 + $0x1e8] sm:$0xff]
  %v74 = vld [vmem:[%s0 + $0x1f0] sm:$0xff]
  %v75 = vld [vmem:[%s0 + $0x1f8] sm:$0xff]
  %v76 = vld [vmem:[%s0 + $0x200] sm:$0xff]
  %v77 = vld [vmem:[%s0 + $0x208] sm:$0xff]
  %v78 = vld [vmem:[%s0 + $0x210] sm:$0xff]
  %v79 = vld [vmem:[%s0 + $0x218] sm:$0xff]
  %v80 = vld [vmem:[%s0 + $0x220] sm:$0xff]
  %v81 = vld [vmem:[%s0 + $0x228] sm:$0xff]
  %v82 = vld [vmem:[%s0 + $0x230] sm:$0xff]
  %v83 = vld [vmem:[%s0 + $0x238] sm:$0xff]
  %v84 = vld [vmem:[%s0 + $0x240] sm:$0xff]
  %v85 = vld [vmem:[%s0 + $0x248] sm:$0xff]
  %v86 = vld [vmem:[%s0 + $0x250] sm:$0xff]
  %v87 = vld [vmem:[%s0 + $0x258] sm:$0xff]
  %v88 = vld [vmem:[%s0 + $0x260] sm:$0xff]
  %v89 = vld [vmem:[%s0 + $0x268] sm:$0xff]
  %v90 = vld [vmem:[%s0 + $0x270] sm:$0xff]
  %v91 = vld [vmem:[%s0 + $0x278] sm:$0xff]
  %v92 = vld [vmem:[%s0 + $0x280] sm:$0xff]
  %v93 = vld [vmem:[%s0 + $0x288] sm:$0xff]
  %v94 = vld [vmem:[%s0 + $0x290] sm:$0xff]
  %v95 = vld [vmem:[%s0 + $0x298] sm:$0xff]
  %v96 = vld [vmem:[%s0 + $0x2a0] sm:$0xff]
  %v97 = vld [vmem:[%s0 + $0x2a8] sm:$0xff]
  %v98 = vld [vmem:[%s0 + $0x2b0] sm:$0xff]
  %v99 = vld [vmem:[%s0 + $0x2b8] sm:$0xff]
  %v100 = vld [vmem:[%s0 + $0x2c0] sm:$0xff]
  %v101 = vld [vmem:[%s0 + $0x2c8] sm:$0xff]
  %v102 = vld [vmem:[%s0 + $0x2d0] sm:$0xff]
  %v103 = vld [vmem:[%s0 + $0x2d8] sm:$0xff]
  %v104 = vld [vmem:[%s0 + $0x2e0] sm:$0xff]
  %v105 = vld [vmem:[%s0 + $0x2e8] sm:$0xff]
  %v106 = vld [vmem:[%s0 + $0x2f0] sm:$0xff]
  %v107 = vld [vmem:[%s0 + $0x2f8] sm:$0xff]
  %v108 = vld [vmem:[%s0 + $0x300] sm:$0xff]
  %v109 = vld [vmem:[%s0 + $0x308] sm:$0xff]
  %v110 = vld [vmem:[%s0 + $0x310] sm:$0xff]
  %v111 = vld [vmem:[%s0 + $0x318] sm:$0xff]
  %v112 = vld [vmem:[%s0 + $0x320] sm:$0xff]
  %v113 = vld [vmem:[%s0 + $0x328] sm:$0xff]
  %v114 = vld [vmem:[%s0 + $0x330] sm:$0xff]
  %v115 = vld [vmem:[%s0 + $0x338] sm:$0xff]
  %v116 = vld [vmem:[%s0 + $0x340] sm:$0xff]
  %v117 = vld [vmem:[%s0 + $0x348] sm:$0xff]
  %v118 = vld [vmem:[%s0 + $0x350] sm:$0xff]
  %v119 = vld [vmem:[%s0 + $0x358] sm:$0xff]
  %v120 = vld [vmem:[%s0 + $0x360] sm:$0xff]
  %v121 = vld [vmem:[%s0 + $0x368] sm:$0xff]
  %v122 = vld [vmem:[%s0 + $0x370] sm:$0xff]
  %v123 = vld [vmem:[%s0 + $0x378] sm:$0xff]
  %v124 = vld [vmem:[%s0 + $0x380] sm:$0xff]
  %v125 = vld [vmem:[%s0 + $0x388] sm:$0xff]
  %v126 = vld [vmem:[%s0 + $0x390] sm:$0xff]
  %v127 = vld [vmem:[%s0 + $0x398] sm:$0xff]
  %v128 = vld [vmem:[%s0 + $0x3a0] sm:$0xff]
  %v129 = vld [vmem:[%s0 + $0x3a8] sm:$0xff]
  %v130 = vld [vmem:[%s0 + $0x3b0] sm:$0xff]
  %v131 = vld [vmem:[%s0 + $0x3b8] sm:$0xff]
  %v132 = vld [vmem:[%s0 + $0x3c0] sm:$0xff]
  %v133 = vld [vmem:[%s0 + $0x3c8] sm:$0xff]
  %v134 = vld [vmem:[%s0 + $0x3d0] sm:$0xff]
  %v135 = vld [vmem:[%s0 + $0x3d8] sm:$0xff]
  %v136 = vld [vmem:[%s0 + $0x3e0] sm:$0xff]
  %v137 = vld [vmem:[%s0 + $0x3e8] sm:$0xff]
  %v138 = vld [vmem:[%s0 + $0x3f0] sm:$0xff]
  %v139 = vld [vmem:[%s0 + $0x3f8] sm:$0xff]
  %v140 = vld [vmem:[%s0 + $0x400] sm:$0xff]
  %v141 = vld [vmem:[%s0 + $0x408] sm:$0xff]
  %v142 = vld [vmem:[%s0 + $0x410] sm:$0xff]
  %v143 = vld [vmem:[%s0 + $0x418] sm:$0xff]
  %v144 = vld [vmem:[%s0 + $0x420] sm:$0xff]
  %v145 = vld [vmem:[%s0 + $0x428] sm:$0xff]
  %v146 = vld [vmem:[%s0 + $0x430] sm:$0xff]
  %v147 = vld [vmem:[%s0 + $0x438] sm:$0xff]
  %v148 = vld [vmem:[%s0 + $0x440] sm:$0xff]
  %v149 = vld [vmem:[%s0 + $0x448] sm:$0xff]
  %v150 = vld [vmem:[%s0 + $0x450] sm:$0xff]
  %v151 = vld [vmem:[%s0 + $0x458] sm:$0xff]
  %v152 = vld [vmem:[%s0 + $0x460] sm:$0xff]
  %v153 = vld [vmem:[%s0 + $0x468] sm:$0xff]
  %v154 = vld [vmem:[%s0 + $0x470] sm:$0xff]
  %v155 = vld [vmem:[%s0 + $0x478] sm:$0xff]
  %v156 = vld [vmem:[%s0 + $0x480] sm:$0xff]
  %v157 = vld [vmem:[%s0 + $0x488] sm:$0xff]
  %v158 = vld [vmem:[%s0 + $0x490] sm:$0xff]
  %v159 = vld [vmem:[%s0 + $0x498] sm:$0xff]
  %v160 = vld [vmem:[%s0 + $0x4a0] sm:$0xff]
  %v161 = vld [vmem:[%s0 + $0x4a8] sm:$0xff]
  %v162 = vld [vmem:[%s0 + $0x4b0] sm:$0xff]
  %v163 = vld [vmem:[%s0 + $0x4b8] sm:$0xff]
  %v164 = vld [vmem:[%s0 + $0x4c0] sm:$0xff]
  %v165 = vld [vmem:[%s0 + $0x4c8] sm:$0xff]
  %v166 = vld [vmem:[%s0 + $0x4d0] sm:$0xff]
  %v167 = vld [vmem:[%s0 + $0x4d8] sm:$0xff]
  %v168 = vld [vmem:[%s0 + $0x4e0] sm:$0xff]
  %v169 = vld [vmem:[%s0 + $0x4e8] sm:$0xff]
  %v170 = vld [vmem:[%s0 + $0x4f0] sm:$0xff]
  %v171 = vld [vmem:[%s0 + $0x4f8] sm:$0xff]
  %v172 = vld [vmem:[%s0 + $0x500] sm:$0xff]
  %v173 = vld [vmem:[%s0 + $0x508] sm:$0xff]
  %v174 = vld [vmem:[%s0 + $0x510] sm:$0xff]
  %v175 = vld [vmem:[%s0 + $0x518] sm:$0xff]
  %v176 = vld [vmem:[%s0 + $0x520] sm:$0xff]
  %v177 = vld [vmem:[%s0 + $0x528] sm:$0xff]
  %v178 = vld [vmem:[%s0 + $0x530] sm:$0xff]
  %v179 = vld [vmem:[%s0 + $0x538] sm:$0xff]
  %v180 = vld [vmem:[%s0 + $0x540] sm:$0xff]
  %v181 = vld [vmem:[%s0 + $0x548] sm:$0xff]
  %v182 = vld [vmem:[%s0 + $0x550] sm:$0xff]
  %v183 = vld [vmem:[%s0 + $0x558] sm:$0xff]
  %v184 = vld [vmem:[%s0 + $0x560] sm:$0xff]
  %v185 = vld [vmem:[%s0 + $0x568] sm:$0xff]
  %v186 = vld [vmem:[%s0 + $0x570] sm:$0xff]
  %v187 = vld [vmem:[%s0 + $0x578] sm:$0xff]
  %v188 = vld [vmem:[%s0 + $0x580] sm:$0xff]
  %v189 = vld [vmem:[%s0 + $0x588] sm:$0xff]
  %v190 = vld [vmem:[%s0 + $0x590] sm:$0xff]
  %v191 = vld [vmem:[%s0 + $0x598] sm:$0xff]
  %v192 = vld [vmem:[%s0 + $0x5a0] sm:$0xff]
  %v193 = vld [vmem:[%s0 + $0x5a8] sm:$0xff]
  %v194 = vld [vmem:[%s0 + $0x5b0] sm:$0xff]
  %v195 = vld [vmem:[%s0 + $0x5b8] sm:$0xff]
  %v196 = vld [vmem:[%s0 + $0x5c0] sm:$0xff]
  %v197 = vld [vmem:[%s0 + $0x5c8] sm:$0xff]
  %v198 = vld [vmem:[%s0 + $0x5d0] sm:$0xff]
  %v199 = vld [vmem:[%s0 + $0x5d8] sm:$0xff]
  %v200 = vld [vmem:[%s0 + $0x5e0] sm:$0xff]
  %v201 = vld [vmem:[%s0 + $0x5e8] sm:$0xff]
  %v202 = vld [vmem:[%s0 + $0x5f0] sm:$0xff]
  %v203 = vld [vmem:[%s0 + $0x5f8] sm:$0xff]
  %v204 = vld [vmem:[%s0 + $0x600] sm:$0xff]
  %v205 = vld [vmem:[%s0 + $0x608] sm:$0xff]
  %v206 = vld [vmem:[%s0 + $0x610] sm:$0xff]
  %v207 = vld [vmem:[%s0 + $0x618] sm:$0xff]
  %v208 = vld [vmem:[%s0 + $0x620] sm:$0xff]
  %v209 = vld [vmem:[%s0 + $0x628] sm:$0xff]
  %v210 = vld [vmem:[%s0 + $0x630] sm:$0xff]
  %v211 = vld [vmem:[%s0 + $0x638] sm:$0xff]
  %v212 = vld [vmem:[%s0 + $0x640] sm:$0xff]
  %v213 = vld [vmem:[%s0 + $0x648] sm:$0xff]
  %v214 = vld [vmem:[%s0 + $0x650] sm:$0xff]
  %v215 = vld [vmem:[%s0 + $0x658] sm:$0xff]
  %v216 = vld [vmem:[%s0 + $0x660] sm:$0xff]
  %v217 = vld [vmem:[%s0 + $0x668] sm:$0xff]
  %v218 = vld [vmem:[%s0 + $0x670] sm:$0xff]
  %v219 = vld [vmem:[%s0 + $0x678] sm:$0xff]
  %v220 = vld [vmem:[%s0 + $0x680] sm:$0xff]
  %v221 = vld [vmem:[%s0 + $0x688] sm:$0xff]
  %v222 = vld [vmem:[%s0 + $0x690] sm:$0xff]
  %v223 = vld [vmem:[%s0 + $0x698] sm:$0xff]
  %v224 = vld [vmem:[%s0 + $0x6a0] sm:$0xff]
  %v225 = vld [vmem:[%s0 + $0x6a8] sm:$0xff]
  %v226 = vld [vmem:[%s0 + $0x6b0] sm:$0xff]
  %v227 = vld [vmem:[%s0 + $0x6b8] sm:$0xff]
  %v228 = vld [vmem:[%s0 + $0x6c0] sm:$0xff]
  %v229 = vld [vmem:[%s0 + $0x6c8] sm:$0xff]
  %v230 = vld [vmem:[%s0 + $0x6d0] sm:$0xff]
  %v231 = vld [vmem:[%s0 + $0x6d8] sm:$0xff]
  %v232 = vld [vmem:[%s0 + $0x6e0] sm:$0xff]
  %v233 = vld [vmem:[%s0 + $0x6e8] sm:$0xff]
  %v234 = vld [vmem:[%s0 + $0x6f0] sm:$0xff]
  %v235 = vld [vmem:[%s0 + $0x6f8] sm:$0xff]
  %v236 = vld [vmem:[%s0 + $0x700] sm:$0xff]
  %v237 = vld [vmem:[%s0 + $0x708] sm:$0xff]
  %v238 = vld [vmem:[%s0 + $0x710] sm:$0xff]
  %v239 = vld [vmem:[%s0 + $0x718] sm:$0xff]
  %v240 = vld [vmem:[%s0 + $0x720] sm:$0xff]
  %v241 = vld [vmem:[%s0 + $0x728] sm:$0xff]
  %v242 = vld [vmem:[%s0 + $0x730] sm:$0xff]
  %v243 = vld [vmem:[%s0 + $0x738] sm:$0xff]
  %v244 = vld [vmem:[%s0 + $0x740] sm:$0xff]
  %v245 = vld [vmem:[%s0 + $0x748] sm:$0xff]
  %v246 = vld [vmem:[%s0 + $0x750] sm:$0xff]
  %v247 = vld [vmem:[%s0 + $0x758] sm:$0xff]
  %v248 = vld [vmem:[%s0 + $0x760] sm:$0xff]
  %v249 = vld [vmem:[%s0 + $0x768] sm:$0xff]
  %v250 = vld [vmem:[%s0 + $0x770] sm:$0xff]
  %v251 = vld [vmem:[%s0 + $0x778] sm:$0xff]
  %v252 = vld [vmem:[%s0 + $0x780] sm:$0xff]
  %v253 = vld [vmem:[%s0 + $0x788] sm:$0xff]
  %v254 = vld [vmem:[%s0 + $0x790] sm:$0xff]
  %v255 = vld [vmem:[%s0 + $0x798] sm:$0xff]
  %v256 = vld [vmem:[%s0 + $0x7a0] sm:$0xff]
  %v257 = vld [vmem:[%s0 + $0x7a8] sm:$0xff]
  %v258 = vld [vmem:[%s0 + $0x7b0] sm:$0xff]
  %v259 = vld [vmem:[%s0 + $0x7b8] sm:$0xff]
  %v260 = vld [vmem:[%s1] sm:$0xf]
  %v261 = vld [vmem:[%s1 + $0x4] sm:$0xf]
  %v262 = vld [vmem:[%s1 + $0x8] sm:$0xf]
  %v263 = vld [vmem:[%s1 + $0xc] sm:$0xf]
  %v264 = vld [vmem:[%s1 + $0x10] sm:$0xf]
  %v265 = vld [vmem:[%s1 + $0x14] sm:$0xf]
  %v266 = vld [vmem:[%s1 + $0x18] sm:$0xf]
  %v267 = vld [vmem:[%s1 + $0x1c] sm:$0xf]
  %v268 = vld [vmem:[%s1 + $0x20] sm:$0xf]
  %v269 = vld [vmem:[%s1 + $0x24] sm:$0xf]
  %v270 = vld [vmem:[%s1 + $0x28] sm:$0xf]
  %v271 = vld [vmem:[%s1 + $0x2c] sm:$0xf]
  %v272 = vld [vmem:[%s1 + $0x30] sm:$0xf]
  %v273 = vld [vmem:[%s1 + $0x34] sm:$0xf]
  %v274 = vld [vmem:[%s1 + $0x38] sm:$0xf]
  %v275 = vld [vmem:[%s1 + $0x3c] sm:$0xf]
  %v276 = vld [vmem:[%s1 + $0x40] sm:$0xf]
  %v277 = vld [vmem:[%s1 + $0x44] sm:$0xf]
  %v278 = vld [vmem:[%s1 + $0x48] sm:$0xf]
  %v279 = vld [vmem:[%s1 + $0x4c] sm:$0xf]
  %v280 = vld [vmem:[%s1 + $0x50] sm:$0xf]
  %v281 = vld [vmem:[%s1 + $0x54] sm:$0xf]
  %v282 = vld [vmem:[%s1 + $0x58] sm:$0xf]
  %v283 = vld [vmem:[%s1 + $0x5c] sm:$0xf]
  %v284 = vld [vmem:[%s1 + $0x60] sm:$0xf]
  %v285 = vld [vmem:[%s1 + $0x64] sm:$0xf]
  %v286 = vld [vmem:[%s1 + $0x68] sm:$0xf]
  %v287 = vld [vmem:[%s1 + $0x6c] sm:$0xf]
  %v288 = vld [vmem:[%s1 + $0x70] sm:$0xf]
  %v289 = vld [vmem:[%s1 + $0x74] sm:$0xf]
  %v290 = vld [vmem:[%s1 + $0x78] sm:$0xf]
  %v291 = vld [vmem:[%s1 + $0x7c] sm:$0xf]
  %v292 = vld [vmem:[%s1 + $0x80] sm:$0xf]
  %v293 = vld [vmem:[%s1 + $0x84] sm:$0xf]
  %v294 = vld [vmem:[%s1 + $0x88] sm:$0xf]
  %v295 = vld [vmem:[%s1 + $0x8c] sm:$0xf]
  %v296 = vld [vmem:[%s1 + $0x90] sm:$0xf]
  %v297 = vld [vmem:[%s1 + $0x94] sm:$0xf]
  %v298 = vld [vmem:[%s1 + $0x98] sm:$0xf]
  %v299 = vld [vmem:[%s1 + $0x9c] sm:$0xf]
  %v300 = vld [vmem:[%s1 + $0xa0] sm:$0xf]
  %v301 = vld [vmem:[%s1 + $0xa4] sm:$0xf]
  %v302 = vld [vmem:[%s1 + $0xa8] sm:$0xf]
  %v303 = vld [vmem:[%s1 + $0xac] sm:$0xf]
  %v304 = vld [vmem:[%s1 + $0xb0] sm:$0xf]
  %v305 = vld [vmem:[%s1 + $0xb4] sm:$0xf]
  %v306 = vld [vmem:[%s1 + $0xb8] sm:$0xf]
  %v307 = vld [vmem:[%s1 + $0xbc] sm:$0xf]
  %v308 = vld [vmem:[%s1 + $0xc0] sm:$0xf]
  %v309 = vld [vmem:[%s1 + $0xc4] sm:$0xf]
  %v310 = vld [vmem:[%s1 + $0xc8] sm:$0xf]
  %v311 = vld [vmem:[%s1 + $0xcc] sm:$0xf]
  %v312 = vld [vmem:[%s1 + $0xd0] sm:$0xf]
  %v313 = vld [vmem:[%s1 + $0xd4] sm:$0xf]
  %v314 = vld [vmem:[%s1 + $0xd8] sm:$0xf]
  %v315 = vld [vmem:[%s1 + $0xdc] sm:$0xf]
  %v316 = vld [vmem:[%s1 + $0xe0] sm:$0xf]
  %v317 = vld [vmem:[%s1 + $0xe4] sm:$0xf]
  %v318 = vld [vmem:[%s1 + $0xe8] sm:$0xf]
  %v319 = vld [vmem:[%s1 + $0xec] sm:$0xf]
  %v320 = vld [vmem:[%s1 + $0xf0] sm:$0xf]
  %v321 = vld [vmem:[%s1 + $0xf4] sm:$0xf]
  %v322 = vld [vmem:[%s1 + $0xf8] sm:$0xf]
  %v323 = vld [vmem:[%s1 + $0xfc] sm:$0xf]
  %v324 = vld [vmem:[%s1 + $0x100] sm:$0xf]
  %v325 = vld [vmem:[%s1 + $0x104] sm:$0xf]
  %v326 = vld [vmem:[%s1 + $0x108] sm:$0xf]
  %v327 = vld [vmem:[%s1 + $0x10c] sm:$0xf]
  %v328 = vld [vmem:[%s1 + $0x110] sm:$0xf]
  %v329 = vld [vmem:[%s1 + $0x114] sm:$0xf]
  %v330 = vld [vmem:[%s1 + $0x118] sm:$0xf]
  %v331 = vld [vmem:[%s1 + $0x11c] sm:$0xf]
  %v332 = vld [vmem:[%s1 + $0x120] sm:$0xf]
  %v333 = vld [vmem:[%s1 + $0x124] sm:$0xf]
  %v334 = vld [vmem:[%s1 + $0x128] sm:$0xf]
  %v335 = vld [vmem:[%s1 + $0x12c] sm:$0xf]
  %v336 = vld [vmem:[%s1 + $0x130] sm:$0xf]
  %v337 = vld [vmem:[%s1 + $0x134] sm:$0xf]
  %v338 = vld [vmem:[%s1 + $0x138] sm:$0xf]
  %v339 = vld [vmem:[%s1 + $0x13c] sm:$0xf]
  %v340 = vld [vmem:[%s1 + $0x140] sm:$0xf]
  %v341 = vld [vmem:[%s1 + $0x144] sm:$0xf]
  %v342 = vld [vmem:[%s1 + $0x148] sm:$0xf]
  %v343 = vld [vmem:[%s1 + $0x14c] sm:$0xf]
  %v344 = vld [vmem:[%s1 + $0x150] sm:$0xf]
  %v345 = vld [vmem:[%s1 + $0x154] sm:$0xf]
  %v346 = vld [vmem:[%s1 + $0x158] sm:$0xf]
  %v347 = vld [vmem:[%s1 + $0x15c] sm:$0xf]
  %v348 = vld [vmem:[%s1 + $0x160] sm:$0xf]
  %v349 = vld [vmem:[%s1 + $0x164] sm:$0xf]
  %v350 = vld [vmem:[%s1 + $0x168] sm:$0xf]
  %v351 = vld [vmem:[%s1 + $0x16c] sm:$0xf]
  %v352 = vld [vmem:[%s1 + $0x170] sm:$0xf]
  %v353 = vld [vmem:[%s1 + $0x174] sm:$0xf]
  %v354 = vld [vmem:[%s1 + $0x178] sm:$0xf]
  %v355 = vld [vmem:[%s1 + $0x17c] sm:$0xf]
  %v356 = vld [vmem:[%s1 + $0x180] sm:$0xf]
  %v357 = vld [vmem:[%s1 + $0x184] sm:$0xf]
  %v358 = vld [vmem:[%s1 + $0x188] sm:$0xf]
  %v359 = vld [vmem:[%s1 + $0x18c] sm:$0xf]
  %v360 = vld [vmem:[%s1 + $0x190] sm:$0xf]
  %v361 = vld [vmem:[%s1 + $0x194] sm:$0xf]
  %v362 = vld [vmem:[%s1 + $0x198] sm:$0xf]
  %v363 = vld [vmem:[%s1 + $0x19c] sm:$0xf]
  %v364 = vld [vmem:[%s1 + $0x1a0] sm:$0xf]
  %v365 = vld [vmem:[%s1 + $0x1a4] sm:$0xf]
  %v366 = vld [vmem:[%s1 + $0x1a8] sm:$0xf]
  %v367 = vld [vmem:[%s1 + $0x1ac] sm:$0xf]
  %v368 = vld [vmem:[%s1 + $0x1b0] sm:$0xf]
  %v369 = vld [vmem:[%s1 + $0x1b4] sm:$0xf]
  %v370 = vld [vmem:[%s1 + $0x1b8] sm:$0xf]
  %v371 = vld [vmem:[%s1 + $0x1bc] sm:$0xf]
  %v372 = vld [vmem:[%s1 + $0x1c0] sm:$0xf]
  %v373 = vld [vmem:[%s1 + $0x1c4] sm:$0xf]
  %v374 = vld [vmem:[%s1 + $0x1c8] sm:$0xf]
  %v375 = vld [vmem:[%s1 + $0x1cc] sm:$0xf]
  %v376 = vld [vmem:[%s1 + $0x1d0] sm:$0xf]
  %v377 = vld [vmem:[%s1 + $0x1d4] sm:$0xf]
  %v378 = vld [vmem:[%s1 + $0x1d8] sm:$0xf]
  %v379 = vld [vmem:[%s1 + $0x1dc] sm:$0xf]
  %v380 = vld [vmem:[%s1 + $0x1e0] sm:$0xf]
  %v381 = vld [vmem:[%s1 + $0x1e4] sm:$0xf]
  %v382 = vld [vmem:[%s1 + $0x1e8] sm:$0xf]
  %v383 = vld [vmem:[%s1 + $0x1ec] sm:$0xf]
  %v384 = vld [vmem:[%s1 + $0x1f0] sm:$0xf]
  %v385 = vld [vmem:[%s1 + $0x1f4] sm:$0xf]
  %v386 = vld [vmem:[%s1 + $0x1f8] sm:$0xf]
  %v387 = vld [vmem:[%s1 + $0x1fc] sm:$0xf]
  %v388 = vld [vmem:[%s1 + $0x200] sm:$0xf]
  %v389 = vld [vmem:[%s1 + $0x204] sm:$0xf]
  %v390 = vld [vmem:[%s1 + $0x208] sm:$0xf]
  %v391 = vld [vmem:[%s1 + $0x20c] sm:$0xf]
  %v392 = vld [vmem:[%s1 + $0x210] sm:$0xf]
  %v393 = vld [vmem:[%s1 + $0x214] sm:$0xf]
  %v394 = vld [vmem:[%s1 + $0x218] sm:$0xf]
  %v395 = vld [vmem:[%s1 + $0x21c] sm:$0xf]
  %v396 = vld [vmem:[%s1 + $0x220] sm:$0xf]
  %v397 = vld [vmem:[%s1 + $0x224] sm:$0xf]
  %v398 = vld [vmem:[%s1 + $0x228] sm:$0xf]
  %v399 = vld [vmem:[%s1 + $0x22c] sm:$0xf]
  %v400 = vld [vmem:[%s1 + $0x230] sm:$0xf]
  %v401 = vld [vmem:[%s1 + $0x234] sm:$0xf]
  %v402 = vld [vmem:[%s1 + $0x238] sm:$0xf]
  %v403 = vld [vmem:[%s1 + $0x23c] sm:$0xf]
  %v404 = vld [vmem:[%s1 + $0x240] sm:$0xf]
  %v405 = vld [vmem:[%s1 + $0x244] sm:$0xf]
  %v406 = vld [vmem:[%s1 + $0x248] sm:$0xf]
  %v407 = vld [vmem:[%s1 + $0x24c] sm:$0xf]
  %v408 = vld [vmem:[%s1 + $0x250] sm:$0xf]
  %v409 = vld [vmem:[%s1 + $0x254] sm:$0xf]
  %v410 = vld [vmem:[%s1 + $0x258] sm:$0xf]
  %v411 = vld [vmem:[%s1 + $0x25c] sm:$0xf]
  %v412 = vld [vmem:[%s1 + $0x260] sm:$0xf]
  %v413 = vld [vmem:[%s1 + $0x264] sm:$0xf]
  %v414 = vld [vmem:[%s1 + $0x268] sm:$0xf]
  %v415 = vld [vmem:[%s1 + $0x26c] sm:$0xf]
  %v416 = vld [vmem:[%s1 + $0x270] sm:$0xf]
  %v417 = vld [vmem:[%s1 + $0x274] sm:$0xf]
  %v418 = vld [vmem:[%s1 + $0x278] sm:$0xf]
  %v419 = vld [vmem:[%s1 + $0x27c] sm:$0xf]
  %v420 = vld [vmem:[%s1 + $0x280] sm:$0xf]
  %v421 = vld [vmem:[%s1 + $0x284] sm:$0xf]
  %v422 = vld [vmem:[%s1 + $0x288] sm:$0xf]
  %v423 = vld [vmem:[%s1 + $0x28c] sm:$0xf]
  %v424 = vld [vmem:[%s1 + $0x290] sm:$0xf]
  %v425 = vld [vmem:[%s1 + $0x294] sm:$0xf]
  %v426 = vld [vmem:[%s1 + $0x298] sm:$0xf]
  %v427 = vld [vmem:[%s1 + $0x29c] sm:$0xf]
  %v428 = vld [vmem:[%s1 + $0x2a0] sm:$0xf]
  %v429 = vld [vmem:[%s1 + $0x2a4] sm:$0xf]
  %v430 = vld [vmem:[%s1 + $0x2a8] sm:$0xf]
  %v431 = vld [vmem:[%s1 + $0x2ac] sm:$0xf]
  %v432 = vld [vmem:[%s1 + $0x2b0] sm:$0xf]
  %v433 = vld [vmem:[%s1 + $0x2b4] sm:$0xf]
  %v434 = vld [vmem:[%s1 + $0x2b8] sm:$0xf]
  %v435 = vld [vmem:[%s1 + $0x2bc] sm:$0xf]
  %v436 = vld [vmem:[%s1 + $0x2c0] sm:$0xf]
  %v437 = vld [vmem:[%s1 + $0x2c4] sm:$0xf]
  %v438 = vld [vmem:[%s1 + $0x2c8] sm:$0xf]
  %v439 = vld [vmem:[%s1 + $0x2cc] sm:$0xf]
  %v440 = vld [vmem:[%s1 + $0x2d0] sm:$0xf]
  %v441 = vld [vmem:[%s1 + $0x2d4] sm:$0xf]
  %v442 = vld [vmem:[%s1 + $0x2d8] sm:$0xf]
  %v443 = vld [vmem:[%s1 + $0x2dc] sm:$0xf]
  %v444 = vld [vmem:[%s1 + $0x2e0] sm:$0xf]
  %v445 = vld [vmem:[%s1 + $0x2e4] sm:$0xf]
  %v446 = vld [vmem:[%s1 + $0x2e8] sm:$0xf]
  %v447 = vld [vmem:[%s1 + $0x2ec] sm:$0xf]
  %v448 = vld [vmem:[%s1 + $0x2f0] sm:$0xf]
  %v449 = vld [vmem:[%s1 + $0x2f4] sm:$0xf]
  %v450 = vld [vmem:[%s1 + $0x2f8] sm:$0xf]
  %v451 = vld [vmem:[%s1 + $0x2fc] sm:$0xf]
  %v452 = vld [vmem:[%s1 + $0x300] sm:$0xf]
  %v453 = vld [vmem:[%s1 + $0x304] sm:$0xf]
  %v454 = vld [vmem:[%s1 + $0x308] sm:$0xf]
  %v455 = vld [vmem:[%s1 + $0x30c] sm:$0xf]
  %v456 = vld [vmem:[%s1 + $0x310] sm:$0xf]
  %v457 = vld [vmem:[%s1 + $0x314] sm:$0xf]
  %v458 = vld [vmem:[%s1 + $0x318] sm:$0xf]
  %v459 = vld [vmem:[%s1 + $0x31c] sm:$0xf]
  %v460 = vld [vmem:[%s1 + $0x320] sm:$0xf]
  %v461 = vld [vmem:[%s1 + $0x324] sm:$0xf]
  %v462 = vld [vmem:[%s1 + $0x328] sm:$0xf]
  %v463 = vld [vmem:[%s1 + $0x32c] sm:$0xf]
  %v464 = vld [vmem:[%s1 + $0x330] sm:$0xf]
  %v465 = vld [vmem:[%s1 + $0x334] sm:$0xf]
  %v466 = vld [vmem:[%s1 + $0x338] sm:$0xf]
  %v467 = vld [vmem:[%s1 + $0x33c] sm:$0xf]
  %v468 = vld [vmem:[%s1 + $0x340] sm:$0xf]
  %v469 = vld [vmem:[%s1 + $0x344] sm:$0xf]
  %v470 = vld [vmem:[%s1 + $0x348] sm:$0xf]
  %v471 = vld [vmem:[%s1 + $0x34c] sm:$0xf]
  %v472 = vld [vmem:[%s1 + $0x350] sm:$0xf]
  %v473 = vld [vmem:[%s1 + $0x354] sm:$0xf]
  %v474 = vld [vmem:[%s1 + $0x358] sm:$0xf]
  %v475 = vld [vmem:[%s1 + $0x35c] sm:$0xf]
  %v476 = vld [vmem:[%s1 + $0x360] sm:$0xf]
  %v477 = vld [vmem:[%s1 + $0x364] sm:$0xf]
  %v478 = vld [vmem:[%s1 + $0x368] sm:$0xf]
  %v479 = vld [vmem:[%s1 + $0x36c] sm:$0xf]
  %v480 = vld [vmem:[%s1 + $0x370] sm:$0xf]
  %v481 = vld [vmem:[%s1 + $0x374] sm:$0xf]
  %v482 = vld [vmem:[%s1 + $0x378] sm:$0xf]
  %v483 = vld [vmem:[%s1 + $0x37c] sm:$0xf]
  %v484 = vld [vmem:[%s1 + $0x380] sm:$0xf]
  %v485 = vld [vmem:[%s1 + $0x384] sm:$0xf]
  %v486 = vld [vmem:[%s1 + $0x388] sm:$0xf]
  %v487 = vld [vmem:[%s1 + $0x38c] sm:$0xf]
  %v488 = vld [vmem:[%s1 + $0x390] sm:$0xf]
  %v489 = vld [vmem:[%s1 + $0x394] sm:$0xf]
  %v490 = vld [vmem:[%s1 + $0x398] sm:$0xf]
  %v491 = vld [vmem:[%s1 + $0x39c] sm:$0xf]
  %v492 = vld [vmem:[%s1 + $0x3a0] sm:$0xf]
  %v493 = vld [vmem:[%s1 + $0x3a4] sm:$0xf]
  %v494 = vld [vmem:[%s1 + $0x3a8] sm:$0xf]
  %v495 = vld [vmem:[%s1 + $0x3ac] sm:$0xf]
  %v496 = vld [vmem:[%s1 + $0x3b0] sm:$0xf]
  %v497 = vld [vmem:[%s1 + $0x3b4] sm:$0xf]
  %v498 = vld [vmem:[%s1 + $0x3b8] sm:$0xf]
  %v499 = vld [vmem:[%s1 + $0x3bc] sm:$0xf]
  %v500 = vld [vmem:[%s1 + $0x3c0] sm:$0xf]
  %v501 = vld [vmem:[%s1 + $0x3c4] sm:$0xf]
  %v502 = vld [vmem:[%s1 + $0x3c8] sm:$0xf]
  %v503 = vld [vmem:[%s1 + $0x3cc] sm:$0xf]
  %v504 = vld [vmem:[%s1 + $0x3d0] sm:$0xf]
  %v505 = vld [vmem:[%s1 + $0x3d4] sm:$0xf]
  %v506 = vld [vmem:[%s1 + $0x3d8] sm:$0xf]
  %v507 = vld [vmem:[%s1 + $0x3dc] sm:$0xf]
  %v508 = vld [vmem:[%s1 + $0x3e0] sm:$0xf]
  %v509 = vld [vmem:[%s1 + $0x3e4] sm:$0xf]
  %v510 = vld [vmem:[%s1 + $0x3e8] sm:$0xf]
  %v511 = vld [vmem:[%s1 + $0x3ec] sm:$0xf]
  %v512 = vld [vmem:[%s1 + $0x3f0] sm:$0xf]
  %v513 = vld [vmem:[%s1 + $0x3f4] sm:$0xf]
  %v514 = vld [vmem:[%s1 + $0x3f8] sm:$0xf]
  %v515 = vld [vmem:[%s1 + $0x3fc] sm:$0xf]
  %v764 = vunpack.c.l.b16 %v12
  %v765 = vunpack.c.h.b16 %v12
  %v766 = vunpack.c.l.b16 %v13
  %v767 = vunpack.c.h.b16 %v13
  %v768 = vunpack.c.l.b16 %v14
  %v769 = vunpack.c.h.b16 %v14
  %v770 = vunpack.c.l.b16 %v15
  %v771 = vunpack.c.h.b16 %v15
  %v772 = vunpack.c.l.b16 %v16
  %v773 = vunpack.c.h.b16 %v16
  %v774 = vunpack.c.l.b16 %v17
  %v775 = vunpack.c.h.b16 %v17
  %v776 = vunpack.c.l.b16 %v18
  %v777 = vunpack.c.h.b16 %v18
  %v778 = vunpack.c.l.b16 %v19
  %v779 = vunpack.c.h.b16 %v19
  %v780 = vunpack.c.l.b16 %v20
  %v781 = vunpack.c.h.b16 %v20
  %v782 = vunpack.c.l.b16 %v21
  %v783 = vunpack.c.h.b16 %v21
  %v784 = vunpack.c.l.b16 %v22
  %v785 = vunpack.c.h.b16 %v22
  %v786 = vunpack.c.l.b16 %v23
  %v787 = vunpack.c.h.b16 %v23
  %v788 = vunpack.c.l.b16 %v24
  %v789 = vunpack.c.h.b16 %v24
  %v790 = vunpack.c.l.b16 %v25
  %v791 = vunpack.c.h.b16 %v25
  %v792 = vunpack.c.l.b16 %v26
  %v793 = vunpack.c.h.b16 %v26
  %v794 = vunpack.c.l.b16 %v27
  %v795 = vunpack.c.h.b16 %v27
  %v796 = vunpack.c.l.b16 %v28
  %v797 = vunpack.c.h.b16 %v28
  %v798 = vunpack.c.l.b16 %v29
  %v799 = vunpack.c.h.b16 %v29
  %v800 = vunpack.c.l.b16 %v30
  %v801 = vunpack.c.h.b16 %v30
  %v802 = vunpack.c.l.b16 %v31
  %v803 = vunpack.c.h.b16 %v31
  %v804 = vunpack.c.l.b16 %v32
  %v805 = vunpack.c.h.b16 %v32
  %v806 = vunpack.c.l.b16 %v33
  %v807 = vunpack.c.h.b16 %v33
  %v808 = vunpack.c.l.b16 %v34
  %v809 = vunpack.c.h.b16 %v34
  %v810 = vunpack.c.l.b16 %v35
  %v811 = vunpack.c.h.b16 %v35
  %v812 = vunpack.c.l.b16 %v36
  %v813 = vunpack.c.h.b16 %v36
  %v814 = vunpack.c.l.b16 %v37
  %v815 = vunpack.c.h.b16 %v37
  %v816 = vunpack.c.l.b16 %v38
  %v817 = vunpack.c.h.b16 %v38
  %v818 = vunpack.c.l.b16 %v39
  %v819 = vunpack.c.h.b16 %v39
  %v820 = vunpack.c.l.b16 %v40
  %v821 = vunpack.c.h.b16 %v40
  %v822 = vunpack.c.l.b16 %v41
  %v823 = vunpack.c.h.b16 %v41
  %v824 = vunpack.c.l.b16 %v42
  %v825 = vunpack.c.h.b16 %v42
  %v826 = vunpack.c.l.b16 %v43
  %v827 = vunpack.c.h.b16 %v43
  %v828 = vunpack.c.l.b16 %v44
  %v829 = vunpack.c.h.b16 %v44
  %v830 = vunpack.c.l.b16 %v45
  %v831 = vunpack.c.h.b16 %v45
  %v832 = vunpack.c.l.b16 %v46
  %v833 = vunpack.c.h.b16 %v46
  %v834 = vunpack.c.l.b16 %v47
  %v835 = vunpack.c.h.b16 %v47
  %v836 = vunpack.c.l.b16 %v48
  %v837 = vunpack.c.h.b16 %v48
  %v838 = vunpack.c.l.b16 %v49
  %v839 = vunpack.c.h.b16 %v49
  %v840 = vunpack.c.l.b16 %v50
  %v841 = vunpack.c.h.b16 %v50
  %v842 = vunpack.c.l.b16 %v51
  %v843 = vunpack.c.h.b16 %v51
  %v844 = vunpack.c.l.b16 %v52
  %v845 = vunpack.c.h.b16 %v52
  %v846 = vunpack.c.l.b16 %v53
  %v847 = vunpack.c.h.b16 %v53
  %v848 = vunpack.c.l.b16 %v54
  %v849 = vunpack.c.h.b16 %v54
  %v850 = vunpack.c.l.b16 %v55
  %v851 = vunpack.c.h.b16 %v55
  %v852 = vunpack.c.l.b16 %v56
  %v853 = vunpack.c.h.b16 %v56
  %v854 = vunpack.c.l.b16 %v57
  %v855 = vunpack.c.h.b16 %v57
  %v856 = vunpack.c.l.b16 %v58
  %v857 = vunpack.c.h.b16 %v58
  %v858 = vunpack.c.l.b16 %v59
  %v859 = vunpack.c.h.b16 %v59
  %v860 = vunpack.c.l.b16 %v60
  %v861 = vunpack.c.h.b16 %v60
  %v862 = vunpack.c.l.b16 %v61
  %v863 = vunpack.c.h.b16 %v61
  %v864 = vunpack.c.l.b16 %v62
  %v865 = vunpack.c.h.b16 %v62
  %v866 = vunpack.c.l.b16 %v63
  %v867 = vunpack.c.h.b16 %v63
  %v868 = vunpack.c.l.b16 %v64
  %v869 = vunpack.c.h.b16 %v64
  %v870 = vunpack.c.l.b16 %v65
  %v871 = vunpack.c.h.b16 %v65
  %v872 = vunpack.c.l.b16 %v66
  %v873 = vunpack.c.h.b16 %v66
  %v874 = vunpack.c.l.b16 %v67
  %v875 = vunpack.c.h.b16 %v67
  %v876 = vunpack.c.l.b16 %v68
  %v877 = vunpack.c.h.b16 %v68
  %v878 = vunpack.c.l.b16 %v69
  %v879 = vunpack.c.h.b16 %v69
  %v880 = vunpack.c.l.b16 %v70
  %v881 = vunpack.c.h.b16 %v70
  %v882 = vunpack.c.l.b16 %v71
  %v883 = vunpack.c.h.b16 %v71
  %v884 = vunpack.c.l.b16 %v72
  %v885 = vunpack.c.h.b16 %v72
  %v886 = vunpack.c.l.b16 %v73
  %v887 = vunpack.c.h.b16 %v73
  %v888 = vunpack.c.l.b16 %v74
  %v889 = vunpack.c.h.b16 %v74
  %v890 = vunpack.c.l.b16 %v75
  %v891 = vunpack.c.h.b16 %v75
  %v892 = vunpack.c.l.b16 %v76
  %v893 = vunpack.c.h.b16 %v76
  %v894 = vunpack.c.l.b16 %v77
  %v895 = vunpack.c.h.b16 %v77
  %v896 = vunpack.c.l.b16 %v78
  %v897 = vunpack.c.h.b16 %v78
  %v898 = vunpack.c.l.b16 %v79
  %v899 = vunpack.c.h.b16 %v79
  %v900 = vunpack.c.l.b16 %v80
  %v901 = vunpack.c.h.b16 %v80
  %v902 = vunpack.c.l.b16 %v81
  %v903 = vunpack.c.h.b16 %v81
  %v904 = vunpack.c.l.b16 %v82
  %v905 = vunpack.c.h.b16 %v82
  %v906 = vunpack.c.l.b16 %v83
  %v907 = vunpack.c.h.b16 %v83
  %v908 = vunpack.c.l.b16 %v84
  %v909 = vunpack.c.h.b16 %v84
  %v910 = vunpack.c.l.b16 %v85
  %v911 = vunpack.c.h.b16 %v85
  %v912 = vunpack.c.l.b16 %v86
  %v913 = vunpack.c.h.b16 %v86
  %v914 = vunpack.c.l.b16 %v87
  %v915 = vunpack.c.h.b16 %v87
  %v916 = vunpack.c.l.b16 %v88
  %v917 = vunpack.c.h.b16 %v88
  %v918 = vunpack.c.l.b16 %v89
  %v919 = vunpack.c.h.b16 %v89
  %v920 = vunpack.c.l.b16 %v90
  %v921 = vunpack.c.h.b16 %v90
  %v922 = vunpack.c.l.b16 %v91
  %v923 = vunpack.c.h.b16 %v91
  %v924 = vunpack.c.l.b16 %v92
  %v925 = vunpack.c.h.b16 %v92
  %v926 = vunpack.c.l.b16 %v93
  %v927 = vunpack.c.h.b16 %v93
  %v928 = vunpack.c.l.b16 %v94
  %v929 = vunpack.c.h.b16 %v94
  %v930 = vunpack.c.l.b16 %v95
  %v931 = vunpack.c.h.b16 %v95
  %v932 = vunpack.c.l.b16 %v96
  %v933 = vunpack.c.h.b16 %v96
  %v934 = vunpack.c.l.b16 %v97
  %v935 = vunpack.c.h.b16 %v97
  %v936 = vunpack.c.l.b16 %v98
  %v937 = vunpack.c.h.b16 %v98
  %v938 = vunpack.c.l.b16 %v99
  %v939 = vunpack.c.h.b16 %v99
  %v940 = vunpack.c.l.b16 %v100
  %v941 = vunpack.c.h.b16 %v100
  %v942 = vunpack.c.l.b16 %v101
  %v943 = vunpack.c.h.b16 %v101
  %v944 = vunpack.c.l.b16 %v102
  %v945 = vunpack.c.h.b16 %v102
  %v946 = vunpack.c.l.b16 %v103
  %v947 = vunpack.c.h.b16 %v103
  %v948 = vunpack.c.l.b16 %v104
  %v949 = vunpack.c.h.b16 %v104
  %v950 = vunpack.c.l.b16 %v105
  %v951 = vunpack.c.h.b16 %v105
  %v952 = vunpack.c.l.b16 %v106
  %v953 = vunpack.c.h.b16 %v106
  %v954 = vunpack.c.l.b16 %v107
  %v955 = vunpack.c.h.b16 %v107
  %v956 = vunpack.c.l.b16 %v108
  %v957 = vunpack.c.h.b16 %v108
  %v958 = vunpack.c.l.b16 %v109
  %v959 = vunpack.c.h.b16 %v109
  %v960 = vunpack.c.l.b16 %v110
  %v961 = vunpack.c.h.b16 %v110
  %v962 = vunpack.c.l.b16 %v111
  %v963 = vunpack.c.h.b16 %v111
  %v964 = vunpack.c.l.b16 %v112
  %v965 = vunpack.c.h.b16 %v112
  %v966 = vunpack.c.l.b16 %v113
  %v967 = vunpack.c.h.b16 %v113
  %v968 = vunpack.c.l.b16 %v114
  %v969 = vunpack.c.h.b16 %v114
  %v970 = vunpack.c.l.b16 %v115
  %v971 = vunpack.c.h.b16 %v115
  %v972 = vunpack.c.l.b16 %v116
  %v973 = vunpack.c.h.b16 %v116
  %v974 = vunpack.c.l.b16 %v117
  %v975 = vunpack.c.h.b16 %v117
  %v976 = vunpack.c.l.b16 %v118
  %v977 = vunpack.c.h.b16 %v118
  %v978 = vunpack.c.l.b16 %v119
  %v979 = vunpack.c.h.b16 %v119
  %v980 = vunpack.c.l.b16 %v120
  %v981 = vunpack.c.h.b16 %v120
  %v982 = vunpack.c.l.b16 %v121
  %v983 = vunpack.c.h.b16 %v121
  %v984 = vunpack.c.l.b16 %v122
  %v985 = vunpack.c.h.b16 %v122
  %v986 = vunpack.c.l.b16 %v123
  %v987 = vunpack.c.h.b16 %v123
  %v988 = vunpack.c.l.b16 %v124
  %v989 = vunpack.c.h.b16 %v124
  %v990 = vunpack.c.l.b16 %v125
  %v991 = vunpack.c.h.b16 %v125
  %v992 = vunpack.c.l.b16 %v126
  %v993 = vunpack.c.h.b16 %v126
  %v994 = vunpack.c.l.b16 %v127
  %v995 = vunpack.c.h.b16 %v127
  %v996 = vunpack.c.l.b16 %v128
  %v997 = vunpack.c.h.b16 %v128
  %v998 = vunpack.c.l.b16 %v129
  %v999 = vunpack.c.h.b16 %v129
  %v1000 = vunpack.c.l.b16 %v130
  %v1001 = vunpack.c.h.b16 %v130
  %v1002 = vunpack.c.l.b16 %v131
  %v1003 = vunpack.c.h.b16 %v131
  %v1004 = vunpack.c.l.b16 %v132
  %v1005 = vunpack.c.h.b16 %v132
  %v1006 = vunpack.c.l.b16 %v133
  %v1007 = vunpack.c.h.b16 %v133
  %v1008 = vunpack.c.l.b16 %v134
  %v1009 = vunpack.c.h.b16 %v134
  %v1010 = vunpack.c.l.b16 %v135
  %v1011 = vunpack.c.h.b16 %v135
  %v1012 = vunpack.c.l.b16 %v136
  %v1013 = vunpack.c.h.b16 %v136
  %v1014 = vunpack.c.l.b16 %v137
  %v1015 = vunpack.c.h.b16 %v137
  %v1016 = vunpack.c.l.b16 %v138
  %v1017 = vunpack.c.h.b16 %v138
  %v1018 = vunpack.c.l.b16 %v139
  %v1019 = vunpack.c.h.b16 %v139
  %v1020 = vunpack.c.l.b16 %v140
  %v1021 = vunpack.c.h.b16 %v140
  %v1022 = vunpack.c.l.b16 %v141
  %v1023 = vunpack.c.h.b16 %v141
  %v1024 = vunpack.c.l.b16 %v142
  %v1025 = vunpack.c.h.b16 %v142
  %v1026 = vunpack.c.l.b16 %v143
  %v1027 = vunpack.c.h.b16 %v143
  %v1028 = vunpack.c.l.b16 %v144
  %v1029 = vunpack.c.h.b16 %v144
  %v1030 = vunpack.c.l.b16 %v145
  %v1031 = vunpack.c.h.b16 %v145
  %v1032 = vunpack.c.l.b16 %v146
  %v1033 = vunpack.c.h.b16 %v146
  %v1034 = vunpack.c.l.b16 %v147
  %v1035 = vunpack.c.h.b16 %v147
  %v1036 = vunpack.c.l.b16 %v148
  %v1037 = vunpack.c.h.b16 %v148
  %v1038 = vunpack.c.l.b16 %v149
  %v1039 = vunpack.c.h.b16 %v149
  %v1040 = vunpack.c.l.b16 %v150
  %v1041 = vunpack.c.h.b16 %v150
  %v1042 = vunpack.c.l.b16 %v151
  %v1043 = vunpack.c.h.b16 %v151
  %v1044 = vunpack.c.l.b16 %v152
  %v1045 = vunpack.c.h.b16 %v152
  %v1046 = vunpack.c.l.b16 %v153
  %v1047 = vunpack.c.h.b16 %v153
  %v1048 = vunpack.c.l.b16 %v154
  %v1049 = vunpack.c.h.b16 %v154
  %v1050 = vunpack.c.l.b16 %v155
  %v1051 = vunpack.c.h.b16 %v155
  %v1052 = vunpack.c.l.b16 %v156
  %v1053 = vunpack.c.h.b16 %v156
  %v1054 = vunpack.c.l.b16 %v157
  %v1055 = vunpack.c.h.b16 %v157
  %v1056 = vunpack.c.l.b16 %v158
  %v1057 = vunpack.c.h.b16 %v158
  %v1058 = vunpack.c.l.b16 %v159
  %v1059 = vunpack.c.h.b16 %v159
  %v1060 = vunpack.c.l.b16 %v160
  %v1061 = vunpack.c.h.b16 %v160
  %v1062 = vunpack.c.l.b16 %v161
  %v1063 = vunpack.c.h.b16 %v161
  %v1064 = vunpack.c.l.b16 %v162
  %v1065 = vunpack.c.h.b16 %v162
  %v1066 = vunpack.c.l.b16 %v163
  %v1067 = vunpack.c.h.b16 %v163
  %v1068 = vunpack.c.l.b16 %v164
  %v1069 = vunpack.c.h.b16 %v164
  %v1070 = vunpack.c.l.b16 %v165
  %v1071 = vunpack.c.h.b16 %v165
  %v1072 = vunpack.c.l.b16 %v166
  %v1073 = vunpack.c.h.b16 %v166
  %v1074 = vunpack.c.l.b16 %v167
  %v1075 = vunpack.c.h.b16 %v167
  %v1076 = vunpack.c.l.b16 %v168
  %v1077 = vunpack.c.h.b16 %v168
  %v1078 = vunpack.c.l.b16 %v169
  %v1079 = vunpack.c.h.b16 %v169
  %v1080 = vunpack.c.l.b16 %v170
  %v1081 = vunpack.c.h.b16 %v170
  %v1082 = vunpack.c.l.b16 %v171
  %v1083 = vunpack.c.h.b16 %v171
  %v1084 = vunpack.c.l.b16 %v172
  %v1085 = vunpack.c.h.b16 %v172
  %v1086 = vunpack.c.l.b16 %v173
  %v1087 = vunpack.c.h.b16 %v173
  %v1088 = vunpack.c.l.b16 %v174
  %v1089 = vunpack.c.h.b16 %v174
  %v1090 = vunpack.c.l.b16 %v175
  %v1091 = vunpack.c.h.b16 %v175
  %v1092 = vunpack.c.l.b16 %v176
  %v1093 = vunpack.c.h.b16 %v176
  %v1094 = vunpack.c.l.b16 %v177
  %v1095 = vunpack.c.h.b16 %v177
  %v1096 = vunpack.c.l.b16 %v178
  %v1097 = vunpack.c.h.b16 %v178
  %v1098 = vunpack.c.l.b16 %v179
  %v1099 = vunpack.c.h.b16 %v179
  %v1100 = vunpack.c.l.b16 %v180
  %v1101 = vunpack.c.h.b16 %v180
  %v1102 = vunpack.c.l.b16 %v181
  %v1103 = vunpack.c.h.b16 %v181
  %v1104 = vunpack.c.l.b16 %v182
  %v1105 = vunpack.c.h.b16 %v182
  %v1106 = vunpack.c.l.b16 %v183
  %v1107 = vunpack.c.h.b16 %v183
  %v1108 = vunpack.c.l.b16 %v184
  %v1109 = vunpack.c.h.b16 %v184
  %v1110 = vunpack.c.l.b16 %v185
  %v1111 = vunpack.c.h.b16 %v185
  %v1112 = vunpack.c.l.b16 %v186
  %v1113 = vunpack.c.h.b16 %v186
  %v1114 = vunpack.c.l.b16 %v187
  %v1115 = vunpack.c.h.b16 %v187
  %v1116 = vunpack.c.l.b16 %v188
  %v1117 = vunpack.c.h.b16 %v188
  %v1118 = vunpack.c.l.b16 %v189
  %v1119 = vunpack.c.h.b16 %v189
  %v1120 = vunpack.c.l.b16 %v190
  %v1121 = vunpack.c.h.b16 %v190
  %v1122 = vunpack.c.l.b16 %v191
  %v1123 = vunpack.c.h.b16 %v191
  %v1124 = vunpack.c.l.b16 %v192
  %v1125 = vunpack.c.h.b16 %v192
  %v1126 = vunpack.c.l.b16 %v193
  %v1127 = vunpack.c.h.b16 %v193
  %v1128 = vunpack.c.l.b16 %v194
  %v1129 = vunpack.c.h.b16 %v194
  %v1130 = vunpack.c.l.b16 %v195
  %v1131 = vunpack.c.h.b16 %v195
  %v1132 = vunpack.c.l.b16 %v196
  %v1133 = vunpack.c.h.b16 %v196
  %v1134 = vunpack.c.l.b16 %v197
  %v1135 = vunpack.c.h.b16 %v197
  %v1136 = vunpack.c.l.b16 %v198
  %v1137 = vunpack.c.h.b16 %v198
  %v1138 = vunpack.c.l.b16 %v199
  %v1139 = vunpack.c.h.b16 %v199
  %v1140 = vunpack.c.l.b16 %v200
  %v1141 = vunpack.c.h.b16 %v200
  %v1142 = vunpack.c.l.b16 %v201
  %v1143 = vunpack.c.h.b16 %v201
  %v1144 = vunpack.c.l.b16 %v202
  %v1145 = vunpack.c.h.b16 %v202
  %v1146 = vunpack.c.l.b16 %v203
  %v1147 = vunpack.c.h.b16 %v203
  %v1148 = vunpack.c.l.b16 %v204
  %v1149 = vunpack.c.h.b16 %v204
  %v1150 = vunpack.c.l.b16 %v205
  %v1151 = vunpack.c.h.b16 %v205
  %v1152 = vunpack.c.l.b16 %v206
  %v1153 = vunpack.c.h.b16 %v206
  %v1154 = vunpack.c.l.b16 %v207
  %v1155 = vunpack.c.h.b16 %v207
  %v1156 = vunpack.c.l.b16 %v208
  %v1157 = vunpack.c.h.b16 %v208
  %v1158 = vunpack.c.l.b16 %v209
  %v1159 = vunpack.c.h.b16 %v209
  %v1160 = vunpack.c.l.b16 %v210
  %v1161 = vunpack.c.h.b16 %v210
  %v1162 = vunpack.c.l.b16 %v211
  %v1163 = vunpack.c.h.b16 %v211
  %v1164 = vunpack.c.l.b16 %v212
  %v1165 = vunpack.c.h.b16 %v212
  %v1166 = vunpack.c.l.b16 %v213
  %v1167 = vunpack.c.h.b16 %v213
  %v1168 = vunpack.c.l.b16 %v214
  %v1169 = vunpack.c.h.b16 %v214
  %v1170 = vunpack.c.l.b16 %v215
  %v1171 = vunpack.c.h.b16 %v215
  %v1172 = vunpack.c.l.b16 %v216
  %v1173 = vunpack.c.h.b16 %v216
  %v1174 = vunpack.c.l.b16 %v217
  %v1175 = vunpack.c.h.b16 %v217
  %v1176 = vunpack.c.l.b16 %v218
  %v1177 = vunpack.c.h.b16 %v218
  %v1178 = vunpack.c.l.b16 %v219
  %v1179 = vunpack.c.h.b16 %v219
  %v1180 = vunpack.c.l.b16 %v220
  %v1181 = vunpack.c.h.b16 %v220
  %v1182 = vunpack.c.l.b16 %v221
  %v1183 = vunpack.c.h.b16 %v221
  %v1184 = vunpack.c.l.b16 %v222
  %v1185 = vunpack.c.h.b16 %v222
  %v1186 = vunpack.c.l.b16 %v223
  %v1187 = vunpack.c.h.b16 %v223
  %v1188 = vunpack.c.l.b16 %v224
  %v1189 = vunpack.c.h.b16 %v224
  %v1190 = vunpack.c.l.b16 %v225
  %v1191 = vunpack.c.h.b16 %v225
  %v1192 = vunpack.c.l.b16 %v226
  %v1193 = vunpack.c.h.b16 %v226
  %v1194 = vunpack.c.l.b16 %v227
  %v1195 = vunpack.c.h.b16 %v227
  %v1196 = vunpack.c.l.b16 %v228
  %v1197 = vunpack.c.h.b16 %v228
  %v1198 = vunpack.c.l.b16 %v229
  %v1199 = vunpack.c.h.b16 %v229
  %v1200 = vunpack.c.l.b16 %v230
  %v1201 = vunpack.c.h.b16 %v230
  %v1202 = vunpack.c.l.b16 %v231
  %v1203 = vunpack.c.h.b16 %v231
  %v1204 = vunpack.c.l.b16 %v232
  %v1205 = vunpack.c.h.b16 %v232
  %v1206 = vunpack.c.l.b16 %v233
  %v1207 = vunpack.c.h.b16 %v233
  %v1208 = vunpack.c.l.b16 %v234
  %v1209 = vunpack.c.h.b16 %v234
  %v1210 = vunpack.c.l.b16 %v235
  %v1211 = vunpack.c.h.b16 %v235
  %v1212 = vunpack.c.l.b16 %v236
  %v1213 = vunpack.c.h.b16 %v236
  %v1214 = vunpack.c.l.b16 %v237
  %v1215 = vunpack.c.h.b16 %v237
  %v1216 = vunpack.c.l.b16 %v238
  %v1217 = vunpack.c.h.b16 %v238
  %v1218 = vunpack.c.l.b16 %v239
  %v1219 = vunpack.c.h.b16 %v239
  %v1220 = vunpack.c.l.b16 %v240
  %v1221 = vunpack.c.h.b16 %v240
  %v1222 = vunpack.c.l.b16 %v241
  %v1223 = vunpack.c.h.b16 %v241
  %v1224 = vunpack.c.l.b16 %v242
  %v1225 = vunpack.c.h.b16 %v242
  %v1226 = vunpack.c.l.b16 %v243
  %v1227 = vunpack.c.h.b16 %v243
  %v1228 = vunpack.c.l.b16 %v244
  %v1229 = vunpack.c.h.b16 %v244
  %v1230 = vunpack.c.l.b16 %v245
  %v1231 = vunpack.c.h.b16 %v245
  %v1232 = vunpack.c.l.b16 %v246
  %v1233 = vunpack.c.h.b16 %v246
  %v1234 = vunpack.c.l.b16 %v247
  %v1235 = vunpack.c.h.b16 %v247
  %v1236 = vunpack.c.l.b16 %v248
  %v1237 = vunpack.c.h.b16 %v248
  %v1238 = vunpack.c.l.b16 %v249
  %v1239 = vunpack.c.h.b16 %v249
  %v1240 = vunpack.c.l.b16 %v250
  %v1241 = vunpack.c.h.b16 %v250
  %v1242 = vunpack.c.l.b16 %v251
  %v1243 = vunpack.c.h.b16 %v251
  %v1244 = vunpack.c.l.b16 %v252
  %v1245 = vunpack.c.h.b16 %v252
  %v1246 = vunpack.c.l.b16 %v253
  %v1247 = vunpack.c.h.b16 %v253
  %v1248 = vunpack.c.l.b16 %v254
  %v1249 = vunpack.c.h.b16 %v254
  %v1250 = vunpack.c.l.b16 %v255
  %v1251 = vunpack.c.h.b16 %v255
  %v1252 = vunpack.c.l.b16 %v256
  %v1253 = vunpack.c.h.b16 %v256
  %v1254 = vunpack.c.l.b16 %v257
  %v1255 = vunpack.c.h.b16 %v257
  %v1256 = vunpack.c.l.b16 %v258
  %v1257 = vunpack.c.h.b16 %v258
  %v1258 = vunpack.c.l.b16 %v259
  %v1259 = vunpack.c.h.b16 %v259
  %v1260 = vpack.c.b16 %v780, %v764
  %v1261 = vpack.c.b16 %v781, %v765
  %v1262 = vpack.c.b16 %v782, %v766
  %v1263 = vpack.c.b16 %v783, %v767
  %v1264 = vpack.c.b16 %v784, %v768
  %v1265 = vpack.c.b16 %v785, %v769
  %v1266 = vpack.c.b16 %v786, %v770
  %v1267 = vpack.c.b16 %v787, %v771
  %v1268 = vpack.c.b16 %v788, %v772
  %v1269 = vpack.c.b16 %v789, %v773
  %v1270 = vpack.c.b16 %v790, %v774
  %v1271 = vpack.c.b16 %v791, %v775
  %v1272 = vpack.c.b16 %v792, %v776
  %v1273 = vpack.c.b16 %v793, %v777
  %v1274 = vpack.c.b16 %v794, %v778
  %v1275 = vpack.c.b16 %v795, %v779
  %v1276 = vpack.c.b16 %v812, %v796
  %v1277 = vpack.c.b16 %v813, %v797
  %v1278 = vpack.c.b16 %v814, %v798
  %v1279 = vpack.c.b16 %v815, %v799
  %v1280 = vpack.c.b16 %v816, %v800
  %v1281 = vpack.c.b16 %v817, %v801
  %v1282 = vpack.c.b16 %v818, %v802
  %v1283 = vpack.c.b16 %v819, %v803
  %v1284 = vpack.c.b16 %v820, %v804
  %v1285 = vpack.c.b16 %v821, %v805
  %v1286 = vpack.c.b16 %v822, %v806
  %v1287 = vpack.c.b16 %v823, %v807
  %v1288 = vpack.c.b16 %v824, %v808
  %v1289 = vpack.c.b16 %v825, %v809
  %v1290 = vpack.c.b16 %v826, %v810
  %v1291 = vpack.c.b16 %v827, %v811
  %v1292 = vpack.c.b16 %v844, %v828
  %v1293 = vpack.c.b16 %v845, %v829
  %v1294 = vpack.c.b16 %v846, %v830
  %v1295 = vpack.c.b16 %v847, %v831
  %v1296 = vpack.c.b16 %v848, %v832
  %v1297 = vpack.c.b16 %v849, %v833
  %v1298 = vpack.c.b16 %v850, %v834
  %v1299 = vpack.c.b16 %v851, %v835
  %v1300 = vpack.c.b16 %v852, %v836
  %v1301 = vpack.c.b16 %v853, %v837
  %v1302 = vpack.c.b16 %v854, %v838
  %v1303 = vpack.c.b16 %v855, %v839
  %v1304 = vpack.c.b16 %v856, %v840
  %v1305 = vpack.c.b16 %v857, %v841
  %v1306 = vpack.c.b16 %v858, %v842
  %v1307 = vpack.c.b16 %v859, %v843
  %v1308 = vpack.c.b16 %v876, %v860
  %v1309 = vpack.c.b16 %v877, %v861
  %v1310 = vpack.c.b16 %v878, %v862
  %v1311 = vpack.c.b16 %v879, %v863
  %v1312 = vpack.c.b16 %v880, %v864
  %v1313 = vpack.c.b16 %v881, %v865
  %v1314 = vpack.c.b16 %v882, %v866
  %v1315 = vpack.c.b16 %v883, %v867
  %v1316 = vpack.c.b16 %v884, %v868
  %v1317 = vpack.c.b16 %v885, %v869
  %v1318 = vpack.c.b16 %v886, %v870
  %v1319 = vpack.c.b16 %v887, %v871
  %v1320 = vpack.c.b16 %v888, %v872
  %v1321 = vpack.c.b16 %v889, %v873
  %v1322 = vpack.c.b16 %v890, %v874
  %v1323 = vpack.c.b16 %v891, %v875
  %v1324 = vpack.c.b16 %v908, %v892
  %v1325 = vpack.c.b16 %v909, %v893
  %v1326 = vpack.c.b16 %v910, %v894
  %v1327 = vpack.c.b16 %v911, %v895
  %v1328 = vpack.c.b16 %v912, %v896
  %v1329 = vpack.c.b16 %v913, %v897
  %v1330 = vpack.c.b16 %v914, %v898
  %v1331 = vpack.c.b16 %v915, %v899
  %v1332 = vpack.c.b16 %v916, %v900
  %v1333 = vpack.c.b16 %v917, %v901
  %v1334 = vpack.c.b16 %v918, %v902
  %v1335 = vpack.c.b16 %v919, %v903
  %v1336 = vpack.c.b16 %v920, %v904
  %v1337 = vpack.c.b16 %v921, %v905
  %v1338 = vpack.c.b16 %v922, %v906
  %v1339 = vpack.c.b16 %v923, %v907
  %v1340 = vpack.c.b16 %v940, %v924
  %v1341 = vpack.c.b16 %v941, %v925
  %v1342 = vpack.c.b16 %v942, %v926
  %v1343 = vpack.c.b16 %v943, %v927
  %v1344 = vpack.c.b16 %v944, %v928
  %v1345 = vpack.c.b16 %v945, %v929
  %v1346 = vpack.c.b16 %v946, %v930
  %v1347 = vpack.c.b16 %v947, %v931
  %v1348 = vpack.c.b16 %v948, %v932
  %v1349 = vpack.c.b16 %v949, %v933
  %v1350 = vpack.c.b16 %v950, %v934
  %v1351 = vpack.c.b16 %v951, %v935
  %v1352 = vpack.c.b16 %v952, %v936
  %v1353 = vpack.c.b16 %v953, %v937
  %v1354 = vpack.c.b16 %v954, %v938
  %v1355 = vpack.c.b16 %v955, %v939
  %v1356 = vpack.c.b16 %v972, %v956
  %v1357 = vpack.c.b16 %v973, %v957
  %v1358 = vpack.c.b16 %v974, %v958
  %v1359 = vpack.c.b16 %v975, %v959
  %v1360 = vpack.c.b16 %v976, %v960
  %v1361 = vpack.c.b16 %v977, %v961
  %v1362 = vpack.c.b16 %v978, %v962
  %v1363 = vpack.c.b16 %v979, %v963
  %v1364 = vpack.c.b16 %v980, %v964
  %v1365 = vpack.c.b16 %v981, %v965
  %v1366 = vpack.c.b16 %v982, %v966
  %v1367 = vpack.c.b16 %v983, %v967
  %v1368 = vpack.c.b16 %v984, %v968
  %v1369 = vpack.c.b16 %v985, %v969
  %v1370 = vpack.c.b16 %v986, %v970
  %v1371 = vpack.c.b16 %v987, %v971
  %v1372 = vpack.c.b16 %v1004, %v988
  %v1373 = vpack.c.b16 %v1005, %v989
  %v1374 = vpack.c.b16 %v1006, %v990
  %v1375 = vpack.c.b16 %v1007, %v991
  %v1376 = vpack.c.b16 %v1008, %v992
  %v1377 = vpack.c.b16 %v1009, %v993
  %v1378 = vpack.c.b16 %v1010, %v994
  %v1379 = vpack.c.b16 %v1011, %v995
  %v1380 = vpack.c.b16 %v1012, %v996
  %v1381 = vpack.c.b16 %v1013, %v997
  %v1382 = vpack.c.b16 %v1014, %v998
  %v1383 = vpack.c.b16 %v1015, %v999
  %v1384 = vpack.c.b16 %v1016, %v1000
  %v1385 = vpack.c.b16 %v1017, %v1001
  %v1386 = vpack.c.b16 %v1018, %v1002
  %v1387 = vpack.c.b16 %v1019, %v1003
  %v1388 = vpack.c.b16 %v1036, %v1020
  %v1389 = vpack.c.b16 %v1037, %v1021
  %v1390 = vpack.c.b16 %v1038, %v1022
  %v1391 = vpack.c.b16 %v1039, %v1023
  %v1392 = vpack.c.b16 %v1040, %v1024
  %v1393 = vpack.c.b16 %v1041, %v1025
  %v1394 = vpack.c.b16 %v1042, %v1026
  %v1395 = vpack.c.b16 %v1043, %v1027
  %v1396 = vpack.c.b16 %v1044, %v1028
  %v1397 = vpack.c.b16 %v1045, %v1029
  %v1398 = vpack.c.b16 %v1046, %v1030
  %v1399 = vpack.c.b16 %v1047, %v1031
  %v1400 = vpack.c.b16 %v1048, %v1032
  %v1401 = vpack.c.b16 %v1049, %v1033
  %v1402 = vpack.c.b16 %v1050, %v1034
  %v1403 = vpack.c.b16 %v1051, %v1035
  %v1404 = vpack.c.b16 %v1068, %v1052
  %v1405 = vpack.c.b16 %v1069, %v1053
  %v1406 = vpack.c.b16 %v1070, %v1054
  %v1407 = vpack.c.b16 %v1071, %v1055
  %v1408 = vpack.c.b16 %v1072, %v1056
  %v1409 = vpack.c.b16 %v1073, %v1057
  %v1410 = vpack.c.b16 %v1074, %v1058
  %v1411 = vpack.c.b16 %v1075, %v1059
  %v1412 = vpack.c.b16 %v1076, %v1060
  %v1413 = vpack.c.b16 %v1077, %v1061
  %v1414 = vpack.c.b16 %v1078, %v1062
  %v1415 = vpack.c.b16 %v1079, %v1063
  %v1416 = vpack.c.b16 %v1080, %v1064
  %v1417 = vpack.c.b16 %v1081, %v1065
  %v1418 = vpack.c.b16 %v1082, %v1066
  %v1419 = vpack.c.b16 %v1083, %v1067
  %v1420 = vpack.c.b16 %v1100, %v1084
  %v1421 = vpack.c.b16 %v1101, %v1085
  %v1422 = vpack.c.b16 %v1102, %v1086
  %v1423 = vpack.c.b16 %v1103, %v1087
  %v1424 = vpack.c.b16 %v1104, %v1088
  %v1425 = vpack.c.b16 %v1105, %v1089
  %v1426 = vpack.c.b16 %v1106, %v1090
  %v1427 = vpack.c.b16 %v1107, %v1091
  %v1428 = vpack.c.b16 %v1108, %v1092
  %v1429 = vpack.c.b16 %v1109, %v1093
  %v1430 = vpack.c.b16 %v1110, %v1094
  %v1431 = vpack.c.b16 %v1111, %v1095
  %v1432 = vpack.c.b16 %v1112, %v1096
  %v1433 = vpack.c.b16 %v1113, %v1097
  %v1434 = vpack.c.b16 %v1114, %v1098
  %v1435 = vpack.c.b16 %v1115, %v1099
  %v1436 = vpack.c.b16 %v1132, %v1116
  %v1437 = vpack.c.b16 %v1133, %v1117
  %v1438 = vpack.c.b16 %v1134, %v1118
  %v1439 = vpack.c.b16 %v1135, %v1119
  %v1440 = vpack.c.b16 %v1136, %v1120
  %v1441 = vpack.c.b16 %v1137, %v1121
  %v1442 = vpack.c.b16 %v1138, %v1122
  %v1443 = vpack.c.b16 %v1139, %v1123
  %v1444 = vpack.c.b16 %v1140, %v1124
  %v1445 = vpack.c.b16 %v1141, %v1125
  %v1446 = vpack.c.b16 %v1142, %v1126
  %v1447 = vpack.c.b16 %v1143, %v1127
  %v1448 = vpack.c.b16 %v1144, %v1128
  %v1449 = vpack.c.b16 %v1145, %v1129
  %v1450 = vpack.c.b16 %v1146, %v1130
  %v1451 = vpack.c.b16 %v1147, %v1131
  %v1452 = vpack.c.b16 %v1164, %v1148
  %v1453 = vpack.c.b16 %v1165, %v1149
  %v1454 = vpack.c.b16 %v1166, %v1150
  %v1455 = vpack.c.b16 %v1167, %v1151
  %v1456 = vpack.c.b16 %v1168, %v1152
  %v1457 = vpack.c.b16 %v1169, %v1153
  %v1458 = vpack.c.b16 %v1170, %v1154
  %v1459 = vpack.c.b16 %v1171, %v1155
  %v1460 = vpack.c.b16 %v1172, %v1156
  %v1461 = vpack.c.b16 %v1173, %v1157
  %v1462 = vpack.c.b16 %v1174, %v1158
  %v1463 = vpack.c.b16 %v1175, %v1159
  %v1464 = vpack.c.b16 %v1176, %v1160
  %v1465 = vpack.c.b16 %v1177, %v1161
  %v1466 = vpack.c.b16 %v1178, %v1162
  %v1467 = vpack.c.b16 %v1179, %v1163
  %v1468 = vpack.c.b16 %v1196, %v1180
  %v1469 = vpack.c.b16 %v1197, %v1181
  %v1470 = vpack.c.b16 %v1198, %v1182
  %v1471 = vpack.c.b16 %v1199, %v1183
  %v1472 = vpack.c.b16 %v1200, %v1184
  %v1473 = vpack.c.b16 %v1201, %v1185
  %v1474 = vpack.c.b16 %v1202, %v1186
  %v1475 = vpack.c.b16 %v1203, %v1187
  %v1476 = vpack.c.b16 %v1204, %v1188
  %v1477 = vpack.c.b16 %v1205, %v1189
  %v1478 = vpack.c.b16 %v1206, %v1190
  %v1479 = vpack.c.b16 %v1207, %v1191
  %v1480 = vpack.c.b16 %v1208, %v1192
  %v1481 = vpack.c.b16 %v1209, %v1193
  %v1482 = vpack.c.b16 %v1210, %v1194
  %v1483 = vpack.c.b16 %v1211, %v1195
  %v1484 = vpack.c.b16 %v1228, %v1212
  %v1485 = vpack.c.b16 %v1229, %v1213
  %v1486 = vpack.c.b16 %v1230, %v1214
  %v1487 = vpack.c.b16 %v1231, %v1215
  %v1488 = vpack.c.b16 %v1232, %v1216
  %v1489 = vpack.c.b16 %v1233, %v1217
  %v1490 = vpack.c.b16 %v1234, %v1218
  %v1491 = vpack.c.b16 %v1235, %v1219
  %v1492 = vpack.c.b16 %v1236, %v1220
  %v1493 = vpack.c.b16 %v1237, %v1221
  %v1494 = vpack.c.b16 %v1238, %v1222
  %v1495 = vpack.c.b16 %v1239, %v1223
  %v1496 = vpack.c.b16 %v1240, %v1224
  %v1497 = vpack.c.b16 %v1241, %v1225
  %v1498 = vpack.c.b16 %v1242, %v1226
  %v1499 = vpack.c.b16 %v1243, %v1227
  %v1500 = vpack.c.b16 %v1244, %v1244
  %v1501 = vpack.c.b16 %v1245, %v1245
  %v1502 = vpack.c.b16 %v1246, %v1246
  %v1503 = vpack.c.b16 %v1247, %v1247
  %v1504 = vpack.c.b16 %v1248, %v1248
  %v1505 = vpack.c.b16 %v1249, %v1249
  %v1506 = vpack.c.b16 %v1250, %v1250
  %v1507 = vpack.c.b16 %v1251, %v1251
  %v1508 = vpack.c.b16 %v1252, %v1252
  %v1509 = vpack.c.b16 %v1253, %v1253
  %v1510 = vpack.c.b16 %v1254, %v1254
  %v1511 = vpack.c.b16 %v1255, %v1255
  %v1512 = vpack.c.b16 %v1256, %v1256
  %v1513 = vpack.c.b16 %v1257, %v1257
  %v1514 = vpack.c.b16 %v1258, %v1258
  %v1515 = vpack.c.b16 %v1259, %v1259
  %v2028 = vunpack.c.l.b16 %v260
  %v2029 = vunpack.c.l.b16 %v261
  %v2030 = vunpack.c.l.b16 %v262
  %v2031 = vunpack.c.l.b16 %v263
  %v2032 = vunpack.c.l.b16 %v264
  %v2033 = vunpack.c.l.b16 %v265
  %v2034 = vunpack.c.l.b16 %v266
  %v2035 = vunpack.c.l.b16 %v267
  %v2036 = vunpack.c.l.b16 %v268
  %v2037 = vunpack.c.l.b16 %v269
  %v2038 = vunpack.c.l.b16 %v270
  %v2039 = vunpack.c.l.b16 %v271
  %v2040 = vunpack.c.l.b16 %v272
  %v2041 = vunpack.c.l.b16 %v273
  %v2042 = vunpack.c.l.b16 %v274
  %v2043 = vunpack.c.l.b16 %v275
  %v2044 = vunpack.c.l.b16 %v276
  %v2045 = vunpack.c.l.b16 %v277
  %v2046 = vunpack.c.l.b16 %v278
  %v2047 = vunpack.c.l.b16 %v279
  %v2048 = vunpack.c.l.b16 %v280
  %v2049 = vunpack.c.l.b16 %v281
  %v2050 = vunpack.c.l.b16 %v282
  %v2051 = vunpack.c.l.b16 %v283
  %v2052 = vunpack.c.l.b16 %v284
  %v2053 = vunpack.c.l.b16 %v285
  %v2054 = vunpack.c.l.b16 %v286
  %v2055 = vunpack.c.l.b16 %v287
  %v2056 = vunpack.c.l.b16 %v288
  %v2057 = vunpack.c.l.b16 %v289
  %v2058 = vunpack.c.l.b16 %v290
  %v2059 = vunpack.c.l.b16 %v291
  %v2060 = vunpack.c.l.b16 %v292
  %v2061 = vunpack.c.l.b16 %v293
  %v2062 = vunpack.c.l.b16 %v294
  %v2063 = vunpack.c.l.b16 %v295
  %v2064 = vunpack.c.l.b16 %v296
  %v2065 = vunpack.c.l.b16 %v297
  %v2066 = vunpack.c.l.b16 %v298
  %v2067 = vunpack.c.l.b16 %v299
  %v2068 = vunpack.c.l.b16 %v300
  %v2069 = vunpack.c.l.b16 %v301
  %v2070 = vunpack.c.l.b16 %v302
  %v2071 = vunpack.c.l.b16 %v303
  %v2072 = vunpack.c.l.b16 %v304
  %v2073 = vunpack.c.l.b16 %v305
  %v2074 = vunpack.c.l.b16 %v306
  %v2075 = vunpack.c.l.b16 %v307
  %v2076 = vunpack.c.l.b16 %v308
  %v2077 = vunpack.c.l.b16 %v309
  %v2078 = vunpack.c.l.b16 %v310
  %v2079 = vunpack.c.l.b16 %v311
  %v2080 = vunpack.c.l.b16 %v312
  %v2081 = vunpack.c.l.b16 %v313
  %v2082 = vunpack.c.l.b16 %v314
  %v2083 = vunpack.c.l.b16 %v315
  %v2084 = vunpack.c.l.b16 %v316
  %v2085 = vunpack.c.l.b16 %v317
  %v2086 = vunpack.c.l.b16 %v318
  %v2087 = vunpack.c.l.b16 %v319
  %v2088 = vunpack.c.l.b16 %v320
  %v2089 = vunpack.c.l.b16 %v321
  %v2090 = vunpack.c.l.b16 %v322
  %v2091 = vunpack.c.l.b16 %v323
  %v2092 = vunpack.c.l.b16 %v324
  %v2093 = vunpack.c.l.b16 %v325
  %v2094 = vunpack.c.l.b16 %v326
  %v2095 = vunpack.c.l.b16 %v327
  %v2096 = vunpack.c.l.b16 %v328
  %v2097 = vunpack.c.l.b16 %v329
  %v2098 = vunpack.c.l.b16 %v330
  %v2099 = vunpack.c.l.b16 %v331
  %v2100 = vunpack.c.l.b16 %v332
  %v2101 = vunpack.c.l.b16 %v333
  %v2102 = vunpack.c.l.b16 %v334
  %v2103 = vunpack.c.l.b16 %v335
  %v2104 = vunpack.c.l.b16 %v336
  %v2105 = vunpack.c.l.b16 %v337
  %v2106 = vunpack.c.l.b16 %v338
  %v2107 = vunpack.c.l.b16 %v339
  %v2108 = vunpack.c.l.b16 %v340
  %v2109 = vunpack.c.l.b16 %v341
  %v2110 = vunpack.c.l.b16 %v342
  %v2111 = vunpack.c.l.b16 %v343
  %v2112 = vunpack.c.l.b16 %v344
  %v2113 = vunpack.c.l.b16 %v345
  %v2114 = vunpack.c.l.b16 %v346
  %v2115 = vunpack.c.l.b16 %v347
  %v2116 = vunpack.c.l.b16 %v348
  %v2117 = vunpack.c.l.b16 %v349
  %v2118 = vunpack.c.l.b16 %v350
  %v2119 = vunpack.c.l.b16 %v351
  %v2120 = vunpack.c.l.b16 %v352
  %v2121 = vunpack.c.l.b16 %v353
  %v2122 = vunpack.c.l.b16 %v354
  %v2123 = vunpack.c.l.b16 %v355
  %v2124 = vunpack.c.l.b16 %v356
  %v2125 = vunpack.c.l.b16 %v357
  %v2126 = vunpack.c.l.b16 %v358
  %v2127 = vunpack.c.l.b16 %v359
  %v2128 = vunpack.c.l.b16 %v360
  %v2129 = vunpack.c.l.b16 %v361
  %v2130 = vunpack.c.l.b16 %v362
  %v2131 = vunpack.c.l.b16 %v363
  %v2132 = vunpack.c.l.b16 %v364
  %v2133 = vunpack.c.l.b16 %v365
  %v2134 = vunpack.c.l.b16 %v366
  %v2135 = vunpack.c.l.b16 %v367
  %v2136 = vunpack.c.l.b16 %v368
  %v2137 = vunpack.c.l.b16 %v369
  %v2138 = vunpack.c.l.b16 %v370
  %v2139 = vunpack.c.l.b16 %v371
  %v2140 = vunpack.c.l.b16 %v372
  %v2141 = vunpack.c.l.b16 %v373
  %v2142 = vunpack.c.l.b16 %v374
  %v2143 = vunpack.c.l.b16 %v375
  %v2144 = vunpack.c.l.b16 %v376
  %v2145 = vunpack.c.l.b16 %v377
  %v2146 = vunpack.c.l.b16 %v378
  %v2147 = vunpack.c.l.b16 %v379
  %v2148 = vunpack.c.l.b16 %v380
  %v2149 = vunpack.c.l.b16 %v381
  %v2150 = vunpack.c.l.b16 %v382
  %v2151 = vunpack.c.l.b16 %v383
  %v2152 = vunpack.c.l.b16 %v384
  %v2153 = vunpack.c.l.b16 %v385
  %v2154 = vunpack.c.l.b16 %v386
  %v2155 = vunpack.c.l.b16 %v387
  %v2156 = vunpack.c.l.b16 %v388
  %v2157 = vunpack.c.l.b16 %v389
  %v2158 = vunpack.c.l.b16 %v390
  %v2159 = vunpack.c.l.b16 %v391
  %v2160 = vunpack.c.l.b16 %v392
  %v2161 = vunpack.c.l.b16 %v393
  %v2162 = vunpack.c.l.b16 %v394
  %v2163 = vunpack.c.l.b16 %v395
  %v2164 = vunpack.c.l.b16 %v396
  %v2165 = vunpack.c.l.b16 %v397
  %v2166 = vunpack.c.l.b16 %v398
  %v2167 = vunpack.c.l.b16 %v399
  %v2168 = vunpack.c.l.b16 %v400
  %v2169 = vunpack.c.l.b16 %v401
  %v2170 = vunpack.c.l.b16 %v402
  %v2171 = vunpack.c.l.b16 %v403
  %v2172 = vunpack.c.l.b16 %v404
  %v2173 = vunpack.c.l.b16 %v405
  %v2174 = vunpack.c.l.b16 %v406
  %v2175 = vunpack.c.l.b16 %v407
  %v2176 = vunpack.c.l.b16 %v408
  %v2177 = vunpack.c.l.b16 %v409
  %v2178 = vunpack.c.l.b16 %v410
  %v2179 = vunpack.c.l.b16 %v411
  %v2180 = vunpack.c.l.b16 %v412
  %v2181 = vunpack.c.l.b16 %v413
  %v2182 = vunpack.c.l.b16 %v414
  %v2183 = vunpack.c.l.b16 %v415
  %v2184 = vunpack.c.l.b16 %v416
  %v2185 = vunpack.c.l.b16 %v417
  %v2186 = vunpack.c.l.b16 %v418
  %v2187 = vunpack.c.l.b16 %v419
  %v2188 = vunpack.c.l.b16 %v420
  %v2189 = vunpack.c.l.b16 %v421
  %v2190 = vunpack.c.l.b16 %v422
  %v2191 = vunpack.c.l.b16 %v423
  %v2192 = vunpack.c.l.b16 %v424
  %v2193 = vunpack.c.l.b16 %v425
  %v2194 = vunpack.c.l.b16 %v426
  %v2195 = vunpack.c.l.b16 %v427
  %v2196 = vunpack.c.l.b16 %v428
  %v2197 = vunpack.c.l.b16 %v429
  %v2198 = vunpack.c.l.b16 %v430
  %v2199 = vunpack.c.l.b16 %v431
  %v2200 = vunpack.c.l.b16 %v432
  %v2201 = vunpack.c.l.b16 %v433
  %v2202 = vunpack.c.l.b16 %v434
  %v2203 = vunpack.c.l.b16 %v435
  %v2204 = vunpack.c.l.b16 %v436
  %v2205 = vunpack.c.l.b16 %v437
  %v2206 = vunpack.c.l.b16 %v438
  %v2207 = vunpack.c.l.b16 %v439
  %v2208 = vunpack.c.l.b16 %v440
  %v2209 = vunpack.c.l.b16 %v441
  %v2210 = vunpack.c.l.b16 %v442
  %v2211 = vunpack.c.l.b16 %v443
  %v2212 = vunpack.c.l.b16 %v444
  %v2213 = vunpack.c.l.b16 %v445
  %v2214 = vunpack.c.l.b16 %v446
  %v2215 = vunpack.c.l.b16 %v447
  %v2216 = vunpack.c.l.b16 %v448
  %v2217 = vunpack.c.l.b16 %v449
  %v2218 = vunpack.c.l.b16 %v450
  %v2219 = vunpack.c.l.b16 %v451
  %v2220 = vunpack.c.l.b16 %v452
  %v2221 = vunpack.c.l.b16 %v453
  %v2222 = vunpack.c.l.b16 %v454
  %v2223 = vunpack.c.l.b16 %v455
  %v2224 = vunpack.c.l.b16 %v456
  %v2225 = vunpack.c.l.b16 %v457
  %v2226 = vunpack.c.l.b16 %v458
  %v2227 = vunpack.c.l.b16 %v459
  %v2228 = vunpack.c.l.b16 %v460
  %v2229 = vunpack.c.l.b16 %v461
  %v2230 = vunpack.c.l.b16 %v462
  %v2231 = vunpack.c.l.b16 %v463
  %v2232 = vunpack.c.l.b16 %v464
  %v2233 = vunpack.c.l.b16 %v465
  %v2234 = vunpack.c.l.b16 %v466
  %v2235 = vunpack.c.l.b16 %v467
  %v2236 = vunpack.c.l.b16 %v468
  %v2237 = vunpack.c.l.b16 %v469
  %v2238 = vunpack.c.l.b16 %v470
  %v2239 = vunpack.c.l.b16 %v471
  %v2240 = vunpack.c.l.b16 %v472
  %v2241 = vunpack.c.l.b16 %v473
  %v2242 = vunpack.c.l.b16 %v474
  %v2243 = vunpack.c.l.b16 %v475
  %v2244 = vunpack.c.l.b16 %v476
  %v2245 = vunpack.c.l.b16 %v477
  %v2246 = vunpack.c.l.b16 %v478
  %v2247 = vunpack.c.l.b16 %v479
  %v2248 = vunpack.c.l.b16 %v480
  %v2249 = vunpack.c.l.b16 %v481
  %v2250 = vunpack.c.l.b16 %v482
  %v2251 = vunpack.c.l.b16 %v483
  %v2252 = vunpack.c.l.b16 %v484
  %v2253 = vunpack.c.l.b16 %v485
  %v2254 = vunpack.c.l.b16 %v486
  %v2255 = vunpack.c.l.b16 %v487
  %v2256 = vunpack.c.l.b16 %v488
  %v2257 = vunpack.c.l.b16 %v489
  %v2258 = vunpack.c.l.b16 %v490
  %v2259 = vunpack.c.l.b16 %v491
  %v2260 = vunpack.c.l.b16 %v492
  %v2261 = vunpack.c.l.b16 %v493
  %v2262 = vunpack.c.l.b16 %v494
  %v2263 = vunpack.c.l.b16 %v495
  %v2264 = vunpack.c.l.b16 %v496
  %v2265 = vunpack.c.l.b16 %v497
  %v2266 = vunpack.c.l.b16 %v498
  %v2267 = vunpack.c.l.b16 %v499
  %v2268 = vunpack.c.l.b16 %v500
  %v2269 = vunpack.c.l.b16 %v501
  %v2270 = vunpack.c.l.b16 %v502
  %v2271 = vunpack.c.l.b16 %v503
  %v2272 = vunpack.c.l.b16 %v504
  %v2273 = vunpack.c.l.b16 %v505
  %v2274 = vunpack.c.l.b16 %v506
  %v2275 = vunpack.c.l.b16 %v507
  %v2276 = vunpack.c.l.b16 %v508
  %v2277 = vunpack.c.l.b16 %v509
  %v2278 = vunpack.c.l.b16 %v510
  %v2279 = vunpack.c.l.b16 %v511
  %v2280 = vunpack.c.l.b16 %v512
  %v2281 = vunpack.c.l.b16 %v513
  %v2282 = vunpack.c.l.b16 %v514
  %v2283 = vunpack.c.l.b16 %v515
  %v2284 = vpack.c.b16 %v2029, %v2028
  %v2285 = vpack.c.b16 %v2031, %v2030
  %v2286 = vpack.c.b16 %v2033, %v2032
  %v2287 = vpack.c.b16 %v2035, %v2034
  %v2288 = vpack.c.b16 %v2037, %v2036
  %v2289 = vpack.c.b16 %v2039, %v2038
  %v2290 = vpack.c.b16 %v2041, %v2040
  %v2291 = vpack.c.b16 %v2043, %v2042
  %v2292 = vpack.c.b16 %v2045, %v2044
  %v2293 = vpack.c.b16 %v2047, %v2046
  %v2294 = vpack.c.b16 %v2049, %v2048
  %v2295 = vpack.c.b16 %v2051, %v2050
  %v2296 = vpack.c.b16 %v2053, %v2052
  %v2297 = vpack.c.b16 %v2055, %v2054
  %v2298 = vpack.c.b16 %v2057, %v2056
  %v2299 = vpack.c.b16 %v2059, %v2058
  %v2300 = vpack.c.b16 %v2061, %v2060
  %v2301 = vpack.c.b16 %v2063, %v2062
  %v2302 = vpack.c.b16 %v2065, %v2064
  %v2303 = vpack.c.b16 %v2067, %v2066
  %v2304 = vpack.c.b16 %v2069, %v2068
  %v2305 = vpack.c.b16 %v2071, %v2070
  %v2306 = vpack.c.b16 %v2073, %v2072
  %v2307 = vpack.c.b16 %v2075, %v2074
  %v2308 = vpack.c.b16 %v2077, %v2076
  %v2309 = vpack.c.b16 %v2079, %v2078
  %v2310 = vpack.c.b16 %v2081, %v2080
  %v2311 = vpack.c.b16 %v2083, %v2082
  %v2312 = vpack.c.b16 %v2085, %v2084
  %v2313 = vpack.c.b16 %v2087, %v2086
  %v2314 = vpack.c.b16 %v2089, %v2088
  %v2315 = vpack.c.b16 %v2091, %v2090
  %v2316 = vpack.c.b16 %v2093, %v2092
  %v2317 = vpack.c.b16 %v2095, %v2094
  %v2318 = vpack.c.b16 %v2097, %v2096
  %v2319 = vpack.c.b16 %v2099, %v2098
  %v2320 = vpack.c.b16 %v2101, %v2100
  %v2321 = vpack.c.b16 %v2103, %v2102
  %v2322 = vpack.c.b16 %v2105, %v2104
  %v2323 = vpack.c.b16 %v2107, %v2106
  %v2324 = vpack.c.b16 %v2109, %v2108
  %v2325 = vpack.c.b16 %v2111, %v2110
  %v2326 = vpack.c.b16 %v2113, %v2112
  %v2327 = vpack.c.b16 %v2115, %v2114
  %v2328 = vpack.c.b16 %v2117, %v2116
  %v2329 = vpack.c.b16 %v2119, %v2118
  %v2330 = vpack.c.b16 %v2121, %v2120
  %v2331 = vpack.c.b16 %v2123, %v2122
  %v2332 = vpack.c.b16 %v2125, %v2124
  %v2333 = vpack.c.b16 %v2127, %v2126
  %v2334 = vpack.c.b16 %v2129, %v2128
  %v2335 = vpack.c.b16 %v2131, %v2130
  %v2336 = vpack.c.b16 %v2133, %v2132
  %v2337 = vpack.c.b16 %v2135, %v2134
  %v2338 = vpack.c.b16 %v2137, %v2136
  %v2339 = vpack.c.b16 %v2139, %v2138
  %v2340 = vpack.c.b16 %v2141, %v2140
  %v2341 = vpack.c.b16 %v2143, %v2142
  %v2342 = vpack.c.b16 %v2145, %v2144
  %v2343 = vpack.c.b16 %v2147, %v2146
  %v2344 = vpack.c.b16 %v2149, %v2148
  %v2345 = vpack.c.b16 %v2151, %v2150
  %v2346 = vpack.c.b16 %v2153, %v2152
  %v2347 = vpack.c.b16 %v2155, %v2154
  %v2348 = vpack.c.b16 %v2157, %v2156
  %v2349 = vpack.c.b16 %v2159, %v2158
  %v2350 = vpack.c.b16 %v2161, %v2160
  %v2351 = vpack.c.b16 %v2163, %v2162
  %v2352 = vpack.c.b16 %v2165, %v2164
  %v2353 = vpack.c.b16 %v2167, %v2166
  %v2354 = vpack.c.b16 %v2169, %v2168
  %v2355 = vpack.c.b16 %v2171, %v2170
  %v2356 = vpack.c.b16 %v2173, %v2172
  %v2357 = vpack.c.b16 %v2175, %v2174
  %v2358 = vpack.c.b16 %v2177, %v2176
  %v2359 = vpack.c.b16 %v2179, %v2178
  %v2360 = vpack.c.b16 %v2181, %v2180
  %v2361 = vpack.c.b16 %v2183, %v2182
  %v2362 = vpack.c.b16 %v2185, %v2184
  %v2363 = vpack.c.b16 %v2187, %v2186
  %v2364 = vpack.c.b16 %v2189, %v2188
  %v2365 = vpack.c.b16 %v2191, %v2190
  %v2366 = vpack.c.b16 %v2193, %v2192
  %v2367 = vpack.c.b16 %v2195, %v2194
  %v2368 = vpack.c.b16 %v2197, %v2196
  %v2369 = vpack.c.b16 %v2199, %v2198
  %v2370 = vpack.c.b16 %v2201, %v2200
  %v2371 = vpack.c.b16 %v2203, %v2202
  %v2372 = vpack.c.b16 %v2205, %v2204
  %v2373 = vpack.c.b16 %v2207, %v2206
  %v2374 = vpack.c.b16 %v2209, %v2208
  %v2375 = vpack.c.b16 %v2211, %v2210
  %v2376 = vpack.c.b16 %v2213, %v2212
  %v2377 = vpack.c.b16 %v2215, %v2214
  %v2378 = vpack.c.b16 %v2217, %v2216
  %v2379 = vpack.c.b16 %v2219, %v2218
  %v2380 = vpack.c.b16 %v2221, %v2220
  %v2381 = vpack.c.b16 %v2223, %v2222
  %v2382 = vpack.c.b16 %v2225, %v2224
  %v2383 = vpack.c.b16 %v2227, %v2226
  %v2384 = vpack.c.b16 %v2229, %v2228
  %v2385 = vpack.c.b16 %v2231, %v2230
  %v2386 = vpack.c.b16 %v2233, %v2232
  %v2387 = vpack.c.b16 %v2235, %v2234
  %v2388 = vpack.c.b16 %v2237, %v2236
  %v2389 = vpack.c.b16 %v2239, %v2238
  %v2390 = vpack.c.b16 %v2241, %v2240
  %v2391 = vpack.c.b16 %v2243, %v2242
  %v2392 = vpack.c.b16 %v2245, %v2244
  %v2393 = vpack.c.b16 %v2247, %v2246
  %v2394 = vpack.c.b16 %v2249, %v2248
  %v2395 = vpack.c.b16 %v2251, %v2250
  %v2396 = vpack.c.b16 %v2253, %v2252
  %v2397 = vpack.c.b16 %v2255, %v2254
  %v2398 = vpack.c.b16 %v2257, %v2256
  %v2399 = vpack.c.b16 %v2259, %v2258
  %v2400 = vpack.c.b16 %v2261, %v2260
  %v2401 = vpack.c.b16 %v2263, %v2262
  %v2402 = vpack.c.b16 %v2265, %v2264
  %v2403 = vpack.c.b16 %v2267, %v2266
  %v2404 = vpack.c.b16 %v2269, %v2268
  %v2405 = vpack.c.b16 %v2271, %v2270
  %v2406 = vpack.c.b16 %v2273, %v2272
  %v2407 = vpack.c.b16 %v2275, %v2274
  %v2408 = vpack.c.b16 %v2277, %v2276
  %v2409 = vpack.c.b16 %v2279, %v2278
  %v2410 = vpack.c.b16 %v2281, %v2280
  %v2411 = vpack.c.b16 %v2283, %v2282
  %2540 = vmatprep.subr.bf16.mxu0 0
  %2541 = vmatpush1.bf16.msra.mxu0 %v2284
  %2542 = vmatprep.subr.bf16.mxu0 0
  %2543 = vmatpush1.bf16.msra.mxu0 %v2285
  %2544 = vmatprep.subr.bf16.mxu0 0
  %2545 = vmatpush1.bf16.msra.mxu0 %v2286
  %2546 = vmatprep.subr.bf16.mxu0 0
  %2547 = vmatpush1.bf16.msra.mxu0 %v2287
  %2548 = vmatprep.subr.bf16.mxu0 0
  %2549 = vmatpush1.bf16.msra.mxu0 %v2288
  %2550 = vmatprep.subr.bf16.mxu0 0
  %2551 = vmatpush1.bf16.msra.mxu0 %v2289
  %2552 = vmatprep.subr.bf16.mxu0 0
  %2553 = vmatpush1.bf16.msra.mxu0 %v2290
  %2554 = vmatprep.subr.bf16.mxu0 0
  %2555 = vmatpush1.bf16.msra.mxu0 %v2291
  %2556 = vmatprep.subr.bf16.mxu0 0
  %2557 = vmatpush1.bf16.msra.mxu0 %v2292
  %2558 = vmatprep.subr.bf16.mxu0 0
  %2559 = vmatpush1.bf16.msra.mxu0 %v2293
  %2560 = vmatprep.subr.bf16.mxu0 0
  %2561 = vmatpush1.bf16.msra.mxu0 %v2294
  %2562 = vmatprep.subr.bf16.mxu0 0
  %2563 = vmatpush1.bf16.msra.mxu0 %v2295
  %2564 = vmatprep.subr.bf16.mxu0 0
  %2565 = vmatpush1.bf16.msra.mxu0 %v2296
  %2566 = vmatprep.subr.bf16.mxu0 0
  %2567 = vmatpush1.bf16.msra.mxu0 %v2297
  %2568 = vmatprep.subr.bf16.mxu0 0
  %2569 = vmatpush1.bf16.msra.mxu0 %v2298
  %2570 = vmatprep.subr.bf16.mxu0 0
  %2571 = vmatpush1.bf16.msra.mxu0 %v2299
  %2572 = vmatprep.mubr.bf16.mxu0 %v1261
  %2573 = vmatmul.mubr.bf16.gmra.mrb[0].mxu0 %v1260
  %v2574 = vpop.f32.mrb[0].mxu0
  %v2575 = vadd.f32 0.0, %v2574
  %v2576 = vpop.f32.mrb[0].mxu0
  %v2577 = vpop.f32.mrb[0].mxu0
  %v2578 = vadd.f32 0.0, %v2577
  %v2579 = vpop.f32.mrb[0].mxu0
  %2580 = vmatprep.mubr.bf16.mxu0 %v1277
  %2581 = vmatmul.mubr.bf16.gmra.mrb[0].mxu0 %v1276
  %v2582 = vpop.f32.mrb[0].mxu0
  %v2583 = vadd.f32 0.0, %v2582
  %v2584 = vpop.f32.mrb[0].mxu0
  %v2585 = vpop.f32.mrb[0].mxu0
  %v2586 = vadd.f32 0.0, %v2585
  %v2587 = vpop.f32.mrb[0].mxu0
  %2588 = vmatprep.mubr.bf16.mxu0 %v1293
  %2589 = vmatmul.mubr.bf16.gmra.mrb[0].mxu0 %v1292
  %v2590 = vpop.f32.mrb[0].mxu0
  %v2591 = vadd.f32 0.0, %v2590
  %v2592 = vpop.f32.mrb[0].mxu0
  %v2593 = vpop.f32.mrb[0].mxu0
  %v2594 = vadd.f32 0.0, %v2593
  %v2595 = vpop.f32.mrb[0].mxu0
  %2596 = vmatprep.mubr.bf16.mxu0 %v1309
  %2597 = vmatmul.mubr.bf16.gmra.mrb[0].mxu0 %v1308
  %v2598 = vpop.f32.mrb[0].mxu0
  %v2599 = vadd.f32 0.0, %v2598
  %v2600 = vpop.f32.mrb[0].mxu0
  %v2601 = vpop.f32.mrb[0].mxu0
  %v2602 = vadd.f32 0.0, %v2601
  %v2603 = vpop.f32.mrb[0].mxu0
  %2604 = vmatprep.mubr.bf16.mxu0 %v1325
  %2605 = vmatmul.mubr.bf16.gmra.mrb[0].mxu0 %v1324
  %v2606 = vpop.f32.mrb[0].mxu0
  %v2607 = vadd.f32 0.0, %v2606
  %v2608 = vpop.f32.mrb[0].mxu0
  %v2609 = vpop.f32.mrb[0].mxu0
  %v2610 = vadd.f32 0.0, %v2609
  %v2611 = vpop.f32.mrb[0].mxu0
  %2612 = vmatprep.mubr.bf16.mxu0 %v1341
  %2613 = vmatmul.mubr.bf16.gmra.mrb[0].mxu0 %v1340
  %v2614 = vpop.f32.mrb[0].mxu0
  %v2615 = vadd.f32 0.0, %v2614
  %v2616 = vpop.f32.mrb[0].mxu0
  %v2617 = vpop.f32.mrb[0].mxu0
  %v2618 = vadd.f32 0.0, %v2617
  %v2619 = vpop.f32.mrb[0].mxu0
  %2620 = vmatprep.mubr.bf16.mxu0 %v1357
  %2621 = vmatmul.mubr.bf16.gmra.mrb[0].mxu0 %v1356
  %v2622 = vpop.f32.mrb[0].mxu0
  %v2623 = vadd.f32 0.0, %v2622
  %v2624 = vpop.f32.mrb[0].mxu0
  %v2625 = vpop.f32.mrb[0].mxu0
  %v2626 = vadd.f32 0.0, %v2625
  %v2627 = vpop.f32.mrb[0].mxu0
  %2628 = vmatprep.mubr.bf16.mxu0 %v1373
  %2629 = vmatmul.mubr.bf16.gmra.mrb[0].mxu0 %v1372
  %v2630 = vpop.f32.mrb[0].mxu0
  %v2631 = vadd.f32 0.0, %v2630
  %v2632 = vpop.f32.mrb[0].mxu0
  %v2633 = vpop.f32.mrb[0].mxu0
  %v2634 = vadd.f32 0.0, %v2633
  %v2635 = vpop.f32.mrb[0].mxu0
  %2636 = vmatprep.mubr.bf16.mxu0 %v1389
  %2637 = vmatmul.mubr.bf16.gmra.mrb[0].mxu0 %v1388
  %v2638 = vpop.f32.mrb[0].mxu0
  %v2639 = vadd.f32 0.0, %v2638
  %v2640 = vpop.f32.mrb[0].mxu0
  %v2641 = vpop.f32.mrb[0].mxu0
  %v2642 = vadd.f32 0.0, %v2641
  %v2643 = vpop.f32.mrb[0].mxu0
  %2644 = vmatprep.mubr.bf16.mxu0 %v1405
  %2645 = vmatmul.mubr.bf16.gmra.mrb[0].mxu0 %v1404
  %v2646 = vpop.f32.mrb[0].mxu0
  %v2647 = vadd.f32 0.0, %v2646
  %v2648 = vpop.f32.mrb[0].mxu0
  %v2649 = vpop.f32.mrb[0].mxu0
  %v2650 = vadd.f32 0.0, %v2649
  %v2651 = vpop.f32.mrb[0].mxu0
  %2652 = vmatprep.mubr.bf16.mxu0 %v1421
  %2653 = vmatmul.mubr.bf16.gmra.mrb[0].mxu0 %v1420
  %v2654 = vpop.f32.mrb[0].mxu0
  %v2655 = vadd.f32 0.0, %v2654
  %v2656 = vpop.f32.mrb[0].mxu0
  %v2657 = vpop.f32.mrb[0].mxu0
  %v2658 = vadd.f32 0.0, %v2657
  %v2659 = vpop.f32.mrb[0].mxu0
  %2660 = vmatprep.mubr.bf16.mxu0 %v1437
  %2661 = vmatmul.mubr.bf16.gmra.mrb[0].mxu0 %v1436
  %v2662 = vpop.f32.mrb[0].mxu0
  %v2663 = vadd.f32 0.0, %v2662
  %v2664 = vpop.f32.mrb[0].mxu0
  %v2665 = vpop.f32.mrb[0].mxu0
  %v2666 = vadd.f32 0.0, %v2665
  %v2667 = vpop.f32.mrb[0].mxu0
  %2668 = vmatprep.mubr.bf16.mxu0 %v1453
  %2669 = vmatmul.mubr.bf16.gmra.mrb[0].mxu0 %v1452
  %v2670 = vpop.f32.mrb[0].mxu0
  %v2671 = vadd.f32 0.0, %v2670
  %v2672 = vpop.f32.mrb[0].mxu0
  %v2673 = vpop.f32.mrb[0].mxu0
  %v2674 = vadd.f32 0.0, %v2673
  %v2675 = vpop.f32.mrb[0].mxu0
  %2676 = vmatprep.mubr.bf16.mxu0 %v1469
  %2677 = vmatmul.mubr.bf16.gmra.mrb[0].mxu0 %v1468
  %v2678 = vpop.f32.mrb[0].mxu0
  %v2679 = vadd.f32 0.0, %v2678
  %v2680 = vpop.f32.mrb[0].mxu0
  %v2681 = vpop.f32.mrb[0].mxu0
  %v2682 = vadd.f32 0.0, %v2681
  %v2683 = vpop.f32.mrb[0].mxu0
  %2684 = vmatprep.mubr.bf16.mxu0 %v1485
  %2685 = vmatmul.mubr.bf16.gmra.mrb[0].mxu0 %v1484
  %v2686 = vpop.f32.mrb[0].mxu0
  %v2687 = vadd.f32 0.0, %v2686
  %v2688 = vpop.f32.mrb[0].mxu0
  %v2689 = vpop.f32.mrb[0].mxu0
  %v2690 = vadd.f32 0.0, %v2689
  %v2691 = vpop.f32.mrb[0].mxu0
  %2692 = vmatprep.mubr.bf16.mxu0 %v1501
  %2693 = vmatmul.mubr.bf16.gmra.mrb[0].mxu0 %v1500
  %v2694 = vpop.f32.mrb[0].mxu0
  %v2695 = vadd.f32 0.0, %v2694
  %v2696 = vpop.f32.mrb[0].mxu0
  %v2697 = vpop.f32.mrb[0].mxu0
  %v2698 = vpop.f32.mrb[0].mxu0
  %2699 = vdwg.mxu0
  %2700 = vmatprep.subr.bf16.mxu0 0
  %2701 = vmatpush1.bf16.msra.mxu0 %v2300
  %2702 = vmatprep.subr.bf16.mxu0 0
  %2703 = vmatpush1.bf16.msra.mxu0 %v2301
  %2704 = vmatprep.subr.bf16.mxu0 0
  %2705 = vmatpush1.bf16.msra.mxu0 %v2302
  %2706 = vmatprep.subr.bf16.mxu0 0
  %2707 = vmatpush1.bf16.msra.mxu0 %v2303
  %2708 = vmatprep.subr.bf16.mxu0 0
  %2709 = vmatpush1.bf16.msra.mxu0 %v2304
  %2710 = vmatprep.subr.bf16.mxu0 0
  %2711 = vmatpush1.bf16.msra.mxu0 %v2305
  %2712 = vmatprep.subr.bf16.mxu0 0
  %2713 = vmatpush1.bf16.msra.mxu0 %v2306
  %2714 = vmatprep.subr.bf16.mxu0 0
  %2715 = vmatpush1.bf16.msra.mxu0 %v2307
  %2716 = vmatprep.subr.bf16.mxu0 0
  %2717 = vmatpush1.bf16.msra.mxu0 %v2308
  %2718 = vmatprep.subr.bf16.mxu0 0
  %2719 = vmatpush1.bf16.msra.mxu0 %v2309
  %2720 = vmatprep.subr.bf16.mxu0 0
  %2721 = vmatpush1.bf16.msra.mxu0 %v2310
  %2722 = vmatprep.subr.bf16.mxu0 0
  %2723 = vmatpush1.bf16.msra.mxu0 %v2311
  %2724 = vmatprep.subr.bf16.mxu0 0
  %2725 = vmatpush1.bf16.msra.mxu0 %v2312
  %2726 = vmatprep.subr.bf16.mxu0 0
  %2727 = vmatpush1.bf16.msra.mxu0 %v2313
  %2728 = vmatprep.subr.bf16.mxu0 0
  %2729 = vmatpush1.bf16.msra.mxu0 %v2314
  %2730 = vmatprep.subr.bf16.mxu0 0
  %2731 = vmatpush1.bf16.msra.mxu0 %v2315
  %2732 = vmatprep.mubr.bf16.mxu0 %v1263
  %2733 = vmatmul.mubr.bf16.gmra.mrb[0].mxu0 %v1262
  %v2734 = vpop.f32.mrb[0].mxu0
  %v2735 = vadd.f32 %v2575, %v2734
  %v2736 = vpop.f32.mrb[0].mxu0
  %v2737 = vpop.f32.mrb[0].mxu0
  %v2738 = vadd.f32 %v2578, %v2737
  %v2739 = vpop.f32.mrb[0].mxu0
  %2740 = vmatprep.mubr.bf16.mxu0 %v1279
  %2741 = vmatmul.mubr.bf16.gmra.mrb[0].mxu0 %v1278
  %v2742 = vpop.f32.mrb[0].mxu0
  %v2743 = vadd.f32 %v2583, %v2742
  %v2744 = vpop.f32.mrb[0].mxu0
  %v2745 = vpop.f32.mrb[0].mxu0
  %v2746 = vadd.f32 %v2586, %v2745
  %v2747 = vpop.f32.mrb[0].mxu0
  %2748 = vmatprep.mubr.bf16.mxu0 %v1295
  %2749 = vmatmul.mubr.bf16.gmra.mrb[0].mxu0 %v1294
  %v2750 = vpop.f32.mrb[0].mxu0
  %v2751 = vadd.f32 %v2591, %v2750
  %v2752 = vpop.f32.mrb[0].mxu0
  %v2753 = vpop.f32.mrb[0].mxu0
  %v2754 = vadd.f32 %v2594, %v2753
  %v2755 = vpop.f32.mrb[0].mxu0
  %2756 = vmatprep.mubr.bf16.mxu0 %v1311
  %2757 = vmatmul.mubr.bf16.gmra.mrb[0].mxu0 %v1310
  %v2758 = vpop.f32.mrb[0].mxu0
  %v2759 = vadd.f32 %v2599, %v2758
  %v2760 = vpop.f32.mrb[0].mxu0
  %v2761 = vpop.f32.mrb[0].mxu0
  %v2762 = vadd.f32 %v2602, %v2761
  %v2763 = vpop.f32.mrb[0].mxu0
  %2764 = vmatprep.mubr.bf16.mxu0 %v1327
  %2765 = vmatmul.mubr.bf16.gmra.mrb[0].mxu0 %v1326
  %v2766 = vpop.f32.mrb[0].mxu0
  %v2767 = vadd.f32 %v2607, %v2766
  %v2768 = vpop.f32.mrb[0].mxu0
  %v2769 = vpop.f32.mrb[0].mxu0
  %v2770 = vadd.f32 %v2610, %v2769
  %v2771 = vpop.f32.mrb[0].mxu0
  %2772 = vmatprep.mubr.bf16.mxu0 %v1343
  %2773 = vmatmul.mubr.bf16.gmra.mrb[0].mxu0 %v1342
  %v2774 = vpop.f32.mrb[0].mxu0
  %v2775 = vadd.f32 %v2615, %v2774
  %v2776 = vpop.f32.mrb[0].mxu0
  %v2777 = vpop.f32.mrb[0].mxu0
  %v2778 = vadd.f32 %v2618, %v2777
  %v2779 = vpop.f32.mrb[0].mxu0
  %2780 = vmatprep.mubr.bf16.mxu0 %v1359
  %2781 = vmatmul.mubr.bf16.gmra.mrb[0].mxu0 %v1358
  %v2782 = vpop.f32.mrb[0].mxu0
  %v2783 = vadd.f32 %v2623, %v2782
  %v2784 = vpop.f32.mrb[0].mxu0
  %v2785 = vpop.f32.mrb[0].mxu0
  %v2786 = vadd.f32 %v2626, %v2785
  %v2787 = vpop.f32.mrb[0].mxu0
  %2788 = vmatprep.mubr.bf16.mxu0 %v1375
  %2789 = vmatmul.mubr.bf16.gmra.mrb[0].mxu0 %v1374
  %v2790 = vpop.f32.mrb[0].mxu0
  %v2791 = vadd.f32 %v2631, %v2790
  %v2792 = vpop.f32.mrb[0].mxu0
  %v2793 = vpop.f32.mrb[0].mxu0
  %v2794 = vadd.f32 %v2634, %v2793
  %v2795 = vpop.f32.mrb[0].mxu0
  %2796 = vmatprep.mubr.bf16.mxu0 %v1391
  %2797 = vmatmul.mubr.bf16.gmra.mrb[0].mxu0 %v1390
  %v2798 = vpop.f32.mrb[0].mxu0
  %v2799 = vadd.f32 %v2639, %v2798
  %v2800 = vpop.f32.mrb[0].mxu0
  %v2801 = vpop.f32.mrb[0].mxu0
  %v2802 = vadd.f32 %v2642, %v2801
  %v2803 = vpop.f32.mrb[0].mxu0
  %2804 = vmatprep.mubr.bf16.mxu0 %v1407
  %2805 = vmatmul.mubr.bf16.gmra.mrb[0].mxu0 %v1406
  %v2806 = vpop.f32.mrb[0].mxu0
  %v2807 = vadd.f32 %v2647, %v2806
  %v2808 = vpop.f32.mrb[0].mxu0
  %v2809 = vpop.f32.mrb[0].mxu0
  %v2810 = vadd.f32 %v2650, %v2809
  %v2811 = vpop.f32.mrb[0].mxu0
  %2812 = vmatprep.mubr.bf16.mxu0 %v1423
  %2813 = vmatmul.mubr.bf16.gmra.mrb[0].mxu0 %v1422
  %v2814 = vpop.f32.mrb[0].mxu0
  %v2815 = vadd.f32 %v2655, %v2814
  %v2816 = vpop.f32.mrb[0].mxu0
  %v2817 = vpop.f32.mrb[0].mxu0
  %v2818 = vadd.f32 %v2658, %v2817
  %v2819 = vpop.f32.mrb[0].mxu0
  %2820 = vmatprep.mubr.bf16.mxu0 %v1439
  %2821 = vmatmul.mubr.bf16.gmra.mrb[0].mxu0 %v1438
  %v2822 = vpop.f32.mrb[0].mxu0
  %v2823 = vadd.f32 %v2663, %v2822
  %v2824 = vpop.f32.mrb[0].mxu0
  %v2825 = vpop.f32.mrb[0].mxu0
  %v2826 = vadd.f32 %v2666, %v2825
  %v2827 = vpop.f32.mrb[0].mxu0
  %2828 = vmatprep.mubr.bf16.mxu0 %v1455
  %2829 = vmatmul.mubr.bf16.gmra.mrb[0].mxu0 %v1454
  %v2830 = vpop.f32.mrb[0].mxu0
  %v2831 = vadd.f32 %v2671, %v2830
  %v2832 = vpop.f32.mrb[0].mxu0
  %v2833 = vpop.f32.mrb[0].mxu0
  %v2834 = vadd.f32 %v2674, %v2833
  %v2835 = vpop.f32.mrb[0].mxu0
  %2836 = vmatprep.mubr.bf16.mxu0 %v1471
  %2837 = vmatmul.mubr.bf16.gmra.mrb[0].mxu0 %v1470
  %v2838 = vpop.f32.mrb[0].mxu0
  %v2839 = vadd.f32 %v2679, %v2838
  %v2840 = vpop.f32.mrb[0].mxu0
  %v2841 = vpop.f32.mrb[0].mxu0
  %v2842 = vadd.f32 %v2682, %v2841
  %v2843 = vpop.f32.mrb[0].mxu0
  %2844 = vmatprep.mubr.bf16.mxu0 %v1487
  %2845 = vmatmul.mubr.bf16.gmra.mrb[0].mxu0 %v1486
  %v2846 = vpop.f32.mrb[0].mxu0
  %v2847 = vadd.f32 %v2687, %v2846
  %v2848 = vpop.f32.mrb[0].mxu0
  %v2849 = vpop.f32.mrb[0].mxu0
  %v2850 = vadd.f32 %v2690, %v2849
  %v2851 = vpop.f32.mrb[0].mxu0
  %2852 = vmatprep.mubr.bf16.mxu0 %v1503
  %2853 = vmatmul.mubr.bf16.gmra.mrb[0].mxu0 %v1502
  %v2854 = vpop.f32.mrb[0].mxu0
  %v2855 = vadd.f32 %v2695, %v2854
  %v2856 = vpop.f32.mrb[0].mxu0
  %v2857 = vpop.f32.mrb[0].mxu0
  %v2858 = vpop.f32.mrb[0].mxu0
  %2859 = vdwg.mxu0
  %2860 = vmatprep.subr.bf16.mxu0 0
  %2861 = vmatpush1.bf16.msra.mxu0 %v2316
  %2862 = vmatprep.subr.bf16.mxu0 0
  %2863 = vmatpush1.bf16.msra.mxu0 %v2317
  %2864 = vmatprep.subr.bf16.mxu0 0
  %2865 = vmatpush1.bf16.msra.mxu0 %v2318
  %2866 = vmatprep.subr.bf16.mxu0 0
  %2867 = vmatpush1.bf16.msra.mxu0 %v2319
  %2868 = vmatprep.subr.bf16.mxu0 0
  %2869 = vmatpush1.bf16.msra.mxu0 %v2320
  %2870 = vmatprep.subr.bf16.mxu0 0
  %2871 = vmatpush1.bf16.msra.mxu0 %v2321
  %2872 = vmatprep.subr.bf16.mxu0 0
  %2873 = vmatpush1.bf16.msra.mxu0 %v2322
  %2874 = vmatprep.subr.bf16.mxu0 0
  %2875 = vmatpush1.bf16.msra.mxu0 %v2323
  %2876 = vmatprep.subr.bf16.mxu0 0
  %2877 = vmatpush1.bf16.msra.mxu0 %v2324
  %2878 = vmatprep.subr.bf16.mxu0 0
  %2879 = vmatpush1.bf16.msra.mxu0 %v2325
  %2880 = vmatprep.subr.bf16.mxu0 0
  %2881 = vmatpush1.bf16.msra.mxu0 %v2326
  %2882 = vmatprep.subr.bf16.mxu0 0
  %2883 = vmatpush1.bf16.msra.mxu0 %v2327
  %2884 = vmatprep.subr.bf16.mxu0 0
  %2885 = vmatpush1.bf16.msra.mxu0 %v2328
  %2886 = vmatprep.subr.bf16.mxu0 0
  %2887 = vmatpush1.bf16.msra.mxu0 %v2329
  %2888 = vmatprep.subr.bf16.mxu0 0
  %2889 = vmatpush1.bf16.msra.mxu0 %v2330
  %2890 = vmatprep.subr.bf16.mxu0 0
  %2891 = vmatpush1.bf16.msra.mxu0 %v2331
  %2892 = vmatprep.mubr.bf16.mxu0 %v1265
  %2893 = vmatmul.mubr.bf16.gmra.mrb[0].mxu0 %v1264
  %v2894 = vpop.f32.mrb[0].mxu0
  %v2895 = vadd.f32 %v2735, %v2894
  %v2896 = vpop.f32.mrb[0].mxu0
  %v2897 = vpop.f32.mrb[0].mxu0
  %v2898 = vadd.f32 %v2738, %v2897
  %v2899 = vpop.f32.mrb[0].mxu0
  %2900 = vmatprep.mubr.bf16.mxu0 %v1281
  %2901 = vmatmul.mubr.bf16.gmra.mrb[0].mxu0 %v1280
  %v2902 = vpop.f32.mrb[0].mxu0
  %v2903 = vadd.f32 %v2743, %v2902
  %v2904 = vpop.f32.mrb[0].mxu0
  %v2905 = vpop.f32.mrb[0].mxu0
  %v2906 = vadd.f32 %v2746, %v2905
  %v2907 = vpop.f32.mrb[0].mxu0
  %2908 = vmatprep.mubr.bf16.mxu0 %v1297
  %2909 = vmatmul.mubr.bf16.gmra.mrb[0].mxu0 %v1296
  %v2910 = vpop.f32.mrb[0].mxu0
  %v2911 = vadd.f32 %v2751, %v2910
  %v2912 = vpop.f32.mrb[0].mxu0
  %v2913 = vpop.f32.mrb[0].mxu0
  %v2914 = vadd.f32 %v2754, %v2913
  %v2915 = vpop.f32.mrb[0].mxu0
  %2916 = vmatprep.mubr.bf16.mxu0 %v1313
  %2917 = vmatmul.mubr.bf16.gmra.mrb[0].mxu0 %v1312
  %v2918 = vpop.f32.mrb[0].mxu0
  %v2919 = vadd.f32 %v2759, %v2918
  %v2920 = vpop.f32.mrb[0].mxu0
  %v2921 = vpop.f32.mrb[0].mxu0
  %v2922 = vadd.f32 %v2762, %v2921
  %v2923 = vpop.f32.mrb[0].mxu0
  %2924 = vmatprep.mubr.bf16.mxu0 %v1329
  %2925 = vmatmul.mubr.bf16.gmra.mrb[0].mxu0 %v1328
  %v2926 = vpop.f32.mrb[0].mxu0
  %v2927 = vadd.f32 %v2767, %v2926
  %v2928 = vpop.f32.mrb[0].mxu0
  %v2929 = vpop.f32.mrb[0].mxu0
  %v2930 = vadd.f32 %v2770, %v2929
  %v2931 = vpop.f32.mrb[0].mxu0
  %2932 = vmatprep.mubr.bf16.mxu0 %v1345
  %2933 = vmatmul.mubr.bf16.gmra.mrb[0].mxu0 %v1344
  %v2934 = vpop.f32.mrb[0].mxu0
  %v2935 = vadd.f32 %v2775, %v2934
  %v2936 = vpop.f32.mrb[0].mxu0
  %v2937 = vpop.f32.mrb[0].mxu0
  %v2938 = vadd.f32 %v2778, %v2937
  %v2939 = vpop.f32.mrb[0].mxu0
  %2940 = vmatprep.mubr.bf16.mxu0 %v1361
  %2941 = vmatmul.mubr.bf16.gmra.mrb[0].mxu0 %v1360
  %v2942 = vpop.f32.mrb[0].mxu0
  %v2943 = vadd.f32 %v2783, %v2942
  %v2944 = vpop.f32.mrb[0].mxu0
  %v2945 = vpop.f32.mrb[0].mxu0
  %v2946 = vadd.f32 %v2786, %v2945
  %v2947 = vpop.f32.mrb[0].mxu0
  %2948 = vmatprep.mubr.bf16.mxu0 %v1377
  %2949 = vmatmul.mubr.bf16.gmra.mrb[0].mxu0 %v1376
  %v2950 = vpop.f32.mrb[0].mxu0
  %v2951 = vadd.f32 %v2791, %v2950
  %v2952 = vpop.f32.mrb[0].mxu0
  %v2953 = vpop.f32.mrb[0].mxu0
  %v2954 = vadd.f32 %v2794, %v2953
  %v2955 = vpop.f32.mrb[0].mxu0
  %2956 = vmatprep.mubr.bf16.mxu0 %v1393
  %2957 = vmatmul.mubr.bf16.gmra.mrb[0].mxu0 %v1392
  %v2958 = vpop.f32.mrb[0].mxu0
  %v2959 = vadd.f32 %v2799, %v2958
  %v2960 = vpop.f32.mrb[0].mxu0
  %v2961 = vpop.f32.mrb[0].mxu0
  %v2962 = vadd.f32 %v2802, %v2961
  %v2963 = vpop.f32.mrb[0].mxu0
  %2964 = vmatprep.mubr.bf16.mxu0 %v1409
  %2965 = vmatmul.mubr.bf16.gmra.mrb[0].mxu0 %v1408
  %v2966 = vpop.f32.mrb[0].mxu0
  %v2967 = vadd.f32 %v2807, %v2966
  %v2968 = vpop.f32.mrb[0].mxu0
  %v2969 = vpop.f32.mrb[0].mxu0
  %v2970 = vadd.f32 %v2810, %v2969
  %v2971 = vpop.f32.mrb[0].mxu0
  %2972 = vmatprep.mubr.bf16.mxu0 %v1425
  %2973 = vmatmul.mubr.bf16.gmra.mrb[0].mxu0 %v1424
  %v2974 = vpop.f32.mrb[0].mxu0
  %v2975 = vadd.f32 %v2815, %v2974
  %v2976 = vpop.f32.mrb[0].mxu0
  %v2977 = vpop.f32.mrb[0].mxu0
  %v2978 = vadd.f32 %v2818, %v2977
  %v2979 = vpop.f32.mrb[0].mxu0
  %2980 = vmatprep.mubr.bf16.mxu0 %v1441
  %2981 = vmatmul.mubr.bf16.gmra.mrb[0].mxu0 %v1440
  %v2982 = vpop.f32.mrb[0].mxu0
  %v2983 = vadd.f32 %v2823, %v2982
  %v2984 = vpop.f32.mrb[0].mxu0
  %v2985 = vpop.f32.mrb[0].mxu0
  %v2986 = vadd.f32 %v2826, %v2985
  %v2987 = vpop.f32.mrb[0].mxu0
  %2988 = vmatprep.mubr.bf16.mxu0 %v1457
  %2989 = vmatmul.mubr.bf16.gmra.mrb[0].mxu0 %v1456
  %v2990 = vpop.f32.mrb[0].mxu0
  %v2991 = vadd.f32 %v2831, %v2990
  %v2992 = vpop.f32.mrb[0].mxu0
  %v2993 = vpop.f32.mrb[0].mxu0
  %v2994 = vadd.f32 %v2834, %v2993
  %v2995 = vpop.f32.mrb[0].mxu0
  %2996 = vmatprep.mubr.bf16.mxu0 %v1473
  %2997 = vmatmul.mubr.bf16.gmra.mrb[0].mxu0 %v1472
  %v2998 = vpop.f32.mrb[0].mxu0
  %v2999 = vadd.f32 %v2839, %v2998
  %v3000 = vpop.f32.mrb[0].mxu0
  %v3001 = vpop.f32.mrb[0].mxu0
  %v3002 = vadd.f32 %v2842, %v3001
  %v3003 = vpop.f32.mrb[0].mxu0
  %3004 = vmatprep.mubr.bf16.mxu0 %v1489
  %3005 = vmatmul.mubr.bf16.gmra.mrb[0].mxu0 %v1488
  %v3006 = vpop.f32.mrb[0].mxu0
  %v3007 = vadd.f32 %v2847, %v3006
  %v3008 = vpop.f32.mrb[0].mxu0
  %v3009 = vpop.f32.mrb[0].mxu0
  %v3010 = vadd.f32 %v2850, %v3009
  %v3011 = vpop.f32.mrb[0].mxu0
  %3012 = vmatprep.mubr.bf16.mxu0 %v1505
  %3013 = vmatmul.mubr.bf16.gmra.mrb[0].mxu0 %v1504
  %v3014 = vpop.f32.mrb[0].mxu0
  %v3015 = vadd.f32 %v2855, %v3014
  %v3016 = vpop.f32.mrb[0].mxu0
  %v3017 = vpop.f32.mrb[0].mxu0
  %v3018 = vpop.f32.mrb[0].mxu0
  %3019 = vdwg.mxu0
  %3020 = vmatprep.subr.bf16.mxu0 0
  %3021 = vmatpush1.bf16.msra.mxu0 %v2332
  %3022 = vmatprep.subr.bf16.mxu0 0
  %3023 = vmatpush1.bf16.msra.mxu0 %v2333
  %3024 = vmatprep.subr.bf16.mxu0 0
  %3025 = vmatpush1.bf16.msra.mxu0 %v2334
  %3026 = vmatprep.subr.bf16.mxu0 0
  %3027 = vmatpush1.bf16.msra.mxu0 %v2335
  %3028 = vmatprep.subr.bf16.mxu0 0
  %3029 = vmatpush1.bf16.msra.mxu0 %v2336
  %3030 = vmatprep.subr.bf16.mxu0 0
  %3031 = vmatpush1.bf16.msra.mxu0 %v2337
  %3032 = vmatprep.subr.bf16.mxu0 0
  %3033 = vmatpush1.bf16.msra.mxu0 %v2338
  %3034 = vmatprep.subr.bf16.mxu0 0
  %3035 = vmatpush1.bf16.msra.mxu0 %v2339
  %3036 = vmatprep.subr.bf16.mxu0 0
  %3037 = vmatpush1.bf16.msra.mxu0 %v2340
  %3038 = vmatprep.subr.bf16.mxu0 0
  %3039 = vmatpush1.bf16.msra.mxu0 %v2341
  %3040 = vmatprep.subr.bf16.mxu0 0
  %3041 = vmatpush1.bf16.msra.mxu0 %v2342
  %3042 = vmatprep.subr.bf16.mxu0 0
  %3043 = vmatpush1.bf16.msra.mxu0 %v2343
  %3044 = vmatprep.subr.bf16.mxu0 0
  %3045 = vmatpush1.bf16.msra.mxu0 %v2344
  %3046 = vmatprep.subr.bf16.mxu0 0
  %3047 = vmatpush1.bf16.msra.mxu0 %v2345
  %3048 = vmatprep.subr.bf16.mxu0 0
  %3049 = vmatpush1.bf16.msra.mxu0 %v2346
  %3050 = vmatprep.subr.bf16.mxu0 0
  %3051 = vmatpush1.bf16.msra.mxu0 %v2347
  %3052 = vmatprep.mubr.bf16.mxu0 %v1267
  %3053 = vmatmul.mubr.bf16.gmra.mrb[0].mxu0 %v1266
  %v3054 = vpop.f32.mrb[0].mxu0
  %v3055 = vadd.f32 %v2895, %v3054
  %v3056 = vpop.f32.mrb[0].mxu0
  %v3057 = vpop.f32.mrb[0].mxu0
  %v3058 = vadd.f32 %v2898, %v3057
  %v3059 = vpop.f32.mrb[0].mxu0
  %3060 = vmatprep.mubr.bf16.mxu0 %v1283
  %3061 = vmatmul.mubr.bf16.gmra.mrb[0].mxu0 %v1282
  %v3062 = vpop.f32.mrb[0].mxu0
  %v3063 = vadd.f32 %v2903, %v3062
  %v3064 = vpop.f32.mrb[0].mxu0
  %v3065 = vpop.f32.mrb[0].mxu0
  %v3066 = vadd.f32 %v2906, %v3065
  %v3067 = vpop.f32.mrb[0].mxu0
  %3068 = vmatprep.mubr.bf16.mxu0 %v1299
  %3069 = vmatmul.mubr.bf16.gmra.mrb[0].mxu0 %v1298
  %v3070 = vpop.f32.mrb[0].mxu0
  %v3071 = vadd.f32 %v2911, %v3070
  %v3072 = vpop.f32.mrb[0].mxu0
  %v3073 = vpop.f32.mrb[0].mxu0
  %v3074 = vadd.f32 %v2914, %v3073
  %v3075 = vpop.f32.mrb[0].mxu0
  %3076 = vmatprep.mubr.bf16.mxu0 %v1315
  %3077 = vmatmul.mubr.bf16.gmra.mrb[0].mxu0 %v1314
  %v3078 = vpop.f32.mrb[0].mxu0
  %v3079 = vadd.f32 %v2919, %v3078
  %v3080 = vpop.f32.mrb[0].mxu0
  %v3081 = vpop.f32.mrb[0].mxu0
  %v3082 = vadd.f32 %v2922, %v3081
  %v3083 = vpop.f32.mrb[0].mxu0
  %3084 = vmatprep.mubr.bf16.mxu0 %v1331
  %3085 = vmatmul.mubr.bf16.gmra.mrb[0].mxu0 %v1330
  %v3086 = vpop.f32.mrb[0].mxu0
  %v3087 = vadd.f32 %v2927, %v3086
  %v3088 = vpop.f32.mrb[0].mxu0
  %v3089 = vpop.f32.mrb[0].mxu0
  %v3090 = vadd.f32 %v2930, %v3089
  %v3091 = vpop.f32.mrb[0].mxu0
  %3092 = vmatprep.mubr.bf16.mxu0 %v1347
  %3093 = vmatmul.mubr.bf16.gmra.mrb[0].mxu0 %v1346
  %v3094 = vpop.f32.mrb[0].mxu0
  %v3095 = vadd.f32 %v2935, %v3094
  %v3096 = vpop.f32.mrb[0].mxu0
  %v3097 = vpop.f32.mrb[0].mxu0
  %v3098 = vadd.f32 %v2938, %v3097
  %v3099 = vpop.f32.mrb[0].mxu0
  %3100 = vmatprep.mubr.bf16.mxu0 %v1363
  %3101 = vmatmul.mubr.bf16.gmra.mrb[0].mxu0 %v1362
  %v3102 = vpop.f32.mrb[0].mxu0
  %v3103 = vadd.f32 %v2943, %v3102
  %v3104 = vpop.f32.mrb[0].mxu0
  %v3105 = vpop.f32.mrb[0].mxu0
  %v3106 = vadd.f32 %v2946, %v3105
  %v3107 = vpop.f32.mrb[0].mxu0
  %3108 = vmatprep.mubr.bf16.mxu0 %v1379
  %3109 = vmatmul.mubr.bf16.gmra.mrb[0].mxu0 %v1378
  %v3110 = vpop.f32.mrb[0].mxu0
  %v3111 = vadd.f32 %v2951, %v3110
  %v3112 = vpop.f32.mrb[0].mxu0
  %v3113 = vpop.f32.mrb[0].mxu0
  %v3114 = vadd.f32 %v2954, %v3113
  %v3115 = vpop.f32.mrb[0].mxu0
  %3116 = vmatprep.mubr.bf16.mxu0 %v1395
  %3117 = vmatmul.mubr.bf16.gmra.mrb[0].mxu0 %v1394
  %v3118 = vpop.f32.mrb[0].mxu0
  %v3119 = vadd.f32 %v2959, %v3118
  %v3120 = vpop.f32.mrb[0].mxu0
  %v3121 = vpop.f32.mrb[0].mxu0
  %v3122 = vadd.f32 %v2962, %v3121
  %v3123 = vpop.f32.mrb[0].mxu0
  %3124 = vmatprep.mubr.bf16.mxu0 %v1411
  %3125 = vmatmul.mubr.bf16.gmra.mrb[0].mxu0 %v1410
  %v3126 = vpop.f32.mrb[0].mxu0
  %v3127 = vadd.f32 %v2967, %v3126
  %v3128 = vpop.f32.mrb[0].mxu0
  %v3129 = vpop.f32.mrb[0].mxu0
  %v3130 = vadd.f32 %v2970, %v3129
  %v3131 = vpop.f32.mrb[0].mxu0
  %3132 = vmatprep.mubr.bf16.mxu0 %v1427
  %3133 = vmatmul.mubr.bf16.gmra.mrb[0].mxu0 %v1426
  %v3134 = vpop.f32.mrb[0].mxu0
  %v3135 = vadd.f32 %v2975, %v3134
  %v3136 = vpop.f32.mrb[0].mxu0
  %v3137 = vpop.f32.mrb[0].mxu0
  %v3138 = vadd.f32 %v2978, %v3137
  %v3139 = vpop.f32.mrb[0].mxu0
  %3140 = vmatprep.mubr.bf16.mxu0 %v1443
  %3141 = vmatmul.mubr.bf16.gmra.mrb[0].mxu0 %v1442
  %v3142 = vpop.f32.mrb[0].mxu0
  %v3143 = vadd.f32 %v2983, %v3142
  %v3144 = vpop.f32.mrb[0].mxu0
  %v3145 = vpop.f32.mrb[0].mxu0
  %v3146 = vadd.f32 %v2986, %v3145
  %v3147 = vpop.f32.mrb[0].mxu0
  %3148 = vmatprep.mubr.bf16.mxu0 %v1459
  %3149 = vmatmul.mubr.bf16.gmra.mrb[0].mxu0 %v1458
  %v3150 = vpop.f32.mrb[0].mxu0
  %v3151 = vadd.f32 %v2991, %v3150
  %v3152 = vpop.f32.mrb[0].mxu0
  %v3153 = vpop.f32.mrb[0].mxu0
  %v3154 = vadd.f32 %v2994, %v3153
  %v3155 = vpop.f32.mrb[0].mxu0
  %3156 = vmatprep.mubr.bf16.mxu0 %v1475
  %3157 = vmatmul.mubr.bf16.gmra.mrb[0].mxu0 %v1474
  %v3158 = vpop.f32.mrb[0].mxu0
  %v3159 = vadd.f32 %v2999, %v3158
  %v3160 = vpop.f32.mrb[0].mxu0
  %v3161 = vpop.f32.mrb[0].mxu0
  %v3162 = vadd.f32 %v3002, %v3161
  %v3163 = vpop.f32.mrb[0].mxu0
  %3164 = vmatprep.mubr.bf16.mxu0 %v1491
  %3165 = vmatmul.mubr.bf16.gmra.mrb[0].mxu0 %v1490
  %v3166 = vpop.f32.mrb[0].mxu0
  %v3167 = vadd.f32 %v3007, %v3166
  %v3168 = vpop.f32.mrb[0].mxu0
  %v3169 = vpop.f32.mrb[0].mxu0
  %v3170 = vadd.f32 %v3010, %v3169
  %v3171 = vpop.f32.mrb[0].mxu0
  %3172 = vmatprep.mubr.bf16.mxu0 %v1507
  %3173 = vmatmul.mubr.bf16.gmra.mrb[0].mxu0 %v1506
  %v3174 = vpop.f32.mrb[0].mxu0
  %v3175 = vadd.f32 %v3015, %v3174
  %v3176 = vpop.f32.mrb[0].mxu0
  %v3177 = vpop.f32.mrb[0].mxu0
  %v3178 = vpop.f32.mrb[0].mxu0
  %3179 = vdwg.mxu0
  %3180 = vmatprep.subr.bf16.mxu0 0
  %3181 = vmatpush1.bf16.msra.mxu0 %v2348
  %3182 = vmatprep.subr.bf16.mxu0 0
  %3183 = vmatpush1.bf16.msra.mxu0 %v2349
  %3184 = vmatprep.subr.bf16.mxu0 0
  %3185 = vmatpush1.bf16.msra.mxu0 %v2350
  %3186 = vmatprep.subr.bf16.mxu0 0
  %3187 = vmatpush1.bf16.msra.mxu0 %v2351
  %3188 = vmatprep.subr.bf16.mxu0 0
  %3189 = vmatpush1.bf16.msra.mxu0 %v2352
  %3190 = vmatprep.subr.bf16.mxu0 0
  %3191 = vmatpush1.bf16.msra.mxu0 %v2353
  %3192 = vmatprep.subr.bf16.mxu0 0
  %3193 = vmatpush1.bf16.msra.mxu0 %v2354
  %3194 = vmatprep.subr.bf16.mxu0 0
  %3195 = vmatpush1.bf16.msra.mxu0 %v2355
  %3196 = vmatprep.subr.bf16.mxu0 0
  %3197 = vmatpush1.bf16.msra.mxu0 %v2356
  %3198 = vmatprep.subr.bf16.mxu0 0
  %3199 = vmatpush1.bf16.msra.mxu0 %v2357
  %3200 = vmatprep.subr.bf16.mxu0 0
  %3201 = vmatpush1.bf16.msra.mxu0 %v2358
  %3202 = vmatprep.subr.bf16.mxu0 0
  %3203 = vmatpush1.bf16.msra.mxu0 %v2359
  %3204 = vmatprep.subr.bf16.mxu0 0
  %3205 = vmatpush1.bf16.msra.mxu0 %v2360
  %3206 = vmatprep.subr.bf16.mxu0 0
  %3207 = vmatpush1.bf16.msra.mxu0 %v2361
  %3208 = vmatprep.subr.bf16.mxu0 0
  %3209 = vmatpush1.bf16.msra.mxu0 %v2362
  %3210 = vmatprep.subr.bf16.mxu0 0
  %3211 = vmatpush1.bf16.msra.mxu0 %v2363
  %3212 = vmatprep.mubr.bf16.mxu0 %v1269
  %3213 = vmatmul.mubr.bf16.gmra.mrb[0].mxu0 %v1268
  %v3214 = vpop.f32.mrb[0].mxu0
  %v3215 = vadd.f32 %v3055, %v3214
  %v3216 = vpop.f32.mrb[0].mxu0
  %v3217 = vpop.f32.mrb[0].mxu0
  %v3218 = vadd.f32 %v3058, %v3217
  %v3219 = vpop.f32.mrb[0].mxu0
  %3220 = vmatprep.mubr.bf16.mxu0 %v1285
  %3221 = vmatmul.mubr.bf16.gmra.mrb[0].mxu0 %v1284
  %v3222 = vpop.f32.mrb[0].mxu0
  %v3223 = vadd.f32 %v3063, %v3222
  %v3224 = vpop.f32.mrb[0].mxu0
  %v3225 = vpop.f32.mrb[0].mxu0
  %v3226 = vadd.f32 %v3066, %v3225
  %v3227 = vpop.f32.mrb[0].mxu0
  %3228 = vmatprep.mubr.bf16.mxu0 %v1301
  %3229 = vmatmul.mubr.bf16.gmra.mrb[0].mxu0 %v1300
  %v3230 = vpop.f32.mrb[0].mxu0
  %v3231 = vadd.f32 %v3071, %v3230
  %v3232 = vpop.f32.mrb[0].mxu0
  %v3233 = vpop.f32.mrb[0].mxu0
  %v3234 = vadd.f32 %v3074, %v3233
  %v3235 = vpop.f32.mrb[0].mxu0
  %3236 = vmatprep.mubr.bf16.mxu0 %v1317
  %3237 = vmatmul.mubr.bf16.gmra.mrb[0].mxu0 %v1316
  %v3238 = vpop.f32.mrb[0].mxu0
  %v3239 = vadd.f32 %v3079, %v3238
  %v3240 = vpop.f32.mrb[0].mxu0
  %v3241 = vpop.f32.mrb[0].mxu0
  %v3242 = vadd.f32 %v3082, %v3241
  %v3243 = vpop.f32.mrb[0].mxu0
  %3244 = vmatprep.mubr.bf16.mxu0 %v1333
  %3245 = vmatmul.mubr.bf16.gmra.mrb[0].mxu0 %v1332
  %v3246 = vpop.f32.mrb[0].mxu0
  %v3247 = vadd.f32 %v3087, %v3246
  %v3248 = vpop.f32.mrb[0].mxu0
  %v3249 = vpop.f32.mrb[0].mxu0
  %v3250 = vadd.f32 %v3090, %v3249
  %v3251 = vpop.f32.mrb[0].mxu0
  %3252 = vmatprep.mubr.bf16.mxu0 %v1349
  %3253 = vmatmul.mubr.bf16.gmra.mrb[0].mxu0 %v1348
  %v3254 = vpop.f32.mrb[0].mxu0
  %v3255 = vadd.f32 %v3095, %v3254
  %v3256 = vpop.f32.mrb[0].mxu0
  %v3257 = vpop.f32.mrb[0].mxu0
  %v3258 = vadd.f32 %v3098, %v3257
  %v3259 = vpop.f32.mrb[0].mxu0
  %3260 = vmatprep.mubr.bf16.mxu0 %v1365
  %3261 = vmatmul.mubr.bf16.gmra.mrb[0].mxu0 %v1364
  %v3262 = vpop.f32.mrb[0].mxu0
  %v3263 = vadd.f32 %v3103, %v3262
  %v3264 = vpop.f32.mrb[0].mxu0
  %v3265 = vpop.f32.mrb[0].mxu0
  %v3266 = vadd.f32 %v3106, %v3265
  %v3267 = vpop.f32.mrb[0].mxu0
  %3268 = vmatprep.mubr.bf16.mxu0 %v1381
  %3269 = vmatmul.mubr.bf16.gmra.mrb[0].mxu0 %v1380
  %v3270 = vpop.f32.mrb[0].mxu0
  %v3271 = vadd.f32 %v3111, %v3270
  %v3272 = vpop.f32.mrb[0].mxu0
  %v3273 = vpop.f32.mrb[0].mxu0
  %v3274 = vadd.f32 %v3114, %v3273
  %v3275 = vpop.f32.mrb[0].mxu0
  %3276 = vmatprep.mubr.bf16.mxu0 %v1397
  %3277 = vmatmul.mubr.bf16.gmra.mrb[0].mxu0 %v1396
  %v3278 = vpop.f32.mrb[0].mxu0
  %v3279 = vadd.f32 %v3119, %v3278
  %v3280 = vpop.f32.mrb[0].mxu0
  %v3281 = vpop.f32.mrb[0].mxu0
  %v3282 = vadd.f32 %v3122, %v3281
  %v3283 = vpop.f32.mrb[0].mxu0
  %3284 = vmatprep.mubr.bf16.mxu0 %v1413
  %3285 = vmatmul.mubr.bf16.gmra.mrb[0].mxu0 %v1412
  %v3286 = vpop.f32.mrb[0].mxu0
  %v3287 = vadd.f32 %v3127, %v3286
  %v3288 = vpop.f32.mrb[0].mxu0
  %v3289 = vpop.f32.mrb[0].mxu0
  %v3290 = vadd.f32 %v3130, %v3289
  %v3291 = vpop.f32.mrb[0].mxu0
  %3292 = vmatprep.mubr.bf16.mxu0 %v1429
  %3293 = vmatmul.mubr.bf16.gmra.mrb[0].mxu0 %v1428
  %v3294 = vpop.f32.mrb[0].mxu0
  %v3295 = vadd.f32 %v3135, %v3294
  %v3296 = vpop.f32.mrb[0].mxu0
  %v3297 = vpop.f32.mrb[0].mxu0
  %v3298 = vadd.f32 %v3138, %v3297
  %v3299 = vpop.f32.mrb[0].mxu0
  %3300 = vmatprep.mubr.bf16.mxu0 %v1445
  %3301 = vmatmul.mubr.bf16.gmra.mrb[0].mxu0 %v1444
  %v3302 = vpop.f32.mrb[0].mxu0
  %v3303 = vadd.f32 %v3143, %v3302
  %v3304 = vpop.f32.mrb[0].mxu0
  %v3305 = vpop.f32.mrb[0].mxu0
  %v3306 = vadd.f32 %v3146, %v3305
  %v3307 = vpop.f32.mrb[0].mxu0
  %3308 = vmatprep.mubr.bf16.mxu0 %v1461
  %3309 = vmatmul.mubr.bf16.gmra.mrb[0].mxu0 %v1460
  %v3310 = vpop.f32.mrb[0].mxu0
  %v3311 = vadd.f32 %v3151, %v3310
  %v3312 = vpop.f32.mrb[0].mxu0
  %v3313 = vpop.f32.mrb[0].mxu0
  %v3314 = vadd.f32 %v3154, %v3313
  %v3315 = vpop.f32.mrb[0].mxu0
  %3316 = vmatprep.mubr.bf16.mxu0 %v1477
  %3317 = vmatmul.mubr.bf16.gmra.mrb[0].mxu0 %v1476
  %v3318 = vpop.f32.mrb[0].mxu0
  %v3319 = vadd.f32 %v3159, %v3318
  %v3320 = vpop.f32.mrb[0].mxu0
  %v3321 = vpop.f32.mrb[0].mxu0
  %v3322 = vadd.f32 %v3162, %v3321
  %v3323 = vpop.f32.mrb[0].mxu0
  %3324 = vmatprep.mubr.bf16.mxu0 %v1493
  %3325 = vmatmul.mubr.bf16.gmra.mrb[0].mxu0 %v1492
  %v3326 = vpop.f32.mrb[0].mxu0
  %v3327 = vadd.f32 %v3167, %v3326
  %v3328 = vpop.f32.mrb[0].mxu0
  %v3329 = vpop.f32.mrb[0].mxu0
  %v3330 = vadd.f32 %v3170, %v3329
  %v3331 = vpop.f32.mrb[0].mxu0
  %3332 = vmatprep.mubr.bf16.mxu0 %v1509
  %3333 = vmatmul.mubr.bf16.gmra.mrb[0].mxu0 %v1508
  %v3334 = vpop.f32.mrb[0].mxu0
  %v3335 = vadd.f32 %v3175, %v3334
  %v3336 = vpop.f32.mrb[0].mxu0
  %v3337 = vpop.f32.mrb[0].mxu0
  %v3338 = vpop.f32.mrb[0].mxu0
  %3339 = vdwg.mxu0
  %3340 = vmatprep.subr.bf16.mxu0 0
  %3341 = vmatpush1.bf16.msra.mxu0 %v2364
  %3342 = vmatprep.subr.bf16.mxu0 0
  %3343 = vmatpush1.bf16.msra.mxu0 %v2365
  %3344 = vmatprep.subr.bf16.mxu0 0
  %3345 = vmatpush1.bf16.msra.mxu0 %v2366
  %3346 = vmatprep.subr.bf16.mxu0 0
  %3347 = vmatpush1.bf16.msra.mxu0 %v2367
  %3348 = vmatprep.subr.bf16.mxu0 0
  %3349 = vmatpush1.bf16.msra.mxu0 %v2368
  %3350 = vmatprep.subr.bf16.mxu0 0
  %3351 = vmatpush1.bf16.msra.mxu0 %v2369
  %3352 = vmatprep.subr.bf16.mxu0 0
  %3353 = vmatpush1.bf16.msra.mxu0 %v2370
  %3354 = vmatprep.subr.bf16.mxu0 0
  %3355 = vmatpush1.bf16.msra.mxu0 %v2371
  %3356 = vmatprep.subr.bf16.mxu0 0
  %3357 = vmatpush1.bf16.msra.mxu0 %v2372
  %3358 = vmatprep.subr.bf16.mxu0 0
  %3359 = vmatpush1.bf16.msra.mxu0 %v2373
  %3360 = vmatprep.subr.bf16.mxu0 0
  %3361 = vmatpush1.bf16.msra.mxu0 %v2374
  %3362 = vmatprep.subr.bf16.mxu0 0
  %3363 = vmatpush1.bf16.msra.mxu0 %v2375
  %3364 = vmatprep.subr.bf16.mxu0 0
  %3365 = vmatpush1.bf16.msra.mxu0 %v2376
  %3366 = vmatprep.subr.bf16.mxu0 0
  %3367 = vmatpush1.bf16.msra.mxu0 %v2377
  %3368 = vmatprep.subr.bf16.mxu0 0
  %3369 = vmatpush1.bf16.msra.mxu0 %v2378
  %3370 = vmatprep.subr.bf16.mxu0 0
  %3371 = vmatpush1.bf16.msra.mxu0 %v2379
  %3372 = vmatprep.mubr.bf16.mxu0 %v1271
  %3373 = vmatmul.mubr.bf16.gmra.mrb[0].mxu0 %v1270
  %v3374 = vpop.f32.mrb[0].mxu0
  %v3375 = vadd.f32 %v3215, %v3374
  %v3376 = vpop.f32.mrb[0].mxu0
  %v3377 = vpop.f32.mrb[0].mxu0
  %v3378 = vadd.f32 %v3218, %v3377
  %v3379 = vpop.f32.mrb[0].mxu0
  %3380 = vmatprep.mubr.bf16.mxu0 %v1287
  %3381 = vmatmul.mubr.bf16.gmra.mrb[0].mxu0 %v1286
  %v3382 = vpop.f32.mrb[0].mxu0
  %v3383 = vadd.f32 %v3223, %v3382
  %v3384 = vpop.f32.mrb[0].mxu0
  %v3385 = vpop.f32.mrb[0].mxu0
  %v3386 = vadd.f32 %v3226, %v3385
  %v3387 = vpop.f32.mrb[0].mxu0
  %3388 = vmatprep.mubr.bf16.mxu0 %v1303
  %3389 = vmatmul.mubr.bf16.gmra.mrb[0].mxu0 %v1302
  %v3390 = vpop.f32.mrb[0].mxu0
  %v3391 = vadd.f32 %v3231, %v3390
  %v3392 = vpop.f32.mrb[0].mxu0
  %v3393 = vpop.f32.mrb[0].mxu0
  %v3394 = vadd.f32 %v3234, %v3393
  %v3395 = vpop.f32.mrb[0].mxu0
  %3396 = vmatprep.mubr.bf16.mxu0 %v1319
  %3397 = vmatmul.mubr.bf16.gmra.mrb[0].mxu0 %v1318
  %v3398 = vpop.f32.mrb[0].mxu0
  %v3399 = vadd.f32 %v3239, %v3398
  %v3400 = vpop.f32.mrb[0].mxu0
  %v3401 = vpop.f32.mrb[0].mxu0
  %v3402 = vadd.f32 %v3242, %v3401
  %v3403 = vpop.f32.mrb[0].mxu0
  %3404 = vmatprep.mubr.bf16.mxu0 %v1335
  %3405 = vmatmul.mubr.bf16.gmra.mrb[0].mxu0 %v1334
  %v3406 = vpop.f32.mrb[0].mxu0
  %v3407 = vadd.f32 %v3247, %v3406
  %v3408 = vpop.f32.mrb[0].mxu0
  %v3409 = vpop.f32.mrb[0].mxu0
  %v3410 = vadd.f32 %v3250, %v3409
  %v3411 = vpop.f32.mrb[0].mxu0
  %3412 = vmatprep.mubr.bf16.mxu0 %v1351
  %3413 = vmatmul.mubr.bf16.gmra.mrb[0].mxu0 %v1350
  %v3414 = vpop.f32.mrb[0].mxu0
  %v3415 = vadd.f32 %v3255, %v3414
  %v3416 = vpop.f32.mrb[0].mxu0
  %v3417 = vpop.f32.mrb[0].mxu0
  %v3418 = vadd.f32 %v3258, %v3417
  %v3419 = vpop.f32.mrb[0].mxu0
  %3420 = vmatprep.mubr.bf16.mxu0 %v1367
  %3421 = vmatmul.mubr.bf16.gmra.mrb[0].mxu0 %v1366
  %v3422 = vpop.f32.mrb[0].mxu0
  %v3423 = vadd.f32 %v3263, %v3422
  %v3424 = vpop.f32.mrb[0].mxu0
  %v3425 = vpop.f32.mrb[0].mxu0
  %v3426 = vadd.f32 %v3266, %v3425
  %v3427 = vpop.f32.mrb[0].mxu0
  %3428 = vmatprep.mubr.bf16.mxu0 %v1383
  %3429 = vmatmul.mubr.bf16.gmra.mrb[0].mxu0 %v1382
  %v3430 = vpop.f32.mrb[0].mxu0
  %v3431 = vadd.f32 %v3271, %v3430
  %v3432 = vpop.f32.mrb[0].mxu0
  %v3433 = vpop.f32.mrb[0].mxu0
  %v3434 = vadd.f32 %v3274, %v3433
  %v3435 = vpop.f32.mrb[0].mxu0
  %3436 = vmatprep.mubr.bf16.mxu0 %v1399
  %3437 = vmatmul.mubr.bf16.gmra.mrb[0].mxu0 %v1398
  %v3438 = vpop.f32.mrb[0].mxu0
  %v3439 = vadd.f32 %v3279, %v3438
  %v3440 = vpop.f32.mrb[0].mxu0
  %v3441 = vpop.f32.mrb[0].mxu0
  %v3442 = vadd.f32 %v3282, %v3441
  %v3443 = vpop.f32.mrb[0].mxu0
  %3444 = vmatprep.mubr.bf16.mxu0 %v1415
  %3445 = vmatmul.mubr.bf16.gmra.mrb[0].mxu0 %v1414
  %v3446 = vpop.f32.mrb[0].mxu0
  %v3447 = vadd.f32 %v3287, %v3446
  %v3448 = vpop.f32.mrb[0].mxu0
  %v3449 = vpop.f32.mrb[0].mxu0
  %v3450 = vadd.f32 %v3290, %v3449
  %v3451 = vpop.f32.mrb[0].mxu0
  %3452 = vmatprep.mubr.bf16.mxu0 %v1431
  %3453 = vmatmul.mubr.bf16.gmra.mrb[0].mxu0 %v1430
  %v3454 = vpop.f32.mrb[0].mxu0
  %v3455 = vadd.f32 %v3295, %v3454
  %v3456 = vpop.f32.mrb[0].mxu0
  %v3457 = vpop.f32.mrb[0].mxu0
  %v3458 = vadd.f32 %v3298, %v3457
  %v3459 = vpop.f32.mrb[0].mxu0
  %3460 = vmatprep.mubr.bf16.mxu0 %v1447
  %3461 = vmatmul.mubr.bf16.gmra.mrb[0].mxu0 %v1446
  %v3462 = vpop.f32.mrb[0].mxu0
  %v3463 = vadd.f32 %v3303, %v3462
  %v3464 = vpop.f32.mrb[0].mxu0
  %v3465 = vpop.f32.mrb[0].mxu0
  %v3466 = vadd.f32 %v3306, %v3465
  %v3467 = vpop.f32.mrb[0].mxu0
  %3468 = vmatprep.mubr.bf16.mxu0 %v1463
  %3469 = vmatmul.mubr.bf16.gmra.mrb[0].mxu0 %v1462
  %v3470 = vpop.f32.mrb[0].mxu0
  %v3471 = vadd.f32 %v3311, %v3470
  %v3472 = vpop.f32.mrb[0].mxu0
  %v3473 = vpop.f32.mrb[0].mxu0
  %v3474 = vadd.f32 %v3314, %v3473
  %v3475 = vpop.f32.mrb[0].mxu0
  %3476 = vmatprep.mubr.bf16.mxu0 %v1479
  %3477 = vmatmul.mubr.bf16.gmra.mrb[0].mxu0 %v1478
  %v3478 = vpop.f32.mrb[0].mxu0
  %v3479 = vadd.f32 %v3319, %v3478
  %v3480 = vpop.f32.mrb[0].mxu0
  %v3481 = vpop.f32.mrb[0].mxu0
  %v3482 = vadd.f32 %v3322, %v3481
  %v3483 = vpop.f32.mrb[0].mxu0
  %3484 = vmatprep.mubr.bf16.mxu0 %v1495
  %3485 = vmatmul.mubr.bf16.gmra.mrb[0].mxu0 %v1494
  %v3486 = vpop.f32.mrb[0].mxu0
  %v3487 = vadd.f32 %v3327, %v3486
  %v3488 = vpop.f32.mrb[0].mxu0
  %v3489 = vpop.f32.mrb[0].mxu0
  %v3490 = vadd.f32 %v3330, %v3489
  %v3491 = vpop.f32.mrb[0].mxu0
  %3492 = vmatprep.mubr.bf16.mxu0 %v1511
  %3493 = vmatmul.mubr.bf16.gmra.mrb[0].mxu0 %v1510
  %v3494 = vpop.f32.mrb[0].mxu0
  %v3495 = vadd.f32 %v3335, %v3494
  %v3496 = vpop.f32.mrb[0].mxu0
  %v3497 = vpop.f32.mrb[0].mxu0
  %v3498 = vpop.f32.mrb[0].mxu0
  %3499 = vdwg.mxu0
  %3500 = vmatprep.subr.bf16.mxu0 0
  %3501 = vmatpush1.bf16.msra.mxu0 %v2380
  %3502 = vmatprep.subr.bf16.mxu0 0
  %3503 = vmatpush1.bf16.msra.mxu0 %v2381
  %3504 = vmatprep.subr.bf16.mxu0 0
  %3505 = vmatpush1.bf16.msra.mxu0 %v2382
  %3506 = vmatprep.subr.bf16.mxu0 0
  %3507 = vmatpush1.bf16.msra.mxu0 %v2383
  %3508 = vmatprep.subr.bf16.mxu0 0
  %3509 = vmatpush1.bf16.msra.mxu0 %v2384
  %3510 = vmatprep.subr.bf16.mxu0 0
  %3511 = vmatpush1.bf16.msra.mxu0 %v2385
  %3512 = vmatprep.subr.bf16.mxu0 0
  %3513 = vmatpush1.bf16.msra.mxu0 %v2386
  %3514 = vmatprep.subr.bf16.mxu0 0
  %3515 = vmatpush1.bf16.msra.mxu0 %v2387
  %3516 = vmatprep.subr.bf16.mxu0 0
  %3517 = vmatpush1.bf16.msra.mxu0 %v2388
  %3518 = vmatprep.subr.bf16.mxu0 0
  %3519 = vmatpush1.bf16.msra.mxu0 %v2389
  %3520 = vmatprep.subr.bf16.mxu0 0
  %3521 = vmatpush1.bf16.msra.mxu0 %v2390
  %3522 = vmatprep.subr.bf16.mxu0 0
  %3523 = vmatpush1.bf16.msra.mxu0 %v2391
  %3524 = vmatprep.subr.bf16.mxu0 0
  %3525 = vmatpush1.bf16.msra.mxu0 %v2392
  %3526 = vmatprep.subr.bf16.mxu0 0
  %3527 = vmatpush1.bf16.msra.mxu0 %v2393
  %3528 = vmatprep.subr.bf16.mxu0 0
  %3529 = vmatpush1.bf16.msra.mxu0 %v2394
  %3530 = vmatprep.subr.bf16.mxu0 0
  %3531 = vmatpush1.bf16.msra.mxu0 %v2395
  %3532 = vmatprep.mubr.bf16.mxu0 %v1273
  %3533 = vmatmul.mubr.bf16.gmra.mrb[0].mxu0 %v1272
  %v3534 = vpop.f32.mrb[0].mxu0
  %v3535 = vadd.f32 %v3375, %v3534
  %v3536 = vpop.f32.mrb[0].mxu0
  %v3537 = vpop.f32.mrb[0].mxu0
  %v3538 = vadd.f32 %v3378, %v3537
  %v3539 = vpop.f32.mrb[0].mxu0
  %3540 = vmatprep.mubr.bf16.mxu0 %v1289
  %3541 = vmatmul.mubr.bf16.gmra.mrb[0].mxu0 %v1288
  %v3542 = vpop.f32.mrb[0].mxu0
  %v3543 = vadd.f32 %v3383, %v3542
  %v3544 = vpop.f32.mrb[0].mxu0
  %v3545 = vpop.f32.mrb[0].mxu0
  %v3546 = vadd.f32 %v3386, %v3545
  %v3547 = vpop.f32.mrb[0].mxu0
  %3548 = vmatprep.mubr.bf16.mxu0 %v1305
  %3549 = vmatmul.mubr.bf16.gmra.mrb[0].mxu0 %v1304
  %v3550 = vpop.f32.mrb[0].mxu0
  %v3551 = vadd.f32 %v3391, %v3550
  %v3552 = vpop.f32.mrb[0].mxu0
  %v3553 = vpop.f32.mrb[0].mxu0
  %v3554 = vadd.f32 %v3394, %v3553
  %v3555 = vpop.f32.mrb[0].mxu0
  %3556 = vmatprep.mubr.bf16.mxu0 %v1321
  %3557 = vmatmul.mubr.bf16.gmra.mrb[0].mxu0 %v1320
  %v3558 = vpop.f32.mrb[0].mxu0
  %v3559 = vadd.f32 %v3399, %v3558
  %v3560 = vpop.f32.mrb[0].mxu0
  %v3561 = vpop.f32.mrb[0].mxu0
  %v3562 = vadd.f32 %v3402, %v3561
  %v3563 = vpop.f32.mrb[0].mxu0
  %3564 = vmatprep.mubr.bf16.mxu0 %v1337
  %3565 = vmatmul.mubr.bf16.gmra.mrb[0].mxu0 %v1336
  %v3566 = vpop.f32.mrb[0].mxu0
  %v3567 = vadd.f32 %v3407, %v3566
  %v3568 = vpop.f32.mrb[0].mxu0
  %v3569 = vpop.f32.mrb[0].mxu0
  %v3570 = vadd.f32 %v3410, %v3569
  %v3571 = vpop.f32.mrb[0].mxu0
  %3572 = vmatprep.mubr.bf16.mxu0 %v1353
  %3573 = vmatmul.mubr.bf16.gmra.mrb[0].mxu0 %v1352
  %v3574 = vpop.f32.mrb[0].mxu0
  %v3575 = vadd.f32 %v3415, %v3574
  %v3576 = vpop.f32.mrb[0].mxu0
  %v3577 = vpop.f32.mrb[0].mxu0
  %v3578 = vadd.f32 %v3418, %v3577
  %v3579 = vpop.f32.mrb[0].mxu0
  %3580 = vmatprep.mubr.bf16.mxu0 %v1369
  %3581 = vmatmul.mubr.bf16.gmra.mrb[0].mxu0 %v1368
  %v3582 = vpop.f32.mrb[0].mxu0
  %v3583 = vadd.f32 %v3423, %v3582
  %v3584 = vpop.f32.mrb[0].mxu0
  %v3585 = vpop.f32.mrb[0].mxu0
  %v3586 = vadd.f32 %v3426, %v3585
  %v3587 = vpop.f32.mrb[0].mxu0
  %3588 = vmatprep.mubr.bf16.mxu0 %v1385
  %3589 = vmatmul.mubr.bf16.gmra.mrb[0].mxu0 %v1384
  %v3590 = vpop.f32.mrb[0].mxu0
  %v3591 = vadd.f32 %v3431, %v3590
  %v3592 = vpop.f32.mrb[0].mxu0
  %v3593 = vpop.f32.mrb[0].mxu0
  %v3594 = vadd.f32 %v3434, %v3593
  %v3595 = vpop.f32.mrb[0].mxu0
  %3596 = vmatprep.mubr.bf16.mxu0 %v1401
  %3597 = vmatmul.mubr.bf16.gmra.mrb[0].mxu0 %v1400
  %v3598 = vpop.f32.mrb[0].mxu0
  %v3599 = vadd.f32 %v3439, %v3598
  %v3600 = vpop.f32.mrb[0].mxu0
  %v3601 = vpop.f32.mrb[0].mxu0
  %v3602 = vadd.f32 %v3442, %v3601
  %v3603 = vpop.f32.mrb[0].mxu0
  %3604 = vmatprep.mubr.bf16.mxu0 %v1417
  %3605 = vmatmul.mubr.bf16.gmra.mrb[0].mxu0 %v1416
  %v3606 = vpop.f32.mrb[0].mxu0
  %v3607 = vadd.f32 %v3447, %v3606
  %v3608 = vpop.f32.mrb[0].mxu0
  %v3609 = vpop.f32.mrb[0].mxu0
  %v3610 = vadd.f32 %v3450, %v3609
  %v3611 = vpop.f32.mrb[0].mxu0
  %3612 = vmatprep.mubr.bf16.mxu0 %v1433
  %3613 = vmatmul.mubr.bf16.gmra.mrb[0].mxu0 %v1432
  %v3614 = vpop.f32.mrb[0].mxu0
  %v3615 = vadd.f32 %v3455, %v3614
  %v3616 = vpop.f32.mrb[0].mxu0
  %v3617 = vpop.f32.mrb[0].mxu0
  %v3618 = vadd.f32 %v3458, %v3617
  %v3619 = vpop.f32.mrb[0].mxu0
  %3620 = vmatprep.mubr.bf16.mxu0 %v1449
  %3621 = vmatmul.mubr.bf16.gmra.mrb[0].mxu0 %v1448
  %v3622 = vpop.f32.mrb[0].mxu0
  %v3623 = vadd.f32 %v3463, %v3622
  %v3624 = vpop.f32.mrb[0].mxu0
  %v3625 = vpop.f32.mrb[0].mxu0
  %v3626 = vadd.f32 %v3466, %v3625
  %v3627 = vpop.f32.mrb[0].mxu0
  %3628 = vmatprep.mubr.bf16.mxu0 %v1465
  %3629 = vmatmul.mubr.bf16.gmra.mrb[0].mxu0 %v1464
  %v3630 = vpop.f32.mrb[0].mxu0
  %v3631 = vadd.f32 %v3471, %v3630
  %v3632 = vpop.f32.mrb[0].mxu0
  %v3633 = vpop.f32.mrb[0].mxu0
  %v3634 = vadd.f32 %v3474, %v3633
  %v3635 = vpop.f32.mrb[0].mxu0
  %3636 = vmatprep.mubr.bf16.mxu0 %v1481
  %3637 = vmatmul.mubr.bf16.gmra.mrb[0].mxu0 %v1480
  %v3638 = vpop.f32.mrb[0].mxu0
  %v3639 = vadd.f32 %v3479, %v3638
  %v3640 = vpop.f32.mrb[0].mxu0
  %v3641 = vpop.f32.mrb[0].mxu0
  %v3642 = vadd.f32 %v3482, %v3641
  %v3643 = vpop.f32.mrb[0].mxu0
  %3644 = vmatprep.mubr.bf16.mxu0 %v1497
  %3645 = vmatmul.mubr.bf16.gmra.mrb[0].mxu0 %v1496
  %v3646 = vpop.f32.mrb[0].mxu0
  %v3647 = vadd.f32 %v3487, %v3646
  %v3648 = vpop.f32.mrb[0].mxu0
  %v3649 = vpop.f32.mrb[0].mxu0
  %v3650 = vadd.f32 %v3490, %v3649
  %v3651 = vpop.f32.mrb[0].mxu0
  %3652 = vmatprep.mubr.bf16.mxu0 %v1513
  %3653 = vmatmul.mubr.bf16.gmra.mrb[0].mxu0 %v1512
  %v3654 = vpop.f32.mrb[0].mxu0
  %v3655 = vadd.f32 %v3495, %v3654
  %v3656 = vpop.f32.mrb[0].mxu0
  %v3657 = vpop.f32.mrb[0].mxu0
  %v3658 = vpop.f32.mrb[0].mxu0
  %3659 = vdwg.mxu0
  %3660 = vmatprep.subr.bf16.mxu0 0
  %3661 = vmatpush1.bf16.msra.mxu0 %v2396
  %3662 = vmatprep.subr.bf16.mxu0 0
  %3663 = vmatpush1.bf16.msra.mxu0 %v2397
  %3664 = vmatprep.subr.bf16.mxu0 0
  %3665 = vmatpush1.bf16.msra.mxu0 %v2398
  %3666 = vmatprep.subr.bf16.mxu0 0
  %3667 = vmatpush1.bf16.msra.mxu0 %v2399
  %3668 = vmatprep.subr.bf16.mxu0 0
  %3669 = vmatpush1.bf16.msra.mxu0 %v2400
  %3670 = vmatprep.subr.bf16.mxu0 0
  %3671 = vmatpush1.bf16.msra.mxu0 %v2401
  %3672 = vmatprep.subr.bf16.mxu0 0
  %3673 = vmatpush1.bf16.msra.mxu0 %v2402
  %3674 = vmatprep.subr.bf16.mxu0 0
  %3675 = vmatpush1.bf16.msra.mxu0 %v2403
  %3676 = vmatprep.subr.bf16.mxu0 0
  %3677 = vmatpush1.bf16.msra.mxu0 %v2404
  %3678 = vmatprep.subr.bf16.mxu0 0
  %3679 = vmatpush1.bf16.msra.mxu0 %v2405
  %3680 = vmatprep.subr.bf16.mxu0 0
  %3681 = vmatpush1.bf16.msra.mxu0 %v2406
  %3682 = vmatprep.subr.bf16.mxu0 0
  %3683 = vmatpush1.bf16.msra.mxu0 %v2407
  %3684 = vmatprep.subr.bf16.mxu0 0
  %3685 = vmatpush1.bf16.msra.mxu0 %v2408
  %3686 = vmatprep.subr.bf16.mxu0 0
  %3687 = vmatpush1.bf16.msra.mxu0 %v2409
  %3688 = vmatprep.subr.bf16.mxu0 0
  %3689 = vmatpush1.bf16.msra.mxu0 %v2410
  %3690 = vmatprep.subr.bf16.mxu0 0
  %3691 = vmatpush1.bf16.msra.mxu0 %v2411
  %3692 = vmatprep.mubr.bf16.mxu0 %v1275
  %3693 = vmatmul.mubr.bf16.gmra.mrb[0].mxu0 %v1274
  %v3694 = vpop.f32.mrb[0].mxu0
  %v3695 = vadd.f32 %v3535, %v3694
  %v3696 = vpop.f32.mrb[0].mxu0
  %v3697 = vpop.f32.mrb[0].mxu0
  %v3698 = vadd.f32 %v3538, %v3697
  %v3699 = vpop.f32.mrb[0].mxu0
  %3700 = vmatprep.mubr.bf16.mxu0 %v1291
  %3701 = vmatmul.mubr.bf16.gmra.mrb[0].mxu0 %v1290
  %v3702 = vpop.f32.mrb[0].mxu0
  %v3703 = vadd.f32 %v3543, %v3702
  %v3704 = vpop.f32.mrb[0].mxu0
  %v3705 = vpop.f32.mrb[0].mxu0
  %v3706 = vadd.f32 %v3546, %v3705
  %v3707 = vpop.f32.mrb[0].mxu0
  %3708 = vmatprep.mubr.bf16.mxu0 %v1307
  %3709 = vmatmul.mubr.bf16.gmra.mrb[0].mxu0 %v1306
  %v3710 = vpop.f32.mrb[0].mxu0
  %v3711 = vadd.f32 %v3551, %v3710
  %v3712 = vpop.f32.mrb[0].mxu0
  %v3713 = vpop.f32.mrb[0].mxu0
  %v3714 = vadd.f32 %v3554, %v3713
  %v3715 = vpop.f32.mrb[0].mxu0
  %3716 = vmatprep.mubr.bf16.mxu0 %v1323
  %3717 = vmatmul.mubr.bf16.gmra.mrb[0].mxu0 %v1322
  %v3718 = vpop.f32.mrb[0].mxu0
  %v3719 = vadd.f32 %v3559, %v3718
  %v3720 = vpop.f32.mrb[0].mxu0
  %v3721 = vpop.f32.mrb[0].mxu0
  %v3722 = vadd.f32 %v3562, %v3721
  %v3723 = vpop.f32.mrb[0].mxu0
  %3724 = vmatprep.mubr.bf16.mxu0 %v1339
  %3725 = vmatmul.mubr.bf16.gmra.mrb[0].mxu0 %v1338
  %v3726 = vpop.f32.mrb[0].mxu0
  %v3727 = vadd.f32 %v3567, %v3726
  %v3728 = vpop.f32.mrb[0].mxu0
  %v3729 = vpop.f32.mrb[0].mxu0
  %v3730 = vadd.f32 %v3570, %v3729
  %v3731 = vpop.f32.mrb[0].mxu0
  %3732 = vmatprep.mubr.bf16.mxu0 %v1355
  %3733 = vmatmul.mubr.bf16.gmra.mrb[0].mxu0 %v1354
  %v3734 = vpop.f32.mrb[0].mxu0
  %v3735 = vadd.f32 %v3575, %v3734
  %v3736 = vpop.f32.mrb[0].mxu0
  %v3737 = vpop.f32.mrb[0].mxu0
  %v3738 = vadd.f32 %v3578, %v3737
  %v3739 = vpop.f32.mrb[0].mxu0
  %3740 = vmatprep.mubr.bf16.mxu0 %v1371
  %3741 = vmatmul.mubr.bf16.gmra.mrb[0].mxu0 %v1370
  %v3742 = vpop.f32.mrb[0].mxu0
  %v3743 = vadd.f32 %v3583, %v3742
  %v3744 = vpop.f32.mrb[0].mxu0
  %v3745 = vpop.f32.mrb[0].mxu0
  %v3746 = vadd.f32 %v3586, %v3745
  %v3747 = vpop.f32.mrb[0].mxu0
  %3748 = vmatprep.mubr.bf16.mxu0 %v1387
  %3749 = vmatmul.mubr.bf16.gmra.mrb[0].mxu0 %v1386
  %v3750 = vpop.f32.mrb[0].mxu0
  %v3751 = vadd.f32 %v3591, %v3750
  %v3752 = vpop.f32.mrb[0].mxu0
  %v3753 = vpop.f32.mrb[0].mxu0
  %v3754 = vadd.f32 %v3594, %v3753
  %v3755 = vpop.f32.mrb[0].mxu0
  %3756 = vmatprep.mubr.bf16.mxu0 %v1403
  %3757 = vmatmul.mubr.bf16.gmra.mrb[0].mxu0 %v1402
  %v3758 = vpop.f32.mrb[0].mxu0
  %v3759 = vadd.f32 %v3599, %v3758
  %v3760 = vpop.f32.mrb[0].mxu0
  %v3761 = vpop.f32.mrb[0].mxu0
  %v3762 = vadd.f32 %v3602, %v3761
  %v3763 = vpop.f32.mrb[0].mxu0
  %3764 = vmatprep.mubr.bf16.mxu0 %v1419
  %3765 = vmatmul.mubr.bf16.gmra.mrb[0].mxu0 %v1418
  %v3766 = vpop.f32.mrb[0].mxu0
  %v3767 = vadd.f32 %v3607, %v3766
  %v3768 = vpop.f32.mrb[0].mxu0
  %v3769 = vpop.f32.mrb[0].mxu0
  %v3770 = vadd.f32 %v3610, %v3769
  %v3771 = vpop.f32.mrb[0].mxu0
  %3772 = vmatprep.mubr.bf16.mxu0 %v1435
  %3773 = vmatmul.mubr.bf16.gmra.mrb[0].mxu0 %v1434
  %v3774 = vpop.f32.mrb[0].mxu0
  %v3775 = vadd.f32 %v3615, %v3774
  %v3776 = vpop.f32.mrb[0].mxu0
  %v3777 = vpop.f32.mrb[0].mxu0
  %v3778 = vadd.f32 %v3618, %v3777
  %v3779 = vpop.f32.mrb[0].mxu0
  %3780 = vmatprep.mubr.bf16.mxu0 %v1451
  %3781 = vmatmul.mubr.bf16.gmra.mrb[0].mxu0 %v1450
  %v3782 = vpop.f32.mrb[0].mxu0
  %v3783 = vadd.f32 %v3623, %v3782
  %v3784 = vpop.f32.mrb[0].mxu0
  %v3785 = vpop.f32.mrb[0].mxu0
  %v3786 = vadd.f32 %v3626, %v3785
  %v3787 = vpop.f32.mrb[0].mxu0
  %3788 = vmatprep.mubr.bf16.mxu0 %v1467
  %3789 = vmatmul.mubr.bf16.gmra.mrb[0].mxu0 %v1466
  %v3790 = vpop.f32.mrb[0].mxu0
  %v3791 = vadd.f32 %v3631, %v3790
  %v3792 = vpop.f32.mrb[0].mxu0
  %v3793 = vpop.f32.mrb[0].mxu0
  %v3794 = vadd.f32 %v3634, %v3793
  %v3795 = vpop.f32.mrb[0].mxu0
  %3796 = vmatprep.mubr.bf16.mxu0 %v1483
  %3797 = vmatmul.mubr.bf16.gmra.mrb[0].mxu0 %v1482
  %v3798 = vpop.f32.mrb[0].mxu0
  %v3799 = vadd.f32 %v3639, %v3798
  %v3800 = vpop.f32.mrb[0].mxu0
  %v3801 = vpop.f32.mrb[0].mxu0
  %v3802 = vadd.f32 %v3642, %v3801
  %v3803 = vpop.f32.mrb[0].mxu0
  %3804 = vmatprep.mubr.bf16.mxu0 %v1499
  %3805 = vmatmul.mubr.bf16.gmra.mrb[0].mxu0 %v1498
  %v3806 = vpop.f32.mrb[0].mxu0
  %v3807 = vadd.f32 %v3647, %v3806
  %v3808 = vpop.f32.mrb[0].mxu0
  %v3809 = vpop.f32.mrb[0].mxu0
  %v3810 = vadd.f32 %v3650, %v3809
  %v3811 = vpop.f32.mrb[0].mxu0
  %3812 = vmatprep.mubr.bf16.mxu0 %v1515
  %3813 = vmatmul.mubr.bf16.gmra.mrb[0].mxu0 %v1514
  %v3814 = vpop.f32.mrb[0].mxu0
  %v3815 = vadd.f32 %v3655, %v3814
  %v3816 = vpop.f32.mrb[0].mxu0
  %v3817 = vpop.f32.mrb[0].mxu0
  %v3818 = vpop.f32.mrb[0].mxu0
  %3819 = vdwg.mxu0
  %vm3820 = vcmp.ge.f32.partialorder %v3695, 0.0
  %vm3821 = vcmp.ge.f32.partialorder %v3698, 0.0
  %vm3822 = vcmp.ge.f32.partialorder %v3703, 0.0
  %vm3823 = vcmp.ge.f32.partialorder %v3706, 0.0
  %vm3824 = vcmp.ge.f32.partialorder %v3711, 0.0
  %vm3825 = vcmp.ge.f32.partialorder %v3714, 0.0
  %vm3826 = vcmp.ge.f32.partialorder %v3719, 0.0
  %vm3827 = vcmp.ge.f32.partialorder %v3722, 0.0
  %vm3828 = vcmp.ge.f32.partialorder %v3727, 0.0
  %vm3829 = vcmp.ge.f32.partialorder %v3730, 0.0
  %vm3830 = vcmp.ge.f32.partialorder %v3735, 0.0
  %vm3831 = vcmp.ge.f32.partialorder %v3738, 0.0
  %vm3832 = vcmp.ge.f32.partialorder %v3743, 0.0
  %vm3833 = vcmp.ge.f32.partialorder %v3746, 0.0
  %vm3834 = vcmp.ge.f32.partialorder %v3751, 0.0
  %vm3835 = vcmp.ge.f32.partialorder %v3754, 0.0
  %vm3836 = vcmp.ge.f32.partialorder %v3759, 0.0
  %vm3837 = vcmp.ge.f32.partialorder %v3762, 0.0
  %vm3838 = vcmp.ge.f32.partialorder %v3767, 0.0
  %vm3839 = vcmp.ge.f32.partialorder %v3770, 0.0
  %vm3840 = vcmp.ge.f32.partialorder %v3775, 0.0
  %vm3841 = vcmp.ge.f32.partialorder %v3778, 0.0
  %vm3842 = vcmp.ge.f32.partialorder %v3783, 0.0
  %vm3843 = vcmp.ge.f32.partialorder %v3786, 0.0
  %vm3844 = vcmp.ge.f32.partialorder %v3791, 0.0
  %vm3845 = vcmp.ge.f32.partialorder %v3794, 0.0
  %vm3846 = vcmp.ge.f32.partialorder %v3799, 0.0
  %vm3847 = vcmp.ge.f32.partialorder %v3802, 0.0
  %vm3848 = vcmp.ge.f32.partialorder %v3807, 0.0
  %vm3849 = vcmp.ge.f32.partialorder %v3810, 0.0
  %vm3850 = vcmp.ge.f32.partialorder %v3815, 0.0
  %v3851 = vmul.f32 %v3695, 0.2
  %v3852 = vmul.f32 %v3698, 0.2
  %v3853 = vmul.f32 %v3703, 0.2
  %v3854 = vmul.f32 %v3706, 0.2
  %v3855 = vmul.f32 %v3711, 0.2
  %v3856 = vmul.f32 %v3714, 0.2
  %v3857 = vmul.f32 %v3719, 0.2
  %v3858 = vmul.f32 %v3722, 0.2
  %v3859 = vmul.f32 %v3727, 0.2
  %v3860 = vmul.f32 %v3730, 0.2
  %v3861 = vmul.f32 %v3735, 0.2
  %v3862 = vmul.f32 %v3738, 0.2
  %v3863 = vmul.f32 %v3743, 0.2
  %v3864 = vmul.f32 %v3746, 0.2
  %v3865 = vmul.f32 %v3751, 0.2
  %v3866 = vmul.f32 %v3754, 0.2
  %v3867 = vmul.f32 %v3759, 0.2
  %v3868 = vmul.f32 %v3762, 0.2
  %v3869 = vmul.f32 %v3767, 0.2
  %v3870 = vmul.f32 %v3770, 0.2
  %v3871 = vmul.f32 %v3775, 0.2
  %v3872 = vmul.f32 %v3778, 0.2
  %v3873 = vmul.f32 %v3783, 0.2
  %v3874 = vmul.f32 %v3786, 0.2
  %v3875 = vmul.f32 %v3791, 0.2
  %v3876 = vmul.f32 %v3794, 0.2
  %v3877 = vmul.f32 %v3799, 0.2
  %v3878 = vmul.f32 %v3802, 0.2
  %v3879 = vmul.f32 %v3807, 0.2
  %v3880 = vmul.f32 %v3810, 0.2
  %v3881 = vmul.f32 %v3815, 0.2
  %v3882 = vsel %vm3820, %v3695, %v3851
  %v3883 = vsel %vm3821, %v3698, %v3852
  %v3884 = vsel %vm3822, %v3703, %v3853
  %v3885 = vsel %vm3823, %v3706, %v3854
  %v3886 = vsel %vm3824, %v3711, %v3855
  %v3887 = vsel %vm3825, %v3714, %v3856
  %v3888 = vsel %vm3826, %v3719, %v3857
  %v3889 = vsel %vm3827, %v3722, %v3858
  %v3890 = vsel %vm3828, %v3727, %v3859
  %v3891 = vsel %vm3829, %v3730, %v3860
  %v3892 = vsel %vm3830, %v3735, %v3861
  %v3893 = vsel %vm3831, %v3738, %v3862
  %v3894 = vsel %vm3832, %v3743, %v3863
  %v3895 = vsel %vm3833, %v3746, %v3864
  %v3896 = vsel %vm3834, %v3751, %v3865
  %v3897 = vsel %vm3835, %v3754, %v3866
  %v3898 = vsel %vm3836, %v3759, %v3867
  %v3899 = vsel %vm3837, %v3762, %v3868
  %v3900 = vsel %vm3838, %v3767, %v3869
  %v3901 = vsel %vm3839, %v3770, %v3870
  %v3902 = vsel %vm3840, %v3775, %v3871
  %v3903 = vsel %vm3841, %v3778, %v3872
  %v3904 = vsel %vm3842, %v3783, %v3873
  %v3905 = vsel %vm3843, %v3786, %v3874
  %v3906 = vsel %vm3844, %v3791, %v3875
  %v3907 = vsel %vm3845, %v3794, %v3876
  %v3908 = vsel %vm3846, %v3799, %v3877
  %v3909 = vsel %vm3847, %v3802, %v3878
  %v3910 = vsel %vm3848, %v3807, %v3879
  %v3911 = vsel %vm3849, %v3810, %v3880
  %v3912 = vsel %vm3850, %v3815, %v3881
  %3913 = vst [vmem:[%s2] sm:$0xff] %v3882
  %3914 = vst [vmem:[%s2 + $0x8] sm:$0xff] %v3883
  %3915 = vst [vmem:[%s2 + $0x10] sm:$0xff] %v3884
  %3916 = vst [vmem:[%s2 + $0x18] sm:$0xff] %v3885
  %3917 = vst [vmem:[%s2 + $0x20] sm:$0xff] %v3886
  %3918 = vst [vmem:[%s2 + $0x28] sm:$0xff] %v3887
  %3919 = vst [vmem:[%s2 + $0x30] sm:$0xff] %v3888
  %3920 = vst [vmem:[%s2 + $0x38] sm:$0xff] %v3889
  %3921 = vst [vmem:[%s2 + $0x40] sm:$0xff] %v3890
  %3922 = vst [vmem:[%s2 + $0x48] sm:$0xff] %v3891
  %3923 = vst [vmem:[%s2 + $0x50] sm:$0xff] %v3892
  %3924 = vst [vmem:[%s2 + $0x58] sm:$0xff] %v3893
  %3925 = vst [vmem:[%s2 + $0x60] sm:$0xff] %v3894
  %3926 = vst [vmem:[%s2 + $0x68] sm:$0xff] %v3895
  %3927 = vst [vmem:[%s2 + $0x70] sm:$0xff] %v3896
  %3928 = vst [vmem:[%s2 + $0x78] sm:$0xff] %v3897
  %3929 = vst [vmem:[%s2 + $0x80] sm:$0xff] %v3898
  %3930 = vst [vmem:[%s2 + $0x88] sm:$0xff] %v3899
  %3931 = vst [vmem:[%s2 + $0x90] sm:$0xff] %v3900
  %3932 = vst [vmem:[%s2 + $0x98] sm:$0xff] %v3901
  %3933 = vst [vmem:[%s2 + $0xa0] sm:$0xff] %v3902
  %3934 = vst [vmem:[%s2 + $0xa8] sm:$0xff] %v3903
  %3935 = vst [vmem:[%s2 + $0xb0] sm:$0xff] %v3904
  %3936 = vst [vmem:[%s2 + $0xb8] sm:$0xff] %v3905
  %3937 = vst [vmem:[%s2 + $0xc0] sm:$0xff] %v3906
  %3938 = vst [vmem:[%s2 + $0xc8] sm:$0xff] %v3907
  %3939 = vst [vmem:[%s2 + $0xd0] sm:$0xff] %v3908
  %3940 = vst [vmem:[%s2 + $0xd8] sm:$0xff] %v3909
  %3941 = vst [vmem:[%s2 + $0xe0] sm:$0xff] %v3910
  %3942 = vst [vmem:[%s2 + $0xe8] sm:$0xff] %v3911
  %3943 = vst [vmem:[%s2 + $0xf0] sm:$0xff] %v3912
  // Predicated region
  $region10: #{discriminator_forward.6} parent=0 // pred_check
    _
  $region11: #{discriminator_forward.6} parent=0 // pred_check_branch
    %3945 = sbr.rel (0) target = $region13
  $region12: #{discriminator_forward.6} parent=0 // pred_region
    _
  $region13: #{discriminator_forward.6} parent=0 // pred_fallthru
    _
  // Predicated region
  $region14: #{discriminator_forward.6} parent=0 // pred_check
    _
  $region15: #{discriminator_forward.6} parent=0 // pred_check_branch
    %3947 = sbr.rel (0) target = $region17
  $region16: #{discriminator_forward.6} parent=0 // pred_region
    _
  $region17: #{discriminator_forward.6} parent=0 // pred_fallthru
    _

// kernel: discriminator_forward.7
$region0: #{discriminator_forward.7}
  #allocation0 [shape = 'u32[]', space=smem, size = 0x4, offset = 0x4, fixed_abs, tag = 'smem constant byte address 0x4 - core index']
  #allocation1 [shape = 'u32[144,128]{1,0:T(1,128)}', space=vmem, size = 0x12000, scoped, tag = 'internal scratch']
  %s0 = inlined_call_operand.vmem [shape: bf16[50,576], index: 0, kind: input, shape index: {}]
  %s1 = inlined_call_operand.vmem [shape: bf16[576,32], index: 1, kind: input, shape index: {}]
  %s2 = inlined_call_operand.vmem [shape: f32[50,32], index: 2, kind: input, shape index: {}]
  %s3 = inlined_call_operand.vmem [shape: f32[2,50], index: 3, kind: input, shape index: {}]
  %s4 = inlined_call_operand.vmem [shape: f32[2,1], index: 4, kind: output, shape index: {}]
  %s5 = sld [smem:[#allocation0]]
  $region26: #{discriminator_forward.7} parent=0
    _
  %s7 = ssub.s32 1, %s5
  %s8 = scalar_select 0, %s7, %s5
  // Predicated region
  $region2: #{discriminator_forward.7} parent=0 // pred_check
    _
  $region3: #{discriminator_forward.7} parent=0 // pred_check_branch
    %10 = sbr.rel (0) target = $region5
  $region4: #{discriminator_forward.7} parent=0 // pred_region
    _
  $region5: #{discriminator_forward.7} parent=0 // pred_fallthru
    _
  // Predicated region
  $region6: #{discriminator_forward.7} parent=0 // pred_check
    _
  $region7: #{discriminator_forward.7} parent=0 // pred_check_branch
    %12 = sbr.rel (0) target = $region9
  $region8: #{discriminator_forward.7} parent=0 // pred_region
    _
  $region9: #{discriminator_forward.7} parent=0 // pred_fallthru
    _
  // Predicated region
  $region10: #{discriminator_forward.7} parent=0 // pred_check
    _
  $region11: #{discriminator_forward.7} parent=0 // pred_check_branch
    %14 = sbr.rel (0) target = $region13
  $region12: #{discriminator_forward.7} parent=0 // pred_region
    _
  $region13: #{discriminator_forward.7} parent=0 // pred_fallthru
    _
  // Predicated region
  $region14: #{discriminator_forward.7} parent=0 // pred_check
    _
  $region15: #{discriminator_forward.7} parent=0 // pred_check_branch
    %16 = sbr.rel (0) target = $region17
  $region16: #{discriminator_forward.7} parent=0 // pred_region
    _
  $region17: #{discriminator_forward.7} parent=0 // pred_fallthru
    _
  %v18 = vld [vmem:[%s0] sm:$0xff]
  %v19 = vld [vmem:[%s0 + $0x8] sm:$0xff]
  %v20 = vld [vmem:[%s0 + $0x10] sm:$0xf]
  %v21 = vld [vmem:[%s0 + $0x14] sm:$0xff]
  %v22 = vld [vmem:[%s0 + $0x1c] sm:$0xff]
  %v23 = vld [vmem:[%s0 + $0x24] sm:$0xf]
  %v24 = vld [vmem:[%s0 + $0x28] sm:$0xff]
  %v25 = vld [vmem:[%s0 + $0x30] sm:$0xff]
  %v26 = vld [vmem:[%s0 + $0x38] sm:$0xf]
  %v27 = vld [vmem:[%s0 + $0x3c] sm:$0xff]
  %v28 = vld [vmem:[%s0 + $0x44] sm:$0xff]
  %v29 = vld [vmem:[%s0 + $0x4c] sm:$0xf]
  %v30 = vld [vmem:[%s0 + $0x50] sm:$0xff]
  %v31 = vld [vmem:[%s0 + $0x58] sm:$0xff]
  %v32 = vld [vmem:[%s0 + $0x60] sm:$0xf]
  %v33 = vld [vmem:[%s0 + $0x64] sm:$0xff]
  %v34 = vld [vmem:[%s0 + $0x6c] sm:$0xff]
  %v35 = vld [vmem:[%s0 + $0x74] sm:$0xf]
  %v36 = vld [vmem:[%s0 + $0x78] sm:$0x11]
  %v37 = vld [vmem:[%s0 + $0x80] sm:$0x11]
  %v38 = vld [vmem:[%s0 + $0x88] sm:$0x1]
  %v39 = vld [vmem:[%s1] sm:$0xf]
  %v40 = vld [vmem:[%s1 + $0x4] sm:$0xf]
  %v41 = vld [vmem:[%s1 + $0x8] sm:$0xf]
  %v42 = vld [vmem:[%s1 + $0xc] sm:$0xf]
  %v43 = vld [vmem:[%s1 + $0x10] sm:$0xf]
  %v44 = vld [vmem:[%s1 + $0x14] sm:$0xf]
  %v45 = vld [vmem:[%s1 + $0x18] sm:$0xf]
  %v46 = vld [vmem:[%s1 + $0x1c] sm:$0xf]
  %v47 = vld [vmem:[%s1 + $0x20] sm:$0xf]
  %v48 = vld [vmem:[%s1 + $0x24] sm:$0xf]
  %v49 = vld [vmem:[%s1 + $0x28] sm:$0xf]
  %v50 = vld [vmem:[%s1 + $0x2c] sm:$0xf]
  %v51 = vld [vmem:[%s1 + $0x30] sm:$0xf]
  %v52 = vld [vmem:[%s1 + $0x34] sm:$0xf]
  %v53 = vld [vmem:[%s1 + $0x38] sm:$0xf]
  %v54 = vld [vmem:[%s1 + $0x3c] sm:$0xf]
  %v55 = vld [vmem:[%s1 + $0x40] sm:$0xf]
  %v56 = vld [vmem:[%s1 + $0x44] sm:$0xf]
  %v57 = vld [vmem:[%s1 + $0x48] sm:$0xf]
  %v58 = vld [vmem:[%s1 + $0x4c] sm:$0xf]
  %v59 = vld [vmem:[%s1 + $0x50] sm:$0xf]
  %v60 = vld [vmem:[%s1 + $0x54] sm:$0xf]
  %v61 = vld [vmem:[%s1 + $0x58] sm:$0xf]
  %v62 = vld [vmem:[%s1 + $0x5c] sm:$0xf]
  %v63 = vld [vmem:[%s1 + $0x60] sm:$0xf]
  %v64 = vld [vmem:[%s1 + $0x64] sm:$0xf]
  %v65 = vld [vmem:[%s1 + $0x68] sm:$0xf]
  %v66 = vld [vmem:[%s1 + $0x6c] sm:$0xf]
  %v67 = vld [vmem:[%s1 + $0x70] sm:$0xf]
  %v68 = vld [vmem:[%s1 + $0x74] sm:$0xf]
  %v69 = vld [vmem:[%s1 + $0x78] sm:$0xf]
  %v70 = vld [vmem:[%s1 + $0x7c] sm:$0xf]
  %v71 = vld [vmem:[%s1 + $0x80] sm:$0xf]
  %v72 = vld [vmem:[%s1 + $0x84] sm:$0xf]
  %v73 = vld [vmem:[%s1 + $0x88] sm:$0xf]
  %v74 = vld [vmem:[%s1 + $0x8c] sm:$0xf]
  %v75 = vld [vmem:[%s1 + $0x90] sm:$0xf]
  %v76 = vld [vmem:[%s1 + $0x94] sm:$0xf]
  %v77 = vld [vmem:[%s1 + $0x98] sm:$0xf]
  %v78 = vld [vmem:[%s1 + $0x9c] sm:$0xf]
  %v79 = vld [vmem:[%s1 + $0xa0] sm:$0xf]
  %v80 = vld [vmem:[%s1 + $0xa4] sm:$0xf]
  %v81 = vld [vmem:[%s1 + $0xa8] sm:$0xf]
  %v82 = vld [vmem:[%s1 + $0xac] sm:$0xf]
  %v83 = vld [vmem:[%s1 + $0xb0] sm:$0xf]
  %v84 = vld [vmem:[%s1 + $0xb4] sm:$0xf]
  %v85 = vld [vmem:[%s1 + $0xb8] sm:$0xf]
  %v86 = vld [vmem:[%s1 + $0xbc] sm:$0xf]
  %v87 = vld [vmem:[%s1 + $0xc0] sm:$0xf]
  %v88 = vld [vmem:[%s1 + $0xc4] sm:$0xf]
  %v89 = vld [vmem:[%s1 + $0xc8] sm:$0xf]
  %v90 = vld [vmem:[%s1 + $0xcc] sm:$0xf]
  %v91 = vld [vmem:[%s1 + $0xd0] sm:$0xf]
  %v92 = vld [vmem:[%s1 + $0xd4] sm:$0xf]
  %v93 = vld [vmem:[%s1 + $0xd8] sm:$0xf]
  %v94 = vld [vmem:[%s1 + $0xdc] sm:$0xf]
  %v95 = vld [vmem:[%s1 + $0xe0] sm:$0xf]
  %v96 = vld [vmem:[%s1 + $0xe4] sm:$0xf]
  %v97 = vld [vmem:[%s1 + $0xe8] sm:$0xf]
  %v98 = vld [vmem:[%s1 + $0xec] sm:$0xf]
  %v99 = vld [vmem:[%s1 + $0xf0] sm:$0xf]
  %v100 = vld [vmem:[%s1 + $0xf4] sm:$0xf]
  %v101 = vld [vmem:[%s1 + $0xf8] sm:$0xf]
  %v102 = vld [vmem:[%s1 + $0xfc] sm:$0xf]
  %v103 = vld [vmem:[%s1 + $0x100] sm:$0xf]
  %v104 = vld [vmem:[%s1 + $0x104] sm:$0xf]
  %v105 = vld [vmem:[%s1 + $0x108] sm:$0xf]
  %v106 = vld [vmem:[%s1 + $0x10c] sm:$0xf]
  %v107 = vld [vmem:[%s1 + $0x110] sm:$0xf]
  %v108 = vld [vmem:[%s1 + $0x114] sm:$0xf]
  %v109 = vld [vmem:[%s1 + $0x118] sm:$0xf]
  %v110 = vld [vmem:[%s1 + $0x11c] sm:$0xf]
  %v132 = vunpack.c.l.b16 %v18
  %v133 = vunpack.c.h.b16 %v18
  %v134 = vunpack.c.l.b16 %v19
  %v135 = vunpack.c.h.b16 %v19
  %v136 = vunpack.c.l.b16 %v20
  %v137 = vunpack.c.l.b16 %v21
  %v138 = vunpack.c.h.b16 %v21
  %v139 = vunpack.c.l.b16 %v22
  %v140 = vunpack.c.h.b16 %v22
  %v141 = vunpack.c.l.b16 %v23
  %v142 = vunpack.c.l.b16 %v24
  %v143 = vunpack.c.h.b16 %v24
  %v144 = vunpack.c.l.b16 %v25
  %v145 = vunpack.c.h.b16 %v25
  %v146 = vunpack.c.l.b16 %v26
  %v147 = vunpack.c.l.b16 %v27
  %v148 = vunpack.c.h.b16 %v27
  %v149 = vunpack.c.l.b16 %v28
  %v150 = vunpack.c.h.b16 %v28
  %v151 = vunpack.c.l.b16 %v29
  %v152 = vunpack.c.l.b16 %v30
  %v153 = vunpack.c.h.b16 %v30
  %v154 = vunpack.c.l.b16 %v31
  %v155 = vunpack.c.h.b16 %v31
  %v156 = vunpack.c.l.b16 %v32
  %v157 = vunpack.c.l.b16 %v33
  %v158 = vunpack.c.h.b16 %v33
  %v159 = vunpack.c.l.b16 %v34
  %v160 = vunpack.c.h.b16 %v34
  %v161 = vunpack.c.l.b16 %v35
  %v162 = vunpack.c.l.b16 %v36
  %v163 = vunpack.c.h.b16 %v36
  %v164 = vunpack.c.l.b16 %v37
  %v165 = vunpack.c.h.b16 %v37
  %v166 = vunpack.c.l.b16 %v38
  %v167 = vpack.c.b16 %v137, %v132
  %v168 = vpack.c.b16 %v138, %v133
  %v169 = vpack.c.b16 %v139, %v134
  %v170 = vpack.c.b16 %v140, %v135
  %v171 = vpack.c.b16 %v141, %v136
  %v172 = vpack.c.b16 %v147, %v142
  %v173 = vpack.c.b16 %v148, %v143
  %v174 = vpack.c.b16 %v149, %v144
  %v175 = vpack.c.b16 %v150, %v145
  %v176 = vpack.c.b16 %v151, %v146
  %v177 = vpack.c.b16 %v157, %v152
  %v178 = vpack.c.b16 %v158, %v153
  %v179 = vpack.c.b16 %v159, %v154
  %v180 = vpack.c.b16 %v160, %v155
  %v181 = vpack.c.b16 %v161, %v156
  %v182 = vpack.c.b16 %v162, %v162
  %v183 = vpack.c.b16 %v163, %v163
  %v184 = vpack.c.b16 %v164, %v164
  %v185 = vpack.c.b16 %v165, %v165
  %v186 = vpack.c.b16 %v166, %v166
  %v275 = vunpack.c.l.b16 %v39
  %v276 = vunpack.c.l.b16 %v40
  %v277 = vunpack.c.l.b16 %v41
  %v278 = vunpack.c.l.b16 %v42
  %v279 = vunpack.c.l.b16 %v43
  %v280 = vunpack.c.l.b16 %v44
  %v281 = vunpack.c.l.b16 %v45
  %v282 = vunpack.c.l.b16 %v46
  %v283 = vunpack.c.l.b16 %v47
  %v284 = vunpack.c.l.b16 %v48
  %v285 = vunpack.c.l.b16 %v49
  %v286 = vunpack.c.l.b16 %v50
  %v287 = vunpack.c.l.b16 %v51
  %v288 = vunpack.c.l.b16 %v52
  %v289 = vunpack.c.l.b16 %v53
  %v290 = vunpack.c.l.b16 %v54
  %v291 = vunpack.c.l.b16 %v55
  %v292 = vunpack.c.l.b16 %v56
  %v293 = vunpack.c.l.b16 %v57
  %v294 = vunpack.c.l.b16 %v58
  %v295 = vunpack.c.l.b16 %v59
  %v296 = vunpack.c.l.b16 %v60
  %v297 = vunpack.c.l.b16 %v61
  %v298 = vunpack.c.l.b16 %v62
  %v299 = vunpack.c.l.b16 %v63
  %v300 = vunpack.c.l.b16 %v64
  %v301 = vunpack.c.l.b16 %v65
  %v302 = vunpack.c.l.b16 %v66
  %v303 = vunpack.c.l.b16 %v67
  %v304 = vunpack.c.l.b16 %v68
  %v305 = vunpack.c.l.b16 %v69
  %v306 = vunpack.c.l.b16 %v70
  %v307 = vunpack.c.l.b16 %v71
  %v308 = vunpack.c.l.b16 %v72
  %v309 = vunpack.c.l.b16 %v73
  %v310 = vunpack.c.l.b16 %v74
  %v311 = vunpack.c.l.b16 %v75
  %v312 = vunpack.c.l.b16 %v76
  %v313 = vunpack.c.l.b16 %v77
  %v314 = vunpack.c.l.b16 %v78
  %v315 = vunpack.c.l.b16 %v79
  %v316 = vunpack.c.l.b16 %v80
  %v317 = vunpack.c.l.b16 %v81
  %v318 = vunpack.c.l.b16 %v82
  %v319 = vunpack.c.l.b16 %v83
  %v320 = vunpack.c.l.b16 %v84
  %v321 = vunpack.c.l.b16 %v85
  %v322 = vunpack.c.l.b16 %v86
  %v323 = vunpack.c.l.b16 %v87
  %v324 = vunpack.c.l.b16 %v88
  %v325 = vunpack.c.l.b16 %v89
  %v326 = vunpack.c.l.b16 %v90
  %v327 = vunpack.c.l.b16 %v91
  %v328 = vunpack.c.l.b16 %v92
  %v329 = vunpack.c.l.b16 %v93
  %v330 = vunpack.c.l.b16 %v94
  %v331 = vunpack.c.l.b16 %v95
  %v332 = vunpack.c.l.b16 %v96
  %v333 = vunpack.c.l.b16 %v97
  %v334 = vunpack.c.l.b16 %v98
  %v335 = vunpack.c.l.b16 %v99
  %v336 = vunpack.c.l.b16 %v100
  %v337 = vunpack.c.l.b16 %v101
  %v338 = vunpack.c.l.b16 %v102
  %v339 = vunpack.c.l.b16 %v103
  %v340 = vunpack.c.l.b16 %v104
  %v341 = vunpack.c.l.b16 %v105
  %v342 = vunpack.c.l.b16 %v106
  %v343 = vunpack.c.l.b16 %v107
  %v344 = vunpack.c.l.b16 %v108
  %v345 = vunpack.c.l.b16 %v109
  %v346 = vunpack.c.l.b16 %v110
  %v347 = vpack.c.b16 %v276, %v275
  %v348 = vpack.c.b16 %v278, %v277
  %v349 = vpack.c.b16 %v280, %v279
  %v350 = vpack.c.b16 %v282, %v281
  %v351 = vpack.c.b16 %v284, %v283
  %v352 = vpack.c.b16 %v286, %v285
  %v353 = vpack.c.b16 %v288, %v287
  %v354 = vpack.c.b16 %v290, %v289
  %v355 = vpack.c.b16 %v292, %v291
  %v356 = vpack.c.b16 %v294, %v293
  %v357 = vpack.c.b16 %v296, %v295
  %v358 = vpack.c.b16 %v298, %v297
  %v359 = vpack.c.b16 %v300, %v299
  %v360 = vpack.c.b16 %v302, %v301
  %v361 = vpack.c.b16 %v304, %v303
  %v362 = vpack.c.b16 %v306, %v305
  %v363 = vpack.c.b16 %v308, %v307
  %v364 = vpack.c.b16 %v310, %v309
  %v365 = vpack.c.b16 %v312, %v311
  %v366 = vpack.c.b16 %v314, %v313
  %v367 = vpack.c.b16 %v316, %v315
  %v368 = vpack.c.b16 %v318, %v317
  %v369 = vpack.c.b16 %v320, %v319
  %v370 = vpack.c.b16 %v322, %v321
  %v371 = vpack.c.b16 %v324, %v323
  %v372 = vpack.c.b16 %v326, %v325
  %v373 = vpack.c.b16 %v328, %v327
  %v374 = vpack.c.b16 %v330, %v329
  %v375 = vpack.c.b16 %v332, %v331
  %v376 = vpack.c.b16 %v334, %v333
  %v377 = vpack.c.b16 %v336, %v335
  %v378 = vpack.c.b16 %v338, %v337
  %v379 = vpack.c.b16 %v340, %v339
  %v380 = vpack.c.b16 %v342, %v341
  %v381 = vpack.c.b16 %v344, %v343
  %v382 = vpack.c.b16 %v346, %v345
  %vm419 = vcmask 523264
  %v421 = vsel %vm419, %v171, 0
  %v424 = vsel %vm419, %v176, 0
  %v427 = vsel %vm419, %v181, 0
  %v430 = vsel %vm419, %v186, 0
  %432 = vmatprep.subr.bf16.mxu0 0
  %433 = vmatpush1.bf16.msra.mxu0 %v347
  %434 = vmatprep.subr.bf16.mxu0 0
  %435 = vmatpush1.bf16.msra.mxu0 %v348
  %436 = vmatprep.subr.bf16.mxu0 0
  %437 = vmatpush1.bf16.msra.mxu0 %v349
  %438 = vmatprep.subr.bf16.mxu0 0
  %439 = vmatpush1.bf16.msra.mxu0 %v350
  %440 = vmatprep.subr.bf16.mxu0 0
  %441 = vmatpush1.bf16.msra.mxu0 %v351
  %442 = vmatprep.subr.bf16.mxu0 0
  %443 = vmatpush1.bf16.msra.mxu0 %v352
  %444 = vmatprep.subr.bf16.mxu0 0
  %445 = vmatpush1.bf16.msra.mxu0 %v353
  %446 = vmatprep.subr.bf16.mxu0 0
  %447 = vmatpush1.bf16.msra.mxu0 %v354
  %448 = vmatprep.subr.bf16.mxu0 0
  %449 = vmatpush1.bf16.msra.mxu0 %v355
  %450 = vmatprep.subr.bf16.mxu0 0
  %451 = vmatpush1.bf16.msra.mxu0 %v356
  %452 = vmatprep.subr.bf16.mxu0 0
  %453 = vmatpush1.bf16.msra.mxu0 %v357
  %454 = vmatprep.subr.bf16.mxu0 0
  %455 = vmatpush1.bf16.msra.mxu0 %v358
  %456 = vmatprep.subr.bf16.mxu0 0
  %457 = vmatpush1.bf16.msra.mxu0 %v359
  %458 = vmatprep.subr.bf16.mxu0 0
  %459 = vmatpush1.bf16.msra.mxu0 %v360
  %460 = vmatprep.subr.bf16.mxu0 0
  %461 = vmatpush1.bf16.msra.mxu0 %v361
  %462 = vmatprep.subr.bf16.mxu0 0
  %463 = vmatpush1.bf16.msra.mxu0 %v362
  %464 = vmatprep.mubr.bf16.mxu0 %v168
  %465 = vmatmul.mubr.bf16.gmra.mrb[0].mxu0 %v167
  %v466 = vpop.f32.mrb[0].mxu0
  %v467 = vadd.f32 0.0, %v466
  %v468 = vpop.f32.mrb[0].mxu0
  %v469 = vpop.f32.mrb[0].mxu0
  %v470 = vadd.f32 0.0, %v469
  %v471 = vpop.f32.mrb[0].mxu0
  %472 = vmatprep.mubr.bf16.mxu0 %v173
  %473 = vmatmul.mubr.bf16.gmra.mrb[0].mxu0 %v172
  %v474 = vpop.f32.mrb[0].mxu0
  %v475 = vadd.f32 0.0, %v474
  %v476 = vpop.f32.mrb[0].mxu0
  %v477 = vpop.f32.mrb[0].mxu0
  %v478 = vadd.f32 0.0, %v477
  %v479 = vpop.f32.mrb[0].mxu0
  %480 = vmatprep.mubr.bf16.mxu0 %v178
  %481 = vmatmul.mubr.bf16.gmra.mrb[0].mxu0 %v177
  %v482 = vpop.f32.mrb[0].mxu0
  %v483 = vadd.f32 0.0, %v482
  %v484 = vpop.f32.mrb[0].mxu0
  %v485 = vpop.f32.mrb[0].mxu0
  %v486 = vadd.f32 0.0, %v485
  %v487 = vpop.f32.mrb[0].mxu0
  %488 = vmatprep.mubr.bf16.mxu0 %v183
  %489 = vmatmul.mubr.bf16.gmra.mrb[0].mxu0 %v182
  %v490 = vpop.f32.mrb[0].mxu0
  %v491 = vadd.f32 0.0, %v490
  %v492 = vpop.f32.mrb[0].mxu0
  %v493 = vpop.f32.mrb[0].mxu0
  %v494 = vpop.f32.mrb[0].mxu0
  %495 = vdwg.mxu0
  %496 = vmatprep.subr.bf16.mxu0 0
  %497 = vmatpush1.bf16.msra.mxu0 %v363
  %498 = vmatprep.subr.bf16.mxu0 0
  %499 = vmatpush1.bf16.msra.mxu0 %v364
  %500 = vmatprep.subr.bf16.mxu0 0
  %501 = vmatpush1.bf16.msra.mxu0 %v365
  %502 = vmatprep.subr.bf16.mxu0 0
  %503 = vmatpush1.bf16.msra.mxu0 %v366
  %504 = vmatprep.subr.bf16.mxu0 0
  %505 = vmatpush1.bf16.msra.mxu0 %v367
  %506 = vmatprep.subr.bf16.mxu0 0
  %507 = vmatpush1.bf16.msra.mxu0 %v368
  %508 = vmatprep.subr.bf16.mxu0 0
  %509 = vmatpush1.bf16.msra.mxu0 %v369
  %510 = vmatprep.subr.bf16.mxu0 0
  %511 = vmatpush1.bf16.msra.mxu0 %v370
  %512 = vmatprep.subr.bf16.mxu0 0
  %513 = vmatpush1.bf16.msra.mxu0 %v371
  %514 = vmatprep.subr.bf16.mxu0 0
  %515 = vmatpush1.bf16.msra.mxu0 %v372
  %516 = vmatprep.subr.bf16.mxu0 0
  %517 = vmatpush1.bf16.msra.mxu0 %v373
  %518 = vmatprep.subr.bf16.mxu0 0
  %519 = vmatpush1.bf16.msra.mxu0 %v374
  %520 = vmatprep.subr.bf16.mxu0 0
  %521 = vmatpush1.bf16.msra.mxu0 %v375
  %522 = vmatprep.subr.bf16.mxu0 0
  %523 = vmatpush1.bf16.msra.mxu0 %v376
  %524 = vmatprep.subr.bf16.mxu0 0
  %525 = vmatpush1.bf16.msra.mxu0 %v377
  %526 = vmatprep.subr.bf16.mxu0 0
  %527 = vmatpush1.bf16.msra.mxu0 %v378
  %528 = vmatprep.mubr.bf16.mxu0 %v170
  %529 = vmatmul.mubr.bf16.gmra.mrb[0].mxu0 %v169
  %v530 = vpop.f32.mrb[0].mxu0
  %v531 = vadd.f32 %v467, %v530
  %v532 = vpop.f32.mrb[0].mxu0
  %v533 = vpop.f32.mrb[0].mxu0
  %v534 = vadd.f32 %v470, %v533
  %v535 = vpop.f32.mrb[0].mxu0
  %536 = vmatprep.mubr.bf16.mxu0 %v175
  %537 = vmatmul.mubr.bf16.gmra.mrb[0].mxu0 %v174
  %v538 = vpop.f32.mrb[0].mxu0
  %v539 = vadd.f32 %v475, %v538
  %v540 = vpop.f32.mrb[0].mxu0
  %v541 = vpop.f32.mrb[0].mxu0
  %v542 = vadd.f32 %v478, %v541
  %v543 = vpop.f32.mrb[0].mxu0
  %544 = vmatprep.mubr.bf16.mxu0 %v180
  %545 = vmatmul.mubr.bf16.gmra.mrb[0].mxu0 %v179
  %v546 = vpop.f32.mrb[0].mxu0
  %v547 = vadd.f32 %v483, %v546
  %v548 = vpop.f32.mrb[0].mxu0
  %v549 = vpop.f32.mrb[0].mxu0
  %v550 = vadd.f32 %v486, %v549
  %v551 = vpop.f32.mrb[0].mxu0
  %552 = vmatprep.mubr.bf16.mxu0 %v185
  %553 = vmatmul.mubr.bf16.gmra.mrb[0].mxu0 %v184
  %v554 = vpop.f32.mrb[0].mxu0
  %v555 = vadd.f32 %v491, %v554
  %v556 = vpop.f32.mrb[0].mxu0
  %v557 = vpop.f32.mrb[0].mxu0
  %v558 = vpop.f32.mrb[0].mxu0
  %559 = vdwg.mxu0
  %560 = vmatprep.subr.bf16.mxu0 0
  %561 = vmatpush1.bf16.msra.mxu0 %v379
  %562 = vmatprep.subr.bf16.mxu0 0
  %563 = vmatpush1.bf16.msra.mxu0 %v380
  %564 = vmatprep.subr.bf16.mxu0 0
  %565 = vmatpush1.bf16.msra.mxu0 %v381
  %566 = vmatprep.subr.bf16.mxu0 0
  %567 = vmatpush1.bf16.msra.mxu0 %v382
  %568 = vmatprep.subr.bf16.mxu0 0
  %569 = vmatpush1.bf16.msra.mxu0 0
  %570 = vmatprep.subr.bf16.mxu0 0
  %571 = vmatpush1.bf16.msra.mxu0 0
  %572 = vmatprep.subr.bf16.mxu0 0
  %573 = vmatpush1.bf16.msra.mxu0 0
  %574 = vmatprep.subr.bf16.mxu0 0
  %575 = vmatpush1.bf16.msra.mxu0 0
  %576 = vmatprep.subr.bf16.mxu0 0
  %577 = vmatpush1.bf16.msra.mxu0 0
  %578 = vmatprep.subr.bf16.mxu0 0
  %579 = vmatpush1.bf16.msra.mxu0 0
  %580 = vmatprep.subr.bf16.mxu0 0
  %581 = vmatpush1.bf16.msra.mxu0 0
  %582 = vmatprep.subr.bf16.mxu0 0
  %583 = vmatpush1.bf16.msra.mxu0 0
  %584 = vmatprep.subr.bf16.mxu0 0
  %585 = vmatpush1.bf16.msra.mxu0 0
  %586 = vmatprep.subr.bf16.mxu0 0
  %587 = vmatpush1.bf16.msra.mxu0 0
  %588 = vmatprep.subr.bf16.mxu0 0
  %589 = vmatpush1.bf16.msra.mxu0 0
  %590 = vmatprep.subr.bf16.mxu0 0
  %591 = vmatpush1.bf16.msra.mxu0 0
  %592 = vmatprep.mubr.bf16.mxu0 0
  %593 = vmatmul.mubr.bf16.gmra.mrb[0].mxu0 %v421
  %v594 = vpop.f32.mrb[0].mxu0
  %v595 = vadd.f32 %v531, %v594
  %v596 = vpop.f32.mrb[0].mxu0
  %v597 = vpop.f32.mrb[0].mxu0
  %v598 = vadd.f32 %v534, %v597
  %v599 = vpop.f32.mrb[0].mxu0
  %600 = vmatprep.mubr.bf16.mxu0 0
  %601 = vmatmul.mubr.bf16.gmra.mrb[0].mxu0 %v424
  %v602 = vpop.f32.mrb[0].mxu0
  %v603 = vadd.f32 %v539, %v602
  %v604 = vpop.f32.mrb[0].mxu0
  %v605 = vpop.f32.mrb[0].mxu0
  %v606 = vadd.f32 %v542, %v605
  %v607 = vpop.f32.mrb[0].mxu0
  %608 = vmatprep.mubr.bf16.mxu0 0
  %609 = vmatmul.mubr.bf16.gmra.mrb[0].mxu0 %v427
  %v610 = vpop.f32.mrb[0].mxu0
  %v611 = vadd.f32 %v547, %v610
  %v612 = vpop.f32.mrb[0].mxu0
  %v613 = vpop.f32.mrb[0].mxu0
  %v614 = vadd.f32 %v550, %v613
  %v615 = vpop.f32.mrb[0].mxu0
  %616 = vmatprep.mubr.bf16.mxu0 0
  %617 = vmatmul.mubr.bf16.gmra.mrb[0].mxu0 %v430
  %v618 = vpop.f32.mrb[0].mxu0
  %v619 = vadd.f32 %v555, %v618
  %v620 = vpop.f32.mrb[0].mxu0
  %v621 = vpop.f32.mrb[0].mxu0
  %v622 = vpop.f32.mrb[0].mxu0
  %623 = vdwg.mxu0
  %vm624 = vcmp.ge.f32.partialorder %v595, 0.0
  %vm625 = vcmp.ge.f32.partialorder %v598, 0.0
  %vm626 = vcmp.ge.f32.partialorder %v603, 0.0
  %vm627 = vcmp.ge.f32.partialorder %v606, 0.0
  %vm628 = vcmp.ge.f32.partialorder %v611, 0.0
  %vm629 = vcmp.ge.f32.partialorder %v614, 0.0
  %vm630 = vcmp.ge.f32.partialorder %v619, 0.0
  %v631 = vmul.f32 %v595, 0.2
  %v632 = vmul.f32 %v598, 0.2
  %v633 = vmul.f32 %v603, 0.2
  %v634 = vmul.f32 %v606, 0.2
  %v635 = vmul.f32 %v611, 0.2
  %v636 = vmul.f32 %v614, 0.2
  %v637 = vmul.f32 %v619, 0.2
  %v638 = vsel %vm624, %v595, %v631
  %v639 = vsel %vm625, %v598, %v632
  %v640 = vsel %vm626, %v603, %v633
  %v641 = vsel %vm627, %v606, %v634
  %v642 = vsel %vm628, %v611, %v635
  %v643 = vsel %vm629, %v614, %v636
  %v644 = vsel %vm630, %v619, %v637
  %v645 = vld [vmem:[%s2] sm:$0xff]
  %v646 = vld [vmem:[%s2 + $0x8] sm:$0xff]
  %v647 = vld [vmem:[%s2 + $0x10] sm:$0xff]
  %v648 = vld [vmem:[%s2 + $0x18] sm:$0xff]
  %v649 = vld [vmem:[%s2 + $0x20] sm:$0xff]
  %v650 = vld [vmem:[%s2 + $0x28] sm:$0xff]
  %v651 = vld [vmem:[%s2 + $0x30] sm:$0x3]
  %v652 = vmul.f32 %v638, %v645
  %v653 = vmul.f32 %v639, %v646
  %v654 = vmul.f32 %v640, %v647
  %v655 = vmul.f32 %v641, %v648
  %v656 = vmul.f32 %v642, %v649
  %v657 = vmul.f32 %v643, %v650
  %v658 = vmul.f32 %v644, %v651
  %v659 = vld [vmem:[%s3] sm:$0x3]
  %vm660 = vcmask 408576
  %v662 = vsel %vm660, %v659, 0
  %vm664 = vcmask 1041408
  %v666 = vsel %vm664, %v658, 0
  %668 = vmatprep.subr.mxu0 0.0
  %669 = vmatpush1.msra.mxu0 %v652
  %670 = vmatprep.subr.mxu0 0.0
  %671 = vmatpush1.msra.mxu0 %v653
  %672 = vmatprep.subr.mxu0 0.0
  %673 = vmatpush1.msra.mxu0 %v654
  %674 = vmatprep.subr.mxu0 0.0
  %675 = vmatpush1.msra.mxu0 %v655
  %676 = vmatprep.subr.mxu0 0.0
  %677 = vmatpush1.msra.mxu0 %v656
  %678 = vmatprep.subr.mxu0 0.0
  %679 = vmatpush1.msra.mxu0 %v657
  %680 = vmatprep.subr.mxu0 0.0
  %681 = vmatpush1.msra.mxu0 %v666
  %682 = vmatprep.subr.mxu0 0.0
  %683 = vmatpush1.msra.mxu0 0.0
  %684 = vmatprep.subr.mxu0 0.0
  %685 = vmatpush1.msra.mxu0 0.0
  %686 = vmatprep.subr.mxu0 0.0
  %687 = vmatpush1.msra.mxu0 0.0
  %688 = vmatprep.subr.mxu0 0.0
  %689 = vmatpush1.msra.mxu0 0.0
  %690 = vmatprep.subr.mxu0 0.0
  %691 = vmatpush1.msra.mxu0 0.0
  %692 = vmatprep.subr.mxu0 0.0
  %693 = vmatpush1.msra.mxu0 0.0
  %694 = vmatprep.subr.mxu0 0.0
  %695 = vmatpush1.msra.mxu0 0.0
  %696 = vmatprep.subr.mxu0 0.0
  %697 = vmatpush1.msra.mxu0 0.0
  %698 = vmatprep.subr.mxu0 0.0
  %699 = vmatpush1.msra.mxu0 0.0
  %700 = vmatprep.subr.mxu0 0.0
  %701 = vmatpush1.msra.mxu0 0.0
  %702 = vmatprep.subr.mxu0 0.0
  %703 = vmatpush1.msra.mxu0 0.0
  %704 = vmatprep.subr.mxu0 0.0
  %705 = vmatpush1.msra.mxu0 0.0
  %706 = vmatprep.subr.mxu0 0.0
  %707 = vmatpush1.msra.mxu0 0.0
  %708 = vmatprep.subr.mxu0 0.0
  %709 = vmatpush1.msra.mxu0 0.0
  %710 = vmatprep.subr.mxu0 0.0
  %711 = vmatpush1.msra.mxu0 0.0
  %712 = vmatprep.subr.mxu0 0.0
  %713 = vmatpush1.msra.mxu0 0.0
  %714 = vmatprep.subr.mxu0 0.0
  %715 = vmatpush1.msra.mxu0 0.0
  %716 = vmatprep.subr.mxu0 0.0
  %717 = vmatpush1.msra.mxu0 0.0
  %718 = vmatprep.subr.mxu0 0.0
  %719 = vmatpush1.msra.mxu0 0.0
  %720 = vmatprep.subr.mxu0 0.0
  %721 = vmatpush1.msra.mxu0 0.0
  %722 = vmatprep.subr.mxu0 0.0
  %723 = vmatpush1.msra.mxu0 0.0
  %724 = vmatprep.subr.mxu0 0.0
  %725 = vmatpush1.msra.mxu0 0.0
  %726 = vmatprep.subr.mxu0 0.0
  %727 = vmatpush1.msra.mxu0 0.0
  %728 = vmatprep.subr.mxu0 0.0
  %729 = vmatpush1.msra.mxu0 0.0
  %730 = vmatprep.subr.mxu0 0.0
  %731 = vmatpush1.msra.mxu0 0.0
  %732 = vmatprep.mubr.f32.mxu0 0.0
  %733 = vmatmul.mubr.f32.gmra.mrb[0].mxu0 %v662
  %v734 = vpop.f32.mrb[0].mxu0
  %v735 = vadd.f32 0.0, %v734
  %v736 = vpop.f32.mrb[0].mxu0
  %737 = vdwg.mxu0
  %vm738 = vcmask 254976
  %v739 = vsel %vm738, %v735, 0.0
  %740 = vadd.xlane.f32.xlu0 %v739
  %v741 = vpop.xlane.xlu0 %740
  %vm742 = vcmask 1024
  %743 = vst.msk [vmem:[%s4] sm:$0x3] %vm742, %v741
  // Predicated region
  $region18: #{discriminator_forward.7} parent=0 // pred_check
    _
  $region19: #{discriminator_forward.7} parent=0 // pred_check_branch
    %745 = sbr.rel (0) target = $region21
  $region20: #{discriminator_forward.7} parent=0 // pred_region
    _
  $region21: #{discriminator_forward.7} parent=0 // pred_fallthru
    _
  // Predicated region
  $region22: #{discriminator_forward.7} parent=0 // pred_check
    _
  $region23: #{discriminator_forward.7} parent=0 // pred_check_branch
    %747 = sbr.rel (0) target = $region25
  $region24: #{discriminator_forward.7} parent=0 // pred_region
    _
  $region25: #{discriminator_forward.7} parent=0 // pred_fallthru
    _

</llo_original>
